<compile_context>
chip_gen: v7x
topology: tpu7x:2x2x1
jax: 0.10.0
libtpu: 0.0.40
codegen_flags: <defaults>
</compile_context>

<pallas_src>
import jax
import jax.numpy as jnp
from jax.experimental import pallas as pl
from jax.experimental.pallas import tpu as pltpu

HIDDEN_DIM = 256
OUTPUT_DIM = 28 * 28        # 784 (logical output width)
OUTPUT_DIM_PAD = 896        # padded to a multiple of 128 lanes for dense stores
BN_EPS = 0.8                # nn.BatchNorm1d(512, 0.8) -> eps = 0.8

# Packed per-feature vector layout (single (1, 5760) f32 array).
# All offsets are multiples of 128 lanes.
_VEC_SLICES = {
    "b1":  (0, 256),
    "b2":  (256, 768),
    "g2":  (768, 1280),
    "be2": (1280, 1792),
    "b3":  (1792, 2816),
    "g3":  (2816, 3840),
    "be3": (3840, 4864),
    "b4":  (4864, 5760),
}
_VEC_LEN = 5760


def _bn_relu(h, gamma, beta, eps=BN_EPS):
    """Training-mode BatchNorm1d (batch statistics) + ReLU, bf16 result.

    Two-pass (centered) variance for numerical robustness; cost is hidden
    under the weight DMA that bounds this kernel.
    """
    inv_n = 1.0 / h.shape[0]
    mean = jnp.sum(h, axis=0, keepdims=True) * inv_n
    d = h - mean
    var = jnp.sum(d * d, axis=0, keepdims=True) * inv_n
    scale = gamma * jax.lax.rsqrt(var + eps)
    h = d * scale + beta
    return jnp.maximum(h, 0.0).astype(jnp.bfloat16)


def generator_kernel(z_ref, w1_ref, w2_ref, w3_ref, w4_ref, vec_ref, o_ref):
    # Static, lane-aligned slices of the packed bias / BN-param vector.
    b1 = vec_ref[:, _VEC_SLICES["b1"][0]:_VEC_SLICES["b1"][1]]
    b2 = vec_ref[:, _VEC_SLICES["b2"][0]:_VEC_SLICES["b2"][1]]
    g2 = vec_ref[:, _VEC_SLICES["g2"][0]:_VEC_SLICES["g2"][1]]
    be2 = vec_ref[:, _VEC_SLICES["be2"][0]:_VEC_SLICES["be2"][1]]
    b3 = vec_ref[:, _VEC_SLICES["b3"][0]:_VEC_SLICES["b3"][1]]
    g3 = vec_ref[:, _VEC_SLICES["g3"][0]:_VEC_SLICES["g3"][1]]
    be3 = vec_ref[:, _VEC_SLICES["be3"][0]:_VEC_SLICES["be3"][1]]
    b4 = vec_ref[:, _VEC_SLICES["b4"][0]:_VEC_SLICES["b4"][1]]

    # Layer 1: Linear(256 -> 256) + ReLU  (bf16 MXU, f32 accumulate)
    x = z_ref[...].astype(jnp.bfloat16)
    h = jnp.dot(x, w1_ref[...], preferred_element_type=jnp.float32) + b1
    h = jnp.maximum(h, 0.0).astype(jnp.bfloat16)

    # Layer 2: Linear(256 -> 512) + BatchNorm1d(512, eps=0.8) + ReLU
    h = jnp.dot(h, w2_ref[...], preferred_element_type=jnp.float32) + b2
    h = _bn_relu(h, g2, be2)

    # Layer 3: Linear(512 -> 1024) + BatchNorm1d(1024, eps=0.8) + ReLU
    h = jnp.dot(h, w3_ref[...], preferred_element_type=jnp.float32) + b3
    h = _bn_relu(h, g3, be3)

    # Layer 4: Linear(1024 -> 896[pad of 784]) + Tanh, lane-dense store.
    h = jnp.dot(h, w4_ref[...], preferred_element_type=jnp.float32) + b4
    o_ref[...] = jnp.tanh(h)


def _generator_forward_padded(z, params, group_size=None):
    """Runs the generator; returns the 896-wide lane-padded output.

    `group_size` rows form one independent BatchNorm batch (one grid step).
    group_size=None -> the whole batch is a single BN batch, which matches a
    single PyTorch forward() call exactly.
    """
    B = z.shape[0]
    if group_size is None:
        group_size = B
    assert B % group_size == 0, "batch must be divisible by group_size"
    assert group_size % 8 == 0 or group_size == B, \
        "group_size must be a multiple of 8 sublanes"
    G = B // group_size

    w1, w2, w3, w4, vec = params

    const2d = lambda g: (0, 0)       # weights / packed vec: VMEM-resident
    batched = lambda g: (g, 0)       # z / output: one block per group

    # Advisory cost estimate for XLA's scheduler.
    flops = 2 * B * (256 * 256 + 256 * 512 + 512 * 1024 + 1024 * OUTPUT_DIM_PAD)
    transcendentals = B * OUTPUT_DIM_PAD + G * (512 + 1024)   # tanh + rsqrt
    bytes_accessed = (
        (w1.size + w2.size + w3.size + w4.size) * 2   # bf16 weights
        + vec.size * 4                                # packed f32 vectors
        + z.size * 4                                  # input
        + B * OUTPUT_DIM_PAD * 4                      # output
    )

    out_pad = pl.pallas_call(
        generator_kernel,
        out_shape=jax.ShapeDtypeStruct((B, OUTPUT_DIM_PAD), jnp.float32),
        grid=(G,),
        in_specs=[
            pl.BlockSpec((group_size, HIDDEN_DIM), batched),
            pl.BlockSpec(w1.shape, const2d),
            pl.BlockSpec(w2.shape, const2d),
            pl.BlockSpec(w3.shape, const2d),
            pl.BlockSpec(w4.shape, const2d),
            pl.BlockSpec(vec.shape, const2d),
        ],
        out_specs=pl.BlockSpec((group_size, OUTPUT_DIM_PAD), batched),
        compiler_params=pltpu.CompilerParams(
            dimension_semantics=("parallel",),   # v7x megacore shards groups
            vmem_limit_bytes=32 << 20,
        ),
        cost_estimate=pl.CostEstimate(
            flops=flops,
            transcendentals=transcendentals,
            bytes_accessed=bytes_accessed,
        ),
    )(z, w1, w2, w3, w4, vec)
    return out_pad


generator_forward_padded = jax.jit(
    _generator_forward_padded, static_argnames=("group_size",))


@jax.jit
def _strip_pad(out_pad):
    return out_pad[:, :OUTPUT_DIM]


def generator_forward(z, params, group_size=None):
    """Returns the logical (B, 784) output (pad stripped)."""
    # Consumers that can accept the 896-wide buffer (or a fused slice in the
    # next op) should use generator_forward_padded directly and avoid this copy.
    return _strip_pad(generator_forward_padded(z, params, group_size=group_size))


def init_params(key):
    """Deterministic init mimicking PyTorch Linear default (U(+-1/sqrt(fan_in))).

    Weights are stored transposed (in, out) and in bf16; the four biases and
    the BatchNorm affine params are packed into one (1, 5760) f32 array.
    W4 / b4 are zero-padded from 784 to 896 output columns.
    """
    dims = [(HIDDEN_DIM, 256), (256, 512), (512, 1024), (1024, OUTPUT_DIM)]
    keys = jax.random.split(key, 2 * len(dims))
    linears = []
    for i, (fan_in, fan_out) in enumerate(dims):
        bound = 1.0 / jnp.sqrt(float(fan_in))
        w = jax.random.uniform(keys[2 * i], (fan_in, fan_out), jnp.float32, -bound, bound)
        b = jax.random.uniform(keys[2 * i + 1], (fan_out,), jnp.float32, -bound, bound)
        linears.append((w, b))

    (w1, b1), (w2, b2), (w3, b3), (w4, b4) = linears

    # Lane-pad the final layer 784 -> 896 with zeros (tanh(0)=0, sliced off).
    pad = OUTPUT_DIM_PAD - OUTPUT_DIM
    w4 = jnp.pad(w4, ((0, 0), (0, pad)))
    b4 = jnp.pad(b4, ((0,), (0, pad))[1])

    # Store weights in bf16 (halves HBM->VMEM weight traffic).
    w1, w2, w3, w4 = (w.astype(jnp.bfloat16) for w in (w1, w2, w3, w4))

    # BatchNorm affine params: gamma=1, beta=0 (PyTorch default init).
    g2 = jnp.ones((512,), jnp.float32)
    be2 = jnp.zeros((512,), jnp.float32)
    g3 = jnp.ones((1024,), jnp.float32)
    be3 = jnp.zeros((1024,), jnp.float32)

    # Pack all per-feature vectors into one lane-aligned array.
    vec = jnp.concatenate([b1, b2, g2, be2, b3, g3, be3, b4]).reshape(1, _VEC_LEN)
    assert vec.shape == (1, _VEC_LEN)
    return (w1, w2, w3, w4, vec)


def reference_forward(z, params, group_size=None):
    """Pure-JAX reference with the same bf16 matmul / f32 accumulate path and
    per-group BatchNorm semantics."""
    w1, w2, w3, w4, vec = params
    s = {k: vec[:, a:b] for k, (a, b) in _VEC_SLICES.items()}

    def bn_relu(h, gamma, beta):
        mean = jnp.mean(h, axis=0, keepdims=True)
        var = jnp.mean((h - mean) ** 2, axis=0, keepdims=True)
        h = (h - mean) * (gamma * jax.lax.rsqrt(var + BN_EPS)) + beta
        return jnp.maximum(h, 0.0).astype(jnp.bfloat16)

    def one_group(zg):
        h = jnp.dot(zg.astype(jnp.bfloat16), w1,
                    preferred_element_type=jnp.float32) + s["b1"]
        h = jnp.maximum(h, 0.0).astype(jnp.bfloat16)
        h = jnp.dot(h, w2, preferred_element_type=jnp.float32) + s["b2"]
        h = bn_relu(h, s["g2"], s["be2"])
        h = jnp.dot(h, w3, preferred_element_type=jnp.float32) + s["b3"]
        h = bn_relu(h, s["g3"], s["be3"])
        h = jnp.dot(h, w4, preferred_element_type=jnp.float32) + s["b4"]
        return jnp.tanh(h)[:, :OUTPUT_DIM]

    B = z.shape[0]
    if group_size is None:
        group_size = B
    outs = [one_group(z[g * group_size:(g + 1) * group_size])
            for g in range(B // group_size)]
    return jnp.concatenate(outs, axis=0)


if __name__ == "__main__":
    key = jax.random.PRNGKey(0)
    k_params, k_z = jax.random.split(key)

    params = init_params(k_params)

    GROUP = 32            # one independent BatchNorm batch per grid step
    NUM_GROUPS = 2        # exercises the batch-group grid + resident weights
    B = GROUP * NUM_GROUPS
    z = jax.random.normal(k_z, (B, HIDDEN_DIM), jnp.float32)

    out = generator_forward(z, params, group_size=GROUP)
    out = jax.block_until_ready(out)

    ref = reference_forward(z, params, group_size=GROUP)
    assert out.shape == (B, OUTPUT_DIM), out.shape
    assert bool(jnp.all(jnp.isfinite(out))), "non-finite output"
    assert bool(jnp.allclose(out, ref, atol=2e-2, rtol=2e-2)), "mismatch vs reference"

    print("KERNEL_OK")
</pallas_src>

<mosaic_0001>
module attributes {stable_mosaic.version = 11 : i64} {
  func.func @generator_kernel(%arg0: i32, %arg1: memref<32x256xf32, #tpu.memory_space<vmem>>, %arg2: memref<256x256xbf16, #tpu.memory_space<vmem>>, %arg3: memref<256x512xbf16, #tpu.memory_space<vmem>>, %arg4: memref<512x1024xbf16, #tpu.memory_space<vmem>>, %arg5: memref<1024x896xbf16, #tpu.memory_space<vmem>>, %arg6: memref<1x5760xf32, #tpu.memory_space<vmem>>, %arg7: memref<32x896xf32, #tpu.memory_space<vmem>>) attributes {dimension_semantics = [#tpu.dimension_semantics<parallel>], iteration_bounds = array<i64: 2>, scalar_prefetch = 0 : i64, scratch_operands = 0 : i64, tpu.core_type = #tpu.core_type<tc>, window_params = [{transform_indices = @transform_0, window_bounds = array<i64: 32, 256>}, {pipeline_mode = #tpu.pipeline_mode<synchronous>, transform_indices = @transform_1, window_bounds = array<i64: 256, 256>}, {pipeline_mode = #tpu.pipeline_mode<synchronous>, transform_indices = @transform_2, window_bounds = array<i64: 256, 512>}, {pipeline_mode = #tpu.pipeline_mode<synchronous>, transform_indices = @transform_3, window_bounds = array<i64: 512, 1024>}, {pipeline_mode = #tpu.pipeline_mode<synchronous>, transform_indices = @transform_4, window_bounds = array<i64: 1024, 896>}, {pipeline_mode = #tpu.pipeline_mode<synchronous>, transform_indices = @transform_5, window_bounds = array<i64: 1, 5760>}, {transform_indices = @transform_6, window_bounds = array<i64: 32, 896>}]} {
    %c0 = arith.constant 0 : index
    %c0_0 = arith.constant 0 : index
    %0 = vector.load %arg6[%c0, %c0_0] : memref<1x5760xf32, #tpu.memory_space<vmem>>, vector<1x256xf32>
    %c0_1 = arith.constant 0 : index
    %c256 = arith.constant 256 : index
    %1 = vector.load %arg6[%c0_1, %c256] : memref<1x5760xf32, #tpu.memory_space<vmem>>, vector<1x512xf32>
    %c0_2 = arith.constant 0 : index
    %c768 = arith.constant 768 : index
    %2 = vector.load %arg6[%c0_2, %c768] : memref<1x5760xf32, #tpu.memory_space<vmem>>, vector<1x512xf32>
    %c0_3 = arith.constant 0 : index
    %c1280 = arith.constant 1280 : index
    %3 = vector.load %arg6[%c0_3, %c1280] : memref<1x5760xf32, #tpu.memory_space<vmem>>, vector<1x512xf32>
    %c0_4 = arith.constant 0 : index
    %c1792 = arith.constant 1792 : index
    %4 = vector.load %arg6[%c0_4, %c1792] : memref<1x5760xf32, #tpu.memory_space<vmem>>, vector<1x1024xf32>
    %c0_5 = arith.constant 0 : index
    %c2816 = arith.constant 2816 : index
    %5 = vector.load %arg6[%c0_5, %c2816] : memref<1x5760xf32, #tpu.memory_space<vmem>>, vector<1x1024xf32>
    %c0_6 = arith.constant 0 : index
    %c3840 = arith.constant 3840 : index
    %6 = vector.load %arg6[%c0_6, %c3840] : memref<1x5760xf32, #tpu.memory_space<vmem>>, vector<1x1024xf32>
    %c0_7 = arith.constant 0 : index
    %c4864 = arith.constant 4864 : index
    %7 = vector.load %arg6[%c0_7, %c4864] : memref<1x5760xf32, #tpu.memory_space<vmem>>, vector<1x896xf32>
    %c0_8 = arith.constant 0 : index
    %c0_9 = arith.constant 0 : index
    %8 = vector.load %arg1[%c0_8, %c0_9] : memref<32x256xf32, #tpu.memory_space<vmem>>, vector<32x256xf32>
    %9 = arith.truncf %8 : vector<32x256xf32> to vector<32x256xbf16>
    %c0_10 = arith.constant 0 : index
    %c0_11 = arith.constant 0 : index
    %10 = vector.load %arg2[%c0_10, %c0_11] : memref<256x256xbf16, #tpu.memory_space<vmem>>, vector<256x256xbf16>
    %cst = arith.constant dense<0.000000e+00> : vector<32x256xf32>
    %11 = tpu.matmul %9, %10, %cst {dimension_numbers = #tpu.dot_dimension_numbers<[1], [0], [0], [1], [0, 0, 1, 1], [], []>} : vector<32x256xbf16>, vector<256x256xbf16>, vector<32x256xf32> -> vector<32x256xf32>
    %12 = vector.broadcast %0 : vector<1x256xf32> to vector<32x256xf32>
    %13 = arith.addf %11, %12 : vector<32x256xf32>
    %cst_12 = arith.constant 0.000000e+00 : f32
    %14 = vector.broadcast %cst_12 : f32 to vector<32x256xf32>
    %15 = arith.maximumf %13, %14 : vector<32x256xf32>
    %16 = arith.truncf %15 : vector<32x256xf32> to vector<32x256xbf16>
    %c0_13 = arith.constant 0 : index
    %c0_14 = arith.constant 0 : index
    %17 = vector.load %arg3[%c0_13, %c0_14] : memref<256x512xbf16, #tpu.memory_space<vmem>>, vector<256x512xbf16>
    %cst_15 = arith.constant dense<0.000000e+00> : vector<32x512xf32>
    %18 = tpu.matmul %16, %17, %cst_15 {dimension_numbers = #tpu.dot_dimension_numbers<[1], [0], [0], [1], [0, 0, 1, 1], [], []>} : vector<32x256xbf16>, vector<256x512xbf16>, vector<32x512xf32> -> vector<32x512xf32>
    %19 = vector.broadcast %1 : vector<1x512xf32> to vector<32x512xf32>
    %20 = arith.addf %18, %19 : vector<32x512xf32>
    %cst_16 = arith.constant dense<0.000000e+00> : vector<512xf32>
    %21 = vector.multi_reduction <add>, %20, %cst_16 [0] : vector<32x512xf32> to vector<512xf32>
    %22 = vector.shape_cast %21 : vector<512xf32> to vector<1x512xf32>
    %cst_17 = arith.constant 3.125000e-02 : f32
    %23 = vector.broadcast %cst_17 : f32 to vector<1x512xf32>
    %24 = arith.mulf %22, %23 : vector<1x512xf32>
    %25 = vector.broadcast %24 : vector<1x512xf32> to vector<32x512xf32>
    %26 = arith.subf %20, %25 : vector<32x512xf32>
    %27 = arith.mulf %26, %26 : vector<32x512xf32>
    %cst_18 = arith.constant dense<0.000000e+00> : vector<512xf32>
    %28 = vector.multi_reduction <add>, %27, %cst_18 [0] : vector<32x512xf32> to vector<512xf32>
    %29 = vector.shape_cast %28 : vector<512xf32> to vector<1x512xf32>
    %cst_19 = arith.constant 3.125000e-02 : f32
    %30 = vector.broadcast %cst_19 : f32 to vector<1x512xf32>
    %31 = arith.mulf %29, %30 : vector<1x512xf32>
    %cst_20 = arith.constant 8.000000e-01 : f32
    %32 = vector.broadcast %cst_20 : f32 to vector<1x512xf32>
    %33 = arith.addf %31, %32 : vector<1x512xf32>
    %34 = math.rsqrt %33 : vector<1x512xf32>
    %35 = arith.mulf %2, %34 : vector<1x512xf32>
    %36 = vector.broadcast %35 : vector<1x512xf32> to vector<32x512xf32>
    %37 = arith.mulf %26, %36 : vector<32x512xf32>
    %38 = vector.broadcast %3 : vector<1x512xf32> to vector<32x512xf32>
    %39 = arith.addf %37, %38 : vector<32x512xf32>
    %cst_21 = arith.constant 0.000000e+00 : f32
    %40 = vector.broadcast %cst_21 : f32 to vector<32x512xf32>
    %41 = arith.maximumf %39, %40 : vector<32x512xf32>
    %42 = arith.truncf %41 : vector<32x512xf32> to vector<32x512xbf16>
    %c0_22 = arith.constant 0 : index
    %c0_23 = arith.constant 0 : index
    %43 = vector.load %arg4[%c0_22, %c0_23] : memref<512x1024xbf16, #tpu.memory_space<vmem>>, vector<512x1024xbf16>
    %cst_24 = arith.constant dense<0.000000e+00> : vector<32x1024xf32>
    %44 = tpu.matmul %42, %43, %cst_24 {dimension_numbers = #tpu.dot_dimension_numbers<[1], [0], [0], [1], [0, 0, 1, 1], [], []>} : vector<32x512xbf16>, vector<512x1024xbf16>, vector<32x1024xf32> -> vector<32x1024xf32>
    %45 = vector.broadcast %4 : vector<1x1024xf32> to vector<32x1024xf32>
    %46 = arith.addf %44, %45 : vector<32x1024xf32>
    %cst_25 = arith.constant dense<0.000000e+00> : vector<1024xf32>
    %47 = vector.multi_reduction <add>, %46, %cst_25 [0] : vector<32x1024xf32> to vector<1024xf32>
    %48 = vector.shape_cast %47 : vector<1024xf32> to vector<1x1024xf32>
    %cst_26 = arith.constant 3.125000e-02 : f32
    %49 = vector.broadcast %cst_26 : f32 to vector<1x1024xf32>
    %50 = arith.mulf %48, %49 : vector<1x1024xf32>
    %51 = vector.broadcast %50 : vector<1x1024xf32> to vector<32x1024xf32>
    %52 = arith.subf %46, %51 : vector<32x1024xf32>
    %53 = arith.mulf %52, %52 : vector<32x1024xf32>
    %cst_27 = arith.constant dense<0.000000e+00> : vector<1024xf32>
    %54 = vector.multi_reduction <add>, %53, %cst_27 [0] : vector<32x1024xf32> to vector<1024xf32>
    %55 = vector.shape_cast %54 : vector<1024xf32> to vector<1x1024xf32>
    %cst_28 = arith.constant 3.125000e-02 : f32
    %56 = vector.broadcast %cst_28 : f32 to vector<1x1024xf32>
    %57 = arith.mulf %55, %56 : vector<1x1024xf32>
    %cst_29 = arith.constant 8.000000e-01 : f32
    %58 = vector.broadcast %cst_29 : f32 to vector<1x1024xf32>
    %59 = arith.addf %57, %58 : vector<1x1024xf32>
    %60 = math.rsqrt %59 : vector<1x1024xf32>
    %61 = arith.mulf %5, %60 : vector<1x1024xf32>
    %62 = vector.broadcast %61 : vector<1x1024xf32> to vector<32x1024xf32>
    %63 = arith.mulf %52, %62 : vector<32x1024xf32>
    %64 = vector.broadcast %6 : vector<1x1024xf32> to vector<32x1024xf32>
    %65 = arith.addf %63, %64 : vector<32x1024xf32>
    %cst_30 = arith.constant 0.000000e+00 : f32
    %66 = vector.broadcast %cst_30 : f32 to vector<32x1024xf32>
    %67 = arith.maximumf %65, %66 : vector<32x1024xf32>
    %68 = arith.truncf %67 : vector<32x1024xf32> to vector<32x1024xbf16>
    %c0_31 = arith.constant 0 : index
    %c0_32 = arith.constant 0 : index
    %69 = vector.load %arg5[%c0_31, %c0_32] : memref<1024x896xbf16, #tpu.memory_space<vmem>>, vector<1024x896xbf16>
    %cst_33 = arith.constant dense<0.000000e+00> : vector<32x896xf32>
    %70 = tpu.matmul %68, %69, %cst_33 {dimension_numbers = #tpu.dot_dimension_numbers<[1], [0], [0], [1], [0, 0, 1, 1], [], []>} : vector<32x1024xbf16>, vector<1024x896xbf16>, vector<32x896xf32> -> vector<32x896xf32>
    %71 = vector.broadcast %7 : vector<1x896xf32> to vector<32x896xf32>
    %72 = arith.addf %70, %71 : vector<32x896xf32>
    %73 = math.tanh %72 : vector<32x896xf32>
    %c0_34 = arith.constant 0 : index
    %c0_35 = arith.constant 0 : index
    %74 = vector.load %arg7[%c0_34, %c0_35] : memref<32x896xf32, #tpu.memory_space<vmem>>, vector<32x896xf32>
    tpu.vector_store %arg7[%c0_34, %c0_35], %73 {strides = array<i32>} : memref<32x896xf32, #tpu.memory_space<vmem>>, vector<32x896xf32>,
    return
  }
  func.func @transform_0(%arg0: i32) -> (i32, i32) {
    %c0_i32 = arith.constant 0 : i32
    %c0_i32_0 = arith.constant 0 : i32
    return %arg0, %c0_i32 : i32, i32
  }
  func.func @transform_1(%arg0: i32) -> (i32, i32) {
    %c0_i32 = arith.constant 0 : i32
    %c0_i32_0 = arith.constant 0 : i32
    %c0_i32_1 = arith.constant 0 : i32
    return %c0_i32, %c0_i32_0 : i32, i32
  }
  func.func @transform_2(%arg0: i32) -> (i32, i32) {
    %c0_i32 = arith.constant 0 : i32
    %c0_i32_0 = arith.constant 0 : i32
    %c0_i32_1 = arith.constant 0 : i32
    return %c0_i32, %c0_i32_0 : i32, i32
  }
  func.func @transform_3(%arg0: i32) -> (i32, i32) {
    %c0_i32 = arith.constant 0 : i32
    %c0_i32_0 = arith.constant 0 : i32
    %c0_i32_1 = arith.constant 0 : i32
    return %c0_i32, %c0_i32_0 : i32, i32
  }
  func.func @transform_4(%arg0: i32) -> (i32, i32) {
    %c0_i32 = arith.constant 0 : i32
    %c0_i32_0 = arith.constant 0 : i32
    %c0_i32_1 = arith.constant 0 : i32
    return %c0_i32, %c0_i32_0 : i32, i32
  }
  func.func @transform_5(%arg0: i32) -> (i32, i32) {
    %c0_i32 = arith.constant 0 : i32
    %c0_i32_0 = arith.constant 0 : i32
    %c0_i32_1 = arith.constant 0 : i32
    return %c0_i32, %c0_i32_0 : i32, i32
  }
  func.func @transform_6(%arg0: i32) -> (i32, i32) {
    %c0_i32 = arith.constant 0 : i32
    %c0_i32_0 = arith.constant 0 : i32
    return %arg0, %c0_i32 : i32, i32
  }
}

</mosaic_0001>

<llo_original>
// kernel: _generator_forward_padded.1
$region0: #{_generator_forward_padded.1}
  #allocation0 [shape = 'u32[]', space=smem, size = 0x4, offset = 0x4, fixed_abs, tag = 'smem constant byte address 0x4 - core index']
  #allocation1 [shape = 'u32[144,128]{1,0:T(1,128)}', space=vmem, size = 0x12000, scoped, tag = 'internal scratch']
  %s0 = inlined_call_operand.hbm [shape: f32[64,256], index: 0, kind: input, shape index: {}]
  %s1 = inlined_call_operand.hbm [shape: bf16[256,256], index: 1, kind: input, shape index: {}]
  %s2 = inlined_call_operand.hbm [shape: bf16[256,512], index: 2, kind: input, shape index: {}]
  %s3 = inlined_call_operand.hbm [shape: bf16[512,1024], index: 3, kind: input, shape index: {}]
  %s4 = inlined_call_operand.hbm [shape: bf16[1024,896], index: 4, kind: input, shape index: {}]
  %s5 = inlined_call_operand.hbm [shape: f32[1,5760], index: 5, kind: input, shape index: {}]
  %s6 = inlined_call_operand.hbm [shape: f32[64,896], index: 6, kind: output, shape index: {}]
  %s7 = sld [smem:[#allocation0]]
  $region81: #{_generator_forward_padded.1} parent=0
    _
  %s9 = ssub.s32 1, %s7
  %s10 = scalar_select 0, %s9, %s7
  $region1: #{_generator_forward_padded.1} parent=0
    #allocation2 [shape = 'u8[65536]{0}', space=vmem, size = 0x10000, scoped, tag = 'input window, operand 0']
    #allocation3 [shape = 's32[2]{0}', space=sflag, size = 0x8, scoped, tag = 'scoped memory for _generator_forward_padded.1']
    #allocation4 [shape = 's32[2]{0}', space=sflag, size = 0x8, scoped, tag = 'scoped memory for _generator_forward_padded.1']
    #allocation5 [shape = 'u8[131072]{0}', space=vmem, size = 0x20000, scoped, tag = 'input window, operand 1, single buffered']
    #allocation6 [shape = 's32[1]{0}', space=sflag, size = 0x4, scoped, tag = 'scoped memory for _generator_forward_padded.1']
    #allocation7 [shape = 'u8[262144]{0}', space=vmem, size = 0x40000, scoped, tag = 'input window, operand 2, single buffered']
    #allocation8 [shape = 'u8[1048576]{0}', space=vmem, size = 0x100000, scoped, tag = 'input window, operand 3, single buffered']
    #allocation9 [shape = 's32[1]{0}', space=sflag, size = 0x4, scoped, tag = 'scoped memory for _generator_forward_padded.1']
    #allocation10 [shape = 'u8[1835008]{0}', space=vmem, size = 0x1c0000, scoped, tag = 'input window, operand 4, single buffered']
    #allocation11 [shape = 'u8[23040]{0}', space=vmem, size = 0x5c00, scoped, tag = 'input window, operand 5, single buffered']
    #allocation12 [shape = 's32[1]{0}', space=sflag, size = 0x4, scoped, tag = 'scoped memory for _generator_forward_padded.1']
    #allocation13 [shape = 'u8[229376]{0}', space=vmem, size = 0x38000, scoped, tag = 'output window, operand 0']
    %11 = vsyncpa [#allocation3], 0
    %s12 = scalar_lea.sflag [#allocation3], 1
    %13 = vsyncpa %s12, 0
    %14 = vsyncpa [#allocation6], 0
    %15 = vsyncpa [#allocation9], 0
    %16 = vsyncpa [#allocation12], 0
    %17 = vsyncpa [#allocation4], 0
    %s18 = scalar_lea.sflag [#allocation4], 1
    %19 = vsyncpa %s18, 0
    loop: start=0, step=1, limit=4
    $region2: #{_generator_forward_padded.1} parent=1 // loop_pre_header
      _
    $region3: #{_generator_forward_padded.1} parent=1 // loop_header
      %s21 = sphi 0, %s25
      %p22 = scmp.ge.s32.totalorder %s21, 4
      %s31 = sphi 0, %s33
      %s34 = sphi 0, %s31
      %s35 = sphi 0, %s34
      %s51 = sphi 0, %s35
      %s55 = sphi 0, %s55
      %s57 = sphi 0, %s55
      %s58 = sphi 0, %s57
      %s72 = sphi 0, %s58
      %s76 = sphi 0, %s76
      %s78 = sphi 0, %s76
      %s79 = sphi 0, %s78
      %s93 = sphi 0, %s79
      %s97 = sphi 0, %s97
      %s99 = sphi 0, %s97
      %s100 = sphi 0, %s99
      %s114 = sphi 0, %s100
      %s118 = sphi 0, %s118
      %s120 = sphi 0, %s118
      %s121 = sphi 0, %s120
      %s135 = sphi 0, %s121
      %s139 = sphi 0, %s139
      %s141 = sphi 0, %s139
      %s142 = sphi 0, %s141
      %s156 = sphi 0, %s142
      %s162 = sphi 0, %s164
      %s165 = sphi 0, %s162
      %s166 = sphi 0, %s165
      %s182 = sphi 0, %s166
    $region4: #{_generator_forward_padded.1} parent=1 // loop_header_branch
      %24 = sbr.rel (%p22) target = $region8
    $region5: #{_generator_forward_padded.1} parent=1 // loop_body
      %s26 = ssub.s32 %s21, 1
      %s27 = ssub.s32 %s21, 2
      %s28 = sadd.s32 %s21, 1
      %s29 = ssub.s32 %s21, %s28
      %p30 = scmp.eq.s32.totalorder %s29, 0
      %s32 = sadd.s32 %s31, 1
      %s33 = scalar_select %p30, %s31, %s32
      %p36 = pneg %p30
      %p37 = scmp.eq.s32.totalorder %s21, 1
      %p38 = por %p36, %p37
      %p39 = scmp.ne.s32.totalorder %s31, %s34
      %p40 = scmp.eq.s32.totalorder %s21, 0
      %p41 = por %p39, %p40
      %p42 = scmp.ne.s32.totalorder %s31, %s34
      %p43 = scmp.eq.s32.totalorder %s26, 1
      %p44 = por %p42, %p43
      %p45 = scmp.ne.s32.totalorder %s34, %s35
      %p46 = scmp.eq.s32.totalorder %s26, 0
      %p47 = por %p45, %p46
      %p48 = scmp.ne.s32.totalorder %s34, %s35
      %p49 = scmp.eq.s32.totalorder %s27, 1
      %p50 = por %p48, %p49
      %p52 = scmp.ne.s32.totalorder %s35, %s51
      %p53 = scmp.eq.s32.totalorder %s27, 0
      %p54 = por %p52, %p53
      %s56 = sadd.s32 %s55, 1
      %p59 = scmp.eq.s32.totalorder %s21, 1
      %p60 = scmp.ne.s32.totalorder %s55, %s57
      %p61 = scmp.eq.s32.totalorder %s21, 0
      %p62 = por %p60, %p61
      %p63 = scmp.ne.s32.totalorder %s55, %s57
      %p64 = scmp.eq.s32.totalorder %s26, 1
      %p65 = por %p63, %p64
      %p66 = scmp.ne.s32.totalorder %s57, %s58
      %p67 = scmp.eq.s32.totalorder %s26, 0
      %p68 = por %p66, %p67
      %p69 = scmp.ne.s32.totalorder %s57, %s58
      %p70 = scmp.eq.s32.totalorder %s27, 1
      %p71 = por %p69, %p70
      %p73 = scmp.ne.s32.totalorder %s58, %s72
      %p74 = scmp.eq.s32.totalorder %s27, 0
      %p75 = por %p73, %p74
      %s77 = sadd.s32 %s76, 1
      %p80 = scmp.eq.s32.totalorder %s21, 1
      %p81 = scmp.ne.s32.totalorder %s76, %s78
      %p82 = scmp.eq.s32.totalorder %s21, 0
      %p83 = por %p81, %p82
      %p84 = scmp.ne.s32.totalorder %s76, %s78
      %p85 = scmp.eq.s32.totalorder %s26, 1
      %p86 = por %p84, %p85
      %p87 = scmp.ne.s32.totalorder %s78, %s79
      %p88 = scmp.eq.s32.totalorder %s26, 0
      %p89 = por %p87, %p88
      %p90 = scmp.ne.s32.totalorder %s78, %s79
      %p91 = scmp.eq.s32.totalorder %s27, 1
      %p92 = por %p90, %p91
      %p94 = scmp.ne.s32.totalorder %s79, %s93
      %p95 = scmp.eq.s32.totalorder %s27, 0
      %p96 = por %p94, %p95
      %s98 = sadd.s32 %s97, 1
      %p101 = scmp.eq.s32.totalorder %s21, 1
      %p102 = scmp.ne.s32.totalorder %s97, %s99
      %p103 = scmp.eq.s32.totalorder %s21, 0
      %p104 = por %p102, %p103
      %p105 = scmp.ne.s32.totalorder %s97, %s99
      %p106 = scmp.eq.s32.totalorder %s26, 1
      %p107 = por %p105, %p106
      %p108 = scmp.ne.s32.totalorder %s99, %s100
      %p109 = scmp.eq.s32.totalorder %s26, 0
      %p110 = por %p108, %p109
      %p111 = scmp.ne.s32.totalorder %s99, %s100
      %p112 = scmp.eq.s32.totalorder %s27, 1
      %p113 = por %p111, %p112
      %p115 = scmp.ne.s32.totalorder %s100, %s114
      %p116 = scmp.eq.s32.totalorder %s27, 0
      %p117 = por %p115, %p116
      %s119 = sadd.s32 %s118, 1
      %p122 = scmp.eq.s32.totalorder %s21, 1
      %p123 = scmp.ne.s32.totalorder %s118, %s120
      %p124 = scmp.eq.s32.totalorder %s21, 0
      %p125 = por %p123, %p124
      %p126 = scmp.ne.s32.totalorder %s118, %s120
      %p127 = scmp.eq.s32.totalorder %s26, 1
      %p128 = por %p126, %p127
      %p129 = scmp.ne.s32.totalorder %s120, %s121
      %p130 = scmp.eq.s32.totalorder %s26, 0
      %p131 = por %p129, %p130
      %p132 = scmp.ne.s32.totalorder %s120, %s121
      %p133 = scmp.eq.s32.totalorder %s27, 1
      %p134 = por %p132, %p133
      %p136 = scmp.ne.s32.totalorder %s121, %s135
      %p137 = scmp.eq.s32.totalorder %s27, 0
      %p138 = por %p136, %p137
      %s140 = sadd.s32 %s139, 1
      %p143 = scmp.eq.s32.totalorder %s21, 1
      %p144 = scmp.ne.s32.totalorder %s139, %s141
      %p145 = scmp.eq.s32.totalorder %s21, 0
      %p146 = por %p144, %p145
      %p147 = scmp.ne.s32.totalorder %s139, %s141
      %p148 = scmp.eq.s32.totalorder %s26, 1
      %p149 = por %p147, %p148
      %p150 = scmp.ne.s32.totalorder %s141, %s142
      %p151 = scmp.eq.s32.totalorder %s26, 0
      %p152 = por %p150, %p151
      %p153 = scmp.ne.s32.totalorder %s141, %s142
      %p154 = scmp.eq.s32.totalorder %s27, 1
      %p155 = por %p153, %p154
      %p157 = scmp.ne.s32.totalorder %s142, %s156
      %p158 = scmp.eq.s32.totalorder %s27, 0
      %p159 = por %p157, %p158
      %s160 = ssub.s32 %s21, %s28
      %p161 = scmp.eq.s32.totalorder %s160, 0
      %s163 = sadd.s32 %s162, 1
      %s164 = scalar_select %p161, %s162, %s163
      %p167 = pneg %p161
      %p168 = scmp.eq.s32.totalorder %s21, 1
      %p169 = por %p167, %p168
      %p170 = scmp.ne.s32.totalorder %s162, %s165
      %p171 = scmp.eq.s32.totalorder %s21, 0
      %p172 = por %p170, %p171
      %p173 = scmp.ne.s32.totalorder %s162, %s165
      %p174 = scmp.eq.s32.totalorder %s26, 1
      %p175 = por %p173, %p174
      %p176 = scmp.ne.s32.totalorder %s165, %s166
      %p177 = scmp.eq.s32.totalorder %s26, 0
      %p178 = por %p176, %p177
      %p179 = scmp.ne.s32.totalorder %s165, %s166
      %p180 = scmp.eq.s32.totalorder %s27, 1
      %p181 = por %p179, %p180
      %p183 = scmp.ne.s32.totalorder %s166, %s182
      %p184 = scmp.eq.s32.totalorder %s27, 0
      %p185 = por %p183, %p184
      %p186 = scmp.le.s32.totalorder 1, %s21
      %p187 = scmp.lt.s32.totalorder %s21, 3
      %p188 = pnand %p186, %p187
      %p189 = pneg %p188
      // Predicated region
      $region9: #{_generator_forward_padded.1} parent=5 // pred_check
        _
      $region10: #{_generator_forward_padded.1} parent=5 // pred_check_branch
        %191 = sbr.rel (%p188) target = $region12
      $region11: #{_generator_forward_padded.1} parent=5 // pred_region
        %s192 = ssub.s32 %s21, 1
        // Predicated region
        $region13: #{_generator_forward_padded.1} parent=11 // pred_check
          %p193 = pneg %p68
        $region14: #{_generator_forward_padded.1} parent=11 // pred_check_branch
          %195 = sbr.rel (%p193) target = $region16
        $region15: #{_generator_forward_padded.1} parent=11 // pred_region
          %s197 = ssub.s32 4096, 4096
          %198 = vsyncadd [#allocation6], %s197
          %s199 = sshll.u32 [#allocation5], 4
          %s200 = int_to_ptr.vmem [resolvable:$true] %s199
          %205 = dma.hbm_to_vmem [thread:$0]  %s1, 4096, %s200, [#allocation6], 128, 128, 8
        $region16: #{_generator_forward_padded.1} parent=11 // pred_fallthru
          _
        // Predicated region
        $region17: #{_generator_forward_padded.1} parent=11 // pred_check
          %p206 = pneg %p89
        $region18: #{_generator_forward_padded.1} parent=11 // pred_check_branch
          %208 = sbr.rel (%p206) target = $region20
        $region19: #{_generator_forward_padded.1} parent=11 // pred_region
          %s210 = ssub.s32 8192, 8192
          %211 = vsyncadd [#allocation6], %s210
          %s212 = sshll.u32 [#allocation7], 4
          %s213 = int_to_ptr.vmem [resolvable:$true] %s212
          %218 = dma.hbm_to_vmem [thread:$0]  %s2, 8192, %s213, [#allocation6], 256, 256, 16
        $region20: #{_generator_forward_padded.1} parent=11 // pred_fallthru
          _
        // Predicated region
        $region21: #{_generator_forward_padded.1} parent=11 // pred_check
          %p219 = pneg %p110
        $region22: #{_generator_forward_padded.1} parent=11 // pred_check_branch
          %221 = sbr.rel (%p219) target = $region24
        $region23: #{_generator_forward_padded.1} parent=11 // pred_region
          %s223 = ssub.s32 32768, 32768
          %224 = vsyncadd [#allocation9], %s223
          %s225 = sshll.u32 [#allocation8], 4
          %s226 = int_to_ptr.vmem [resolvable:$true] %s225
          %231 = dma.hbm_to_vmem [thread:$0]  %s3, 32768, %s226, [#allocation9], 512, 512, 32
        $region24: #{_generator_forward_padded.1} parent=11 // pred_fallthru
          _
        // Predicated region
        $region25: #{_generator_forward_padded.1} parent=11 // pred_check
          %p232 = pneg %p131
        $region26: #{_generator_forward_padded.1} parent=11 // pred_check_branch
          %234 = sbr.rel (%p232) target = $region28
        $region27: #{_generator_forward_padded.1} parent=11 // pred_region
          %s236 = ssub.s32 57344, 57344
          %237 = vsyncadd [#allocation9], %s236
          %s238 = sshll.u32 [#allocation10], 4
          %s239 = int_to_ptr.vmem [resolvable:$true] %s238
          %244 = dma.hbm_to_vmem [thread:$0]  %s4, 57344, %s239, [#allocation9], 448, 448, 28
        $region28: #{_generator_forward_padded.1} parent=11 // pred_fallthru
          _
        // Predicated region
        $region29: #{_generator_forward_padded.1} parent=11 // pred_check
          %p245 = pneg %p152
        $region30: #{_generator_forward_padded.1} parent=11 // pred_check_branch
          %247 = sbr.rel (%p245) target = $region32
        $region31: #{_generator_forward_padded.1} parent=11 // pred_region
          %s249 = ssub.s32 720, 720
          %250 = vsyncadd [#allocation12], %s249
          %s252 = sshll.u32 [#allocation11], 4
          %s253 = int_to_ptr.vmem [resolvable:$true] %s252
          %255 = dma.hbm_to_vmem [thread:$0]  %s5, 720, %s253, [#allocation12]
        $region32: #{_generator_forward_padded.1} parent=11 // pred_fallthru
          _
      $region12: #{_generator_forward_padded.1} parent=5 // pred_fallthru
        _
      %p256 = scmp.lt.s32.totalorder %s21, 2
      // Predicated region
      $region33: #{_generator_forward_padded.1} parent=5 // pred_check
        %p257 = pneg %p256
      $region34: #{_generator_forward_padded.1} parent=5 // pred_check_branch
        %259 = sbr.rel (%p257) target = $region36
      $region35: #{_generator_forward_padded.1} parent=5 // pred_region
        // Predicated region
        $region37: #{_generator_forward_padded.1} parent=35 // pred_check
          %p260 = pneg %p41
        $region38: #{_generator_forward_padded.1} parent=35 // pred_check_branch
          %262 = sbr.rel (%p260) target = $region40
        $region39: #{_generator_forward_padded.1} parent=35 // pred_region
          %s263 = sand.u32 %s31, 1
          %s264 = scalar_lea.sflag [#allocation3], %s263
          %s265 = sand.u32 %s31, 1
          %s266 = smul.addr %s265, 64
          %s267 = scalar_lea.vmem [#allocation2], %s266
          %s268 = smul.u32 4, %s21
          %s270 = ssub.s32 1024, 1024
          %271 = vsyncadd %s264, %s270
          %s272 = smul.addr %s268, 2
          %s273 = smul.addr %s272, 128
          %s274 = scalar_lea.hbm %s0, %s273
          %s275 = sshll.u32 %s267, 4
          %s276 = int_to_ptr.vmem [resolvable:$true] %s275
          %281 = dma.hbm_to_vmem [thread:$0]  %s274, 1024, %s276, %s264, 256, 256, 16
        $region40: #{_generator_forward_padded.1} parent=35 // pred_fallthru
          _
      $region36: #{_generator_forward_padded.1} parent=5 // pred_fallthru
        _
      %p282 = scmp.le.s32.totalorder 1, %s21
      %p283 = scmp.lt.s32.totalorder %s21, 3
      %p284 = pnand %p282, %p283
      %p285 = pneg %p284
      // Predicated region
      $region41: #{_generator_forward_padded.1} parent=5 // pred_check
        _
      $region42: #{_generator_forward_padded.1} parent=5 // pred_check_branch
        %287 = sbr.rel (%p284) target = $region44
      $region43: #{_generator_forward_padded.1} parent=5 // pred_region
        %s288 = ssub.s32 %s21, 1
        %s289 = sand.u32 %s34, 1
        %s290 = scalar_lea.sflag [#allocation3], %s289
        %s291 = sand.u32 %s34, 1
        %s292 = smul.addr %s291, 64
        %s293 = scalar_lea.vmem [#allocation2], %s292
        // Predicated region
        $region45: #{_generator_forward_padded.1} parent=43 // pred_check
          %p294 = pneg %p47
        $region46: #{_generator_forward_padded.1} parent=43 // pred_check_branch
          %296 = sbr.rel (%p294) target = $region48
        $region47: #{_generator_forward_padded.1} parent=43 // pred_region
          %297 = dma.done %s290, 1024
        $region48: #{_generator_forward_padded.1} parent=43 // pred_fallthru
          _
        // Predicated region
        $region49: #{_generator_forward_padded.1} parent=43 // pred_check
          %p298 = pneg %p68
        $region50: #{_generator_forward_padded.1} parent=43 // pred_check_branch
          %300 = sbr.rel (%p298) target = $region52
        $region51: #{_generator_forward_padded.1} parent=43 // pred_region
          %301 = dma.done [#allocation6], 4096
        $region52: #{_generator_forward_padded.1} parent=43 // pred_fallthru
          _
        // Predicated region
        $region53: #{_generator_forward_padded.1} parent=43 // pred_check
          %p302 = pneg %p89
        $region54: #{_generator_forward_padded.1} parent=43 // pred_check_branch
          %304 = sbr.rel (%p302) target = $region56
        $region55: #{_generator_forward_padded.1} parent=43 // pred_region
          %305 = dma.done [#allocation6], 8192
        $region56: #{_generator_forward_padded.1} parent=43 // pred_fallthru
          _
        // Predicated region
        $region57: #{_generator_forward_padded.1} parent=43 // pred_check
          %p306 = pneg %p110
        $region58: #{_generator_forward_padded.1} parent=43 // pred_check_branch
          %308 = sbr.rel (%p306) target = $region60
        $region59: #{_generator_forward_padded.1} parent=43 // pred_region
          %309 = dma.done [#allocation9], 32768
        $region60: #{_generator_forward_padded.1} parent=43 // pred_fallthru
          _
        // Predicated region
        $region61: #{_generator_forward_padded.1} parent=43 // pred_check
          %p310 = pneg %p131
        $region62: #{_generator_forward_padded.1} parent=43 // pred_check_branch
          %312 = sbr.rel (%p310) target = $region64
        $region63: #{_generator_forward_padded.1} parent=43 // pred_region
          %313 = dma.done [#allocation9], 57344
        $region64: #{_generator_forward_padded.1} parent=43 // pred_fallthru
          _
        // Predicated region
        $region65: #{_generator_forward_padded.1} parent=43 // pred_check
          %p314 = pneg %p152
        $region66: #{_generator_forward_padded.1} parent=43 // pred_check_branch
          %316 = sbr.rel (%p314) target = $region68
        $region67: #{_generator_forward_padded.1} parent=43 // pred_region
          %317 = dma.done [#allocation12], 720
        $region68: #{_generator_forward_padded.1} parent=43 // pred_fallthru
          _
        %s318 = sand.u32 %s34, 1
        %s319 = scalar_lea.sflag [#allocation3], %s318
        %s320 = sand.u32 %s34, 1
        %s321 = smul.addr %s320, 64
        %s322 = scalar_lea.vmem [#allocation2], %s321
        %p323 = pneg %p47
        %p324 = pneg %p44
        %p325 = pneg %p68
        %p326 = pneg %p65
        %p327 = pneg %p89
        %p328 = pneg %p86
        %p329 = pneg %p110
        %p330 = pneg %p107
        %p331 = pneg %p131
        %p332 = pneg %p128
        %p333 = pneg %p152
        %p334 = pneg %p149
        %p335 = pneg %p178
        %p336 = pneg %p175
        %s337 = sand.u32 %s165, 1
        %s338 = scalar_lea.sflag [#allocation4], %s337
        %s339 = sand.u32 %s165, 1
        %s340 = smul.addr %s339, 224
        %s341 = scalar_lea.vmem [#allocation13], %s340
        %s342 = smul.u32 4, %s26
        %s343 = smul.u32 4, %s26
        %v345 = vld [vmem:[#allocation11] sm:$0x3]
        %v346 = vld [vmem:[#allocation11 + $0x2] sm:$0xf]
        %v347 = vld [vmem:[#allocation11 + $0x6] sm:$0xf]
        %v348 = vld [vmem:[#allocation11 + $0xa] sm:$0xf]
        %v349 = vld [vmem:[#allocation11 + $0xe] sm:$0xff]
        %v350 = vld [vmem:[#allocation11 + $0x16] sm:$0xff]
        %v351 = vld [vmem:[#allocation11 + $0x1e] sm:$0xff]
        %v352 = vld [vmem:[#allocation11 + $0x26] sm:$0xff]
        %v353 = vld [vmem:[%s293] sm:$0xff]
        %v354 = vld [vmem:[%s293 + $0x8] sm:$0xff]
        %v355 = vld [vmem:[%s293 + $0x10] sm:$0xff]
        %v356 = vld [vmem:[%s293 + $0x18] sm:$0xff]
        %v357 = vld [vmem:[%s293 + $0x20] sm:$0xff]
        %v358 = vld [vmem:[%s293 + $0x28] sm:$0xff]
        %v359 = vld [vmem:[%s293 + $0x30] sm:$0xff]
        %v360 = vld [vmem:[%s293 + $0x38] sm:$0xff]
        %v361 = vpack.c.bf16 %v355, %v353
        %v362 = vpack.c.bf16 %v356, %v354
        %v363 = vpack.c.bf16 %v359, %v357
        %v364 = vpack.c.bf16 %v360, %v358
        %v365 = vld [vmem:[#allocation5] sm:$0xff]
        %v366 = vld [vmem:[#allocation5 + $0x8] sm:$0xff]
        %v367 = vld [vmem:[#allocation5 + $0x10] sm:$0xff]
        %v368 = vld [vmem:[#allocation5 + $0x18] sm:$0xff]
        %v369 = vld [vmem:[#allocation5 + $0x20] sm:$0xff]
        %v370 = vld [vmem:[#allocation5 + $0x28] sm:$0xff]
        %v371 = vld [vmem:[#allocation5 + $0x30] sm:$0xff]
        %v372 = vld [vmem:[#allocation5 + $0x38] sm:$0xff]
        %v373 = vld [vmem:[#allocation5 + $0x40] sm:$0xff]
        %v374 = vld [vmem:[#allocation5 + $0x48] sm:$0xff]
        %v375 = vld [vmem:[#allocation5 + $0x50] sm:$0xff]
        %v376 = vld [vmem:[#allocation5 + $0x58] sm:$0xff]
        %v377 = vld [vmem:[#allocation5 + $0x60] sm:$0xff]
        %v378 = vld [vmem:[#allocation5 + $0x68] sm:$0xff]
        %v379 = vld [vmem:[#allocation5 + $0x70] sm:$0xff]
        %v380 = vld [vmem:[#allocation5 + $0x78] sm:$0xff]
        %v381 = vld [vmem:[#allocation5 + $0x80] sm:$0xff]
        %v382 = vld [vmem:[#allocation5 + $0x88] sm:$0xff]
        %v383 = vld [vmem:[#allocation5 + $0x90] sm:$0xff]
        %v384 = vld [vmem:[#allocation5 + $0x98] sm:$0xff]
        %v385 = vld [vmem:[#allocation5 + $0xa0] sm:$0xff]
        %v386 = vld [vmem:[#allocation5 + $0xa8] sm:$0xff]
        %v387 = vld [vmem:[#allocation5 + $0xb0] sm:$0xff]
        %v388 = vld [vmem:[#allocation5 + $0xb8] sm:$0xff]
        %v389 = vld [vmem:[#allocation5 + $0xc0] sm:$0xff]
        %v390 = vld [vmem:[#allocation5 + $0xc8] sm:$0xff]
        %v391 = vld [vmem:[#allocation5 + $0xd0] sm:$0xff]
        %v392 = vld [vmem:[#allocation5 + $0xd8] sm:$0xff]
        %v393 = vld [vmem:[#allocation5 + $0xe0] sm:$0xff]
        %v394 = vld [vmem:[#allocation5 + $0xe8] sm:$0xff]
        %v395 = vld [vmem:[#allocation5 + $0xf0] sm:$0xff]
        %v396 = vld [vmem:[#allocation5 + $0xf8] sm:$0xff]
        %v398 = vlaneseq
        %v399 = vshrl.u32 %v398, 7
        %v400 = vsub.s32 0, %v399
        %v401 = vrot.slane %v345, %v400
        %v402 = vlaneseq
        %v403 = vshrl.u32 %v402, 7
        %v404 = vsub.s32 1, %v403
        %v405 = vrot.slane %v345, %v404
        %v440 = vunpack.c.l.b16 %v365
        %v441 = vunpack.c.h.b16 %v365
        %v442 = vunpack.c.l.b16 %v366
        %v443 = vunpack.c.h.b16 %v366
        %v444 = vunpack.c.l.b16 %v367
        %v445 = vunpack.c.h.b16 %v367
        %v446 = vunpack.c.l.b16 %v368
        %v447 = vunpack.c.h.b16 %v368
        %v448 = vunpack.c.l.b16 %v369
        %v449 = vunpack.c.h.b16 %v369
        %v450 = vunpack.c.l.b16 %v370
        %v451 = vunpack.c.h.b16 %v370
        %v452 = vunpack.c.l.b16 %v371
        %v453 = vunpack.c.h.b16 %v371
        %v454 = vunpack.c.l.b16 %v372
        %v455 = vunpack.c.h.b16 %v372
        %v456 = vunpack.c.l.b16 %v373
        %v457 = vunpack.c.h.b16 %v373
        %v458 = vunpack.c.l.b16 %v374
        %v459 = vunpack.c.h.b16 %v374
        %v460 = vunpack.c.l.b16 %v375
        %v461 = vunpack.c.h.b16 %v375
        %v462 = vunpack.c.l.b16 %v376
        %v463 = vunpack.c.h.b16 %v376
        %v464 = vunpack.c.l.b16 %v377
        %v465 = vunpack.c.h.b16 %v377
        %v466 = vunpack.c.l.b16 %v378
        %v467 = vunpack.c.h.b16 %v378
        %v468 = vunpack.c.l.b16 %v379
        %v469 = vunpack.c.h.b16 %v379
        %v470 = vunpack.c.l.b16 %v380
        %v471 = vunpack.c.h.b16 %v380
        %v472 = vunpack.c.l.b16 %v381
        %v473 = vunpack.c.h.b16 %v381
        %v474 = vunpack.c.l.b16 %v382
        %v475 = vunpack.c.h.b16 %v382
        %v476 = vunpack.c.l.b16 %v383
        %v477 = vunpack.c.h.b16 %v383
        %v478 = vunpack.c.l.b16 %v384
        %v479 = vunpack.c.h.b16 %v384
        %v480 = vunpack.c.l.b16 %v385
        %v481 = vunpack.c.h.b16 %v385
        %v482 = vunpack.c.l.b16 %v386
        %v483 = vunpack.c.h.b16 %v386
        %v484 = vunpack.c.l.b16 %v387
        %v485 = vunpack.c.h.b16 %v387
        %v486 = vunpack.c.l.b16 %v388
        %v487 = vunpack.c.h.b16 %v388
        %v488 = vunpack.c.l.b16 %v389
        %v489 = vunpack.c.h.b16 %v389
        %v490 = vunpack.c.l.b16 %v390
        %v491 = vunpack.c.h.b16 %v390
        %v492 = vunpack.c.l.b16 %v391
        %v493 = vunpack.c.h.b16 %v391
        %v494 = vunpack.c.l.b16 %v392
        %v495 = vunpack.c.h.b16 %v392
        %v496 = vunpack.c.l.b16 %v393
        %v497 = vunpack.c.h.b16 %v393
        %v498 = vunpack.c.l.b16 %v394
        %v499 = vunpack.c.h.b16 %v394
        %v500 = vunpack.c.l.b16 %v395
        %v501 = vunpack.c.h.b16 %v395
        %v502 = vunpack.c.l.b16 %v396
        %v503 = vunpack.c.h.b16 %v396
        %v504 = vpack.c.b16 %v442, %v440
        %v505 = vpack.c.b16 %v443, %v441
        %v506 = vpack.c.b16 %v446, %v444
        %v507 = vpack.c.b16 %v447, %v445
        %v508 = vpack.c.b16 %v450, %v448
        %v509 = vpack.c.b16 %v451, %v449
        %v510 = vpack.c.b16 %v454, %v452
        %v511 = vpack.c.b16 %v455, %v453
        %v512 = vpack.c.b16 %v458, %v456
        %v513 = vpack.c.b16 %v459, %v457
        %v514 = vpack.c.b16 %v462, %v460
        %v515 = vpack.c.b16 %v463, %v461
        %v516 = vpack.c.b16 %v466, %v464
        %v517 = vpack.c.b16 %v467, %v465
        %v518 = vpack.c.b16 %v470, %v468
        %v519 = vpack.c.b16 %v471, %v469
        %v520 = vpack.c.b16 %v474, %v472
        %v521 = vpack.c.b16 %v475, %v473
        %v522 = vpack.c.b16 %v478, %v476
        %v523 = vpack.c.b16 %v479, %v477
        %v524 = vpack.c.b16 %v482, %v480
        %v525 = vpack.c.b16 %v483, %v481
        %v526 = vpack.c.b16 %v486, %v484
        %v527 = vpack.c.b16 %v487, %v485
        %v528 = vpack.c.b16 %v490, %v488
        %v529 = vpack.c.b16 %v491, %v489
        %v530 = vpack.c.b16 %v494, %v492
        %v531 = vpack.c.b16 %v495, %v493
        %v532 = vpack.c.b16 %v498, %v496
        %v533 = vpack.c.b16 %v499, %v497
        %v534 = vpack.c.b16 %v502, %v500
        %v535 = vpack.c.b16 %v503, %v501
        %568 = vmatprep.subr.bf16.mxu0 %v505
        %569 = vmatpush1.bf16.msra.mxu0 %v504
        %570 = vmatprep.subr.bf16.mxu0 %v507
        %571 = vmatpush1.bf16.msra.mxu0 %v506
        %572 = vmatprep.subr.bf16.mxu0 %v509
        %573 = vmatpush1.bf16.msra.mxu0 %v508
        %574 = vmatprep.subr.bf16.mxu0 %v511
        %575 = vmatpush1.bf16.msra.mxu0 %v510
        %576 = vmatprep.subr.bf16.mxu0 %v513
        %577 = vmatpush1.bf16.msra.mxu0 %v512
        %578 = vmatprep.subr.bf16.mxu0 %v515
        %579 = vmatpush1.bf16.msra.mxu0 %v514
        %580 = vmatprep.subr.bf16.mxu0 %v517
        %581 = vmatpush1.bf16.msra.mxu0 %v516
        %582 = vmatprep.subr.bf16.mxu0 %v519
        %583 = vmatpush1.bf16.msra.mxu0 %v518
        %584 = vmatprep.subr.bf16.mxu0 %v521
        %585 = vmatpush1.bf16.msra.mxu0 %v520
        %586 = vmatprep.subr.bf16.mxu0 %v523
        %587 = vmatpush1.bf16.msra.mxu0 %v522
        %588 = vmatprep.subr.bf16.mxu0 %v525
        %589 = vmatpush1.bf16.msra.mxu0 %v524
        %590 = vmatprep.subr.bf16.mxu0 %v527
        %591 = vmatpush1.bf16.msra.mxu0 %v526
        %592 = vmatprep.subr.bf16.mxu0 %v529
        %593 = vmatpush1.bf16.msra.mxu0 %v528
        %594 = vmatprep.subr.bf16.mxu0 %v531
        %595 = vmatpush1.bf16.msra.mxu0 %v530
        %596 = vmatprep.subr.bf16.mxu0 %v533
        %597 = vmatpush1.bf16.msra.mxu0 %v532
        %598 = vmatprep.subr.bf16.mxu0 %v535
        %599 = vmatpush1.bf16.msra.mxu0 %v534
        %600 = vmatprep.mubr.bf16.mxu0 %v362
        %601 = vmatmul.mubr.bf16.gmra.mrb[0].mxu0 %v361
        %v602 = vpop.f32.mrb[0].mxu0
        %v603 = vadd.f32 %v401, %v602
        %v604 = vpop.f32.mrb[0].mxu0
        %v605 = vadd.f32 %v405, %v604
        %v606 = vpop.f32.mrb[0].mxu0
        %v607 = vadd.f32 %v401, %v606
        %v608 = vpop.f32.mrb[0].mxu0
        %v609 = vadd.f32 %v405, %v608
        %610 = vmatprep.mubr.bf16.mxu0 %v364
        %611 = vmatmul.mubr.bf16.gmra.mrb[0].mxu0 %v363
        %v612 = vpop.f32.mrb[0].mxu0
        %v613 = vadd.f32 %v401, %v612
        %v614 = vpop.f32.mrb[0].mxu0
        %v615 = vadd.f32 %v405, %v614
        %v616 = vpop.f32.mrb[0].mxu0
        %v617 = vadd.f32 %v401, %v616
        %v618 = vpop.f32.mrb[0].mxu0
        %v619 = vadd.f32 %v405, %v618
        %620 = vdwg.mxu0
        %v621 = vmax.f32 %v603, 0.0
        %v622 = vmax.f32 %v605, 0.0
        %v623 = vmax.f32 %v607, 0.0
        %v624 = vmax.f32 %v609, 0.0
        %v625 = vmax.f32 %v613, 0.0
        %v626 = vmax.f32 %v615, 0.0
        %v627 = vmax.f32 %v617, 0.0
        %v628 = vmax.f32 %v619, 0.0
        %v629 = vpack.c.bf16 %v623, %v621
        %v630 = vpack.c.bf16 %v624, %v622
        %v631 = vpack.c.bf16 %v627, %v625
        %v632 = vpack.c.bf16 %v628, %v626
        %v633 = vld [vmem:[#allocation7] sm:$0xff]
        %v634 = vld [vmem:[#allocation7 + $0x8] sm:$0xff]
        %v635 = vld [vmem:[#allocation7 + $0x10] sm:$0xff]
        %v636 = vld [vmem:[#allocation7 + $0x18] sm:$0xff]
        %v637 = vld [vmem:[#allocation7 + $0x20] sm:$0xff]
        %v638 = vld [vmem:[#allocation7 + $0x28] sm:$0xff]
        %v639 = vld [vmem:[#allocation7 + $0x30] sm:$0xff]
        %v640 = vld [vmem:[#allocation7 + $0x38] sm:$0xff]
        %v641 = vld [vmem:[#allocation7 + $0x40] sm:$0xff]
        %v642 = vld [vmem:[#allocation7 + $0x48] sm:$0xff]
        %v643 = vld [vmem:[#allocation7 + $0x50] sm:$0xff]
        %v644 = vld [vmem:[#allocation7 + $0x58] sm:$0xff]
        %v645 = vld [vmem:[#allocation7 + $0x60] sm:$0xff]
        %v646 = vld [vmem:[#allocation7 + $0x68] sm:$0xff]
        %v647 = vld [vmem:[#allocation7 + $0x70] sm:$0xff]
        %v648 = vld [vmem:[#allocation7 + $0x78] sm:$0xff]
        %v649 = vld [vmem:[#allocation7 + $0x80] sm:$0xff]
        %v650 = vld [vmem:[#allocation7 + $0x88] sm:$0xff]
        %v651 = vld [vmem:[#allocation7 + $0x90] sm:$0xff]
        %v652 = vld [vmem:[#allocation7 + $0x98] sm:$0xff]
        %v653 = vld [vmem:[#allocation7 + $0xa0] sm:$0xff]
        %v654 = vld [vmem:[#allocation7 + $0xa8] sm:$0xff]
        %v655 = vld [vmem:[#allocation7 + $0xb0] sm:$0xff]
        %v656 = vld [vmem:[#allocation7 + $0xb8] sm:$0xff]
        %v657 = vld [vmem:[#allocation7 + $0xc0] sm:$0xff]
        %v658 = vld [vmem:[#allocation7 + $0xc8] sm:$0xff]
        %v659 = vld [vmem:[#allocation7 + $0xd0] sm:$0xff]
        %v660 = vld [vmem:[#allocation7 + $0xd8] sm:$0xff]
        %v661 = vld [vmem:[#allocation7 + $0xe0] sm:$0xff]
        %v662 = vld [vmem:[#allocation7 + $0xe8] sm:$0xff]
        %v663 = vld [vmem:[#allocation7 + $0xf0] sm:$0xff]
        %v664 = vld [vmem:[#allocation7 + $0xf8] sm:$0xff]
        %v665 = vld [vmem:[#allocation7 + $0x100] sm:$0xff]
        %v666 = vld [vmem:[#allocation7 + $0x108] sm:$0xff]
        %v667 = vld [vmem:[#allocation7 + $0x110] sm:$0xff]
        %v668 = vld [vmem:[#allocation7 + $0x118] sm:$0xff]
        %v669 = vld [vmem:[#allocation7 + $0x120] sm:$0xff]
        %v670 = vld [vmem:[#allocation7 + $0x128] sm:$0xff]
        %v671 = vld [vmem:[#allocation7 + $0x130] sm:$0xff]
        %v672 = vld [vmem:[#allocation7 + $0x138] sm:$0xff]
        %v673 = vld [vmem:[#allocation7 + $0x140] sm:$0xff]
        %v674 = vld [vmem:[#allocation7 + $0x148] sm:$0xff]
        %v675 = vld [vmem:[#allocation7 + $0x150] sm:$0xff]
        %v676 = vld [vmem:[#allocation7 + $0x158] sm:$0xff]
        %v677 = vld [vmem:[#allocation7 + $0x160] sm:$0xff]
        %v678 = vld [vmem:[#allocation7 + $0x168] sm:$0xff]
        %v679 = vld [vmem:[#allocation7 + $0x170] sm:$0xff]
        %v680 = vld [vmem:[#allocation7 + $0x178] sm:$0xff]
        %v681 = vld [vmem:[#allocation7 + $0x180] sm:$0xff]
        %v682 = vld [vmem:[#allocation7 + $0x188] sm:$0xff]
        %v683 = vld [vmem:[#allocation7 + $0x190] sm:$0xff]
        %v684 = vld [vmem:[#allocation7 + $0x198] sm:$0xff]
        %v685 = vld [vmem:[#allocation7 + $0x1a0] sm:$0xff]
        %v686 = vld [vmem:[#allocation7 + $0x1a8] sm:$0xff]
        %v687 = vld [vmem:[#allocation7 + $0x1b0] sm:$0xff]
        %v688 = vld [vmem:[#allocation7 + $0x1b8] sm:$0xff]
        %v689 = vld [vmem:[#allocation7 + $0x1c0] sm:$0xff]
        %v690 = vld [vmem:[#allocation7 + $0x1c8] sm:$0xff]
        %v691 = vld [vmem:[#allocation7 + $0x1d0] sm:$0xff]
        %v692 = vld [vmem:[#allocation7 + $0x1d8] sm:$0xff]
        %v693 = vld [vmem:[#allocation7 + $0x1e0] sm:$0xff]
        %v694 = vld [vmem:[#allocation7 + $0x1e8] sm:$0xff]
        %v695 = vld [vmem:[#allocation7 + $0x1f0] sm:$0xff]
        %v696 = vld [vmem:[#allocation7 + $0x1f8] sm:$0xff]
        %v698 = vlaneseq
        %v699 = vshrl.u32 %v698, 7
        %v700 = vsub.s32 0, %v699
        %v701 = vrot.slane %v346, %v700
        %v702 = vlaneseq
        %v703 = vshrl.u32 %v702, 7
        %v704 = vsub.s32 1, %v703
        %v705 = vrot.slane %v346, %v704
        %v706 = vlaneseq
        %v707 = vshrl.u32 %v706, 7
        %v708 = vsub.s32 2, %v707
        %v709 = vrot.slane %v346, %v708
        %v710 = vlaneseq
        %v711 = vshrl.u32 %v710, 7
        %v712 = vsub.s32 3, %v711
        %v713 = vrot.slane %v346, %v712
        %v782 = vunpack.c.l.b16 %v633
        %v783 = vunpack.c.h.b16 %v633
        %v784 = vunpack.c.l.b16 %v634
        %v785 = vunpack.c.h.b16 %v634
        %v786 = vunpack.c.l.b16 %v635
        %v787 = vunpack.c.h.b16 %v635
        %v788 = vunpack.c.l.b16 %v636
        %v789 = vunpack.c.h.b16 %v636
        %v790 = vunpack.c.l.b16 %v637
        %v791 = vunpack.c.h.b16 %v637
        %v792 = vunpack.c.l.b16 %v638
        %v793 = vunpack.c.h.b16 %v638
        %v794 = vunpack.c.l.b16 %v639
        %v795 = vunpack.c.h.b16 %v639
        %v796 = vunpack.c.l.b16 %v640
        %v797 = vunpack.c.h.b16 %v640
        %v798 = vunpack.c.l.b16 %v641
        %v799 = vunpack.c.h.b16 %v641
        %v800 = vunpack.c.l.b16 %v642
        %v801 = vunpack.c.h.b16 %v642
        %v802 = vunpack.c.l.b16 %v643
        %v803 = vunpack.c.h.b16 %v643
        %v804 = vunpack.c.l.b16 %v644
        %v805 = vunpack.c.h.b16 %v644
        %v806 = vunpack.c.l.b16 %v645
        %v807 = vunpack.c.h.b16 %v645
        %v808 = vunpack.c.l.b16 %v646
        %v809 = vunpack.c.h.b16 %v646
        %v810 = vunpack.c.l.b16 %v647
        %v811 = vunpack.c.h.b16 %v647
        %v812 = vunpack.c.l.b16 %v648
        %v813 = vunpack.c.h.b16 %v648
        %v814 = vunpack.c.l.b16 %v649
        %v815 = vunpack.c.h.b16 %v649
        %v816 = vunpack.c.l.b16 %v650
        %v817 = vunpack.c.h.b16 %v650
        %v818 = vunpack.c.l.b16 %v651
        %v819 = vunpack.c.h.b16 %v651
        %v820 = vunpack.c.l.b16 %v652
        %v821 = vunpack.c.h.b16 %v652
        %v822 = vunpack.c.l.b16 %v653
        %v823 = vunpack.c.h.b16 %v653
        %v824 = vunpack.c.l.b16 %v654
        %v825 = vunpack.c.h.b16 %v654
        %v826 = vunpack.c.l.b16 %v655
        %v827 = vunpack.c.h.b16 %v655
        %v828 = vunpack.c.l.b16 %v656
        %v829 = vunpack.c.h.b16 %v656
        %v830 = vunpack.c.l.b16 %v657
        %v831 = vunpack.c.h.b16 %v657
        %v832 = vunpack.c.l.b16 %v658
        %v833 = vunpack.c.h.b16 %v658
        %v834 = vunpack.c.l.b16 %v659
        %v835 = vunpack.c.h.b16 %v659
        %v836 = vunpack.c.l.b16 %v660
        %v837 = vunpack.c.h.b16 %v660
        %v838 = vunpack.c.l.b16 %v661
        %v839 = vunpack.c.h.b16 %v661
        %v840 = vunpack.c.l.b16 %v662
        %v841 = vunpack.c.h.b16 %v662
        %v842 = vunpack.c.l.b16 %v663
        %v843 = vunpack.c.h.b16 %v663
        %v844 = vunpack.c.l.b16 %v664
        %v845 = vunpack.c.h.b16 %v664
        %v846 = vunpack.c.l.b16 %v665
        %v847 = vunpack.c.h.b16 %v665
        %v848 = vunpack.c.l.b16 %v666
        %v849 = vunpack.c.h.b16 %v666
        %v850 = vunpack.c.l.b16 %v667
        %v851 = vunpack.c.h.b16 %v667
        %v852 = vunpack.c.l.b16 %v668
        %v853 = vunpack.c.h.b16 %v668
        %v854 = vunpack.c.l.b16 %v669
        %v855 = vunpack.c.h.b16 %v669
        %v856 = vunpack.c.l.b16 %v670
        %v857 = vunpack.c.h.b16 %v670
        %v858 = vunpack.c.l.b16 %v671
        %v859 = vunpack.c.h.b16 %v671
        %v860 = vunpack.c.l.b16 %v672
        %v861 = vunpack.c.h.b16 %v672
        %v862 = vunpack.c.l.b16 %v673
        %v863 = vunpack.c.h.b16 %v673
        %v864 = vunpack.c.l.b16 %v674
        %v865 = vunpack.c.h.b16 %v674
        %v866 = vunpack.c.l.b16 %v675
        %v867 = vunpack.c.h.b16 %v675
        %v868 = vunpack.c.l.b16 %v676
        %v869 = vunpack.c.h.b16 %v676
        %v870 = vunpack.c.l.b16 %v677
        %v871 = vunpack.c.h.b16 %v677
        %v872 = vunpack.c.l.b16 %v678
        %v873 = vunpack.c.h.b16 %v678
        %v874 = vunpack.c.l.b16 %v679
        %v875 = vunpack.c.h.b16 %v679
        %v876 = vunpack.c.l.b16 %v680
        %v877 = vunpack.c.h.b16 %v680
        %v878 = vunpack.c.l.b16 %v681
        %v879 = vunpack.c.h.b16 %v681
        %v880 = vunpack.c.l.b16 %v682
        %v881 = vunpack.c.h.b16 %v682
        %v882 = vunpack.c.l.b16 %v683
        %v883 = vunpack.c.h.b16 %v683
        %v884 = vunpack.c.l.b16 %v684
        %v885 = vunpack.c.h.b16 %v684
        %v886 = vunpack.c.l.b16 %v685
        %v887 = vunpack.c.h.b16 %v685
        %v888 = vunpack.c.l.b16 %v686
        %v889 = vunpack.c.h.b16 %v686
        %v890 = vunpack.c.l.b16 %v687
        %v891 = vunpack.c.h.b16 %v687
        %v892 = vunpack.c.l.b16 %v688
        %v893 = vunpack.c.h.b16 %v688
        %v894 = vunpack.c.l.b16 %v689
        %v895 = vunpack.c.h.b16 %v689
        %v896 = vunpack.c.l.b16 %v690
        %v897 = vunpack.c.h.b16 %v690
        %v898 = vunpack.c.l.b16 %v691
        %v899 = vunpack.c.h.b16 %v691
        %v900 = vunpack.c.l.b16 %v692
        %v901 = vunpack.c.h.b16 %v692
        %v902 = vunpack.c.l.b16 %v693
        %v903 = vunpack.c.h.b16 %v693
        %v904 = vunpack.c.l.b16 %v694
        %v905 = vunpack.c.h.b16 %v694
        %v906 = vunpack.c.l.b16 %v695
        %v907 = vunpack.c.h.b16 %v695
        %v908 = vunpack.c.l.b16 %v696
        %v909 = vunpack.c.h.b16 %v696
        %v910 = vpack.c.b16 %v786, %v782
        %v911 = vpack.c.b16 %v787, %v783
        %v912 = vpack.c.b16 %v788, %v784
        %v913 = vpack.c.b16 %v789, %v785
        %v914 = vpack.c.b16 %v794, %v790
        %v915 = vpack.c.b16 %v795, %v791
        %v916 = vpack.c.b16 %v796, %v792
        %v917 = vpack.c.b16 %v797, %v793
        %v918 = vpack.c.b16 %v802, %v798
        %v919 = vpack.c.b16 %v803, %v799
        %v920 = vpack.c.b16 %v804, %v800
        %v921 = vpack.c.b16 %v805, %v801
        %v922 = vpack.c.b16 %v810, %v806
        %v923 = vpack.c.b16 %v811, %v807
        %v924 = vpack.c.b16 %v812, %v808
        %v925 = vpack.c.b16 %v813, %v809
        %v926 = vpack.c.b16 %v818, %v814
        %v927 = vpack.c.b16 %v819, %v815
        %v928 = vpack.c.b16 %v820, %v816
        %v929 = vpack.c.b16 %v821, %v817
        %v930 = vpack.c.b16 %v826, %v822
        %v931 = vpack.c.b16 %v827, %v823
        %v932 = vpack.c.b16 %v828, %v824
        %v933 = vpack.c.b16 %v829, %v825
        %v934 = vpack.c.b16 %v834, %v830
        %v935 = vpack.c.b16 %v835, %v831
        %v936 = vpack.c.b16 %v836, %v832
        %v937 = vpack.c.b16 %v837, %v833
        %v938 = vpack.c.b16 %v842, %v838
        %v939 = vpack.c.b16 %v843, %v839
        %v940 = vpack.c.b16 %v844, %v840
        %v941 = vpack.c.b16 %v845, %v841
        %v942 = vpack.c.b16 %v850, %v846
        %v943 = vpack.c.b16 %v851, %v847
        %v944 = vpack.c.b16 %v852, %v848
        %v945 = vpack.c.b16 %v853, %v849
        %v946 = vpack.c.b16 %v858, %v854
        %v947 = vpack.c.b16 %v859, %v855
        %v948 = vpack.c.b16 %v860, %v856
        %v949 = vpack.c.b16 %v861, %v857
        %v950 = vpack.c.b16 %v866, %v862
        %v951 = vpack.c.b16 %v867, %v863
        %v952 = vpack.c.b16 %v868, %v864
        %v953 = vpack.c.b16 %v869, %v865
        %v954 = vpack.c.b16 %v874, %v870
        %v955 = vpack.c.b16 %v875, %v871
        %v956 = vpack.c.b16 %v876, %v872
        %v957 = vpack.c.b16 %v877, %v873
        %v958 = vpack.c.b16 %v882, %v878
        %v959 = vpack.c.b16 %v883, %v879
        %v960 = vpack.c.b16 %v884, %v880
        %v961 = vpack.c.b16 %v885, %v881
        %v962 = vpack.c.b16 %v890, %v886
        %v963 = vpack.c.b16 %v891, %v887
        %v964 = vpack.c.b16 %v892, %v888
        %v965 = vpack.c.b16 %v893, %v889
        %v966 = vpack.c.b16 %v898, %v894
        %v967 = vpack.c.b16 %v899, %v895
        %v968 = vpack.c.b16 %v900, %v896
        %v969 = vpack.c.b16 %v901, %v897
        %v970 = vpack.c.b16 %v906, %v902
        %v971 = vpack.c.b16 %v907, %v903
        %v972 = vpack.c.b16 %v908, %v904
        %v973 = vpack.c.b16 %v909, %v905
        %1038 = vmatprep.subr.bf16.mxu0 %v911
        %1039 = vmatpush1.bf16.msra.mxu0 %v910
        %1040 = vmatprep.subr.bf16.mxu0 %v915
        %1041 = vmatpush1.bf16.msra.mxu0 %v914
        %1042 = vmatprep.subr.bf16.mxu0 %v919
        %1043 = vmatpush1.bf16.msra.mxu0 %v918
        %1044 = vmatprep.subr.bf16.mxu0 %v923
        %1045 = vmatpush1.bf16.msra.mxu0 %v922
        %1046 = vmatprep.subr.bf16.mxu0 %v927
        %1047 = vmatpush1.bf16.msra.mxu0 %v926
        %1048 = vmatprep.subr.bf16.mxu0 %v931
        %1049 = vmatpush1.bf16.msra.mxu0 %v930
        %1050 = vmatprep.subr.bf16.mxu0 %v935
        %1051 = vmatpush1.bf16.msra.mxu0 %v934
        %1052 = vmatprep.subr.bf16.mxu0 %v939
        %1053 = vmatpush1.bf16.msra.mxu0 %v938
        %1054 = vmatprep.subr.bf16.mxu0 %v943
        %1055 = vmatpush1.bf16.msra.mxu0 %v942
        %1056 = vmatprep.subr.bf16.mxu0 %v947
        %1057 = vmatpush1.bf16.msra.mxu0 %v946
        %1058 = vmatprep.subr.bf16.mxu0 %v951
        %1059 = vmatpush1.bf16.msra.mxu0 %v950
        %1060 = vmatprep.subr.bf16.mxu0 %v955
        %1061 = vmatpush1.bf16.msra.mxu0 %v954
        %1062 = vmatprep.subr.bf16.mxu0 %v959
        %1063 = vmatpush1.bf16.msra.mxu0 %v958
        %1064 = vmatprep.subr.bf16.mxu0 %v963
        %1065 = vmatpush1.bf16.msra.mxu0 %v962
        %1066 = vmatprep.subr.bf16.mxu0 %v967
        %1067 = vmatpush1.bf16.msra.mxu0 %v966
        %1068 = vmatprep.subr.bf16.mxu0 %v971
        %1069 = vmatpush1.bf16.msra.mxu0 %v970
        %1070 = vmatprep.mubr.bf16.mxu0 %v630
        %1071 = vmatmul.mubr.bf16.gmra.mrb[0].mxu0 %v629
        %v1072 = vpop.f32.mrb[0].mxu0
        %v1073 = vadd.f32 %v701, %v1072
        %v1074 = vpop.f32.mrb[0].mxu0
        %v1075 = vadd.f32 %v705, %v1074
        %v1076 = vpop.f32.mrb[0].mxu0
        %v1077 = vadd.f32 %v701, %v1076
        %v1078 = vpop.f32.mrb[0].mxu0
        %v1079 = vadd.f32 %v705, %v1078
        %1080 = vmatprep.mubr.bf16.mxu0 %v632
        %1081 = vmatmul.mubr.bf16.gmra.mrb[0].mxu0 %v631
        %v1082 = vpop.f32.mrb[0].mxu0
        %v1083 = vadd.f32 %v701, %v1082
        %v1084 = vpop.f32.mrb[0].mxu0
        %v1085 = vadd.f32 %v705, %v1084
        %v1086 = vpop.f32.mrb[0].mxu0
        %v1087 = vadd.f32 %v701, %v1086
        %v1088 = vpop.f32.mrb[0].mxu0
        %v1089 = vadd.f32 %v705, %v1088
        %1090 = vdwg.mxu0
        %1091 = vmatprep.subr.bf16.mxu0 %v913
        %1092 = vmatpush1.bf16.msra.mxu0 %v912
        %1093 = vmatprep.subr.bf16.mxu0 %v917
        %1094 = vmatpush1.bf16.msra.mxu0 %v916
        %1095 = vmatprep.subr.bf16.mxu0 %v921
        %1096 = vmatpush1.bf16.msra.mxu0 %v920
        %1097 = vmatprep.subr.bf16.mxu0 %v925
        %1098 = vmatpush1.bf16.msra.mxu0 %v924
        %1099 = vmatprep.subr.bf16.mxu0 %v929
        %1100 = vmatpush1.bf16.msra.mxu0 %v928
        %1101 = vmatprep.subr.bf16.mxu0 %v933
        %1102 = vmatpush1.bf16.msra.mxu0 %v932
        %1103 = vmatprep.subr.bf16.mxu0 %v937
        %1104 = vmatpush1.bf16.msra.mxu0 %v936
        %1105 = vmatprep.subr.bf16.mxu0 %v941
        %1106 = vmatpush1.bf16.msra.mxu0 %v940
        %1107 = vmatprep.subr.bf16.mxu0 %v945
        %1108 = vmatpush1.bf16.msra.mxu0 %v944
        %1109 = vmatprep.subr.bf16.mxu0 %v949
        %1110 = vmatpush1.bf16.msra.mxu0 %v948
        %1111 = vmatprep.subr.bf16.mxu0 %v953
        %1112 = vmatpush1.bf16.msra.mxu0 %v952
        %1113 = vmatprep.subr.bf16.mxu0 %v957
        %1114 = vmatpush1.bf16.msra.mxu0 %v956
        %1115 = vmatprep.subr.bf16.mxu0 %v961
        %1116 = vmatpush1.bf16.msra.mxu0 %v960
        %1117 = vmatprep.subr.bf16.mxu0 %v965
        %1118 = vmatpush1.bf16.msra.mxu0 %v964
        %1119 = vmatprep.subr.bf16.mxu0 %v969
        %1120 = vmatpush1.bf16.msra.mxu0 %v968
        %1121 = vmatprep.subr.bf16.mxu0 %v973
        %1122 = vmatpush1.bf16.msra.mxu0 %v972
        %1123 = vmatprep.mubr.bf16.mxu0 %v630
        %1124 = vmatmul.mubr.bf16.gmra.mrb[0].mxu0 %v629
        %v1125 = vpop.f32.mrb[0].mxu0
        %v1126 = vadd.f32 %v709, %v1125
        %v1127 = vpop.f32.mrb[0].mxu0
        %v1128 = vadd.f32 %v713, %v1127
        %v1129 = vpop.f32.mrb[0].mxu0
        %v1130 = vadd.f32 %v709, %v1129
        %v1131 = vpop.f32.mrb[0].mxu0
        %v1132 = vadd.f32 %v713, %v1131
        %1133 = vmatprep.mubr.bf16.mxu0 %v632
        %1134 = vmatmul.mubr.bf16.gmra.mrb[0].mxu0 %v631
        %v1135 = vpop.f32.mrb[0].mxu0
        %v1136 = vadd.f32 %v709, %v1135
        %v1137 = vpop.f32.mrb[0].mxu0
        %v1138 = vadd.f32 %v713, %v1137
        %v1139 = vpop.f32.mrb[0].mxu0
        %v1140 = vadd.f32 %v709, %v1139
        %v1141 = vpop.f32.mrb[0].mxu0
        %v1142 = vadd.f32 %v713, %v1141
        %1143 = vdwg.mxu0
        %v1144 = vadd.f32 %v1073, %v1077
        %v1145 = vadd.f32 %v1144, %v1083
        %v1146 = vadd.f32 %v1145, %v1087
        %v1147 = vrot.slane %v1146, 4
        %v1148 = vadd.f32 %v1146, %v1147
        %v1149 = vrot.slane %v1148, 2
        %v1150 = vadd.f32 %v1148, %v1149
        %v1151 = vrot.slane %v1150, 1
        %v1152 = vadd.f32 %v1150, %v1151
        %v1153 = vadd.f32 %v1075, %v1079
        %v1154 = vadd.f32 %v1153, %v1085
        %v1155 = vadd.f32 %v1154, %v1089
        %v1156 = vrot.slane %v1155, 4
        %v1157 = vadd.f32 %v1155, %v1156
        %v1158 = vrot.slane %v1157, 2
        %v1159 = vadd.f32 %v1157, %v1158
        %v1160 = vrot.slane %v1159, 1
        %v1161 = vadd.f32 %v1159, %v1160
        %v1162 = vadd.f32 %v1126, %v1130
        %v1163 = vadd.f32 %v1162, %v1136
        %v1164 = vadd.f32 %v1163, %v1140
        %v1165 = vrot.slane %v1164, 4
        %v1166 = vadd.f32 %v1164, %v1165
        %v1167 = vrot.slane %v1166, 2
        %v1168 = vadd.f32 %v1166, %v1167
        %v1169 = vrot.slane %v1168, 1
        %v1170 = vadd.f32 %v1168, %v1169
        %v1171 = vadd.f32 %v1128, %v1132
        %v1172 = vadd.f32 %v1171, %v1138
        %v1173 = vadd.f32 %v1172, %v1142
        %v1174 = vrot.slane %v1173, 4
        %v1175 = vadd.f32 %v1173, %v1174
        %v1176 = vrot.slane %v1175, 2
        %v1177 = vadd.f32 %v1175, %v1176
        %v1178 = vrot.slane %v1177, 1
        %v1179 = vadd.f32 %v1177, %v1178
        %v1180 = vmul.f32 %v1152, 0.03125
        %v1181 = vmul.f32 %v1161, 0.03125
        %v1182 = vmul.f32 %v1170, 0.03125
        %v1183 = vmul.f32 %v1179, 0.03125
        %v1184 = vsub.f32 %v1073, %v1180
        %v1185 = vsub.f32 %v1075, %v1181
        %v1186 = vsub.f32 %v1126, %v1182
        %v1187 = vsub.f32 %v1128, %v1183
        %v1188 = vsub.f32 %v1077, %v1180
        %v1189 = vsub.f32 %v1079, %v1181
        %v1190 = vsub.f32 %v1130, %v1182
        %v1191 = vsub.f32 %v1132, %v1183
        %v1192 = vsub.f32 %v1083, %v1180
        %v1193 = vsub.f32 %v1085, %v1181
        %v1194 = vsub.f32 %v1136, %v1182
        %v1195 = vsub.f32 %v1138, %v1183
        %v1196 = vsub.f32 %v1087, %v1180
        %v1197 = vsub.f32 %v1089, %v1181
        %v1198 = vsub.f32 %v1140, %v1182
        %v1199 = vsub.f32 %v1142, %v1183
        %v1200 = vmul.f32 %v1184, %v1184
        %v1201 = vmul.f32 %v1185, %v1185
        %v1202 = vmul.f32 %v1186, %v1186
        %v1203 = vmul.f32 %v1187, %v1187
        %v1204 = vmul.f32 %v1188, %v1188
        %v1205 = vmul.f32 %v1189, %v1189
        %v1206 = vmul.f32 %v1190, %v1190
        %v1207 = vmul.f32 %v1191, %v1191
        %v1208 = vmul.f32 %v1192, %v1192
        %v1209 = vmul.f32 %v1193, %v1193
        %v1210 = vmul.f32 %v1194, %v1194
        %v1211 = vmul.f32 %v1195, %v1195
        %v1212 = vmul.f32 %v1196, %v1196
        %v1213 = vmul.f32 %v1197, %v1197
        %v1214 = vmul.f32 %v1198, %v1198
        %v1215 = vmul.f32 %v1199, %v1199
        %v1216 = vadd.f32 %v1200, %v1204
        %v1217 = vadd.f32 %v1216, %v1208
        %v1218 = vadd.f32 %v1217, %v1212
        %v1219 = vrot.slane %v1218, 4
        %v1220 = vadd.f32 %v1218, %v1219
        %v1221 = vrot.slane %v1220, 2
        %v1222 = vadd.f32 %v1220, %v1221
        %v1223 = vrot.slane %v1222, 1
        %v1224 = vadd.f32 %v1222, %v1223
        %v1225 = vadd.f32 %v1201, %v1205
        %v1226 = vadd.f32 %v1225, %v1209
        %v1227 = vadd.f32 %v1226, %v1213
        %v1228 = vrot.slane %v1227, 4
        %v1229 = vadd.f32 %v1227, %v1228
        %v1230 = vrot.slane %v1229, 2
        %v1231 = vadd.f32 %v1229, %v1230
        %v1232 = vrot.slane %v1231, 1
        %v1233 = vadd.f32 %v1231, %v1232
        %v1234 = vadd.f32 %v1202, %v1206
        %v1235 = vadd.f32 %v1234, %v1210
        %v1236 = vadd.f32 %v1235, %v1214
        %v1237 = vrot.slane %v1236, 4
        %v1238 = vadd.f32 %v1236, %v1237
        %v1239 = vrot.slane %v1238, 2
        %v1240 = vadd.f32 %v1238, %v1239
        %v1241 = vrot.slane %v1240, 1
        %v1242 = vadd.f32 %v1240, %v1241
        %v1243 = vadd.f32 %v1203, %v1207
        %v1244 = vadd.f32 %v1243, %v1211
        %v1245 = vadd.f32 %v1244, %v1215
        %v1246 = vrot.slane %v1245, 4
        %v1247 = vadd.f32 %v1245, %v1246
        %v1248 = vrot.slane %v1247, 2
        %v1249 = vadd.f32 %v1247, %v1248
        %v1250 = vrot.slane %v1249, 1
        %v1251 = vadd.f32 %v1249, %v1250
        %v1252 = vmul.f32 %v1224, 0.03125
        %v1253 = vmul.f32 %v1233, 0.03125
        %v1254 = vmul.f32 %v1242, 0.03125
        %v1255 = vmul.f32 %v1251, 0.03125
        %v1256 = vadd.f32 %v1252, 0.8
        %v1257 = vadd.f32 %v1253, 0.8
        %v1258 = vadd.f32 %v1254, 0.8
        %v1259 = vadd.f32 %v1255, 0.8
        %v1260 = vrsqrt.pop %v1256
        %v1261 = vrsqrt.pop %v1257
        %v1262 = vrsqrt.pop %v1258
        %v1263 = vrsqrt.pop %v1259
        %v1268 = vcombine.low %v1260, %v1261
        %v1269 = vcombine.low %v1262, %v1263
        %v1271 = vunpack.c.l.s4 1966171168
        %v1272 = vunpack.c.0.s8 %v1271
        %v1273 = vlaneseq
        %v1274 = vshrl.u32 %v1273, 7
        %v1275 = vsub.s32 %v1272, %v1274
        %v1276 = vrot.slane %v1268, %v1275
        %v1278 = vunpack.c.l.s4 1966171168
        %v1279 = vunpack.c.0.s8 %v1278
        %v1280 = vlaneseq
        %v1281 = vshrl.u32 %v1280, 7
        %v1282 = vsub.s32 %v1279, %v1281
        %v1283 = vrot.slane %v1269, %v1282
        %v1284 = vcombine.low %v1276, %v1283
        %v1286 = vunpack.c.l.s4 1966171168
        %v1287 = vunpack.c.0.s8 %v1286
        %v1288 = vlaneseq
        %v1289 = vshrl.u32 %v1288, 7
        %v1290 = vsub.s32 %v1287, %v1289
        %v1291 = vrot.slane %v1284, %v1290
        %v1293 = vmul.f32 %v347, %v1291
        %v1295 = vlaneseq
        %v1296 = vshrl.u32 %v1295, 7
        %v1297 = vsub.s32 0, %v1296
        %v1298 = vrot.slane %v1293, %v1297
        %v1299 = vlaneseq
        %v1300 = vshrl.u32 %v1299, 7
        %v1301 = vsub.s32 1, %v1300
        %v1302 = vrot.slane %v1293, %v1301
        %v1303 = vlaneseq
        %v1304 = vshrl.u32 %v1303, 7
        %v1305 = vsub.s32 2, %v1304
        %v1306 = vrot.slane %v1293, %v1305
        %v1307 = vlaneseq
        %v1308 = vshrl.u32 %v1307, 7
        %v1309 = vsub.s32 3, %v1308
        %v1310 = vrot.slane %v1293, %v1309
        %v1315 = vmul.f32 %v1184, %v1298
        %v1316 = vmul.f32 %v1185, %v1302
        %v1317 = vmul.f32 %v1186, %v1306
        %v1318 = vmul.f32 %v1187, %v1310
        %v1319 = vmul.f32 %v1188, %v1298
        %v1320 = vmul.f32 %v1189, %v1302
        %v1321 = vmul.f32 %v1190, %v1306
        %v1322 = vmul.f32 %v1191, %v1310
        %v1323 = vmul.f32 %v1192, %v1298
        %v1324 = vmul.f32 %v1193, %v1302
        %v1325 = vmul.f32 %v1194, %v1306
        %v1326 = vmul.f32 %v1195, %v1310
        %v1327 = vmul.f32 %v1196, %v1298
        %v1328 = vmul.f32 %v1197, %v1302
        %v1329 = vmul.f32 %v1198, %v1306
        %v1330 = vmul.f32 %v1199, %v1310
        %v1332 = vlaneseq
        %v1333 = vshrl.u32 %v1332, 7
        %v1334 = vsub.s32 0, %v1333
        %v1335 = vrot.slane %v348, %v1334
        %v1336 = vlaneseq
        %v1337 = vshrl.u32 %v1336, 7
        %v1338 = vsub.s32 1, %v1337
        %v1339 = vrot.slane %v348, %v1338
        %v1340 = vlaneseq
        %v1341 = vshrl.u32 %v1340, 7
        %v1342 = vsub.s32 2, %v1341
        %v1343 = vrot.slane %v348, %v1342
        %v1344 = vlaneseq
        %v1345 = vshrl.u32 %v1344, 7
        %v1346 = vsub.s32 3, %v1345
        %v1347 = vrot.slane %v348, %v1346
        %v1352 = vadd.f32 %v1315, %v1335
        %v1353 = vadd.f32 %v1316, %v1339
        %v1354 = vadd.f32 %v1317, %v1343
        %v1355 = vadd.f32 %v1318, %v1347
        %v1356 = vadd.f32 %v1319, %v1335
        %v1357 = vadd.f32 %v1320, %v1339
        %v1358 = vadd.f32 %v1321, %v1343
        %v1359 = vadd.f32 %v1322, %v1347
        %v1360 = vadd.f32 %v1323, %v1335
        %v1361 = vadd.f32 %v1324, %v1339
        %v1362 = vadd.f32 %v1325, %v1343
        %v1363 = vadd.f32 %v1326, %v1347
        %v1364 = vadd.f32 %v1327, %v1335
        %v1365 = vadd.f32 %v1328, %v1339
        %v1366 = vadd.f32 %v1329, %v1343
        %v1367 = vadd.f32 %v1330, %v1347
        %v1368 = vmax.f32 %v1352, 0.0
        %v1369 = vmax.f32 %v1353, 0.0
        %v1370 = vmax.f32 %v1354, 0.0
        %v1371 = vmax.f32 %v1355, 0.0
        %v1372 = vmax.f32 %v1356, 0.0
        %v1373 = vmax.f32 %v1357, 0.0
        %v1374 = vmax.f32 %v1358, 0.0
        %v1375 = vmax.f32 %v1359, 0.0
        %v1376 = vmax.f32 %v1360, 0.0
        %v1377 = vmax.f32 %v1361, 0.0
        %v1378 = vmax.f32 %v1362, 0.0
        %v1379 = vmax.f32 %v1363, 0.0
        %v1380 = vmax.f32 %v1364, 0.0
        %v1381 = vmax.f32 %v1365, 0.0
        %v1382 = vmax.f32 %v1366, 0.0
        %v1383 = vmax.f32 %v1367, 0.0
        %v1384 = vpack.c.bf16 %v1372, %v1368
        %v1385 = vpack.c.bf16 %v1373, %v1369
        %v1386 = vpack.c.bf16 %v1374, %v1370
        %v1387 = vpack.c.bf16 %v1375, %v1371
        %v1388 = vpack.c.bf16 %v1380, %v1376
        %v1389 = vpack.c.bf16 %v1381, %v1377
        %v1390 = vpack.c.bf16 %v1382, %v1378
        %v1391 = vpack.c.bf16 %v1383, %v1379
        %v1392 = vld [vmem:[#allocation8] sm:$0xff]
        %v1393 = vld [vmem:[#allocation8 + $0x8] sm:$0xff]
        %v1394 = vld [vmem:[#allocation8 + $0x10] sm:$0xff]
        %v1395 = vld [vmem:[#allocation8 + $0x18] sm:$0xff]
        %v1396 = vld [vmem:[#allocation8 + $0x20] sm:$0xff]
        %v1397 = vld [vmem:[#allocation8 + $0x28] sm:$0xff]
        %v1398 = vld [vmem:[#allocation8 + $0x30] sm:$0xff]
        %v1399 = vld [vmem:[#allocation8 + $0x38] sm:$0xff]
        %v1400 = vld [vmem:[#allocation8 + $0x40] sm:$0xff]
        %v1401 = vld [vmem:[#allocation8 + $0x48] sm:$0xff]
        %v1402 = vld [vmem:[#allocation8 + $0x50] sm:$0xff]
        %v1403 = vld [vmem:[#allocation8 + $0x58] sm:$0xff]
        %v1404 = vld [vmem:[#allocation8 + $0x60] sm:$0xff]
        %v1405 = vld [vmem:[#allocation8 + $0x68] sm:$0xff]
        %v1406 = vld [vmem:[#allocation8 + $0x70] sm:$0xff]
        %v1407 = vld [vmem:[#allocation8 + $0x78] sm:$0xff]
        %v1408 = vld [vmem:[#allocation8 + $0x80] sm:$0xff]
        %v1409 = vld [vmem:[#allocation8 + $0x88] sm:$0xff]
        %v1410 = vld [vmem:[#allocation8 + $0x90] sm:$0xff]
        %v1411 = vld [vmem:[#allocation8 + $0x98] sm:$0xff]
        %v1412 = vld [vmem:[#allocation8 + $0xa0] sm:$0xff]
        %v1413 = vld [vmem:[#allocation8 + $0xa8] sm:$0xff]
        %v1414 = vld [vmem:[#allocation8 + $0xb0] sm:$0xff]
        %v1415 = vld [vmem:[#allocation8 + $0xb8] sm:$0xff]
        %v1416 = vld [vmem:[#allocation8 + $0xc0] sm:$0xff]
        %v1417 = vld [vmem:[#allocation8 + $0xc8] sm:$0xff]
        %v1418 = vld [vmem:[#allocation8 + $0xd0] sm:$0xff]
        %v1419 = vld [vmem:[#allocation8 + $0xd8] sm:$0xff]
        %v1420 = vld [vmem:[#allocation8 + $0xe0] sm:$0xff]
        %v1421 = vld [vmem:[#allocation8 + $0xe8] sm:$0xff]
        %v1422 = vld [vmem:[#allocation8 + $0xf0] sm:$0xff]
        %v1423 = vld [vmem:[#allocation8 + $0xf8] sm:$0xff]
        %v1424 = vld [vmem:[#allocation8 + $0x100] sm:$0xff]
        %v1425 = vld [vmem:[#allocation8 + $0x108] sm:$0xff]
        %v1426 = vld [vmem:[#allocation8 + $0x110] sm:$0xff]
        %v1427 = vld [vmem:[#allocation8 + $0x118] sm:$0xff]
        %v1428 = vld [vmem:[#allocation8 + $0x120] sm:$0xff]
        %v1429 = vld [vmem:[#allocation8 + $0x128] sm:$0xff]
        %v1430 = vld [vmem:[#allocation8 + $0x130] sm:$0xff]
        %v1431 = vld [vmem:[#allocation8 + $0x138] sm:$0xff]
        %v1432 = vld [vmem:[#allocation8 + $0x140] sm:$0xff]
        %v1433 = vld [vmem:[#allocation8 + $0x148] sm:$0xff]
        %v1434 = vld [vmem:[#allocation8 + $0x150] sm:$0xff]
        %v1435 = vld [vmem:[#allocation8 + $0x158] sm:$0xff]
        %v1436 = vld [vmem:[#allocation8 + $0x160] sm:$0xff]
        %v1437 = vld [vmem:[#allocation8 + $0x168] sm:$0xff]
        %v1438 = vld [vmem:[#allocation8 + $0x170] sm:$0xff]
        %v1439 = vld [vmem:[#allocation8 + $0x178] sm:$0xff]
        %v1440 = vld [vmem:[#allocation8 + $0x180] sm:$0xff]
        %v1441 = vld [vmem:[#allocation8 + $0x188] sm:$0xff]
        %v1442 = vld [vmem:[#allocation8 + $0x190] sm:$0xff]
        %v1443 = vld [vmem:[#allocation8 + $0x198] sm:$0xff]
        %v1444 = vld [vmem:[#allocation8 + $0x1a0] sm:$0xff]
        %v1445 = vld [vmem:[#allocation8 + $0x1a8] sm:$0xff]
        %v1446 = vld [vmem:[#allocation8 + $0x1b0] sm:$0xff]
        %v1447 = vld [vmem:[#allocation8 + $0x1b8] sm:$0xff]
        %v1448 = vld [vmem:[#allocation8 + $0x1c0] sm:$0xff]
        %v1449 = vld [vmem:[#allocation8 + $0x1c8] sm:$0xff]
        %v1450 = vld [vmem:[#allocation8 + $0x1d0] sm:$0xff]
        %v1451 = vld [vmem:[#allocation8 + $0x1d8] sm:$0xff]
        %v1452 = vld [vmem:[#allocation8 + $0x1e0] sm:$0xff]
        %v1453 = vld [vmem:[#allocation8 + $0x1e8] sm:$0xff]
        %v1454 = vld [vmem:[#allocation8 + $0x1f0] sm:$0xff]
        %v1455 = vld [vmem:[#allocation8 + $0x1f8] sm:$0xff]
        %v1456 = vld [vmem:[#allocation8 + $0x200] sm:$0xff]
        %v1457 = vld [vmem:[#allocation8 + $0x208] sm:$0xff]
        %v1458 = vld [vmem:[#allocation8 + $0x210] sm:$0xff]
        %v1459 = vld [vmem:[#allocation8 + $0x218] sm:$0xff]
        %v1460 = vld [vmem:[#allocation8 + $0x220] sm:$0xff]
        %v1461 = vld [vmem:[#allocation8 + $0x228] sm:$0xff]
        %v1462 = vld [vmem:[#allocation8 + $0x230] sm:$0xff]
        %v1463 = vld [vmem:[#allocation8 + $0x238] sm:$0xff]
        %v1464 = vld [vmem:[#allocation8 + $0x240] sm:$0xff]
        %v1465 = vld [vmem:[#allocation8 + $0x248] sm:$0xff]
        %v1466 = vld [vmem:[#allocation8 + $0x250] sm:$0xff]
        %v1467 = vld [vmem:[#allocation8 + $0x258] sm:$0xff]
        %v1468 = vld [vmem:[#allocation8 + $0x260] sm:$0xff]
        %v1469 = vld [vmem:[#allocation8 + $0x268] sm:$0xff]
        %v1470 = vld [vmem:[#allocation8 + $0x270] sm:$0xff]
        %v1471 = vld [vmem:[#allocation8 + $0x278] sm:$0xff]
        %v1472 = vld [vmem:[#allocation8 + $0x280] sm:$0xff]
        %v1473 = vld [vmem:[#allocation8 + $0x288] sm:$0xff]
        %v1474 = vld [vmem:[#allocation8 + $0x290] sm:$0xff]
        %v1475 = vld [vmem:[#allocation8 + $0x298] sm:$0xff]
        %v1476 = vld [vmem:[#allocation8 + $0x2a0] sm:$0xff]
        %v1477 = vld [vmem:[#allocation8 + $0x2a8] sm:$0xff]
        %v1478 = vld [vmem:[#allocation8 + $0x2b0] sm:$0xff]
        %v1479 = vld [vmem:[#allocation8 + $0x2b8] sm:$0xff]
        %v1480 = vld [vmem:[#allocation8 + $0x2c0] sm:$0xff]
        %v1481 = vld [vmem:[#allocation8 + $0x2c8] sm:$0xff]
        %v1482 = vld [vmem:[#allocation8 + $0x2d0] sm:$0xff]
        %v1483 = vld [vmem:[#allocation8 + $0x2d8] sm:$0xff]
        %v1484 = vld [vmem:[#allocation8 + $0x2e0] sm:$0xff]
        %v1485 = vld [vmem:[#allocation8 + $0x2e8] sm:$0xff]
        %v1486 = vld [vmem:[#allocation8 + $0x2f0] sm:$0xff]
        %v1487 = vld [vmem:[#allocation8 + $0x2f8] sm:$0xff]
        %v1488 = vld [vmem:[#allocation8 + $0x300] sm:$0xff]
        %v1489 = vld [vmem:[#allocation8 + $0x308] sm:$0xff]
        %v1490 = vld [vmem:[#allocation8 + $0x310] sm:$0xff]
        %v1491 = vld [vmem:[#allocation8 + $0x318] sm:$0xff]
        %v1492 = vld [vmem:[#allocation8 + $0x320] sm:$0xff]
        %v1493 = vld [vmem:[#allocation8 + $0x328] sm:$0xff]
        %v1494 = vld [vmem:[#allocation8 + $0x330] sm:$0xff]
        %v1495 = vld [vmem:[#allocation8 + $0x338] sm:$0xff]
        %v1496 = vld [vmem:[#allocation8 + $0x340] sm:$0xff]
        %v1497 = vld [vmem:[#allocation8 + $0x348] sm:$0xff]
        %v1498 = vld [vmem:[#allocation8 + $0x350] sm:$0xff]
        %v1499 = vld [vmem:[#allocation8 + $0x358] sm:$0xff]
        %v1500 = vld [vmem:[#allocation8 + $0x360] sm:$0xff]
        %v1501 = vld [vmem:[#allocation8 + $0x368] sm:$0xff]
        %v1502 = vld [vmem:[#allocation8 + $0x370] sm:$0xff]
        %v1503 = vld [vmem:[#allocation8 + $0x378] sm:$0xff]
        %v1504 = vld [vmem:[#allocation8 + $0x380] sm:$0xff]
        %v1505 = vld [vmem:[#allocation8 + $0x388] sm:$0xff]
        %v1506 = vld [vmem:[#allocation8 + $0x390] sm:$0xff]
        %v1507 = vld [vmem:[#allocation8 + $0x398] sm:$0xff]
        %v1508 = vld [vmem:[#allocation8 + $0x3a0] sm:$0xff]
        %v1509 = vld [vmem:[#allocation8 + $0x3a8] sm:$0xff]
        %v1510 = vld [vmem:[#allocation8 + $0x3b0] sm:$0xff]
        %v1511 = vld [vmem:[#allocation8 + $0x3b8] sm:$0xff]
        %v1512 = vld [vmem:[#allocation8 + $0x3c0] sm:$0xff]
        %v1513 = vld [vmem:[#allocation8 + $0x3c8] sm:$0xff]
        %v1514 = vld [vmem:[#allocation8 + $0x3d0] sm:$0xff]
        %v1515 = vld [vmem:[#allocation8 + $0x3d8] sm:$0xff]
        %v1516 = vld [vmem:[#allocation8 + $0x3e0] sm:$0xff]
        %v1517 = vld [vmem:[#allocation8 + $0x3e8] sm:$0xff]
        %v1518 = vld [vmem:[#allocation8 + $0x3f0] sm:$0xff]
        %v1519 = vld [vmem:[#allocation8 + $0x3f8] sm:$0xff]
        %v1520 = vld [vmem:[#allocation8 + $0x400] sm:$0xff]
        %v1521 = vld [vmem:[#allocation8 + $0x408] sm:$0xff]
        %v1522 = vld [vmem:[#allocation8 + $0x410] sm:$0xff]
        %v1523 = vld [vmem:[#allocation8 + $0x418] sm:$0xff]
        %v1524 = vld [vmem:[#allocation8 + $0x420] sm:$0xff]
        %v1525 = vld [vmem:[#allocation8 + $0x428] sm:$0xff]
        %v1526 = vld [vmem:[#allocation8 + $0x430] sm:$0xff]
        %v1527 = vld [vmem:[#allocation8 + $0x438] sm:$0xff]
        %v1528 = vld [vmem:[#allocation8 + $0x440] sm:$0xff]
        %v1529 = vld [vmem:[#allocation8 + $0x448] sm:$0xff]
        %v1530 = vld [vmem:[#allocation8 + $0x450] sm:$0xff]
        %v1531 = vld [vmem:[#allocation8 + $0x458] sm:$0xff]
        %v1532 = vld [vmem:[#allocation8 + $0x460] sm:$0xff]
        %v1533 = vld [vmem:[#allocation8 + $0x468] sm:$0xff]
        %v1534 = vld [vmem:[#allocation8 + $0x470] sm:$0xff]
        %v1535 = vld [vmem:[#allocation8 + $0x478] sm:$0xff]
        %v1536 = vld [vmem:[#allocation8 + $0x480] sm:$0xff]
        %v1537 = vld [vmem:[#allocation8 + $0x488] sm:$0xff]
        %v1538 = vld [vmem:[#allocation8 + $0x490] sm:$0xff]
        %v1539 = vld [vmem:[#allocation8 + $0x498] sm:$0xff]
        %v1540 = vld [vmem:[#allocation8 + $0x4a0] sm:$0xff]
        %v1541 = vld [vmem:[#allocation8 + $0x4a8] sm:$0xff]
        %v1542 = vld [vmem:[#allocation8 + $0x4b0] sm:$0xff]
        %v1543 = vld [vmem:[#allocation8 + $0x4b8] sm:$0xff]
        %v1544 = vld [vmem:[#allocation8 + $0x4c0] sm:$0xff]
        %v1545 = vld [vmem:[#allocation8 + $0x4c8] sm:$0xff]
        %v1546 = vld [vmem:[#allocation8 + $0x4d0] sm:$0xff]
        %v1547 = vld [vmem:[#allocation8 + $0x4d8] sm:$0xff]
        %v1548 = vld [vmem:[#allocation8 + $0x4e0] sm:$0xff]
        %v1549 = vld [vmem:[#allocation8 + $0x4e8] sm:$0xff]
        %v1550 = vld [vmem:[#allocation8 + $0x4f0] sm:$0xff]
        %v1551 = vld [vmem:[#allocation8 + $0x4f8] sm:$0xff]
        %v1552 = vld [vmem:[#allocation8 + $0x500] sm:$0xff]
        %v1553 = vld [vmem:[#allocation8 + $0x508] sm:$0xff]
        %v1554 = vld [vmem:[#allocation8 + $0x510] sm:$0xff]
        %v1555 = vld [vmem:[#allocation8 + $0x518] sm:$0xff]
        %v1556 = vld [vmem:[#allocation8 + $0x520] sm:$0xff]
        %v1557 = vld [vmem:[#allocation8 + $0x528] sm:$0xff]
        %v1558 = vld [vmem:[#allocation8 + $0x530] sm:$0xff]
        %v1559 = vld [vmem:[#allocation8 + $0x538] sm:$0xff]
        %v1560 = vld [vmem:[#allocation8 + $0x540] sm:$0xff]
        %v1561 = vld [vmem:[#allocation8 + $0x548] sm:$0xff]
        %v1562 = vld [vmem:[#allocation8 + $0x550] sm:$0xff]
        %v1563 = vld [vmem:[#allocation8 + $0x558] sm:$0xff]
        %v1564 = vld [vmem:[#allocation8 + $0x560] sm:$0xff]
        %v1565 = vld [vmem:[#allocation8 + $0x568] sm:$0xff]
        %v1566 = vld [vmem:[#allocation8 + $0x570] sm:$0xff]
        %v1567 = vld [vmem:[#allocation8 + $0x578] sm:$0xff]
        %v1568 = vld [vmem:[#allocation8 + $0x580] sm:$0xff]
        %v1569 = vld [vmem:[#allocation8 + $0x588] sm:$0xff]
        %v1570 = vld [vmem:[#allocation8 + $0x590] sm:$0xff]
        %v1571 = vld [vmem:[#allocation8 + $0x598] sm:$0xff]
        %v1572 = vld [vmem:[#allocation8 + $0x5a0] sm:$0xff]
        %v1573 = vld [vmem:[#allocation8 + $0x5a8] sm:$0xff]
        %v1574 = vld [vmem:[#allocation8 + $0x5b0] sm:$0xff]
        %v1575 = vld [vmem:[#allocation8 + $0x5b8] sm:$0xff]
        %v1576 = vld [vmem:[#allocation8 + $0x5c0] sm:$0xff]
        %v1577 = vld [vmem:[#allocation8 + $0x5c8] sm:$0xff]
        %v1578 = vld [vmem:[#allocation8 + $0x5d0] sm:$0xff]
        %v1579 = vld [vmem:[#allocation8 + $0x5d8] sm:$0xff]
        %v1580 = vld [vmem:[#allocation8 + $0x5e0] sm:$0xff]
        %v1581 = vld [vmem:[#allocation8 + $0x5e8] sm:$0xff]
        %v1582 = vld [vmem:[#allocation8 + $0x5f0] sm:$0xff]
        %v1583 = vld [vmem:[#allocation8 + $0x5f8] sm:$0xff]
        %v1584 = vld [vmem:[#allocation8 + $0x600] sm:$0xff]
        %v1585 = vld [vmem:[#allocation8 + $0x608] sm:$0xff]
        %v1586 = vld [vmem:[#allocation8 + $0x610] sm:$0xff]
        %v1587 = vld [vmem:[#allocation8 + $0x618] sm:$0xff]
        %v1588 = vld [vmem:[#allocation8 + $0x620] sm:$0xff]
        %v1589 = vld [vmem:[#allocation8 + $0x628] sm:$0xff]
        %v1590 = vld [vmem:[#allocation8 + $0x630] sm:$0xff]
        %v1591 = vld [vmem:[#allocation8 + $0x638] sm:$0xff]
        %v1592 = vld [vmem:[#allocation8 + $0x640] sm:$0xff]
        %v1593 = vld [vmem:[#allocation8 + $0x648] sm:$0xff]
        %v1594 = vld [vmem:[#allocation8 + $0x650] sm:$0xff]
        %v1595 = vld [vmem:[#allocation8 + $0x658] sm:$0xff]
        %v1596 = vld [vmem:[#allocation8 + $0x660] sm:$0xff]
        %v1597 = vld [vmem:[#allocation8 + $0x668] sm:$0xff]
        %v1598 = vld [vmem:[#allocation8 + $0x670] sm:$0xff]
        %v1599 = vld [vmem:[#allocation8 + $0x678] sm:$0xff]
        %v1600 = vld [vmem:[#allocation8 + $0x680] sm:$0xff]
        %v1601 = vld [vmem:[#allocation8 + $0x688] sm:$0xff]
        %v1602 = vld [vmem:[#allocation8 + $0x690] sm:$0xff]
        %v1603 = vld [vmem:[#allocation8 + $0x698] sm:$0xff]
        %v1604 = vld [vmem:[#allocation8 + $0x6a0] sm:$0xff]
        %v1605 = vld [vmem:[#allocation8 + $0x6a8] sm:$0xff]
        %v1606 = vld [vmem:[#allocation8 + $0x6b0] sm:$0xff]
        %v1607 = vld [vmem:[#allocation8 + $0x6b8] sm:$0xff]
        %v1608 = vld [vmem:[#allocation8 + $0x6c0] sm:$0xff]
        %v1609 = vld [vmem:[#allocation8 + $0x6c8] sm:$0xff]
        %v1610 = vld [vmem:[#allocation8 + $0x6d0] sm:$0xff]
        %v1611 = vld [vmem:[#allocation8 + $0x6d8] sm:$0xff]
        %v1612 = vld [vmem:[#allocation8 + $0x6e0] sm:$0xff]
        %v1613 = vld [vmem:[#allocation8 + $0x6e8] sm:$0xff]
        %v1614 = vld [vmem:[#allocation8 + $0x6f0] sm:$0xff]
        %v1615 = vld [vmem:[#allocation8 + $0x6f8] sm:$0xff]
        %v1616 = vld [vmem:[#allocation8 + $0x700] sm:$0xff]
        %v1617 = vld [vmem:[#allocation8 + $0x708] sm:$0xff]
        %v1618 = vld [vmem:[#allocation8 + $0x710] sm:$0xff]
        %v1619 = vld [vmem:[#allocation8 + $0x718] sm:$0xff]
        %v1620 = vld [vmem:[#allocation8 + $0x720] sm:$0xff]
        %v1621 = vld [vmem:[#allocation8 + $0x728] sm:$0xff]
        %v1622 = vld [vmem:[#allocation8 + $0x730] sm:$0xff]
        %v1623 = vld [vmem:[#allocation8 + $0x738] sm:$0xff]
        %v1624 = vld [vmem:[#allocation8 + $0x740] sm:$0xff]
        %v1625 = vld [vmem:[#allocation8 + $0x748] sm:$0xff]
        %v1626 = vld [vmem:[#allocation8 + $0x750] sm:$0xff]
        %v1627 = vld [vmem:[#allocation8 + $0x758] sm:$0xff]
        %v1628 = vld [vmem:[#allocation8 + $0x760] sm:$0xff]
        %v1629 = vld [vmem:[#allocation8 + $0x768] sm:$0xff]
        %v1630 = vld [vmem:[#allocation8 + $0x770] sm:$0xff]
        %v1631 = vld [vmem:[#allocation8 + $0x778] sm:$0xff]
        %v1632 = vld [vmem:[#allocation8 + $0x780] sm:$0xff]
        %v1633 = vld [vmem:[#allocation8 + $0x788] sm:$0xff]
        %v1634 = vld [vmem:[#allocation8 + $0x790] sm:$0xff]
        %v1635 = vld [vmem:[#allocation8 + $0x798] sm:$0xff]
        %v1636 = vld [vmem:[#allocation8 + $0x7a0] sm:$0xff]
        %v1637 = vld [vmem:[#allocation8 + $0x7a8] sm:$0xff]
        %v1638 = vld [vmem:[#allocation8 + $0x7b0] sm:$0xff]
        %v1639 = vld [vmem:[#allocation8 + $0x7b8] sm:$0xff]
        %v1640 = vld [vmem:[#allocation8 + $0x7c0] sm:$0xff]
        %v1641 = vld [vmem:[#allocation8 + $0x7c8] sm:$0xff]
        %v1642 = vld [vmem:[#allocation8 + $0x7d0] sm:$0xff]
        %v1643 = vld [vmem:[#allocation8 + $0x7d8] sm:$0xff]
        %v1644 = vld [vmem:[#allocation8 + $0x7e0] sm:$0xff]
        %v1645 = vld [vmem:[#allocation8 + $0x7e8] sm:$0xff]
        %v1646 = vld [vmem:[#allocation8 + $0x7f0] sm:$0xff]
        %v1647 = vld [vmem:[#allocation8 + $0x7f8] sm:$0xff]
        %v1649 = vlaneseq
        %v1650 = vshrl.u32 %v1649, 7
        %v1651 = vsub.s32 0, %v1650
        %v1652 = vrot.slane %v349, %v1651
        %v1653 = vlaneseq
        %v1654 = vshrl.u32 %v1653, 7
        %v1655 = vsub.s32 1, %v1654
        %v1656 = vrot.slane %v349, %v1655
        %v1657 = vlaneseq
        %v1658 = vshrl.u32 %v1657, 7
        %v1659 = vsub.s32 2, %v1658
        %v1660 = vrot.slane %v349, %v1659
        %v1661 = vlaneseq
        %v1662 = vshrl.u32 %v1661, 7
        %v1663 = vsub.s32 3, %v1662
        %v1664 = vrot.slane %v349, %v1663
        %v1665 = vlaneseq
        %v1666 = vshrl.u32 %v1665, 7
        %v1667 = vsub.s32 4, %v1666
        %v1668 = vrot.slane %v349, %v1667
        %v1669 = vlaneseq
        %v1670 = vshrl.u32 %v1669, 7
        %v1671 = vsub.s32 5, %v1670
        %v1672 = vrot.slane %v349, %v1671
        %v1673 = vlaneseq
        %v1674 = vshrl.u32 %v1673, 7
        %v1675 = vsub.s32 6, %v1674
        %v1676 = vrot.slane %v349, %v1675
        %v1677 = vlaneseq
        %v1678 = vshrl.u32 %v1677, 7
        %v1679 = vsub.s32 7, %v1678
        %v1680 = vrot.slane %v349, %v1679
        %v1945 = vunpack.c.l.b16 %v1392
        %v1946 = vunpack.c.h.b16 %v1392
        %v1947 = vunpack.c.l.b16 %v1393
        %v1948 = vunpack.c.h.b16 %v1393
        %v1949 = vunpack.c.l.b16 %v1394
        %v1950 = vunpack.c.h.b16 %v1394
        %v1951 = vunpack.c.l.b16 %v1395
        %v1952 = vunpack.c.h.b16 %v1395
        %v1953 = vunpack.c.l.b16 %v1396
        %v1954 = vunpack.c.h.b16 %v1396
        %v1955 = vunpack.c.l.b16 %v1397
        %v1956 = vunpack.c.h.b16 %v1397
        %v1957 = vunpack.c.l.b16 %v1398
        %v1958 = vunpack.c.h.b16 %v1398
        %v1959 = vunpack.c.l.b16 %v1399
        %v1960 = vunpack.c.h.b16 %v1399
        %v1961 = vunpack.c.l.b16 %v1400
        %v1962 = vunpack.c.h.b16 %v1400
        %v1963 = vunpack.c.l.b16 %v1401
        %v1964 = vunpack.c.h.b16 %v1401
        %v1965 = vunpack.c.l.b16 %v1402
        %v1966 = vunpack.c.h.b16 %v1402
        %v1967 = vunpack.c.l.b16 %v1403
        %v1968 = vunpack.c.h.b16 %v1403
        %v1969 = vunpack.c.l.b16 %v1404
        %v1970 = vunpack.c.h.b16 %v1404
        %v1971 = vunpack.c.l.b16 %v1405
        %v1972 = vunpack.c.h.b16 %v1405
        %v1973 = vunpack.c.l.b16 %v1406
        %v1974 = vunpack.c.h.b16 %v1406
        %v1975 = vunpack.c.l.b16 %v1407
        %v1976 = vunpack.c.h.b16 %v1407
        %v1977 = vunpack.c.l.b16 %v1408
        %v1978 = vunpack.c.h.b16 %v1408
        %v1979 = vunpack.c.l.b16 %v1409
        %v1980 = vunpack.c.h.b16 %v1409
        %v1981 = vunpack.c.l.b16 %v1410
        %v1982 = vunpack.c.h.b16 %v1410
        %v1983 = vunpack.c.l.b16 %v1411
        %v1984 = vunpack.c.h.b16 %v1411
        %v1985 = vunpack.c.l.b16 %v1412
        %v1986 = vunpack.c.h.b16 %v1412
        %v1987 = vunpack.c.l.b16 %v1413
        %v1988 = vunpack.c.h.b16 %v1413
        %v1989 = vunpack.c.l.b16 %v1414
        %v1990 = vunpack.c.h.b16 %v1414
        %v1991 = vunpack.c.l.b16 %v1415
        %v1992 = vunpack.c.h.b16 %v1415
        %v1993 = vunpack.c.l.b16 %v1416
        %v1994 = vunpack.c.h.b16 %v1416
        %v1995 = vunpack.c.l.b16 %v1417
        %v1996 = vunpack.c.h.b16 %v1417
        %v1997 = vunpack.c.l.b16 %v1418
        %v1998 = vunpack.c.h.b16 %v1418
        %v1999 = vunpack.c.l.b16 %v1419
        %v2000 = vunpack.c.h.b16 %v1419
        %v2001 = vunpack.c.l.b16 %v1420
        %v2002 = vunpack.c.h.b16 %v1420
        %v2003 = vunpack.c.l.b16 %v1421
        %v2004 = vunpack.c.h.b16 %v1421
        %v2005 = vunpack.c.l.b16 %v1422
        %v2006 = vunpack.c.h.b16 %v1422
        %v2007 = vunpack.c.l.b16 %v1423
        %v2008 = vunpack.c.h.b16 %v1423
        %v2009 = vunpack.c.l.b16 %v1424
        %v2010 = vunpack.c.h.b16 %v1424
        %v2011 = vunpack.c.l.b16 %v1425
        %v2012 = vunpack.c.h.b16 %v1425
        %v2013 = vunpack.c.l.b16 %v1426
        %v2014 = vunpack.c.h.b16 %v1426
        %v2015 = vunpack.c.l.b16 %v1427
        %v2016 = vunpack.c.h.b16 %v1427
        %v2017 = vunpack.c.l.b16 %v1428
        %v2018 = vunpack.c.h.b16 %v1428
        %v2019 = vunpack.c.l.b16 %v1429
        %v2020 = vunpack.c.h.b16 %v1429
        %v2021 = vunpack.c.l.b16 %v1430
        %v2022 = vunpack.c.h.b16 %v1430
        %v2023 = vunpack.c.l.b16 %v1431
        %v2024 = vunpack.c.h.b16 %v1431
        %v2025 = vunpack.c.l.b16 %v1432
        %v2026 = vunpack.c.h.b16 %v1432
        %v2027 = vunpack.c.l.b16 %v1433
        %v2028 = vunpack.c.h.b16 %v1433
        %v2029 = vunpack.c.l.b16 %v1434
        %v2030 = vunpack.c.h.b16 %v1434
        %v2031 = vunpack.c.l.b16 %v1435
        %v2032 = vunpack.c.h.b16 %v1435
        %v2033 = vunpack.c.l.b16 %v1436
        %v2034 = vunpack.c.h.b16 %v1436
        %v2035 = vunpack.c.l.b16 %v1437
        %v2036 = vunpack.c.h.b16 %v1437
        %v2037 = vunpack.c.l.b16 %v1438
        %v2038 = vunpack.c.h.b16 %v1438
        %v2039 = vunpack.c.l.b16 %v1439
        %v2040 = vunpack.c.h.b16 %v1439
        %v2041 = vunpack.c.l.b16 %v1440
        %v2042 = vunpack.c.h.b16 %v1440
        %v2043 = vunpack.c.l.b16 %v1441
        %v2044 = vunpack.c.h.b16 %v1441
        %v2045 = vunpack.c.l.b16 %v1442
        %v2046 = vunpack.c.h.b16 %v1442
        %v2047 = vunpack.c.l.b16 %v1443
        %v2048 = vunpack.c.h.b16 %v1443
        %v2049 = vunpack.c.l.b16 %v1444
        %v2050 = vunpack.c.h.b16 %v1444
        %v2051 = vunpack.c.l.b16 %v1445
        %v2052 = vunpack.c.h.b16 %v1445
        %v2053 = vunpack.c.l.b16 %v1446
        %v2054 = vunpack.c.h.b16 %v1446
        %v2055 = vunpack.c.l.b16 %v1447
        %v2056 = vunpack.c.h.b16 %v1447
        %v2057 = vunpack.c.l.b16 %v1448
        %v2058 = vunpack.c.h.b16 %v1448
        %v2059 = vunpack.c.l.b16 %v1449
        %v2060 = vunpack.c.h.b16 %v1449
        %v2061 = vunpack.c.l.b16 %v1450
        %v2062 = vunpack.c.h.b16 %v1450
        %v2063 = vunpack.c.l.b16 %v1451
        %v2064 = vunpack.c.h.b16 %v1451
        %v2065 = vunpack.c.l.b16 %v1452
        %v2066 = vunpack.c.h.b16 %v1452
        %v2067 = vunpack.c.l.b16 %v1453
        %v2068 = vunpack.c.h.b16 %v1453
        %v2069 = vunpack.c.l.b16 %v1454
        %v2070 = vunpack.c.h.b16 %v1454
        %v2071 = vunpack.c.l.b16 %v1455
        %v2072 = vunpack.c.h.b16 %v1455
        %v2073 = vunpack.c.l.b16 %v1456
        %v2074 = vunpack.c.h.b16 %v1456
        %v2075 = vunpack.c.l.b16 %v1457
        %v2076 = vunpack.c.h.b16 %v1457
        %v2077 = vunpack.c.l.b16 %v1458
        %v2078 = vunpack.c.h.b16 %v1458
        %v2079 = vunpack.c.l.b16 %v1459
        %v2080 = vunpack.c.h.b16 %v1459
        %v2081 = vunpack.c.l.b16 %v1460
        %v2082 = vunpack.c.h.b16 %v1460
        %v2083 = vunpack.c.l.b16 %v1461
        %v2084 = vunpack.c.h.b16 %v1461
        %v2085 = vunpack.c.l.b16 %v1462
        %v2086 = vunpack.c.h.b16 %v1462
        %v2087 = vunpack.c.l.b16 %v1463
        %v2088 = vunpack.c.h.b16 %v1463
        %v2089 = vunpack.c.l.b16 %v1464
        %v2090 = vunpack.c.h.b16 %v1464
        %v2091 = vunpack.c.l.b16 %v1465
        %v2092 = vunpack.c.h.b16 %v1465
        %v2093 = vunpack.c.l.b16 %v1466
        %v2094 = vunpack.c.h.b16 %v1466
        %v2095 = vunpack.c.l.b16 %v1467
        %v2096 = vunpack.c.h.b16 %v1467
        %v2097 = vunpack.c.l.b16 %v1468
        %v2098 = vunpack.c.h.b16 %v1468
        %v2099 = vunpack.c.l.b16 %v1469
        %v2100 = vunpack.c.h.b16 %v1469
        %v2101 = vunpack.c.l.b16 %v1470
        %v2102 = vunpack.c.h.b16 %v1470
        %v2103 = vunpack.c.l.b16 %v1471
        %v2104 = vunpack.c.h.b16 %v1471
        %v2105 = vunpack.c.l.b16 %v1472
        %v2106 = vunpack.c.h.b16 %v1472
        %v2107 = vunpack.c.l.b16 %v1473
        %v2108 = vunpack.c.h.b16 %v1473
        %v2109 = vunpack.c.l.b16 %v1474
        %v2110 = vunpack.c.h.b16 %v1474
        %v2111 = vunpack.c.l.b16 %v1475
        %v2112 = vunpack.c.h.b16 %v1475
        %v2113 = vunpack.c.l.b16 %v1476
        %v2114 = vunpack.c.h.b16 %v1476
        %v2115 = vunpack.c.l.b16 %v1477
        %v2116 = vunpack.c.h.b16 %v1477
        %v2117 = vunpack.c.l.b16 %v1478
        %v2118 = vunpack.c.h.b16 %v1478
        %v2119 = vunpack.c.l.b16 %v1479
        %v2120 = vunpack.c.h.b16 %v1479
        %v2121 = vunpack.c.l.b16 %v1480
        %v2122 = vunpack.c.h.b16 %v1480
        %v2123 = vunpack.c.l.b16 %v1481
        %v2124 = vunpack.c.h.b16 %v1481
        %v2125 = vunpack.c.l.b16 %v1482
        %v2126 = vunpack.c.h.b16 %v1482
        %v2127 = vunpack.c.l.b16 %v1483
        %v2128 = vunpack.c.h.b16 %v1483
        %v2129 = vunpack.c.l.b16 %v1484
        %v2130 = vunpack.c.h.b16 %v1484
        %v2131 = vunpack.c.l.b16 %v1485
        %v2132 = vunpack.c.h.b16 %v1485
        %v2133 = vunpack.c.l.b16 %v1486
        %v2134 = vunpack.c.h.b16 %v1486
        %v2135 = vunpack.c.l.b16 %v1487
        %v2136 = vunpack.c.h.b16 %v1487
        %v2137 = vunpack.c.l.b16 %v1488
        %v2138 = vunpack.c.h.b16 %v1488
        %v2139 = vunpack.c.l.b16 %v1489
        %v2140 = vunpack.c.h.b16 %v1489
        %v2141 = vunpack.c.l.b16 %v1490
        %v2142 = vunpack.c.h.b16 %v1490
        %v2143 = vunpack.c.l.b16 %v1491
        %v2144 = vunpack.c.h.b16 %v1491
        %v2145 = vunpack.c.l.b16 %v1492
        %v2146 = vunpack.c.h.b16 %v1492
        %v2147 = vunpack.c.l.b16 %v1493
        %v2148 = vunpack.c.h.b16 %v1493
        %v2149 = vunpack.c.l.b16 %v1494
        %v2150 = vunpack.c.h.b16 %v1494
        %v2151 = vunpack.c.l.b16 %v1495
        %v2152 = vunpack.c.h.b16 %v1495
        %v2153 = vunpack.c.l.b16 %v1496
        %v2154 = vunpack.c.h.b16 %v1496
        %v2155 = vunpack.c.l.b16 %v1497
        %v2156 = vunpack.c.h.b16 %v1497
        %v2157 = vunpack.c.l.b16 %v1498
        %v2158 = vunpack.c.h.b16 %v1498
        %v2159 = vunpack.c.l.b16 %v1499
        %v2160 = vunpack.c.h.b16 %v1499
        %v2161 = vunpack.c.l.b16 %v1500
        %v2162 = vunpack.c.h.b16 %v1500
        %v2163 = vunpack.c.l.b16 %v1501
        %v2164 = vunpack.c.h.b16 %v1501
        %v2165 = vunpack.c.l.b16 %v1502
        %v2166 = vunpack.c.h.b16 %v1502
        %v2167 = vunpack.c.l.b16 %v1503
        %v2168 = vunpack.c.h.b16 %v1503
        %v2169 = vunpack.c.l.b16 %v1504
        %v2170 = vunpack.c.h.b16 %v1504
        %v2171 = vunpack.c.l.b16 %v1505
        %v2172 = vunpack.c.h.b16 %v1505
        %v2173 = vunpack.c.l.b16 %v1506
        %v2174 = vunpack.c.h.b16 %v1506
        %v2175 = vunpack.c.l.b16 %v1507
        %v2176 = vunpack.c.h.b16 %v1507
        %v2177 = vunpack.c.l.b16 %v1508
        %v2178 = vunpack.c.h.b16 %v1508
        %v2179 = vunpack.c.l.b16 %v1509
        %v2180 = vunpack.c.h.b16 %v1509
        %v2181 = vunpack.c.l.b16 %v1510
        %v2182 = vunpack.c.h.b16 %v1510
        %v2183 = vunpack.c.l.b16 %v1511
        %v2184 = vunpack.c.h.b16 %v1511
        %v2185 = vunpack.c.l.b16 %v1512
        %v2186 = vunpack.c.h.b16 %v1512
        %v2187 = vunpack.c.l.b16 %v1513
        %v2188 = vunpack.c.h.b16 %v1513
        %v2189 = vunpack.c.l.b16 %v1514
        %v2190 = vunpack.c.h.b16 %v1514
        %v2191 = vunpack.c.l.b16 %v1515
        %v2192 = vunpack.c.h.b16 %v1515
        %v2193 = vunpack.c.l.b16 %v1516
        %v2194 = vunpack.c.h.b16 %v1516
        %v2195 = vunpack.c.l.b16 %v1517
        %v2196 = vunpack.c.h.b16 %v1517
        %v2197 = vunpack.c.l.b16 %v1518
        %v2198 = vunpack.c.h.b16 %v1518
        %v2199 = vunpack.c.l.b16 %v1519
        %v2200 = vunpack.c.h.b16 %v1519
        %v2201 = vunpack.c.l.b16 %v1520
        %v2202 = vunpack.c.h.b16 %v1520
        %v2203 = vunpack.c.l.b16 %v1521
        %v2204 = vunpack.c.h.b16 %v1521
        %v2205 = vunpack.c.l.b16 %v1522
        %v2206 = vunpack.c.h.b16 %v1522
        %v2207 = vunpack.c.l.b16 %v1523
        %v2208 = vunpack.c.h.b16 %v1523
        %v2209 = vunpack.c.l.b16 %v1524
        %v2210 = vunpack.c.h.b16 %v1524
        %v2211 = vunpack.c.l.b16 %v1525
        %v2212 = vunpack.c.h.b16 %v1525
        %v2213 = vunpack.c.l.b16 %v1526
        %v2214 = vunpack.c.h.b16 %v1526
        %v2215 = vunpack.c.l.b16 %v1527
        %v2216 = vunpack.c.h.b16 %v1527
        %v2217 = vunpack.c.l.b16 %v1528
        %v2218 = vunpack.c.h.b16 %v1528
        %v2219 = vunpack.c.l.b16 %v1529
        %v2220 = vunpack.c.h.b16 %v1529
        %v2221 = vunpack.c.l.b16 %v1530
        %v2222 = vunpack.c.h.b16 %v1530
        %v2223 = vunpack.c.l.b16 %v1531
        %v2224 = vunpack.c.h.b16 %v1531
        %v2225 = vunpack.c.l.b16 %v1532
        %v2226 = vunpack.c.h.b16 %v1532
        %v2227 = vunpack.c.l.b16 %v1533
        %v2228 = vunpack.c.h.b16 %v1533
        %v2229 = vunpack.c.l.b16 %v1534
        %v2230 = vunpack.c.h.b16 %v1534
        %v2231 = vunpack.c.l.b16 %v1535
        %v2232 = vunpack.c.h.b16 %v1535
        %v2233 = vunpack.c.l.b16 %v1536
        %v2234 = vunpack.c.h.b16 %v1536
        %v2235 = vunpack.c.l.b16 %v1537
        %v2236 = vunpack.c.h.b16 %v1537
        %v2237 = vunpack.c.l.b16 %v1538
        %v2238 = vunpack.c.h.b16 %v1538
        %v2239 = vunpack.c.l.b16 %v1539
        %v2240 = vunpack.c.h.b16 %v1539
        %v2241 = vunpack.c.l.b16 %v1540
        %v2242 = vunpack.c.h.b16 %v1540
        %v2243 = vunpack.c.l.b16 %v1541
        %v2244 = vunpack.c.h.b16 %v1541
        %v2245 = vunpack.c.l.b16 %v1542
        %v2246 = vunpack.c.h.b16 %v1542
        %v2247 = vunpack.c.l.b16 %v1543
        %v2248 = vunpack.c.h.b16 %v1543
        %v2249 = vunpack.c.l.b16 %v1544
        %v2250 = vunpack.c.h.b16 %v1544
        %v2251 = vunpack.c.l.b16 %v1545
        %v2252 = vunpack.c.h.b16 %v1545
        %v2253 = vunpack.c.l.b16 %v1546
        %v2254 = vunpack.c.h.b16 %v1546
        %v2255 = vunpack.c.l.b16 %v1547
        %v2256 = vunpack.c.h.b16 %v1547
        %v2257 = vunpack.c.l.b16 %v1548
        %v2258 = vunpack.c.h.b16 %v1548
        %v2259 = vunpack.c.l.b16 %v1549
        %v2260 = vunpack.c.h.b16 %v1549
        %v2261 = vunpack.c.l.b16 %v1550
        %v2262 = vunpack.c.h.b16 %v1550
        %v2263 = vunpack.c.l.b16 %v1551
        %v2264 = vunpack.c.h.b16 %v1551
        %v2265 = vunpack.c.l.b16 %v1552
        %v2266 = vunpack.c.h.b16 %v1552
        %v2267 = vunpack.c.l.b16 %v1553
        %v2268 = vunpack.c.h.b16 %v1553
        %v2269 = vunpack.c.l.b16 %v1554
        %v2270 = vunpack.c.h.b16 %v1554
        %v2271 = vunpack.c.l.b16 %v1555
        %v2272 = vunpack.c.h.b16 %v1555
        %v2273 = vunpack.c.l.b16 %v1556
        %v2274 = vunpack.c.h.b16 %v1556
        %v2275 = vunpack.c.l.b16 %v1557
        %v2276 = vunpack.c.h.b16 %v1557
        %v2277 = vunpack.c.l.b16 %v1558
        %v2278 = vunpack.c.h.b16 %v1558
        %v2279 = vunpack.c.l.b16 %v1559
        %v2280 = vunpack.c.h.b16 %v1559
        %v2281 = vunpack.c.l.b16 %v1560
        %v2282 = vunpack.c.h.b16 %v1560
        %v2283 = vunpack.c.l.b16 %v1561
        %v2284 = vunpack.c.h.b16 %v1561
        %v2285 = vunpack.c.l.b16 %v1562
        %v2286 = vunpack.c.h.b16 %v1562
        %v2287 = vunpack.c.l.b16 %v1563
        %v2288 = vunpack.c.h.b16 %v1563
        %v2289 = vunpack.c.l.b16 %v1564
        %v2290 = vunpack.c.h.b16 %v1564
        %v2291 = vunpack.c.l.b16 %v1565
        %v2292 = vunpack.c.h.b16 %v1565
        %v2293 = vunpack.c.l.b16 %v1566
        %v2294 = vunpack.c.h.b16 %v1566
        %v2295 = vunpack.c.l.b16 %v1567
        %v2296 = vunpack.c.h.b16 %v1567
        %v2297 = vunpack.c.l.b16 %v1568
        %v2298 = vunpack.c.h.b16 %v1568
        %v2299 = vunpack.c.l.b16 %v1569
        %v2300 = vunpack.c.h.b16 %v1569
        %v2301 = vunpack.c.l.b16 %v1570
        %v2302 = vunpack.c.h.b16 %v1570
        %v2303 = vunpack.c.l.b16 %v1571
        %v2304 = vunpack.c.h.b16 %v1571
        %v2305 = vunpack.c.l.b16 %v1572
        %v2306 = vunpack.c.h.b16 %v1572
        %v2307 = vunpack.c.l.b16 %v1573
        %v2308 = vunpack.c.h.b16 %v1573
        %v2309 = vunpack.c.l.b16 %v1574
        %v2310 = vunpack.c.h.b16 %v1574
        %v2311 = vunpack.c.l.b16 %v1575
        %v2312 = vunpack.c.h.b16 %v1575
        %v2313 = vunpack.c.l.b16 %v1576
        %v2314 = vunpack.c.h.b16 %v1576
        %v2315 = vunpack.c.l.b16 %v1577
        %v2316 = vunpack.c.h.b16 %v1577
        %v2317 = vunpack.c.l.b16 %v1578
        %v2318 = vunpack.c.h.b16 %v1578
        %v2319 = vunpack.c.l.b16 %v1579
        %v2320 = vunpack.c.h.b16 %v1579
        %v2321 = vunpack.c.l.b16 %v1580
        %v2322 = vunpack.c.h.b16 %v1580
        %v2323 = vunpack.c.l.b16 %v1581
        %v2324 = vunpack.c.h.b16 %v1581
        %v2325 = vunpack.c.l.b16 %v1582
        %v2326 = vunpack.c.h.b16 %v1582
        %v2327 = vunpack.c.l.b16 %v1583
        %v2328 = vunpack.c.h.b16 %v1583
        %v2329 = vunpack.c.l.b16 %v1584
        %v2330 = vunpack.c.h.b16 %v1584
        %v2331 = vunpack.c.l.b16 %v1585
        %v2332 = vunpack.c.h.b16 %v1585
        %v2333 = vunpack.c.l.b16 %v1586
        %v2334 = vunpack.c.h.b16 %v1586
        %v2335 = vunpack.c.l.b16 %v1587
        %v2336 = vunpack.c.h.b16 %v1587
        %v2337 = vunpack.c.l.b16 %v1588
        %v2338 = vunpack.c.h.b16 %v1588
        %v2339 = vunpack.c.l.b16 %v1589
        %v2340 = vunpack.c.h.b16 %v1589
        %v2341 = vunpack.c.l.b16 %v1590
        %v2342 = vunpack.c.h.b16 %v1590
        %v2343 = vunpack.c.l.b16 %v1591
        %v2344 = vunpack.c.h.b16 %v1591
        %v2345 = vunpack.c.l.b16 %v1592
        %v2346 = vunpack.c.h.b16 %v1592
        %v2347 = vunpack.c.l.b16 %v1593
        %v2348 = vunpack.c.h.b16 %v1593
        %v2349 = vunpack.c.l.b16 %v1594
        %v2350 = vunpack.c.h.b16 %v1594
        %v2351 = vunpack.c.l.b16 %v1595
        %v2352 = vunpack.c.h.b16 %v1595
        %v2353 = vunpack.c.l.b16 %v1596
        %v2354 = vunpack.c.h.b16 %v1596
        %v2355 = vunpack.c.l.b16 %v1597
        %v2356 = vunpack.c.h.b16 %v1597
        %v2357 = vunpack.c.l.b16 %v1598
        %v2358 = vunpack.c.h.b16 %v1598
        %v2359 = vunpack.c.l.b16 %v1599
        %v2360 = vunpack.c.h.b16 %v1599
        %v2361 = vunpack.c.l.b16 %v1600
        %v2362 = vunpack.c.h.b16 %v1600
        %v2363 = vunpack.c.l.b16 %v1601
        %v2364 = vunpack.c.h.b16 %v1601
        %v2365 = vunpack.c.l.b16 %v1602
        %v2366 = vunpack.c.h.b16 %v1602
        %v2367 = vunpack.c.l.b16 %v1603
        %v2368 = vunpack.c.h.b16 %v1603
        %v2369 = vunpack.c.l.b16 %v1604
        %v2370 = vunpack.c.h.b16 %v1604
        %v2371 = vunpack.c.l.b16 %v1605
        %v2372 = vunpack.c.h.b16 %v1605
        %v2373 = vunpack.c.l.b16 %v1606
        %v2374 = vunpack.c.h.b16 %v1606
        %v2375 = vunpack.c.l.b16 %v1607
        %v2376 = vunpack.c.h.b16 %v1607
        %v2377 = vunpack.c.l.b16 %v1608
        %v2378 = vunpack.c.h.b16 %v1608
        %v2379 = vunpack.c.l.b16 %v1609
        %v2380 = vunpack.c.h.b16 %v1609
        %v2381 = vunpack.c.l.b16 %v1610
        %v2382 = vunpack.c.h.b16 %v1610
        %v2383 = vunpack.c.l.b16 %v1611
        %v2384 = vunpack.c.h.b16 %v1611
        %v2385 = vunpack.c.l.b16 %v1612
        %v2386 = vunpack.c.h.b16 %v1612
        %v2387 = vunpack.c.l.b16 %v1613
        %v2388 = vunpack.c.h.b16 %v1613
        %v2389 = vunpack.c.l.b16 %v1614
        %v2390 = vunpack.c.h.b16 %v1614
        %v2391 = vunpack.c.l.b16 %v1615
        %v2392 = vunpack.c.h.b16 %v1615
        %v2393 = vunpack.c.l.b16 %v1616
        %v2394 = vunpack.c.h.b16 %v1616
        %v2395 = vunpack.c.l.b16 %v1617
        %v2396 = vunpack.c.h.b16 %v1617
        %v2397 = vunpack.c.l.b16 %v1618
        %v2398 = vunpack.c.h.b16 %v1618
        %v2399 = vunpack.c.l.b16 %v1619
        %v2400 = vunpack.c.h.b16 %v1619
        %v2401 = vunpack.c.l.b16 %v1620
        %v2402 = vunpack.c.h.b16 %v1620
        %v2403 = vunpack.c.l.b16 %v1621
        %v2404 = vunpack.c.h.b16 %v1621
        %v2405 = vunpack.c.l.b16 %v1622
        %v2406 = vunpack.c.h.b16 %v1622
        %v2407 = vunpack.c.l.b16 %v1623
        %v2408 = vunpack.c.h.b16 %v1623
        %v2409 = vunpack.c.l.b16 %v1624
        %v2410 = vunpack.c.h.b16 %v1624
        %v2411 = vunpack.c.l.b16 %v1625
        %v2412 = vunpack.c.h.b16 %v1625
        %v2413 = vunpack.c.l.b16 %v1626
        %v2414 = vunpack.c.h.b16 %v1626
        %v2415 = vunpack.c.l.b16 %v1627
        %v2416 = vunpack.c.h.b16 %v1627
        %v2417 = vunpack.c.l.b16 %v1628
        %v2418 = vunpack.c.h.b16 %v1628
        %v2419 = vunpack.c.l.b16 %v1629
        %v2420 = vunpack.c.h.b16 %v1629
        %v2421 = vunpack.c.l.b16 %v1630
        %v2422 = vunpack.c.h.b16 %v1630
        %v2423 = vunpack.c.l.b16 %v1631
        %v2424 = vunpack.c.h.b16 %v1631
        %v2425 = vunpack.c.l.b16 %v1632
        %v2426 = vunpack.c.h.b16 %v1632
        %v2427 = vunpack.c.l.b16 %v1633
        %v2428 = vunpack.c.h.b16 %v1633
        %v2429 = vunpack.c.l.b16 %v1634
        %v2430 = vunpack.c.h.b16 %v1634
        %v2431 = vunpack.c.l.b16 %v1635
        %v2432 = vunpack.c.h.b16 %v1635
        %v2433 = vunpack.c.l.b16 %v1636
        %v2434 = vunpack.c.h.b16 %v1636
        %v2435 = vunpack.c.l.b16 %v1637
        %v2436 = vunpack.c.h.b16 %v1637
        %v2437 = vunpack.c.l.b16 %v1638
        %v2438 = vunpack.c.h.b16 %v1638
        %v2439 = vunpack.c.l.b16 %v1639
        %v2440 = vunpack.c.h.b16 %v1639
        %v2441 = vunpack.c.l.b16 %v1640
        %v2442 = vunpack.c.h.b16 %v1640
        %v2443 = vunpack.c.l.b16 %v1641
        %v2444 = vunpack.c.h.b16 %v1641
        %v2445 = vunpack.c.l.b16 %v1642
        %v2446 = vunpack.c.h.b16 %v1642
        %v2447 = vunpack.c.l.b16 %v1643
        %v2448 = vunpack.c.h.b16 %v1643
        %v2449 = vunpack.c.l.b16 %v1644
        %v2450 = vunpack.c.h.b16 %v1644
        %v2451 = vunpack.c.l.b16 %v1645
        %v2452 = vunpack.c.h.b16 %v1645
        %v2453 = vunpack.c.l.b16 %v1646
        %v2454 = vunpack.c.h.b16 %v1646
        %v2455 = vunpack.c.l.b16 %v1647
        %v2456 = vunpack.c.h.b16 %v1647
        %v2457 = vpack.c.b16 %v1953, %v1945
        %v2458 = vpack.c.b16 %v1954, %v1946
        %v2459 = vpack.c.b16 %v1955, %v1947
        %v2460 = vpack.c.b16 %v1956, %v1948
        %v2461 = vpack.c.b16 %v1957, %v1949
        %v2462 = vpack.c.b16 %v1958, %v1950
        %v2463 = vpack.c.b16 %v1959, %v1951
        %v2464 = vpack.c.b16 %v1960, %v1952
        %v2465 = vpack.c.b16 %v1969, %v1961
        %v2466 = vpack.c.b16 %v1970, %v1962
        %v2467 = vpack.c.b16 %v1971, %v1963
        %v2468 = vpack.c.b16 %v1972, %v1964
        %v2469 = vpack.c.b16 %v1973, %v1965
        %v2470 = vpack.c.b16 %v1974, %v1966
        %v2471 = vpack.c.b16 %v1975, %v1967
        %v2472 = vpack.c.b16 %v1976, %v1968
        %v2473 = vpack.c.b16 %v1985, %v1977
        %v2474 = vpack.c.b16 %v1986, %v1978
        %v2475 = vpack.c.b16 %v1987, %v1979
        %v2476 = vpack.c.b16 %v1988, %v1980
        %v2477 = vpack.c.b16 %v1989, %v1981
        %v2478 = vpack.c.b16 %v1990, %v1982
        %v2479 = vpack.c.b16 %v1991, %v1983
        %v2480 = vpack.c.b16 %v1992, %v1984
        %v2481 = vpack.c.b16 %v2001, %v1993
        %v2482 = vpack.c.b16 %v2002, %v1994
        %v2483 = vpack.c.b16 %v2003, %v1995
        %v2484 = vpack.c.b16 %v2004, %v1996
        %v2485 = vpack.c.b16 %v2005, %v1997
        %v2486 = vpack.c.b16 %v2006, %v1998
        %v2487 = vpack.c.b16 %v2007, %v1999
        %v2488 = vpack.c.b16 %v2008, %v2000
        %v2489 = vpack.c.b16 %v2017, %v2009
        %v2490 = vpack.c.b16 %v2018, %v2010
        %v2491 = vpack.c.b16 %v2019, %v2011
        %v2492 = vpack.c.b16 %v2020, %v2012
        %v2493 = vpack.c.b16 %v2021, %v2013
        %v2494 = vpack.c.b16 %v2022, %v2014
        %v2495 = vpack.c.b16 %v2023, %v2015
        %v2496 = vpack.c.b16 %v2024, %v2016
        %v2497 = vpack.c.b16 %v2033, %v2025
        %v2498 = vpack.c.b16 %v2034, %v2026
        %v2499 = vpack.c.b16 %v2035, %v2027
        %v2500 = vpack.c.b16 %v2036, %v2028
        %v2501 = vpack.c.b16 %v2037, %v2029
        %v2502 = vpack.c.b16 %v2038, %v2030
        %v2503 = vpack.c.b16 %v2039, %v2031
        %v2504 = vpack.c.b16 %v2040, %v2032
        %v2505 = vpack.c.b16 %v2049, %v2041
        %v2506 = vpack.c.b16 %v2050, %v2042
        %v2507 = vpack.c.b16 %v2051, %v2043
        %v2508 = vpack.c.b16 %v2052, %v2044
        %v2509 = vpack.c.b16 %v2053, %v2045
        %v2510 = vpack.c.b16 %v2054, %v2046
        %v2511 = vpack.c.b16 %v2055, %v2047
        %v2512 = vpack.c.b16 %v2056, %v2048
        %v2513 = vpack.c.b16 %v2065, %v2057
        %v2514 = vpack.c.b16 %v2066, %v2058
        %v2515 = vpack.c.b16 %v2067, %v2059
        %v2516 = vpack.c.b16 %v2068, %v2060
        %v2517 = vpack.c.b16 %v2069, %v2061
        %v2518 = vpack.c.b16 %v2070, %v2062
        %v2519 = vpack.c.b16 %v2071, %v2063
        %v2520 = vpack.c.b16 %v2072, %v2064
        %v2521 = vpack.c.b16 %v2081, %v2073
        %v2522 = vpack.c.b16 %v2082, %v2074
        %v2523 = vpack.c.b16 %v2083, %v2075
        %v2524 = vpack.c.b16 %v2084, %v2076
        %v2525 = vpack.c.b16 %v2085, %v2077
        %v2526 = vpack.c.b16 %v2086, %v2078
        %v2527 = vpack.c.b16 %v2087, %v2079
        %v2528 = vpack.c.b16 %v2088, %v2080
        %v2529 = vpack.c.b16 %v2097, %v2089
        %v2530 = vpack.c.b16 %v2098, %v2090
        %v2531 = vpack.c.b16 %v2099, %v2091
        %v2532 = vpack.c.b16 %v2100, %v2092
        %v2533 = vpack.c.b16 %v2101, %v2093
        %v2534 = vpack.c.b16 %v2102, %v2094
        %v2535 = vpack.c.b16 %v2103, %v2095
        %v2536 = vpack.c.b16 %v2104, %v2096
        %v2537 = vpack.c.b16 %v2113, %v2105
        %v2538 = vpack.c.b16 %v2114, %v2106
        %v2539 = vpack.c.b16 %v2115, %v2107
        %v2540 = vpack.c.b16 %v2116, %v2108
        %v2541 = vpack.c.b16 %v2117, %v2109
        %v2542 = vpack.c.b16 %v2118, %v2110
        %v2543 = vpack.c.b16 %v2119, %v2111
        %v2544 = vpack.c.b16 %v2120, %v2112
        %v2545 = vpack.c.b16 %v2129, %v2121
        %v2546 = vpack.c.b16 %v2130, %v2122
        %v2547 = vpack.c.b16 %v2131, %v2123
        %v2548 = vpack.c.b16 %v2132, %v2124
        %v2549 = vpack.c.b16 %v2133, %v2125
        %v2550 = vpack.c.b16 %v2134, %v2126
        %v2551 = vpack.c.b16 %v2135, %v2127
        %v2552 = vpack.c.b16 %v2136, %v2128
        %v2553 = vpack.c.b16 %v2145, %v2137
        %v2554 = vpack.c.b16 %v2146, %v2138
        %v2555 = vpack.c.b16 %v2147, %v2139
        %v2556 = vpack.c.b16 %v2148, %v2140
        %v2557 = vpack.c.b16 %v2149, %v2141
        %v2558 = vpack.c.b16 %v2150, %v2142
        %v2559 = vpack.c.b16 %v2151, %v2143
        %v2560 = vpack.c.b16 %v2152, %v2144
        %v2561 = vpack.c.b16 %v2161, %v2153
        %v2562 = vpack.c.b16 %v2162, %v2154
        %v2563 = vpack.c.b16 %v2163, %v2155
        %v2564 = vpack.c.b16 %v2164, %v2156
        %v2565 = vpack.c.b16 %v2165, %v2157
        %v2566 = vpack.c.b16 %v2166, %v2158
        %v2567 = vpack.c.b16 %v2167, %v2159
        %v2568 = vpack.c.b16 %v2168, %v2160
        %v2569 = vpack.c.b16 %v2177, %v2169
        %v2570 = vpack.c.b16 %v2178, %v2170
        %v2571 = vpack.c.b16 %v2179, %v2171
        %v2572 = vpack.c.b16 %v2180, %v2172
        %v2573 = vpack.c.b16 %v2181, %v2173
        %v2574 = vpack.c.b16 %v2182, %v2174
        %v2575 = vpack.c.b16 %v2183, %v2175
        %v2576 = vpack.c.b16 %v2184, %v2176
        %v2577 = vpack.c.b16 %v2193, %v2185
        %v2578 = vpack.c.b16 %v2194, %v2186
        %v2579 = vpack.c.b16 %v2195, %v2187
        %v2580 = vpack.c.b16 %v2196, %v2188
        %v2581 = vpack.c.b16 %v2197, %v2189
        %v2582 = vpack.c.b16 %v2198, %v2190
        %v2583 = vpack.c.b16 %v2199, %v2191
        %v2584 = vpack.c.b16 %v2200, %v2192
        %v2585 = vpack.c.b16 %v2209, %v2201
        %v2586 = vpack.c.b16 %v2210, %v2202
        %v2587 = vpack.c.b16 %v2211, %v2203
        %v2588 = vpack.c.b16 %v2212, %v2204
        %v2589 = vpack.c.b16 %v2213, %v2205
        %v2590 = vpack.c.b16 %v2214, %v2206
        %v2591 = vpack.c.b16 %v2215, %v2207
        %v2592 = vpack.c.b16 %v2216, %v2208
        %v2593 = vpack.c.b16 %v2225, %v2217
        %v2594 = vpack.c.b16 %v2226, %v2218
        %v2595 = vpack.c.b16 %v2227, %v2219
        %v2596 = vpack.c.b16 %v2228, %v2220
        %v2597 = vpack.c.b16 %v2229, %v2221
        %v2598 = vpack.c.b16 %v2230, %v2222
        %v2599 = vpack.c.b16 %v2231, %v2223
        %v2600 = vpack.c.b16 %v2232, %v2224
        %v2601 = vpack.c.b16 %v2241, %v2233
        %v2602 = vpack.c.b16 %v2242, %v2234
        %v2603 = vpack.c.b16 %v2243, %v2235
        %v2604 = vpack.c.b16 %v2244, %v2236
        %v2605 = vpack.c.b16 %v2245, %v2237
        %v2606 = vpack.c.b16 %v2246, %v2238
        %v2607 = vpack.c.b16 %v2247, %v2239
        %v2608 = vpack.c.b16 %v2248, %v2240
        %v2609 = vpack.c.b16 %v2257, %v2249
        %v2610 = vpack.c.b16 %v2258, %v2250
        %v2611 = vpack.c.b16 %v2259, %v2251
        %v2612 = vpack.c.b16 %v2260, %v2252
        %v2613 = vpack.c.b16 %v2261, %v2253
        %v2614 = vpack.c.b16 %v2262, %v2254
        %v2615 = vpack.c.b16 %v2263, %v2255
        %v2616 = vpack.c.b16 %v2264, %v2256
        %v2617 = vpack.c.b16 %v2273, %v2265
        %v2618 = vpack.c.b16 %v2274, %v2266
        %v2619 = vpack.c.b16 %v2275, %v2267
        %v2620 = vpack.c.b16 %v2276, %v2268
        %v2621 = vpack.c.b16 %v2277, %v2269
        %v2622 = vpack.c.b16 %v2278, %v2270
        %v2623 = vpack.c.b16 %v2279, %v2271
        %v2624 = vpack.c.b16 %v2280, %v2272
        %v2625 = vpack.c.b16 %v2289, %v2281
        %v2626 = vpack.c.b16 %v2290, %v2282
        %v2627 = vpack.c.b16 %v2291, %v2283
        %v2628 = vpack.c.b16 %v2292, %v2284
        %v2629 = vpack.c.b16 %v2293, %v2285
        %v2630 = vpack.c.b16 %v2294, %v2286
        %v2631 = vpack.c.b16 %v2295, %v2287
        %v2632 = vpack.c.b16 %v2296, %v2288
        %v2633 = vpack.c.b16 %v2305, %v2297
        %v2634 = vpack.c.b16 %v2306, %v2298
        %v2635 = vpack.c.b16 %v2307, %v2299
        %v2636 = vpack.c.b16 %v2308, %v2300
        %v2637 = vpack.c.b16 %v2309, %v2301
        %v2638 = vpack.c.b16 %v2310, %v2302
        %v2639 = vpack.c.b16 %v2311, %v2303
        %v2640 = vpack.c.b16 %v2312, %v2304
        %v2641 = vpack.c.b16 %v2321, %v2313
        %v2642 = vpack.c.b16 %v2322, %v2314
        %v2643 = vpack.c.b16 %v2323, %v2315
        %v2644 = vpack.c.b16 %v2324, %v2316
        %v2645 = vpack.c.b16 %v2325, %v2317
        %v2646 = vpack.c.b16 %v2326, %v2318
        %v2647 = vpack.c.b16 %v2327, %v2319
        %v2648 = vpack.c.b16 %v2328, %v2320
        %v2649 = vpack.c.b16 %v2337, %v2329
        %v2650 = vpack.c.b16 %v2338, %v2330
        %v2651 = vpack.c.b16 %v2339, %v2331
        %v2652 = vpack.c.b16 %v2340, %v2332
        %v2653 = vpack.c.b16 %v2341, %v2333
        %v2654 = vpack.c.b16 %v2342, %v2334
        %v2655 = vpack.c.b16 %v2343, %v2335
        %v2656 = vpack.c.b16 %v2344, %v2336
        %v2657 = vpack.c.b16 %v2353, %v2345
        %v2658 = vpack.c.b16 %v2354, %v2346
        %v2659 = vpack.c.b16 %v2355, %v2347
        %v2660 = vpack.c.b16 %v2356, %v2348
        %v2661 = vpack.c.b16 %v2357, %v2349
        %v2662 = vpack.c.b16 %v2358, %v2350
        %v2663 = vpack.c.b16 %v2359, %v2351
        %v2664 = vpack.c.b16 %v2360, %v2352
        %v2665 = vpack.c.b16 %v2369, %v2361
        %v2666 = vpack.c.b16 %v2370, %v2362
        %v2667 = vpack.c.b16 %v2371, %v2363
        %v2668 = vpack.c.b16 %v2372, %v2364
        %v2669 = vpack.c.b16 %v2373, %v2365
        %v2670 = vpack.c.b16 %v2374, %v2366
        %v2671 = vpack.c.b16 %v2375, %v2367
        %v2672 = vpack.c.b16 %v2376, %v2368
        %v2673 = vpack.c.b16 %v2385, %v2377
        %v2674 = vpack.c.b16 %v2386, %v2378
        %v2675 = vpack.c.b16 %v2387, %v2379
        %v2676 = vpack.c.b16 %v2388, %v2380
        %v2677 = vpack.c.b16 %v2389, %v2381
        %v2678 = vpack.c.b16 %v2390, %v2382
        %v2679 = vpack.c.b16 %v2391, %v2383
        %v2680 = vpack.c.b16 %v2392, %v2384
        %v2681 = vpack.c.b16 %v2401, %v2393
        %v2682 = vpack.c.b16 %v2402, %v2394
        %v2683 = vpack.c.b16 %v2403, %v2395
        %v2684 = vpack.c.b16 %v2404, %v2396
        %v2685 = vpack.c.b16 %v2405, %v2397
        %v2686 = vpack.c.b16 %v2406, %v2398
        %v2687 = vpack.c.b16 %v2407, %v2399
        %v2688 = vpack.c.b16 %v2408, %v2400
        %v2689 = vpack.c.b16 %v2417, %v2409
        %v2690 = vpack.c.b16 %v2418, %v2410
        %v2691 = vpack.c.b16 %v2419, %v2411
        %v2692 = vpack.c.b16 %v2420, %v2412
        %v2693 = vpack.c.b16 %v2421, %v2413
        %v2694 = vpack.c.b16 %v2422, %v2414
        %v2695 = vpack.c.b16 %v2423, %v2415
        %v2696 = vpack.c.b16 %v2424, %v2416
        %v2697 = vpack.c.b16 %v2433, %v2425
        %v2698 = vpack.c.b16 %v2434, %v2426
        %v2699 = vpack.c.b16 %v2435, %v2427
        %v2700 = vpack.c.b16 %v2436, %v2428
        %v2701 = vpack.c.b16 %v2437, %v2429
        %v2702 = vpack.c.b16 %v2438, %v2430
        %v2703 = vpack.c.b16 %v2439, %v2431
        %v2704 = vpack.c.b16 %v2440, %v2432
        %v2705 = vpack.c.b16 %v2449, %v2441
        %v2706 = vpack.c.b16 %v2450, %v2442
        %v2707 = vpack.c.b16 %v2451, %v2443
        %v2708 = vpack.c.b16 %v2452, %v2444
        %v2709 = vpack.c.b16 %v2453, %v2445
        %v2710 = vpack.c.b16 %v2454, %v2446
        %v2711 = vpack.c.b16 %v2455, %v2447
        %v2712 = vpack.c.b16 %v2456, %v2448
        %2969 = vmatprep.subr.bf16.mxu0 %v2458
        %2970 = vmatpush1.bf16.msra.mxu0 %v2457
        %2971 = vmatprep.subr.bf16.mxu0 %v2466
        %2972 = vmatpush1.bf16.msra.mxu0 %v2465
        %2973 = vmatprep.subr.bf16.mxu0 %v2474
        %2974 = vmatpush1.bf16.msra.mxu0 %v2473
        %2975 = vmatprep.subr.bf16.mxu0 %v2482
        %2976 = vmatpush1.bf16.msra.mxu0 %v2481
        %2977 = vmatprep.subr.bf16.mxu0 %v2490
        %2978 = vmatpush1.bf16.msra.mxu0 %v2489
        %2979 = vmatprep.subr.bf16.mxu0 %v2498
        %2980 = vmatpush1.bf16.msra.mxu0 %v2497
        %2981 = vmatprep.subr.bf16.mxu0 %v2506
        %2982 = vmatpush1.bf16.msra.mxu0 %v2505
        %2983 = vmatprep.subr.bf16.mxu0 %v2514
        %2984 = vmatpush1.bf16.msra.mxu0 %v2513
        %2985 = vmatprep.subr.bf16.mxu0 %v2522
        %2986 = vmatpush1.bf16.msra.mxu0 %v2521
        %2987 = vmatprep.subr.bf16.mxu0 %v2530
        %2988 = vmatpush1.bf16.msra.mxu0 %v2529
        %2989 = vmatprep.subr.bf16.mxu0 %v2538
        %2990 = vmatpush1.bf16.msra.mxu0 %v2537
        %2991 = vmatprep.subr.bf16.mxu0 %v2546
        %2992 = vmatpush1.bf16.msra.mxu0 %v2545
        %2993 = vmatprep.subr.bf16.mxu0 %v2554
        %2994 = vmatpush1.bf16.msra.mxu0 %v2553
        %2995 = vmatprep.subr.bf16.mxu0 %v2562
        %2996 = vmatpush1.bf16.msra.mxu0 %v2561
        %2997 = vmatprep.subr.bf16.mxu0 %v2570
        %2998 = vmatpush1.bf16.msra.mxu0 %v2569
        %2999 = vmatprep.subr.bf16.mxu0 %v2578
        %3000 = vmatpush1.bf16.msra.mxu0 %v2577
        %3001 = vmatprep.mubr.bf16.mxu0 %v1385
        %3002 = vmatmul.mubr.bf16.gmra.mrb[0].mxu0 %v1384
        %v3003 = vpop.f32.mrb[0].mxu0
        %v3004 = vadd.f32 %v1652, %v3003
        %v3005 = vpop.f32.mrb[0].mxu0
        %v3006 = vadd.f32 %v1656, %v3005
        %v3007 = vpop.f32.mrb[0].mxu0
        %v3008 = vadd.f32 %v1652, %v3007
        %v3009 = vpop.f32.mrb[0].mxu0
        %v3010 = vadd.f32 %v1656, %v3009
        %3011 = vmatprep.mubr.bf16.mxu0 %v1389
        %3012 = vmatmul.mubr.bf16.gmra.mrb[0].mxu0 %v1388
        %v3013 = vpop.f32.mrb[0].mxu0
        %v3014 = vadd.f32 %v1652, %v3013
        %v3015 = vpop.f32.mrb[0].mxu0
        %v3016 = vadd.f32 %v1656, %v3015
        %v3017 = vpop.f32.mrb[0].mxu0
        %v3018 = vadd.f32 %v1652, %v3017
        %v3019 = vpop.f32.mrb[0].mxu0
        %v3020 = vadd.f32 %v1656, %v3019
        %3021 = vdwg.mxu0
        %3022 = vmatprep.subr.bf16.mxu0 %v2586
        %3023 = vmatpush1.bf16.msra.mxu0 %v2585
        %3024 = vmatprep.subr.bf16.mxu0 %v2594
        %3025 = vmatpush1.bf16.msra.mxu0 %v2593
        %3026 = vmatprep.subr.bf16.mxu0 %v2602
        %3027 = vmatpush1.bf16.msra.mxu0 %v2601
        %3028 = vmatprep.subr.bf16.mxu0 %v2610
        %3029 = vmatpush1.bf16.msra.mxu0 %v2609
        %3030 = vmatprep.subr.bf16.mxu0 %v2618
        %3031 = vmatpush1.bf16.msra.mxu0 %v2617
        %3032 = vmatprep.subr.bf16.mxu0 %v2626
        %3033 = vmatpush1.bf16.msra.mxu0 %v2625
        %3034 = vmatprep.subr.bf16.mxu0 %v2634
        %3035 = vmatpush1.bf16.msra.mxu0 %v2633
        %3036 = vmatprep.subr.bf16.mxu0 %v2642
        %3037 = vmatpush1.bf16.msra.mxu0 %v2641
        %3038 = vmatprep.subr.bf16.mxu0 %v2650
        %3039 = vmatpush1.bf16.msra.mxu0 %v2649
        %3040 = vmatprep.subr.bf16.mxu0 %v2658
        %3041 = vmatpush1.bf16.msra.mxu0 %v2657
        %3042 = vmatprep.subr.bf16.mxu0 %v2666
        %3043 = vmatpush1.bf16.msra.mxu0 %v2665
        %3044 = vmatprep.subr.bf16.mxu0 %v2674
        %3045 = vmatpush1.bf16.msra.mxu0 %v2673
        %3046 = vmatprep.subr.bf16.mxu0 %v2682
        %3047 = vmatpush1.bf16.msra.mxu0 %v2681
        %3048 = vmatprep.subr.bf16.mxu0 %v2690
        %3049 = vmatpush1.bf16.msra.mxu0 %v2689
        %3050 = vmatprep.subr.bf16.mxu0 %v2698
        %3051 = vmatpush1.bf16.msra.mxu0 %v2697
        %3052 = vmatprep.subr.bf16.mxu0 %v2706
        %3053 = vmatpush1.bf16.msra.mxu0 %v2705
        %3054 = vmatprep.mubr.bf16.mxu0 %v1387
        %3055 = vmatmul.mubr.bf16.gmra.mrb[0].mxu0 %v1386
        %v3056 = vpop.f32.mrb[0].mxu0
        %v3057 = vadd.f32 %v3004, %v3056
        %v3058 = vpop.f32.mrb[0].mxu0
        %v3059 = vadd.f32 %v3006, %v3058
        %v3060 = vpop.f32.mrb[0].mxu0
        %v3061 = vadd.f32 %v3008, %v3060
        %v3062 = vpop.f32.mrb[0].mxu0
        %v3063 = vadd.f32 %v3010, %v3062
        %3064 = vmatprep.mubr.bf16.mxu0 %v1391
        %3065 = vmatmul.mubr.bf16.gmra.mrb[0].mxu0 %v1390
        %v3066 = vpop.f32.mrb[0].mxu0
        %v3067 = vadd.f32 %v3014, %v3066
        %v3068 = vpop.f32.mrb[0].mxu0
        %v3069 = vadd.f32 %v3016, %v3068
        %v3070 = vpop.f32.mrb[0].mxu0
        %v3071 = vadd.f32 %v3018, %v3070
        %v3072 = vpop.f32.mrb[0].mxu0
        %v3073 = vadd.f32 %v3020, %v3072
        %3074 = vdwg.mxu0
        %3075 = vmatprep.subr.bf16.mxu0 %v2460
        %3076 = vmatpush1.bf16.msra.mxu0 %v2459
        %3077 = vmatprep.subr.bf16.mxu0 %v2468
        %3078 = vmatpush1.bf16.msra.mxu0 %v2467
        %3079 = vmatprep.subr.bf16.mxu0 %v2476
        %3080 = vmatpush1.bf16.msra.mxu0 %v2475
        %3081 = vmatprep.subr.bf16.mxu0 %v2484
        %3082 = vmatpush1.bf16.msra.mxu0 %v2483
        %3083 = vmatprep.subr.bf16.mxu0 %v2492
        %3084 = vmatpush1.bf16.msra.mxu0 %v2491
        %3085 = vmatprep.subr.bf16.mxu0 %v2500
        %3086 = vmatpush1.bf16.msra.mxu0 %v2499
        %3087 = vmatprep.subr.bf16.mxu0 %v2508
        %3088 = vmatpush1.bf16.msra.mxu0 %v2507
        %3089 = vmatprep.subr.bf16.mxu0 %v2516
        %3090 = vmatpush1.bf16.msra.mxu0 %v2515
        %3091 = vmatprep.subr.bf16.mxu0 %v2524
        %3092 = vmatpush1.bf16.msra.mxu0 %v2523
        %3093 = vmatprep.subr.bf16.mxu0 %v2532
        %3094 = vmatpush1.bf16.msra.mxu0 %v2531
        %3095 = vmatprep.subr.bf16.mxu0 %v2540
        %3096 = vmatpush1.bf16.msra.mxu0 %v2539
        %3097 = vmatprep.subr.bf16.mxu0 %v2548
        %3098 = vmatpush1.bf16.msra.mxu0 %v2547
        %3099 = vmatprep.subr.bf16.mxu0 %v2556
        %3100 = vmatpush1.bf16.msra.mxu0 %v2555
        %3101 = vmatprep.subr.bf16.mxu0 %v2564
        %3102 = vmatpush1.bf16.msra.mxu0 %v2563
        %3103 = vmatprep.subr.bf16.mxu0 %v2572
        %3104 = vmatpush1.bf16.msra.mxu0 %v2571
        %3105 = vmatprep.subr.bf16.mxu0 %v2580
        %3106 = vmatpush1.bf16.msra.mxu0 %v2579
        %3107 = vmatprep.mubr.bf16.mxu0 %v1385
        %3108 = vmatmul.mubr.bf16.gmra.mrb[0].mxu0 %v1384
        %v3109 = vpop.f32.mrb[0].mxu0
        %v3110 = vadd.f32 %v1660, %v3109
        %v3111 = vpop.f32.mrb[0].mxu0
        %v3112 = vadd.f32 %v1664, %v3111
        %v3113 = vpop.f32.mrb[0].mxu0
        %v3114 = vadd.f32 %v1660, %v3113
        %v3115 = vpop.f32.mrb[0].mxu0
        %v3116 = vadd.f32 %v1664, %v3115
        %3117 = vmatprep.mubr.bf16.mxu0 %v1389
        %3118 = vmatmul.mubr.bf16.gmra.mrb[0].mxu0 %v1388
        %v3119 = vpop.f32.mrb[0].mxu0
        %v3120 = vadd.f32 %v1660, %v3119
        %v3121 = vpop.f32.mrb[0].mxu0
        %v3122 = vadd.f32 %v1664, %v3121
        %v3123 = vpop.f32.mrb[0].mxu0
        %v3124 = vadd.f32 %v1660, %v3123
        %v3125 = vpop.f32.mrb[0].mxu0
        %v3126 = vadd.f32 %v1664, %v3125
        %3127 = vdwg.mxu0
        %3128 = vmatprep.subr.bf16.mxu0 %v2588
        %3129 = vmatpush1.bf16.msra.mxu0 %v2587
        %3130 = vmatprep.subr.bf16.mxu0 %v2596
        %3131 = vmatpush1.bf16.msra.mxu0 %v2595
        %3132 = vmatprep.subr.bf16.mxu0 %v2604
        %3133 = vmatpush1.bf16.msra.mxu0 %v2603
        %3134 = vmatprep.subr.bf16.mxu0 %v2612
        %3135 = vmatpush1.bf16.msra.mxu0 %v2611
        %3136 = vmatprep.subr.bf16.mxu0 %v2620
        %3137 = vmatpush1.bf16.msra.mxu0 %v2619
        %3138 = vmatprep.subr.bf16.mxu0 %v2628
        %3139 = vmatpush1.bf16.msra.mxu0 %v2627
        %3140 = vmatprep.subr.bf16.mxu0 %v2636
        %3141 = vmatpush1.bf16.msra.mxu0 %v2635
        %3142 = vmatprep.subr.bf16.mxu0 %v2644
        %3143 = vmatpush1.bf16.msra.mxu0 %v2643
        %3144 = vmatprep.subr.bf16.mxu0 %v2652
        %3145 = vmatpush1.bf16.msra.mxu0 %v2651
        %3146 = vmatprep.subr.bf16.mxu0 %v2660
        %3147 = vmatpush1.bf16.msra.mxu0 %v2659
        %3148 = vmatprep.subr.bf16.mxu0 %v2668
        %3149 = vmatpush1.bf16.msra.mxu0 %v2667
        %3150 = vmatprep.subr.bf16.mxu0 %v2676
        %3151 = vmatpush1.bf16.msra.mxu0 %v2675
        %3152 = vmatprep.subr.bf16.mxu0 %v2684
        %3153 = vmatpush1.bf16.msra.mxu0 %v2683
        %3154 = vmatprep.subr.bf16.mxu0 %v2692
        %3155 = vmatpush1.bf16.msra.mxu0 %v2691
        %3156 = vmatprep.subr.bf16.mxu0 %v2700
        %3157 = vmatpush1.bf16.msra.mxu0 %v2699
        %3158 = vmatprep.subr.bf16.mxu0 %v2708
        %3159 = vmatpush1.bf16.msra.mxu0 %v2707
        %3160 = vmatprep.mubr.bf16.mxu0 %v1387
        %3161 = vmatmul.mubr.bf16.gmra.mrb[0].mxu0 %v1386
        %v3162 = vpop.f32.mrb[0].mxu0
        %v3163 = vadd.f32 %v3110, %v3162
        %v3164 = vpop.f32.mrb[0].mxu0
        %v3165 = vadd.f32 %v3112, %v3164
        %v3166 = vpop.f32.mrb[0].mxu0
        %v3167 = vadd.f32 %v3114, %v3166
        %v3168 = vpop.f32.mrb[0].mxu0
        %v3169 = vadd.f32 %v3116, %v3168
        %3170 = vmatprep.mubr.bf16.mxu0 %v1391
        %3171 = vmatmul.mubr.bf16.gmra.mrb[0].mxu0 %v1390
        %v3172 = vpop.f32.mrb[0].mxu0
        %v3173 = vadd.f32 %v3120, %v3172
        %v3174 = vpop.f32.mrb[0].mxu0
        %v3175 = vadd.f32 %v3122, %v3174
        %v3176 = vpop.f32.mrb[0].mxu0
        %v3177 = vadd.f32 %v3124, %v3176
        %v3178 = vpop.f32.mrb[0].mxu0
        %v3179 = vadd.f32 %v3126, %v3178
        %3180 = vdwg.mxu0
        %3181 = vmatprep.subr.bf16.mxu0 %v2462
        %3182 = vmatpush1.bf16.msra.mxu0 %v2461
        %3183 = vmatprep.subr.bf16.mxu0 %v2470
        %3184 = vmatpush1.bf16.msra.mxu0 %v2469
        %3185 = vmatprep.subr.bf16.mxu0 %v2478
        %3186 = vmatpush1.bf16.msra.mxu0 %v2477
        %3187 = vmatprep.subr.bf16.mxu0 %v2486
        %3188 = vmatpush1.bf16.msra.mxu0 %v2485
        %3189 = vmatprep.subr.bf16.mxu0 %v2494
        %3190 = vmatpush1.bf16.msra.mxu0 %v2493
        %3191 = vmatprep.subr.bf16.mxu0 %v2502
        %3192 = vmatpush1.bf16.msra.mxu0 %v2501
        %3193 = vmatprep.subr.bf16.mxu0 %v2510
        %3194 = vmatpush1.bf16.msra.mxu0 %v2509
        %3195 = vmatprep.subr.bf16.mxu0 %v2518
        %3196 = vmatpush1.bf16.msra.mxu0 %v2517
        %3197 = vmatprep.subr.bf16.mxu0 %v2526
        %3198 = vmatpush1.bf16.msra.mxu0 %v2525
        %3199 = vmatprep.subr.bf16.mxu0 %v2534
        %3200 = vmatpush1.bf16.msra.mxu0 %v2533
        %3201 = vmatprep.subr.bf16.mxu0 %v2542
        %3202 = vmatpush1.bf16.msra.mxu0 %v2541
        %3203 = vmatprep.subr.bf16.mxu0 %v2550
        %3204 = vmatpush1.bf16.msra.mxu0 %v2549
        %3205 = vmatprep.subr.bf16.mxu0 %v2558
        %3206 = vmatpush1.bf16.msra.mxu0 %v2557
        %3207 = vmatprep.subr.bf16.mxu0 %v2566
        %3208 = vmatpush1.bf16.msra.mxu0 %v2565
        %3209 = vmatprep.subr.bf16.mxu0 %v2574
        %3210 = vmatpush1.bf16.msra.mxu0 %v2573
        %3211 = vmatprep.subr.bf16.mxu0 %v2582
        %3212 = vmatpush1.bf16.msra.mxu0 %v2581
        %3213 = vmatprep.mubr.bf16.mxu0 %v1385
        %3214 = vmatmul.mubr.bf16.gmra.mrb[0].mxu0 %v1384
        %v3215 = vpop.f32.mrb[0].mxu0
        %v3216 = vadd.f32 %v1668, %v3215
        %v3217 = vpop.f32.mrb[0].mxu0
        %v3218 = vadd.f32 %v1672, %v3217
        %v3219 = vpop.f32.mrb[0].mxu0
        %v3220 = vadd.f32 %v1668, %v3219
        %v3221 = vpop.f32.mrb[0].mxu0
        %v3222 = vadd.f32 %v1672, %v3221
        %3223 = vmatprep.mubr.bf16.mxu0 %v1389
        %3224 = vmatmul.mubr.bf16.gmra.mrb[0].mxu0 %v1388
        %v3225 = vpop.f32.mrb[0].mxu0
        %v3226 = vadd.f32 %v1668, %v3225
        %v3227 = vpop.f32.mrb[0].mxu0
        %v3228 = vadd.f32 %v1672, %v3227
        %v3229 = vpop.f32.mrb[0].mxu0
        %v3230 = vadd.f32 %v1668, %v3229
        %v3231 = vpop.f32.mrb[0].mxu0
        %v3232 = vadd.f32 %v1672, %v3231
        %3233 = vdwg.mxu0
        %3234 = vmatprep.subr.bf16.mxu0 %v2590
        %3235 = vmatpush1.bf16.msra.mxu0 %v2589
        %3236 = vmatprep.subr.bf16.mxu0 %v2598
        %3237 = vmatpush1.bf16.msra.mxu0 %v2597
        %3238 = vmatprep.subr.bf16.mxu0 %v2606
        %3239 = vmatpush1.bf16.msra.mxu0 %v2605
        %3240 = vmatprep.subr.bf16.mxu0 %v2614
        %3241 = vmatpush1.bf16.msra.mxu0 %v2613
        %3242 = vmatprep.subr.bf16.mxu0 %v2622
        %3243 = vmatpush1.bf16.msra.mxu0 %v2621
        %3244 = vmatprep.subr.bf16.mxu0 %v2630
        %3245 = vmatpush1.bf16.msra.mxu0 %v2629
        %3246 = vmatprep.subr.bf16.mxu0 %v2638
        %3247 = vmatpush1.bf16.msra.mxu0 %v2637
        %3248 = vmatprep.subr.bf16.mxu0 %v2646
        %3249 = vmatpush1.bf16.msra.mxu0 %v2645
        %3250 = vmatprep.subr.bf16.mxu0 %v2654
        %3251 = vmatpush1.bf16.msra.mxu0 %v2653
        %3252 = vmatprep.subr.bf16.mxu0 %v2662
        %3253 = vmatpush1.bf16.msra.mxu0 %v2661
        %3254 = vmatprep.subr.bf16.mxu0 %v2670
        %3255 = vmatpush1.bf16.msra.mxu0 %v2669
        %3256 = vmatprep.subr.bf16.mxu0 %v2678
        %3257 = vmatpush1.bf16.msra.mxu0 %v2677
        %3258 = vmatprep.subr.bf16.mxu0 %v2686
        %3259 = vmatpush1.bf16.msra.mxu0 %v2685
        %3260 = vmatprep.subr.bf16.mxu0 %v2694
        %3261 = vmatpush1.bf16.msra.mxu0 %v2693
        %3262 = vmatprep.subr.bf16.mxu0 %v2702
        %3263 = vmatpush1.bf16.msra.mxu0 %v2701
        %3264 = vmatprep.subr.bf16.mxu0 %v2710
        %3265 = vmatpush1.bf16.msra.mxu0 %v2709
        %3266 = vmatprep.mubr.bf16.mxu0 %v1387
        %3267 = vmatmul.mubr.bf16.gmra.mrb[0].mxu0 %v1386
        %v3268 = vpop.f32.mrb[0].mxu0
        %v3269 = vadd.f32 %v3216, %v3268
        %v3270 = vpop.f32.mrb[0].mxu0
        %v3271 = vadd.f32 %v3218, %v3270
        %v3272 = vpop.f32.mrb[0].mxu0
        %v3273 = vadd.f32 %v3220, %v3272
        %v3274 = vpop.f32.mrb[0].mxu0
        %v3275 = vadd.f32 %v3222, %v3274
        %3276 = vmatprep.mubr.bf16.mxu0 %v1391
        %3277 = vmatmul.mubr.bf16.gmra.mrb[0].mxu0 %v1390
        %v3278 = vpop.f32.mrb[0].mxu0
        %v3279 = vadd.f32 %v3226, %v3278
        %v3280 = vpop.f32.mrb[0].mxu0
        %v3281 = vadd.f32 %v3228, %v3280
        %v3282 = vpop.f32.mrb[0].mxu0
        %v3283 = vadd.f32 %v3230, %v3282
        %v3284 = vpop.f32.mrb[0].mxu0
        %v3285 = vadd.f32 %v3232, %v3284
        %3286 = vdwg.mxu0
        %3287 = vmatprep.subr.bf16.mxu0 %v2464
        %3288 = vmatpush1.bf16.msra.mxu0 %v2463
        %3289 = vmatprep.subr.bf16.mxu0 %v2472
        %3290 = vmatpush1.bf16.msra.mxu0 %v2471
        %3291 = vmatprep.subr.bf16.mxu0 %v2480
        %3292 = vmatpush1.bf16.msra.mxu0 %v2479
        %3293 = vmatprep.subr.bf16.mxu0 %v2488
        %3294 = vmatpush1.bf16.msra.mxu0 %v2487
        %3295 = vmatprep.subr.bf16.mxu0 %v2496
        %3296 = vmatpush1.bf16.msra.mxu0 %v2495
        %3297 = vmatprep.subr.bf16.mxu0 %v2504
        %3298 = vmatpush1.bf16.msra.mxu0 %v2503
        %3299 = vmatprep.subr.bf16.mxu0 %v2512
        %3300 = vmatpush1.bf16.msra.mxu0 %v2511
        %3301 = vmatprep.subr.bf16.mxu0 %v2520
        %3302 = vmatpush1.bf16.msra.mxu0 %v2519
        %3303 = vmatprep.subr.bf16.mxu0 %v2528
        %3304 = vmatpush1.bf16.msra.mxu0 %v2527
        %3305 = vmatprep.subr.bf16.mxu0 %v2536
        %3306 = vmatpush1.bf16.msra.mxu0 %v2535
        %3307 = vmatprep.subr.bf16.mxu0 %v2544
        %3308 = vmatpush1.bf16.msra.mxu0 %v2543
        %3309 = vmatprep.subr.bf16.mxu0 %v2552
        %3310 = vmatpush1.bf16.msra.mxu0 %v2551
        %3311 = vmatprep.subr.bf16.mxu0 %v2560
        %3312 = vmatpush1.bf16.msra.mxu0 %v2559
        %3313 = vmatprep.subr.bf16.mxu0 %v2568
        %3314 = vmatpush1.bf16.msra.mxu0 %v2567
        %3315 = vmatprep.subr.bf16.mxu0 %v2576
        %3316 = vmatpush1.bf16.msra.mxu0 %v2575
        %3317 = vmatprep.subr.bf16.mxu0 %v2584
        %3318 = vmatpush1.bf16.msra.mxu0 %v2583
        %3319 = vmatprep.mubr.bf16.mxu0 %v1385
        %3320 = vmatmul.mubr.bf16.gmra.mrb[0].mxu0 %v1384
        %v3321 = vpop.f32.mrb[0].mxu0
        %v3322 = vadd.f32 %v1676, %v3321
        %v3323 = vpop.f32.mrb[0].mxu0
        %v3324 = vadd.f32 %v1680, %v3323
        %v3325 = vpop.f32.mrb[0].mxu0
        %v3326 = vadd.f32 %v1676, %v3325
        %v3327 = vpop.f32.mrb[0].mxu0
        %v3328 = vadd.f32 %v1680, %v3327
        %3329 = vmatprep.mubr.bf16.mxu0 %v1389
        %3330 = vmatmul.mubr.bf16.gmra.mrb[0].mxu0 %v1388
        %v3331 = vpop.f32.mrb[0].mxu0
        %v3332 = vadd.f32 %v1676, %v3331
        %v3333 = vpop.f32.mrb[0].mxu0
        %v3334 = vadd.f32 %v1680, %v3333
        %v3335 = vpop.f32.mrb[0].mxu0
        %v3336 = vadd.f32 %v1676, %v3335
        %v3337 = vpop.f32.mrb[0].mxu0
        %v3338 = vadd.f32 %v1680, %v3337
        %3339 = vdwg.mxu0
        %3340 = vmatprep.subr.bf16.mxu0 %v2592
        %3341 = vmatpush1.bf16.msra.mxu0 %v2591
        %3342 = vmatprep.subr.bf16.mxu0 %v2600
        %3343 = vmatpush1.bf16.msra.mxu0 %v2599
        %3344 = vmatprep.subr.bf16.mxu0 %v2608
        %3345 = vmatpush1.bf16.msra.mxu0 %v2607
        %3346 = vmatprep.subr.bf16.mxu0 %v2616
        %3347 = vmatpush1.bf16.msra.mxu0 %v2615
        %3348 = vmatprep.subr.bf16.mxu0 %v2624
        %3349 = vmatpush1.bf16.msra.mxu0 %v2623
        %3350 = vmatprep.subr.bf16.mxu0 %v2632
        %3351 = vmatpush1.bf16.msra.mxu0 %v2631
        %3352 = vmatprep.subr.bf16.mxu0 %v2640
        %3353 = vmatpush1.bf16.msra.mxu0 %v2639
        %3354 = vmatprep.subr.bf16.mxu0 %v2648
        %3355 = vmatpush1.bf16.msra.mxu0 %v2647
        %3356 = vmatprep.subr.bf16.mxu0 %v2656
        %3357 = vmatpush1.bf16.msra.mxu0 %v2655
        %3358 = vmatprep.subr.bf16.mxu0 %v2664
        %3359 = vmatpush1.bf16.msra.mxu0 %v2663
        %3360 = vmatprep.subr.bf16.mxu0 %v2672
        %3361 = vmatpush1.bf16.msra.mxu0 %v2671
        %3362 = vmatprep.subr.bf16.mxu0 %v2680
        %3363 = vmatpush1.bf16.msra.mxu0 %v2679
        %3364 = vmatprep.subr.bf16.mxu0 %v2688
        %3365 = vmatpush1.bf16.msra.mxu0 %v2687
        %3366 = vmatprep.subr.bf16.mxu0 %v2696
        %3367 = vmatpush1.bf16.msra.mxu0 %v2695
        %3368 = vmatprep.subr.bf16.mxu0 %v2704
        %3369 = vmatpush1.bf16.msra.mxu0 %v2703
        %3370 = vmatprep.subr.bf16.mxu0 %v2712
        %3371 = vmatpush1.bf16.msra.mxu0 %v2711
        %3372 = vmatprep.mubr.bf16.mxu0 %v1387
        %3373 = vmatmul.mubr.bf16.gmra.mrb[0].mxu0 %v1386
        %v3374 = vpop.f32.mrb[0].mxu0
        %v3375 = vadd.f32 %v3322, %v3374
        %v3376 = vpop.f32.mrb[0].mxu0
        %v3377 = vadd.f32 %v3324, %v3376
        %v3378 = vpop.f32.mrb[0].mxu0
        %v3379 = vadd.f32 %v3326, %v3378
        %v3380 = vpop.f32.mrb[0].mxu0
        %v3381 = vadd.f32 %v3328, %v3380
        %3382 = vmatprep.mubr.bf16.mxu0 %v1391
        %3383 = vmatmul.mubr.bf16.gmra.mrb[0].mxu0 %v1390
        %v3384 = vpop.f32.mrb[0].mxu0
        %v3385 = vadd.f32 %v3332, %v3384
        %v3386 = vpop.f32.mrb[0].mxu0
        %v3387 = vadd.f32 %v3334, %v3386
        %v3388 = vpop.f32.mrb[0].mxu0
        %v3389 = vadd.f32 %v3336, %v3388
        %v3390 = vpop.f32.mrb[0].mxu0
        %v3391 = vadd.f32 %v3338, %v3390
        %3392 = vdwg.mxu0
        %v3393 = vadd.f32 %v3057, %v3061
        %v3394 = vadd.f32 %v3393, %v3067
        %v3395 = vadd.f32 %v3394, %v3071
        %v3396 = vrot.slane %v3395, 4
        %v3397 = vadd.f32 %v3395, %v3396
        %v3398 = vrot.slane %v3397, 2
        %v3399 = vadd.f32 %v3397, %v3398
        %v3400 = vrot.slane %v3399, 1
        %v3401 = vadd.f32 %v3399, %v3400
        %v3402 = vadd.f32 %v3059, %v3063
        %v3403 = vadd.f32 %v3402, %v3069
        %v3404 = vadd.f32 %v3403, %v3073
        %v3405 = vrot.slane %v3404, 4
        %v3406 = vadd.f32 %v3404, %v3405
        %v3407 = vrot.slane %v3406, 2
        %v3408 = vadd.f32 %v3406, %v3407
        %v3409 = vrot.slane %v3408, 1
        %v3410 = vadd.f32 %v3408, %v3409
        %v3411 = vadd.f32 %v3163, %v3167
        %v3412 = vadd.f32 %v3411, %v3173
        %v3413 = vadd.f32 %v3412, %v3177
        %v3414 = vrot.slane %v3413, 4
        %v3415 = vadd.f32 %v3413, %v3414
        %v3416 = vrot.slane %v3415, 2
        %v3417 = vadd.f32 %v3415, %v3416
        %v3418 = vrot.slane %v3417, 1
        %v3419 = vadd.f32 %v3417, %v3418
        %v3420 = vadd.f32 %v3165, %v3169
        %v3421 = vadd.f32 %v3420, %v3175
        %v3422 = vadd.f32 %v3421, %v3179
        %v3423 = vrot.slane %v3422, 4
        %v3424 = vadd.f32 %v3422, %v3423
        %v3425 = vrot.slane %v3424, 2
        %v3426 = vadd.f32 %v3424, %v3425
        %v3427 = vrot.slane %v3426, 1
        %v3428 = vadd.f32 %v3426, %v3427
        %v3429 = vadd.f32 %v3269, %v3273
        %v3430 = vadd.f32 %v3429, %v3279
        %v3431 = vadd.f32 %v3430, %v3283
        %v3432 = vrot.slane %v3431, 4
        %v3433 = vadd.f32 %v3431, %v3432
        %v3434 = vrot.slane %v3433, 2
        %v3435 = vadd.f32 %v3433, %v3434
        %v3436 = vrot.slane %v3435, 1
        %v3437 = vadd.f32 %v3435, %v3436
        %v3438 = vadd.f32 %v3271, %v3275
        %v3439 = vadd.f32 %v3438, %v3281
        %v3440 = vadd.f32 %v3439, %v3285
        %v3441 = vrot.slane %v3440, 4
        %v3442 = vadd.f32 %v3440, %v3441
        %v3443 = vrot.slane %v3442, 2
        %v3444 = vadd.f32 %v3442, %v3443
        %v3445 = vrot.slane %v3444, 1
        %v3446 = vadd.f32 %v3444, %v3445
        %v3447 = vadd.f32 %v3375, %v3379
        %v3448 = vadd.f32 %v3447, %v3385
        %v3449 = vadd.f32 %v3448, %v3389
        %v3450 = vrot.slane %v3449, 4
        %v3451 = vadd.f32 %v3449, %v3450
        %v3452 = vrot.slane %v3451, 2
        %v3453 = vadd.f32 %v3451, %v3452
        %v3454 = vrot.slane %v3453, 1
        %v3455 = vadd.f32 %v3453, %v3454
        %v3456 = vadd.f32 %v3377, %v3381
        %v3457 = vadd.f32 %v3456, %v3387
        %v3458 = vadd.f32 %v3457, %v3391
        %v3459 = vrot.slane %v3458, 4
        %v3460 = vadd.f32 %v3458, %v3459
        %v3461 = vrot.slane %v3460, 2
        %v3462 = vadd.f32 %v3460, %v3461
        %v3463 = vrot.slane %v3462, 1
        %v3464 = vadd.f32 %v3462, %v3463
        %v3465 = vmul.f32 %v3401, 0.03125
        %v3466 = vmul.f32 %v3410, 0.03125
        %v3467 = vmul.f32 %v3419, 0.03125
        %v3468 = vmul.f32 %v3428, 0.03125
        %v3469 = vmul.f32 %v3437, 0.03125
        %v3470 = vmul.f32 %v3446, 0.03125
        %v3471 = vmul.f32 %v3455, 0.03125
        %v3472 = vmul.f32 %v3464, 0.03125
        %v3473 = vsub.f32 %v3057, %v3465
        %v3474 = vsub.f32 %v3059, %v3466
        %v3475 = vsub.f32 %v3163, %v3467
        %v3476 = vsub.f32 %v3165, %v3468
        %v3477 = vsub.f32 %v3269, %v3469
        %v3478 = vsub.f32 %v3271, %v3470
        %v3479 = vsub.f32 %v3375, %v3471
        %v3480 = vsub.f32 %v3377, %v3472
        %v3481 = vsub.f32 %v3061, %v3465
        %v3482 = vsub.f32 %v3063, %v3466
        %v3483 = vsub.f32 %v3167, %v3467
        %v3484 = vsub.f32 %v3169, %v3468
        %v3485 = vsub.f32 %v3273, %v3469
        %v3486 = vsub.f32 %v3275, %v3470
        %v3487 = vsub.f32 %v3379, %v3471
        %v3488 = vsub.f32 %v3381, %v3472
        %v3489 = vsub.f32 %v3067, %v3465
        %v3490 = vsub.f32 %v3069, %v3466
        %v3491 = vsub.f32 %v3173, %v3467
        %v3492 = vsub.f32 %v3175, %v3468
        %v3493 = vsub.f32 %v3279, %v3469
        %v3494 = vsub.f32 %v3281, %v3470
        %v3495 = vsub.f32 %v3385, %v3471
        %v3496 = vsub.f32 %v3387, %v3472
        %v3497 = vsub.f32 %v3071, %v3465
        %v3498 = vsub.f32 %v3073, %v3466
        %v3499 = vsub.f32 %v3177, %v3467
        %v3500 = vsub.f32 %v3179, %v3468
        %v3501 = vsub.f32 %v3283, %v3469
        %v3502 = vsub.f32 %v3285, %v3470
        %v3503 = vsub.f32 %v3389, %v3471
        %v3504 = vsub.f32 %v3391, %v3472
        %v3505 = vmul.f32 %v3473, %v3473
        %v3506 = vmul.f32 %v3474, %v3474
        %v3507 = vmul.f32 %v3475, %v3475
        %v3508 = vmul.f32 %v3476, %v3476
        %v3509 = vmul.f32 %v3477, %v3477
        %v3510 = vmul.f32 %v3478, %v3478
        %v3511 = vmul.f32 %v3479, %v3479
        %v3512 = vmul.f32 %v3480, %v3480
        %v3513 = vmul.f32 %v3481, %v3481
        %v3514 = vmul.f32 %v3482, %v3482
        %v3515 = vmul.f32 %v3483, %v3483
        %v3516 = vmul.f32 %v3484, %v3484
        %v3517 = vmul.f32 %v3485, %v3485
        %v3518 = vmul.f32 %v3486, %v3486
        %v3519 = vmul.f32 %v3487, %v3487
        %v3520 = vmul.f32 %v3488, %v3488
        %v3521 = vmul.f32 %v3489, %v3489
        %v3522 = vmul.f32 %v3490, %v3490
        %v3523 = vmul.f32 %v3491, %v3491
        %v3524 = vmul.f32 %v3492, %v3492
        %v3525 = vmul.f32 %v3493, %v3493
        %v3526 = vmul.f32 %v3494, %v3494
        %v3527 = vmul.f32 %v3495, %v3495
        %v3528 = vmul.f32 %v3496, %v3496
        %v3529 = vmul.f32 %v3497, %v3497
        %v3530 = vmul.f32 %v3498, %v3498
        %v3531 = vmul.f32 %v3499, %v3499
        %v3532 = vmul.f32 %v3500, %v3500
        %v3533 = vmul.f32 %v3501, %v3501
        %v3534 = vmul.f32 %v3502, %v3502
        %v3535 = vmul.f32 %v3503, %v3503
        %v3536 = vmul.f32 %v3504, %v3504
        %v3537 = vadd.f32 %v3505, %v3513
        %v3538 = vadd.f32 %v3537, %v3521
        %v3539 = vadd.f32 %v3538, %v3529
        %v3540 = vrot.slane %v3539, 4
        %v3541 = vadd.f32 %v3539, %v3540
        %v3542 = vrot.slane %v3541, 2
        %v3543 = vadd.f32 %v3541, %v3542
        %v3544 = vrot.slane %v3543, 1
        %v3545 = vadd.f32 %v3543, %v3544
        %v3546 = vadd.f32 %v3506, %v3514
        %v3547 = vadd.f32 %v3546, %v3522
        %v3548 = vadd.f32 %v3547, %v3530
        %v3549 = vrot.slane %v3548, 4
        %v3550 = vadd.f32 %v3548, %v3549
        %v3551 = vrot.slane %v3550, 2
        %v3552 = vadd.f32 %v3550, %v3551
        %v3553 = vrot.slane %v3552, 1
        %v3554 = vadd.f32 %v3552, %v3553
        %v3555 = vadd.f32 %v3507, %v3515
        %v3556 = vadd.f32 %v3555, %v3523
        %v3557 = vadd.f32 %v3556, %v3531
        %v3558 = vrot.slane %v3557, 4
        %v3559 = vadd.f32 %v3557, %v3558
        %v3560 = vrot.slane %v3559, 2
        %v3561 = vadd.f32 %v3559, %v3560
        %v3562 = vrot.slane %v3561, 1
        %v3563 = vadd.f32 %v3561, %v3562
        %v3564 = vadd.f32 %v3508, %v3516
        %v3565 = vadd.f32 %v3564, %v3524
        %v3566 = vadd.f32 %v3565, %v3532
        %v3567 = vrot.slane %v3566, 4
        %v3568 = vadd.f32 %v3566, %v3567
        %v3569 = vrot.slane %v3568, 2
        %v3570 = vadd.f32 %v3568, %v3569
        %v3571 = vrot.slane %v3570, 1
        %v3572 = vadd.f32 %v3570, %v3571
        %v3573 = vadd.f32 %v3509, %v3517
        %v3574 = vadd.f32 %v3573, %v3525
        %v3575 = vadd.f32 %v3574, %v3533
        %v3576 = vrot.slane %v3575, 4
        %v3577 = vadd.f32 %v3575, %v3576
        %v3578 = vrot.slane %v3577, 2
        %v3579 = vadd.f32 %v3577, %v3578
        %v3580 = vrot.slane %v3579, 1
        %v3581 = vadd.f32 %v3579, %v3580
        %v3582 = vadd.f32 %v3510, %v3518
        %v3583 = vadd.f32 %v3582, %v3526
        %v3584 = vadd.f32 %v3583, %v3534
        %v3585 = vrot.slane %v3584, 4
        %v3586 = vadd.f32 %v3584, %v3585
        %v3587 = vrot.slane %v3586, 2
        %v3588 = vadd.f32 %v3586, %v3587
        %v3589 = vrot.slane %v3588, 1
        %v3590 = vadd.f32 %v3588, %v3589
        %v3591 = vadd.f32 %v3511, %v3519
        %v3592 = vadd.f32 %v3591, %v3527
        %v3593 = vadd.f32 %v3592, %v3535
        %v3594 = vrot.slane %v3593, 4
        %v3595 = vadd.f32 %v3593, %v3594
        %v3596 = vrot.slane %v3595, 2
        %v3597 = vadd.f32 %v3595, %v3596
        %v3598 = vrot.slane %v3597, 1
        %v3599 = vadd.f32 %v3597, %v3598
        %v3600 = vadd.f32 %v3512, %v3520
        %v3601 = vadd.f32 %v3600, %v3528
        %v3602 = vadd.f32 %v3601, %v3536
        %v3603 = vrot.slane %v3602, 4
        %v3604 = vadd.f32 %v3602, %v3603
        %v3605 = vrot.slane %v3604, 2
        %v3606 = vadd.f32 %v3604, %v3605
        %v3607 = vrot.slane %v3606, 1
        %v3608 = vadd.f32 %v3606, %v3607
        %v3609 = vmul.f32 %v3545, 0.03125
        %v3610 = vmul.f32 %v3554, 0.03125
        %v3611 = vmul.f32 %v3563, 0.03125
        %v3612 = vmul.f32 %v3572, 0.03125
        %v3613 = vmul.f32 %v3581, 0.03125
        %v3614 = vmul.f32 %v3590, 0.03125
        %v3615 = vmul.f32 %v3599, 0.03125
        %v3616 = vmul.f32 %v3608, 0.03125
        %v3617 = vadd.f32 %v3609, 0.8
        %v3618 = vadd.f32 %v3610, 0.8
        %v3619 = vadd.f32 %v3611, 0.8
        %v3620 = vadd.f32 %v3612, 0.8
        %v3621 = vadd.f32 %v3613, 0.8
        %v3622 = vadd.f32 %v3614, 0.8
        %v3623 = vadd.f32 %v3615, 0.8
        %v3624 = vadd.f32 %v3616, 0.8
        %v3625 = vrsqrt.pop %v3617
        %v3626 = vrsqrt.pop %v3618
        %v3627 = vrsqrt.pop %v3619
        %v3628 = vrsqrt.pop %v3620
        %v3629 = vrsqrt.pop %v3621
        %v3630 = vrsqrt.pop %v3622
        %v3631 = vrsqrt.pop %v3623
        %v3632 = vrsqrt.pop %v3624
        %v3641 = vcombine.low %v3625, %v3626
        %v3642 = vcombine.low %v3627, %v3628
        %v3643 = vcombine.low %v3629, %v3630
        %v3644 = vcombine.low %v3631, %v3632
        %v3646 = vunpack.c.l.s4 1966171168
        %v3647 = vunpack.c.0.s8 %v3646
        %v3648 = vlaneseq
        %v3649 = vshrl.u32 %v3648, 7
        %v3650 = vsub.s32 %v3647, %v3649
        %v3651 = vrot.slane %v3641, %v3650
        %v3653 = vunpack.c.l.s4 1966171168
        %v3654 = vunpack.c.0.s8 %v3653
        %v3655 = vlaneseq
        %v3656 = vshrl.u32 %v3655, 7
        %v3657 = vsub.s32 %v3654, %v3656
        %v3658 = vrot.slane %v3642, %v3657
        %v3660 = vunpack.c.l.s4 1966171168
        %v3661 = vunpack.c.0.s8 %v3660
        %v3662 = vlaneseq
        %v3663 = vshrl.u32 %v3662, 7
        %v3664 = vsub.s32 %v3661, %v3663
        %v3665 = vrot.slane %v3643, %v3664
        %v3667 = vunpack.c.l.s4 1966171168
        %v3668 = vunpack.c.0.s8 %v3667
        %v3669 = vlaneseq
        %v3670 = vshrl.u32 %v3669, 7
        %v3671 = vsub.s32 %v3668, %v3670
        %v3672 = vrot.slane %v3644, %v3671
        %v3673 = vcombine.low %v3651, %v3658
        %v3674 = vcombine.low %v3665, %v3672
        %v3676 = vunpack.c.l.s4 1966171168
        %v3677 = vunpack.c.0.s8 %v3676
        %v3678 = vlaneseq
        %v3679 = vshrl.u32 %v3678, 7
        %v3680 = vsub.s32 %v3677, %v3679
        %v3681 = vrot.slane %v3673, %v3680
        %v3683 = vunpack.c.l.s4 1966171168
        %v3684 = vunpack.c.0.s8 %v3683
        %v3685 = vlaneseq
        %v3686 = vshrl.u32 %v3685, 7
        %v3687 = vsub.s32 %v3684, %v3686
        %v3688 = vrot.slane %v3674, %v3687
        %v3689 = vcombine.low %v3681, %v3688
        %v3691 = vmul.f32 %v350, %v3689
        %v3693 = vlaneseq
        %v3694 = vshrl.u32 %v3693, 7
        %v3695 = vsub.s32 0, %v3694
        %v3696 = vrot.slane %v3691, %v3695
        %v3697 = vlaneseq
        %v3698 = vshrl.u32 %v3697, 7
        %v3699 = vsub.s32 1, %v3698
        %v3700 = vrot.slane %v3691, %v3699
        %v3701 = vlaneseq
        %v3702 = vshrl.u32 %v3701, 7
        %v3703 = vsub.s32 2, %v3702
        %v3704 = vrot.slane %v3691, %v3703
        %v3705 = vlaneseq
        %v3706 = vshrl.u32 %v3705, 7
        %v3707 = vsub.s32 3, %v3706
        %v3708 = vrot.slane %v3691, %v3707
        %v3709 = vlaneseq
        %v3710 = vshrl.u32 %v3709, 7
        %v3711 = vsub.s32 4, %v3710
        %v3712 = vrot.slane %v3691, %v3711
        %v3713 = vlaneseq
        %v3714 = vshrl.u32 %v3713, 7
        %v3715 = vsub.s32 5, %v3714
        %v3716 = vrot.slane %v3691, %v3715
        %v3717 = vlaneseq
        %v3718 = vshrl.u32 %v3717, 7
        %v3719 = vsub.s32 6, %v3718
        %v3720 = vrot.slane %v3691, %v3719
        %v3721 = vlaneseq
        %v3722 = vshrl.u32 %v3721, 7
        %v3723 = vsub.s32 7, %v3722
        %v3724 = vrot.slane %v3691, %v3723
        %v3733 = vmul.f32 %v3473, %v3696
        %v3734 = vmul.f32 %v3474, %v3700
        %v3735 = vmul.f32 %v3475, %v3704
        %v3736 = vmul.f32 %v3476, %v3708
        %v3737 = vmul.f32 %v3477, %v3712
        %v3738 = vmul.f32 %v3478, %v3716
        %v3739 = vmul.f32 %v3479, %v3720
        %v3740 = vmul.f32 %v3480, %v3724
        %v3741 = vmul.f32 %v3481, %v3696
        %v3742 = vmul.f32 %v3482, %v3700
        %v3743 = vmul.f32 %v3483, %v3704
        %v3744 = vmul.f32 %v3484, %v3708
        %v3745 = vmul.f32 %v3485, %v3712
        %v3746 = vmul.f32 %v3486, %v3716
        %v3747 = vmul.f32 %v3487, %v3720
        %v3748 = vmul.f32 %v3488, %v3724
        %v3749 = vmul.f32 %v3489, %v3696
        %v3750 = vmul.f32 %v3490, %v3700
        %v3751 = vmul.f32 %v3491, %v3704
        %v3752 = vmul.f32 %v3492, %v3708
        %v3753 = vmul.f32 %v3493, %v3712
        %v3754 = vmul.f32 %v3494, %v3716
        %v3755 = vmul.f32 %v3495, %v3720
        %v3756 = vmul.f32 %v3496, %v3724
        %v3757 = vmul.f32 %v3497, %v3696
        %v3758 = vmul.f32 %v3498, %v3700
        %v3759 = vmul.f32 %v3499, %v3704
        %v3760 = vmul.f32 %v3500, %v3708
        %v3761 = vmul.f32 %v3501, %v3712
        %v3762 = vmul.f32 %v3502, %v3716
        %v3763 = vmul.f32 %v3503, %v3720
        %v3764 = vmul.f32 %v3504, %v3724
        %v3766 = vlaneseq
        %v3767 = vshrl.u32 %v3766, 7
        %v3768 = vsub.s32 0, %v3767
        %v3769 = vrot.slane %v351, %v3768
        %v3770 = vlaneseq
        %v3771 = vshrl.u32 %v3770, 7
        %v3772 = vsub.s32 1, %v3771
        %v3773 = vrot.slane %v351, %v3772
        %v3774 = vlaneseq
        %v3775 = vshrl.u32 %v3774, 7
        %v3776 = vsub.s32 2, %v3775
        %v3777 = vrot.slane %v351, %v3776
        %v3778 = vlaneseq
        %v3779 = vshrl.u32 %v3778, 7
        %v3780 = vsub.s32 3, %v3779
        %v3781 = vrot.slane %v351, %v3780
        %v3782 = vlaneseq
        %v3783 = vshrl.u32 %v3782, 7
        %v3784 = vsub.s32 4, %v3783
        %v3785 = vrot.slane %v351, %v3784
        %v3786 = vlaneseq
        %v3787 = vshrl.u32 %v3786, 7
        %v3788 = vsub.s32 5, %v3787
        %v3789 = vrot.slane %v351, %v3788
        %v3790 = vlaneseq
        %v3791 = vshrl.u32 %v3790, 7
        %v3792 = vsub.s32 6, %v3791
        %v3793 = vrot.slane %v351, %v3792
        %v3794 = vlaneseq
        %v3795 = vshrl.u32 %v3794, 7
        %v3796 = vsub.s32 7, %v3795
        %v3797 = vrot.slane %v351, %v3796
        %v3806 = vadd.f32 %v3733, %v3769
        %v3807 = vadd.f32 %v3734, %v3773
        %v3808 = vadd.f32 %v3735, %v3777
        %v3809 = vadd.f32 %v3736, %v3781
        %v3810 = vadd.f32 %v3737, %v3785
        %v3811 = vadd.f32 %v3738, %v3789
        %v3812 = vadd.f32 %v3739, %v3793
        %v3813 = vadd.f32 %v3740, %v3797
        %v3814 = vadd.f32 %v3741, %v3769
        %v3815 = vadd.f32 %v3742, %v3773
        %v3816 = vadd.f32 %v3743, %v3777
        %v3817 = vadd.f32 %v3744, %v3781
        %v3818 = vadd.f32 %v3745, %v3785
        %v3819 = vadd.f32 %v3746, %v3789
        %v3820 = vadd.f32 %v3747, %v3793
        %v3821 = vadd.f32 %v3748, %v3797
        %v3822 = vadd.f32 %v3749, %v3769
        %v3823 = vadd.f32 %v3750, %v3773
        %v3824 = vadd.f32 %v3751, %v3777
        %v3825 = vadd.f32 %v3752, %v3781
        %v3826 = vadd.f32 %v3753, %v3785
        %v3827 = vadd.f32 %v3754, %v3789
        %v3828 = vadd.f32 %v3755, %v3793
        %v3829 = vadd.f32 %v3756, %v3797
        %v3830 = vadd.f32 %v3757, %v3769
        %v3831 = vadd.f32 %v3758, %v3773
        %v3832 = vadd.f32 %v3759, %v3777
        %v3833 = vadd.f32 %v3760, %v3781
        %v3834 = vadd.f32 %v3761, %v3785
        %v3835 = vadd.f32 %v3762, %v3789
        %v3836 = vadd.f32 %v3763, %v3793
        %v3837 = vadd.f32 %v3764, %v3797
        %v3838 = vmax.f32 %v3806, 0.0
        %v3839 = vmax.f32 %v3807, 0.0
        %v3840 = vmax.f32 %v3808, 0.0
        %v3841 = vmax.f32 %v3809, 0.0
        %v3842 = vmax.f32 %v3810, 0.0
        %v3843 = vmax.f32 %v3811, 0.0
        %v3844 = vmax.f32 %v3812, 0.0
        %v3845 = vmax.f32 %v3813, 0.0
        %v3846 = vmax.f32 %v3814, 0.0
        %v3847 = vmax.f32 %v3815, 0.0
        %v3848 = vmax.f32 %v3816, 0.0
        %v3849 = vmax.f32 %v3817, 0.0
        %v3850 = vmax.f32 %v3818, 0.0
        %v3851 = vmax.f32 %v3819, 0.0
        %v3852 = vmax.f32 %v3820, 0.0
        %v3853 = vmax.f32 %v3821, 0.0
        %v3854 = vmax.f32 %v3822, 0.0
        %v3855 = vmax.f32 %v3823, 0.0
        %v3856 = vmax.f32 %v3824, 0.0
        %v3857 = vmax.f32 %v3825, 0.0
        %v3858 = vmax.f32 %v3826, 0.0
        %v3859 = vmax.f32 %v3827, 0.0
        %v3860 = vmax.f32 %v3828, 0.0
        %v3861 = vmax.f32 %v3829, 0.0
        %v3862 = vmax.f32 %v3830, 0.0
        %v3863 = vmax.f32 %v3831, 0.0
        %v3864 = vmax.f32 %v3832, 0.0
        %v3865 = vmax.f32 %v3833, 0.0
        %v3866 = vmax.f32 %v3834, 0.0
        %v3867 = vmax.f32 %v3835, 0.0
        %v3868 = vmax.f32 %v3836, 0.0
        %v3869 = vmax.f32 %v3837, 0.0
        %v3870 = vpack.c.bf16 %v3846, %v3838
        %v3871 = vpack.c.bf16 %v3847, %v3839
        %v3872 = vpack.c.bf16 %v3848, %v3840
        %v3873 = vpack.c.bf16 %v3849, %v3841
        %v3874 = vpack.c.bf16 %v3850, %v3842
        %v3875 = vpack.c.bf16 %v3851, %v3843
        %v3876 = vpack.c.bf16 %v3852, %v3844
        %v3877 = vpack.c.bf16 %v3853, %v3845
        %v3878 = vpack.c.bf16 %v3862, %v3854
        %v3879 = vpack.c.bf16 %v3863, %v3855
        %v3880 = vpack.c.bf16 %v3864, %v3856
        %v3881 = vpack.c.bf16 %v3865, %v3857
        %v3882 = vpack.c.bf16 %v3866, %v3858
        %v3883 = vpack.c.bf16 %v3867, %v3859
        %v3884 = vpack.c.bf16 %v3868, %v3860
        %v3885 = vpack.c.bf16 %v3869, %v3861
        %v3886 = vld [vmem:[#allocation10] sm:$0xff]
        %v3887 = vld [vmem:[#allocation10 + $0x8] sm:$0xff]
        %v3888 = vld [vmem:[#allocation10 + $0x10] sm:$0xff]
        %v3889 = vld [vmem:[#allocation10 + $0x18] sm:$0xf]
        %v3890 = vld [vmem:[#allocation10 + $0x1c] sm:$0xff]
        %v3891 = vld [vmem:[#allocation10 + $0x24] sm:$0xff]
        %v3892 = vld [vmem:[#allocation10 + $0x2c] sm:$0xff]
        %v3893 = vld [vmem:[#allocation10 + $0x34] sm:$0xf]
        %v3894 = vld [vmem:[#allocation10 + $0x38] sm:$0xff]
        %v3895 = vld [vmem:[#allocation10 + $0x40] sm:$0xff]
        %v3896 = vld [vmem:[#allocation10 + $0x48] sm:$0xff]
        %v3897 = vld [vmem:[#allocation10 + $0x50] sm:$0xf]
        %v3898 = vld [vmem:[#allocation10 + $0x54] sm:$0xff]
        %v3899 = vld [vmem:[#allocation10 + $0x5c] sm:$0xff]
        %v3900 = vld [vmem:[#allocation10 + $0x64] sm:$0xff]
        %v3901 = vld [vmem:[#allocation10 + $0x6c] sm:$0xf]
        %v3902 = vld [vmem:[#allocation10 + $0x70] sm:$0xff]
        %v3903 = vld [vmem:[#allocation10 + $0x78] sm:$0xff]
        %v3904 = vld [vmem:[#allocation10 + $0x80] sm:$0xff]
        %v3905 = vld [vmem:[#allocation10 + $0x88] sm:$0xf]
        %v3906 = vld [vmem:[#allocation10 + $0x8c] sm:$0xff]
        %v3907 = vld [vmem:[#allocation10 + $0x94] sm:$0xff]
        %v3908 = vld [vmem:[#allocation10 + $0x9c] sm:$0xff]
        %v3909 = vld [vmem:[#allocation10 + $0xa4] sm:$0xf]
        %v3910 = vld [vmem:[#allocation10 + $0xa8] sm:$0xff]
        %v3911 = vld [vmem:[#allocation10 + $0xb0] sm:$0xff]
        %v3912 = vld [vmem:[#allocation10 + $0xb8] sm:$0xff]
        %v3913 = vld [vmem:[#allocation10 + $0xc0] sm:$0xf]
        %v3914 = vld [vmem:[#allocation10 + $0xc4] sm:$0xff]
        %v3915 = vld [vmem:[#allocation10 + $0xcc] sm:$0xff]
        %v3916 = vld [vmem:[#allocation10 + $0xd4] sm:$0xff]
        %v3917 = vld [vmem:[#allocation10 + $0xdc] sm:$0xf]
        %v3918 = vld [vmem:[#allocation10 + $0xe0] sm:$0xff]
        %v3919 = vld [vmem:[#allocation10 + $0xe8] sm:$0xff]
        %v3920 = vld [vmem:[#allocation10 + $0xf0] sm:$0xff]
        %v3921 = vld [vmem:[#allocation10 + $0xf8] sm:$0xf]
        %v3922 = vld [vmem:[#allocation10 + $0xfc] sm:$0xff]
        %v3923 = vld [vmem:[#allocation10 + $0x104] sm:$0xff]
        %v3924 = vld [vmem:[#allocation10 + $0x10c] sm:$0xff]
        %v3925 = vld [vmem:[#allocation10 + $0x114] sm:$0xf]
        %v3926 = vld [vmem:[#allocation10 + $0x118] sm:$0xff]
        %v3927 = vld [vmem:[#allocation10 + $0x120] sm:$0xff]
        %v3928 = vld [vmem:[#allocation10 + $0x128] sm:$0xff]
        %v3929 = vld [vmem:[#allocation10 + $0x130] sm:$0xf]
        %v3930 = vld [vmem:[#allocation10 + $0x134] sm:$0xff]
        %v3931 = vld [vmem:[#allocation10 + $0x13c] sm:$0xff]
        %v3932 = vld [vmem:[#allocation10 + $0x144] sm:$0xff]
        %v3933 = vld [vmem:[#allocation10 + $0x14c] sm:$0xf]
        %v3934 = vld [vmem:[#allocation10 + $0x150] sm:$0xff]
        %v3935 = vld [vmem:[#allocation10 + $0x158] sm:$0xff]
        %v3936 = vld [vmem:[#allocation10 + $0x160] sm:$0xff]
        %v3937 = vld [vmem:[#allocation10 + $0x168] sm:$0xf]
        %v3938 = vld [vmem:[#allocation10 + $0x16c] sm:$0xff]
        %v3939 = vld [vmem:[#allocation10 + $0x174] sm:$0xff]
        %v3940 = vld [vmem:[#allocation10 + $0x17c] sm:$0xff]
        %v3941 = vld [vmem:[#allocation10 + $0x184] sm:$0xf]
        %v3942 = vld [vmem:[#allocation10 + $0x188] sm:$0xff]
        %v3943 = vld [vmem:[#allocation10 + $0x190] sm:$0xff]
        %v3944 = vld [vmem:[#allocation10 + $0x198] sm:$0xff]
        %v3945 = vld [vmem:[#allocation10 + $0x1a0] sm:$0xf]
        %v3946 = vld [vmem:[#allocation10 + $0x1a4] sm:$0xff]
        %v3947 = vld [vmem:[#allocation10 + $0x1ac] sm:$0xff]
        %v3948 = vld [vmem:[#allocation10 + $0x1b4] sm:$0xff]
        %v3949 = vld [vmem:[#allocation10 + $0x1bc] sm:$0xf]
        %v3950 = vld [vmem:[#allocation10 + $0x1c0] sm:$0xff]
        %v3951 = vld [vmem:[#allocation10 + $0x1c8] sm:$0xff]
        %v3952 = vld [vmem:[#allocation10 + $0x1d0] sm:$0xff]
        %v3953 = vld [vmem:[#allocation10 + $0x1d8] sm:$0xf]
        %v3954 = vld [vmem:[#allocation10 + $0x1dc] sm:$0xff]
        %v3955 = vld [vmem:[#allocation10 + $0x1e4] sm:$0xff]
        %v3956 = vld [vmem:[#allocation10 + $0x1ec] sm:$0xff]
        %v3957 = vld [vmem:[#allocation10 + $0x1f4] sm:$0xf]
        %v3958 = vld [vmem:[#allocation10 + $0x1f8] sm:$0xff]
        %v3959 = vld [vmem:[#allocation10 + $0x200] sm:$0xff]
        %v3960 = vld [vmem:[#allocation10 + $0x208] sm:$0xff]
        %v3961 = vld [vmem:[#allocation10 + $0x210] sm:$0xf]
        %v3962 = vld [vmem:[#allocation10 + $0x214] sm:$0xff]
        %v3963 = vld [vmem:[#allocation10 + $0x21c] sm:$0xff]
        %v3964 = vld [vmem:[#allocation10 + $0x224] sm:$0xff]
        %v3965 = vld [vmem:[#allocation10 + $0x22c] sm:$0xf]
        %v3966 = vld [vmem:[#allocation10 + $0x230] sm:$0xff]
        %v3967 = vld [vmem:[#allocation10 + $0x238] sm:$0xff]
        %v3968 = vld [vmem:[#allocation10 + $0x240] sm:$0xff]
        %v3969 = vld [vmem:[#allocation10 + $0x248] sm:$0xf]
        %v3970 = vld [vmem:[#allocation10 + $0x24c] sm:$0xff]
        %v3971 = vld [vmem:[#allocation10 + $0x254] sm:$0xff]
        %v3972 = vld [vmem:[#allocation10 + $0x25c] sm:$0xff]
        %v3973 = vld [vmem:[#allocation10 + $0x264] sm:$0xf]
        %v3974 = vld [vmem:[#allocation10 + $0x268] sm:$0xff]
        %v3975 = vld [vmem:[#allocation10 + $0x270] sm:$0xff]
        %v3976 = vld [vmem:[#allocation10 + $0x278] sm:$0xff]
        %v3977 = vld [vmem:[#allocation10 + $0x280] sm:$0xf]
        %v3978 = vld [vmem:[#allocation10 + $0x284] sm:$0xff]
        %v3979 = vld [vmem:[#allocation10 + $0x28c] sm:$0xff]
        %v3980 = vld [vmem:[#allocation10 + $0x294] sm:$0xff]
        %v3981 = vld [vmem:[#allocation10 + $0x29c] sm:$0xf]
        %v3982 = vld [vmem:[#allocation10 + $0x2a0] sm:$0xff]
        %v3983 = vld [vmem:[#allocation10 + $0x2a8] sm:$0xff]
        %v3984 = vld [vmem:[#allocation10 + $0x2b0] sm:$0xff]
        %v3985 = vld [vmem:[#allocation10 + $0x2b8] sm:$0xf]
        %v3986 = vld [vmem:[#allocation10 + $0x2bc] sm:$0xff]
        %v3987 = vld [vmem:[#allocation10 + $0x2c4] sm:$0xff]
        %v3988 = vld [vmem:[#allocation10 + $0x2cc] sm:$0xff]
        %v3989 = vld [vmem:[#allocation10 + $0x2d4] sm:$0xf]
        %v3990 = vld [vmem:[#allocation10 + $0x2d8] sm:$0xff]
        %v3991 = vld [vmem:[#allocation10 + $0x2e0] sm:$0xff]
        %v3992 = vld [vmem:[#allocation10 + $0x2e8] sm:$0xff]
        %v3993 = vld [vmem:[#allocation10 + $0x2f0] sm:$0xf]
        %v3994 = vld [vmem:[#allocation10 + $0x2f4] sm:$0xff]
        %v3995 = vld [vmem:[#allocation10 + $0x2fc] sm:$0xff]
        %v3996 = vld [vmem:[#allocation10 + $0x304] sm:$0xff]
        %v3997 = vld [vmem:[#allocation10 + $0x30c] sm:$0xf]
        %v3998 = vld [vmem:[#allocation10 + $0x310] sm:$0xff]
        %v3999 = vld [vmem:[#allocation10 + $0x318] sm:$0xff]
        %v4000 = vld [vmem:[#allocation10 + $0x320] sm:$0xff]
        %v4001 = vld [vmem:[#allocation10 + $0x328] sm:$0xf]
        %v4002 = vld [vmem:[#allocation10 + $0x32c] sm:$0xff]
        %v4003 = vld [vmem:[#allocation10 + $0x334] sm:$0xff]
        %v4004 = vld [vmem:[#allocation10 + $0x33c] sm:$0xff]
        %v4005 = vld [vmem:[#allocation10 + $0x344] sm:$0xf]
        %v4006 = vld [vmem:[#allocation10 + $0x348] sm:$0xff]
        %v4007 = vld [vmem:[#allocation10 + $0x350] sm:$0xff]
        %v4008 = vld [vmem:[#allocation10 + $0x358] sm:$0xff]
        %v4009 = vld [vmem:[#allocation10 + $0x360] sm:$0xf]
        %v4010 = vld [vmem:[#allocation10 + $0x364] sm:$0xff]
        %v4011 = vld [vmem:[#allocation10 + $0x36c] sm:$0xff]
        %v4012 = vld [vmem:[#allocation10 + $0x374] sm:$0xff]
        %v4013 = vld [vmem:[#allocation10 + $0x37c] sm:$0xf]
        %v4014 = vld [vmem:[#allocation10 + $0x380] sm:$0xff]
        %v4015 = vld [vmem:[#allocation10 + $0x388] sm:$0xff]
        %v4016 = vld [vmem:[#allocation10 + $0x390] sm:$0xff]
        %v4017 = vld [vmem:[#allocation10 + $0x398] sm:$0xf]
        %v4018 = vld [vmem:[#allocation10 + $0x39c] sm:$0xff]
        %v4019 = vld [vmem:[#allocation10 + $0x3a4] sm:$0xff]
        %v4020 = vld [vmem:[#allocation10 + $0x3ac] sm:$0xff]
        %v4021 = vld [vmem:[#allocation10 + $0x3b4] sm:$0xf]
        %v4022 = vld [vmem:[#allocation10 + $0x3b8] sm:$0xff]
        %v4023 = vld [vmem:[#allocation10 + $0x3c0] sm:$0xff]
        %v4024 = vld [vmem:[#allocation10 + $0x3c8] sm:$0xff]
        %v4025 = vld [vmem:[#allocation10 + $0x3d0] sm:$0xf]
        %v4026 = vld [vmem:[#allocation10 + $0x3d4] sm:$0xff]
        %v4027 = vld [vmem:[#allocation10 + $0x3dc] sm:$0xff]
        %v4028 = vld [vmem:[#allocation10 + $0x3e4] sm:$0xff]
        %v4029 = vld [vmem:[#allocation10 + $0x3ec] sm:$0xf]
        %v4030 = vld [vmem:[#allocation10 + $0x3f0] sm:$0xff]
        %v4031 = vld [vmem:[#allocation10 + $0x3f8] sm:$0xff]
        %v4032 = vld [vmem:[#allocation10 + $0x400] sm:$0xff]
        %v4033 = vld [vmem:[#allocation10 + $0x408] sm:$0xf]
        %v4034 = vld [vmem:[#allocation10 + $0x40c] sm:$0xff]
        %v4035 = vld [vmem:[#allocation10 + $0x414] sm:$0xff]
        %v4036 = vld [vmem:[#allocation10 + $0x41c] sm:$0xff]
        %v4037 = vld [vmem:[#allocation10 + $0x424] sm:$0xf]
        %v4038 = vld [vmem:[#allocation10 + $0x428] sm:$0xff]
        %v4039 = vld [vmem:[#allocation10 + $0x430] sm:$0xff]
        %v4040 = vld [vmem:[#allocation10 + $0x438] sm:$0xff]
        %v4041 = vld [vmem:[#allocation10 + $0x440] sm:$0xf]
        %v4042 = vld [vmem:[#allocation10 + $0x444] sm:$0xff]
        %v4043 = vld [vmem:[#allocation10 + $0x44c] sm:$0xff]
        %v4044 = vld [vmem:[#allocation10 + $0x454] sm:$0xff]
        %v4045 = vld [vmem:[#allocation10 + $0x45c] sm:$0xf]
        %v4046 = vld [vmem:[#allocation10 + $0x460] sm:$0xff]
        %v4047 = vld [vmem:[#allocation10 + $0x468] sm:$0xff]
        %v4048 = vld [vmem:[#allocation10 + $0x470] sm:$0xff]
        %v4049 = vld [vmem:[#allocation10 + $0x478] sm:$0xf]
        %v4050 = vld [vmem:[#allocation10 + $0x47c] sm:$0xff]
        %v4051 = vld [vmem:[#allocation10 + $0x484] sm:$0xff]
        %v4052 = vld [vmem:[#allocation10 + $0x48c] sm:$0xff]
        %v4053 = vld [vmem:[#allocation10 + $0x494] sm:$0xf]
        %v4054 = vld [vmem:[#allocation10 + $0x498] sm:$0xff]
        %v4055 = vld [vmem:[#allocation10 + $0x4a0] sm:$0xff]
        %v4056 = vld [vmem:[#allocation10 + $0x4a8] sm:$0xff]
        %v4057 = vld [vmem:[#allocation10 + $0x4b0] sm:$0xf]
        %v4058 = vld [vmem:[#allocation10 + $0x4b4] sm:$0xff]
        %v4059 = vld [vmem:[#allocation10 + $0x4bc] sm:$0xff]
        %v4060 = vld [vmem:[#allocation10 + $0x4c4] sm:$0xff]
        %v4061 = vld [vmem:[#allocation10 + $0x4cc] sm:$0xf]
        %v4062 = vld [vmem:[#allocation10 + $0x4d0] sm:$0xff]
        %v4063 = vld [vmem:[#allocation10 + $0x4d8] sm:$0xff]
        %v4064 = vld [vmem:[#allocation10 + $0x4e0] sm:$0xff]
        %v4065 = vld [vmem:[#allocation10 + $0x4e8] sm:$0xf]
        %v4066 = vld [vmem:[#allocation10 + $0x4ec] sm:$0xff]
        %v4067 = vld [vmem:[#allocation10 + $0x4f4] sm:$0xff]
        %v4068 = vld [vmem:[#allocation10 + $0x4fc] sm:$0xff]
        %v4069 = vld [vmem:[#allocation10 + $0x504] sm:$0xf]
        %v4070 = vld [vmem:[#allocation10 + $0x508] sm:$0xff]
        %v4071 = vld [vmem:[#allocation10 + $0x510] sm:$0xff]
        %v4072 = vld [vmem:[#allocation10 + $0x518] sm:$0xff]
        %v4073 = vld [vmem:[#allocation10 + $0x520] sm:$0xf]
        %v4074 = vld [vmem:[#allocation10 + $0x524] sm:$0xff]
        %v4075 = vld [vmem:[#allocation10 + $0x52c] sm:$0xff]
        %v4076 = vld [vmem:[#allocation10 + $0x534] sm:$0xff]
        %v4077 = vld [vmem:[#allocation10 + $0x53c] sm:$0xf]
        %v4078 = vld [vmem:[#allocation10 + $0x540] sm:$0xff]
        %v4079 = vld [vmem:[#allocation10 + $0x548] sm:$0xff]
        %v4080 = vld [vmem:[#allocation10 + $0x550] sm:$0xff]
        %v4081 = vld [vmem:[#allocation10 + $0x558] sm:$0xf]
        %v4082 = vld [vmem:[#allocation10 + $0x55c] sm:$0xff]
        %v4083 = vld [vmem:[#allocation10 + $0x564] sm:$0xff]
        %v4084 = vld [vmem:[#allocation10 + $0x56c] sm:$0xff]
        %v4085 = vld [vmem:[#allocation10 + $0x574] sm:$0xf]
        %v4086 = vld [vmem:[#allocation10 + $0x578] sm:$0xff]
        %v4087 = vld [vmem:[#allocation10 + $0x580] sm:$0xff]
        %v4088 = vld [vmem:[#allocation10 + $0x588] sm:$0xff]
        %v4089 = vld [vmem:[#allocation10 + $0x590] sm:$0xf]
        %v4090 = vld [vmem:[#allocation10 + $0x594] sm:$0xff]
        %v4091 = vld [vmem:[#allocation10 + $0x59c] sm:$0xff]
        %v4092 = vld [vmem:[#allocation10 + $0x5a4] sm:$0xff]
        %v4093 = vld [vmem:[#allocation10 + $0x5ac] sm:$0xf]
        %v4094 = vld [vmem:[#allocation10 + $0x5b0] sm:$0xff]
        %v4095 = vld [vmem:[#allocation10 + $0x5b8] sm:$0xff]
        %v4096 = vld [vmem:[#allocation10 + $0x5c0] sm:$0xff]
        %v4097 = vld [vmem:[#allocation10 + $0x5c8] sm:$0xf]
        %v4098 = vld [vmem:[#allocation10 + $0x5cc] sm:$0xff]
        %v4099 = vld [vmem:[#allocation10 + $0x5d4] sm:$0xff]
        %v4100 = vld [vmem:[#allocation10 + $0x5dc] sm:$0xff]
        %v4101 = vld [vmem:[#allocation10 + $0x5e4] sm:$0xf]
        %v4102 = vld [vmem:[#allocation10 + $0x5e8] sm:$0xff]
        %v4103 = vld [vmem:[#allocation10 + $0x5f0] sm:$0xff]
        %v4104 = vld [vmem:[#allocation10 + $0x5f8] sm:$0xff]
        %v4105 = vld [vmem:[#allocation10 + $0x600] sm:$0xf]
        %v4106 = vld [vmem:[#allocation10 + $0x604] sm:$0xff]
        %v4107 = vld [vmem:[#allocation10 + $0x60c] sm:$0xff]
        %v4108 = vld [vmem:[#allocation10 + $0x614] sm:$0xff]
        %v4109 = vld [vmem:[#allocation10 + $0x61c] sm:$0xf]
        %v4110 = vld [vmem:[#allocation10 + $0x620] sm:$0xff]
        %v4111 = vld [vmem:[#allocation10 + $0x628] sm:$0xff]
        %v4112 = vld [vmem:[#allocation10 + $0x630] sm:$0xff]
        %v4113 = vld [vmem:[#allocation10 + $0x638] sm:$0xf]
        %v4114 = vld [vmem:[#allocation10 + $0x63c] sm:$0xff]
        %v4115 = vld [vmem:[#allocation10 + $0x644] sm:$0xff]
        %v4116 = vld [vmem:[#allocation10 + $0x64c] sm:$0xff]
        %v4117 = vld [vmem:[#allocation10 + $0x654] sm:$0xf]
        %v4118 = vld [vmem:[#allocation10 + $0x658] sm:$0xff]
        %v4119 = vld [vmem:[#allocation10 + $0x660] sm:$0xff]
        %v4120 = vld [vmem:[#allocation10 + $0x668] sm:$0xff]
        %v4121 = vld [vmem:[#allocation10 + $0x670] sm:$0xf]
        %v4122 = vld [vmem:[#allocation10 + $0x674] sm:$0xff]
        %v4123 = vld [vmem:[#allocation10 + $0x67c] sm:$0xff]
        %v4124 = vld [vmem:[#allocation10 + $0x684] sm:$0xff]
        %v4125 = vld [vmem:[#allocation10 + $0x68c] sm:$0xf]
        %v4126 = vld [vmem:[#allocation10 + $0x690] sm:$0xff]
        %v4127 = vld [vmem:[#allocation10 + $0x698] sm:$0xff]
        %v4128 = vld [vmem:[#allocation10 + $0x6a0] sm:$0xff]
        %v4129 = vld [vmem:[#allocation10 + $0x6a8] sm:$0xf]
        %v4130 = vld [vmem:[#allocation10 + $0x6ac] sm:$0xff]
        %v4131 = vld [vmem:[#allocation10 + $0x6b4] sm:$0xff]
        %v4132 = vld [vmem:[#allocation10 + $0x6bc] sm:$0xff]
        %v4133 = vld [vmem:[#allocation10 + $0x6c4] sm:$0xf]
        %v4134 = vld [vmem:[#allocation10 + $0x6c8] sm:$0xff]
        %v4135 = vld [vmem:[#allocation10 + $0x6d0] sm:$0xff]
        %v4136 = vld [vmem:[#allocation10 + $0x6d8] sm:$0xff]
        %v4137 = vld [vmem:[#allocation10 + $0x6e0] sm:$0xf]
        %v4138 = vld [vmem:[#allocation10 + $0x6e4] sm:$0xff]
        %v4139 = vld [vmem:[#allocation10 + $0x6ec] sm:$0xff]
        %v4140 = vld [vmem:[#allocation10 + $0x6f4] sm:$0xff]
        %v4141 = vld [vmem:[#allocation10 + $0x6fc] sm:$0xf]
        %v4142 = vld [vmem:[#allocation10 + $0x700] sm:$0xff]
        %v4143 = vld [vmem:[#allocation10 + $0x708] sm:$0xff]
        %v4144 = vld [vmem:[#allocation10 + $0x710] sm:$0xff]
        %v4145 = vld [vmem:[#allocation10 + $0x718] sm:$0xf]
        %v4146 = vld [vmem:[#allocation10 + $0x71c] sm:$0xff]
        %v4147 = vld [vmem:[#allocation10 + $0x724] sm:$0xff]
        %v4148 = vld [vmem:[#allocation10 + $0x72c] sm:$0xff]
        %v4149 = vld [vmem:[#allocation10 + $0x734] sm:$0xf]
        %v4150 = vld [vmem:[#allocation10 + $0x738] sm:$0xff]
        %v4151 = vld [vmem:[#allocation10 + $0x740] sm:$0xff]
        %v4152 = vld [vmem:[#allocation10 + $0x748] sm:$0xff]
        %v4153 = vld [vmem:[#allocation10 + $0x750] sm:$0xf]
        %v4154 = vld [vmem:[#allocation10 + $0x754] sm:$0xff]
        %v4155 = vld [vmem:[#allocation10 + $0x75c] sm:$0xff]
        %v4156 = vld [vmem:[#allocation10 + $0x764] sm:$0xff]
        %v4157 = vld [vmem:[#allocation10 + $0x76c] sm:$0xf]
        %v4158 = vld [vmem:[#allocation10 + $0x770] sm:$0xff]
        %v4159 = vld [vmem:[#allocation10 + $0x778] sm:$0xff]
        %v4160 = vld [vmem:[#allocation10 + $0x780] sm:$0xff]
        %v4161 = vld [vmem:[#allocation10 + $0x788] sm:$0xf]
        %v4162 = vld [vmem:[#allocation10 + $0x78c] sm:$0xff]
        %v4163 = vld [vmem:[#allocation10 + $0x794] sm:$0xff]
        %v4164 = vld [vmem:[#allocation10 + $0x79c] sm:$0xff]
        %v4165 = vld [vmem:[#allocation10 + $0x7a4] sm:$0xf]
        %v4166 = vld [vmem:[#allocation10 + $0x7a8] sm:$0xff]
        %v4167 = vld [vmem:[#allocation10 + $0x7b0] sm:$0xff]
        %v4168 = vld [vmem:[#allocation10 + $0x7b8] sm:$0xff]
        %v4169 = vld [vmem:[#allocation10 + $0x7c0] sm:$0xf]
        %v4170 = vld [vmem:[#allocation10 + $0x7c4] sm:$0xff]
        %v4171 = vld [vmem:[#allocation10 + $0x7cc] sm:$0xff]
        %v4172 = vld [vmem:[#allocation10 + $0x7d4] sm:$0xff]
        %v4173 = vld [vmem:[#allocation10 + $0x7dc] sm:$0xf]
        %v4174 = vld [vmem:[#allocation10 + $0x7e0] sm:$0xff]
        %v4175 = vld [vmem:[#allocation10 + $0x7e8] sm:$0xff]
        %v4176 = vld [vmem:[#allocation10 + $0x7f0] sm:$0xff]
        %v4177 = vld [vmem:[#allocation10 + $0x7f8] sm:$0xf]
        %v4178 = vld [vmem:[#allocation10 + $0x7fc] sm:$0xff]
        %v4179 = vld [vmem:[#allocation10 + $0x804] sm:$0xff]
        %v4180 = vld [vmem:[#allocation10 + $0x80c] sm:$0xff]
        %v4181 = vld [vmem:[#allocation10 + $0x814] sm:$0xf]
        %v4182 = vld [vmem:[#allocation10 + $0x818] sm:$0xff]
        %v4183 = vld [vmem:[#allocation10 + $0x820] sm:$0xff]
        %v4184 = vld [vmem:[#allocation10 + $0x828] sm:$0xff]
        %v4185 = vld [vmem:[#allocation10 + $0x830] sm:$0xf]
        %v4186 = vld [vmem:[#allocation10 + $0x834] sm:$0xff]
        %v4187 = vld [vmem:[#allocation10 + $0x83c] sm:$0xff]
        %v4188 = vld [vmem:[#allocation10 + $0x844] sm:$0xff]
        %v4189 = vld [vmem:[#allocation10 + $0x84c] sm:$0xf]
        %v4190 = vld [vmem:[#allocation10 + $0x850] sm:$0xff]
        %v4191 = vld [vmem:[#allocation10 + $0x858] sm:$0xff]
        %v4192 = vld [vmem:[#allocation10 + $0x860] sm:$0xff]
        %v4193 = vld [vmem:[#allocation10 + $0x868] sm:$0xf]
        %v4194 = vld [vmem:[#allocation10 + $0x86c] sm:$0xff]
        %v4195 = vld [vmem:[#allocation10 + $0x874] sm:$0xff]
        %v4196 = vld [vmem:[#allocation10 + $0x87c] sm:$0xff]
        %v4197 = vld [vmem:[#allocation10 + $0x884] sm:$0xf]
        %v4198 = vld [vmem:[#allocation10 + $0x888] sm:$0xff]
        %v4199 = vld [vmem:[#allocation10 + $0x890] sm:$0xff]
        %v4200 = vld [vmem:[#allocation10 + $0x898] sm:$0xff]
        %v4201 = vld [vmem:[#allocation10 + $0x8a0] sm:$0xf]
        %v4202 = vld [vmem:[#allocation10 + $0x8a4] sm:$0xff]
        %v4203 = vld [vmem:[#allocation10 + $0x8ac] sm:$0xff]
        %v4204 = vld [vmem:[#allocation10 + $0x8b4] sm:$0xff]
        %v4205 = vld [vmem:[#allocation10 + $0x8bc] sm:$0xf]
        %v4206 = vld [vmem:[#allocation10 + $0x8c0] sm:$0xff]
        %v4207 = vld [vmem:[#allocation10 + $0x8c8] sm:$0xff]
        %v4208 = vld [vmem:[#allocation10 + $0x8d0] sm:$0xff]
        %v4209 = vld [vmem:[#allocation10 + $0x8d8] sm:$0xf]
        %v4210 = vld [vmem:[#allocation10 + $0x8dc] sm:$0xff]
        %v4211 = vld [vmem:[#allocation10 + $0x8e4] sm:$0xff]
        %v4212 = vld [vmem:[#allocation10 + $0x8ec] sm:$0xff]
        %v4213 = vld [vmem:[#allocation10 + $0x8f4] sm:$0xf]
        %v4214 = vld [vmem:[#allocation10 + $0x8f8] sm:$0xff]
        %v4215 = vld [vmem:[#allocation10 + $0x900] sm:$0xff]
        %v4216 = vld [vmem:[#allocation10 + $0x908] sm:$0xff]
        %v4217 = vld [vmem:[#allocation10 + $0x910] sm:$0xf]
        %v4218 = vld [vmem:[#allocation10 + $0x914] sm:$0xff]
        %v4219 = vld [vmem:[#allocation10 + $0x91c] sm:$0xff]
        %v4220 = vld [vmem:[#allocation10 + $0x924] sm:$0xff]
        %v4221 = vld [vmem:[#allocation10 + $0x92c] sm:$0xf]
        %v4222 = vld [vmem:[#allocation10 + $0x930] sm:$0xff]
        %v4223 = vld [vmem:[#allocation10 + $0x938] sm:$0xff]
        %v4224 = vld [vmem:[#allocation10 + $0x940] sm:$0xff]
        %v4225 = vld [vmem:[#allocation10 + $0x948] sm:$0xf]
        %v4226 = vld [vmem:[#allocation10 + $0x94c] sm:$0xff]
        %v4227 = vld [vmem:[#allocation10 + $0x954] sm:$0xff]
        %v4228 = vld [vmem:[#allocation10 + $0x95c] sm:$0xff]
        %v4229 = vld [vmem:[#allocation10 + $0x964] sm:$0xf]
        %v4230 = vld [vmem:[#allocation10 + $0x968] sm:$0xff]
        %v4231 = vld [vmem:[#allocation10 + $0x970] sm:$0xff]
        %v4232 = vld [vmem:[#allocation10 + $0x978] sm:$0xff]
        %v4233 = vld [vmem:[#allocation10 + $0x980] sm:$0xf]
        %v4234 = vld [vmem:[#allocation10 + $0x984] sm:$0xff]
        %v4235 = vld [vmem:[#allocation10 + $0x98c] sm:$0xff]
        %v4236 = vld [vmem:[#allocation10 + $0x994] sm:$0xff]
        %v4237 = vld [vmem:[#allocation10 + $0x99c] sm:$0xf]
        %v4238 = vld [vmem:[#allocation10 + $0x9a0] sm:$0xff]
        %v4239 = vld [vmem:[#allocation10 + $0x9a8] sm:$0xff]
        %v4240 = vld [vmem:[#allocation10 + $0x9b0] sm:$0xff]
        %v4241 = vld [vmem:[#allocation10 + $0x9b8] sm:$0xf]
        %v4242 = vld [vmem:[#allocation10 + $0x9bc] sm:$0xff]
        %v4243 = vld [vmem:[#allocation10 + $0x9c4] sm:$0xff]
        %v4244 = vld [vmem:[#allocation10 + $0x9cc] sm:$0xff]
        %v4245 = vld [vmem:[#allocation10 + $0x9d4] sm:$0xf]
        %v4246 = vld [vmem:[#allocation10 + $0x9d8] sm:$0xff]
        %v4247 = vld [vmem:[#allocation10 + $0x9e0] sm:$0xff]
        %v4248 = vld [vmem:[#allocation10 + $0x9e8] sm:$0xff]
        %v4249 = vld [vmem:[#allocation10 + $0x9f0] sm:$0xf]
        %v4250 = vld [vmem:[#allocation10 + $0x9f4] sm:$0xff]
        %v4251 = vld [vmem:[#allocation10 + $0x9fc] sm:$0xff]
        %v4252 = vld [vmem:[#allocation10 + $0xa04] sm:$0xff]
        %v4253 = vld [vmem:[#allocation10 + $0xa0c] sm:$0xf]
        %v4254 = vld [vmem:[#allocation10 + $0xa10] sm:$0xff]
        %v4255 = vld [vmem:[#allocation10 + $0xa18] sm:$0xff]
        %v4256 = vld [vmem:[#allocation10 + $0xa20] sm:$0xff]
        %v4257 = vld [vmem:[#allocation10 + $0xa28] sm:$0xf]
        %v4258 = vld [vmem:[#allocation10 + $0xa2c] sm:$0xff]
        %v4259 = vld [vmem:[#allocation10 + $0xa34] sm:$0xff]
        %v4260 = vld [vmem:[#allocation10 + $0xa3c] sm:$0xff]
        %v4261 = vld [vmem:[#allocation10 + $0xa44] sm:$0xf]
        %v4262 = vld [vmem:[#allocation10 + $0xa48] sm:$0xff]
        %v4263 = vld [vmem:[#allocation10 + $0xa50] sm:$0xff]
        %v4264 = vld [vmem:[#allocation10 + $0xa58] sm:$0xff]
        %v4265 = vld [vmem:[#allocation10 + $0xa60] sm:$0xf]
        %v4266 = vld [vmem:[#allocation10 + $0xa64] sm:$0xff]
        %v4267 = vld [vmem:[#allocation10 + $0xa6c] sm:$0xff]
        %v4268 = vld [vmem:[#allocation10 + $0xa74] sm:$0xff]
        %v4269 = vld [vmem:[#allocation10 + $0xa7c] sm:$0xf]
        %v4270 = vld [vmem:[#allocation10 + $0xa80] sm:$0xff]
        %v4271 = vld [vmem:[#allocation10 + $0xa88] sm:$0xff]
        %v4272 = vld [vmem:[#allocation10 + $0xa90] sm:$0xff]
        %v4273 = vld [vmem:[#allocation10 + $0xa98] sm:$0xf]
        %v4274 = vld [vmem:[#allocation10 + $0xa9c] sm:$0xff]
        %v4275 = vld [vmem:[#allocation10 + $0xaa4] sm:$0xff]
        %v4276 = vld [vmem:[#allocation10 + $0xaac] sm:$0xff]
        %v4277 = vld [vmem:[#allocation10 + $0xab4] sm:$0xf]
        %v4278 = vld [vmem:[#allocation10 + $0xab8] sm:$0xff]
        %v4279 = vld [vmem:[#allocation10 + $0xac0] sm:$0xff]
        %v4280 = vld [vmem:[#allocation10 + $0xac8] sm:$0xff]
        %v4281 = vld [vmem:[#allocation10 + $0xad0] sm:$0xf]
        %v4282 = vld [vmem:[#allocation10 + $0xad4] sm:$0xff]
        %v4283 = vld [vmem:[#allocation10 + $0xadc] sm:$0xff]
        %v4284 = vld [vmem:[#allocation10 + $0xae4] sm:$0xff]
        %v4285 = vld [vmem:[#allocation10 + $0xaec] sm:$0xf]
        %v4286 = vld [vmem:[#allocation10 + $0xaf0] sm:$0xff]
        %v4287 = vld [vmem:[#allocation10 + $0xaf8] sm:$0xff]
        %v4288 = vld [vmem:[#allocation10 + $0xb00] sm:$0xff]
        %v4289 = vld [vmem:[#allocation10 + $0xb08] sm:$0xf]
        %v4290 = vld [vmem:[#allocation10 + $0xb0c] sm:$0xff]
        %v4291 = vld [vmem:[#allocation10 + $0xb14] sm:$0xff]
        %v4292 = vld [vmem:[#allocation10 + $0xb1c] sm:$0xff]
        %v4293 = vld [vmem:[#allocation10 + $0xb24] sm:$0xf]
        %v4294 = vld [vmem:[#allocation10 + $0xb28] sm:$0xff]
        %v4295 = vld [vmem:[#allocation10 + $0xb30] sm:$0xff]
        %v4296 = vld [vmem:[#allocation10 + $0xb38] sm:$0xff]
        %v4297 = vld [vmem:[#allocation10 + $0xb40] sm:$0xf]
        %v4298 = vld [vmem:[#allocation10 + $0xb44] sm:$0xff]
        %v4299 = vld [vmem:[#allocation10 + $0xb4c] sm:$0xff]
        %v4300 = vld [vmem:[#allocation10 + $0xb54] sm:$0xff]
        %v4301 = vld [vmem:[#allocation10 + $0xb5c] sm:$0xf]
        %v4302 = vld [vmem:[#allocation10 + $0xb60] sm:$0xff]
        %v4303 = vld [vmem:[#allocation10 + $0xb68] sm:$0xff]
        %v4304 = vld [vmem:[#allocation10 + $0xb70] sm:$0xff]
        %v4305 = vld [vmem:[#allocation10 + $0xb78] sm:$0xf]
        %v4306 = vld [vmem:[#allocation10 + $0xb7c] sm:$0xff]
        %v4307 = vld [vmem:[#allocation10 + $0xb84] sm:$0xff]
        %v4308 = vld [vmem:[#allocation10 + $0xb8c] sm:$0xff]
        %v4309 = vld [vmem:[#allocation10 + $0xb94] sm:$0xf]
        %v4310 = vld [vmem:[#allocation10 + $0xb98] sm:$0xff]
        %v4311 = vld [vmem:[#allocation10 + $0xba0] sm:$0xff]
        %v4312 = vld [vmem:[#allocation10 + $0xba8] sm:$0xff]
        %v4313 = vld [vmem:[#allocation10 + $0xbb0] sm:$0xf]
        %v4314 = vld [vmem:[#allocation10 + $0xbb4] sm:$0xff]
        %v4315 = vld [vmem:[#allocation10 + $0xbbc] sm:$0xff]
        %v4316 = vld [vmem:[#allocation10 + $0xbc4] sm:$0xff]
        %v4317 = vld [vmem:[#allocation10 + $0xbcc] sm:$0xf]
        %v4318 = vld [vmem:[#allocation10 + $0xbd0] sm:$0xff]
        %v4319 = vld [vmem:[#allocation10 + $0xbd8] sm:$0xff]
        %v4320 = vld [vmem:[#allocation10 + $0xbe0] sm:$0xff]
        %v4321 = vld [vmem:[#allocation10 + $0xbe8] sm:$0xf]
        %v4322 = vld [vmem:[#allocation10 + $0xbec] sm:$0xff]
        %v4323 = vld [vmem:[#allocation10 + $0xbf4] sm:$0xff]
        %v4324 = vld [vmem:[#allocation10 + $0xbfc] sm:$0xff]
        %v4325 = vld [vmem:[#allocation10 + $0xc04] sm:$0xf]
        %v4326 = vld [vmem:[#allocation10 + $0xc08] sm:$0xff]
        %v4327 = vld [vmem:[#allocation10 + $0xc10] sm:$0xff]
        %v4328 = vld [vmem:[#allocation10 + $0xc18] sm:$0xff]
        %v4329 = vld [vmem:[#allocation10 + $0xc20] sm:$0xf]
        %v4330 = vld [vmem:[#allocation10 + $0xc24] sm:$0xff]
        %v4331 = vld [vmem:[#allocation10 + $0xc2c] sm:$0xff]
        %v4332 = vld [vmem:[#allocation10 + $0xc34] sm:$0xff]
        %v4333 = vld [vmem:[#allocation10 + $0xc3c] sm:$0xf]
        %v4334 = vld [vmem:[#allocation10 + $0xc40] sm:$0xff]
        %v4335 = vld [vmem:[#allocation10 + $0xc48] sm:$0xff]
        %v4336 = vld [vmem:[#allocation10 + $0xc50] sm:$0xff]
        %v4337 = vld [vmem:[#allocation10 + $0xc58] sm:$0xf]
        %v4338 = vld [vmem:[#allocation10 + $0xc5c] sm:$0xff]
        %v4339 = vld [vmem:[#allocation10 + $0xc64] sm:$0xff]
        %v4340 = vld [vmem:[#allocation10 + $0xc6c] sm:$0xff]
        %v4341 = vld [vmem:[#allocation10 + $0xc74] sm:$0xf]
        %v4342 = vld [vmem:[#allocation10 + $0xc78] sm:$0xff]
        %v4343 = vld [vmem:[#allocation10 + $0xc80] sm:$0xff]
        %v4344 = vld [vmem:[#allocation10 + $0xc88] sm:$0xff]
        %v4345 = vld [vmem:[#allocation10 + $0xc90] sm:$0xf]
        %v4346 = vld [vmem:[#allocation10 + $0xc94] sm:$0xff]
        %v4347 = vld [vmem:[#allocation10 + $0xc9c] sm:$0xff]
        %v4348 = vld [vmem:[#allocation10 + $0xca4] sm:$0xff]
        %v4349 = vld [vmem:[#allocation10 + $0xcac] sm:$0xf]
        %v4350 = vld [vmem:[#allocation10 + $0xcb0] sm:$0xff]
        %v4351 = vld [vmem:[#allocation10 + $0xcb8] sm:$0xff]
        %v4352 = vld [vmem:[#allocation10 + $0xcc0] sm:$0xff]
        %v4353 = vld [vmem:[#allocation10 + $0xcc8] sm:$0xf]
        %v4354 = vld [vmem:[#allocation10 + $0xccc] sm:$0xff]
        %v4355 = vld [vmem:[#allocation10 + $0xcd4] sm:$0xff]
        %v4356 = vld [vmem:[#allocation10 + $0xcdc] sm:$0xff]
        %v4357 = vld [vmem:[#allocation10 + $0xce4] sm:$0xf]
        %v4358 = vld [vmem:[#allocation10 + $0xce8] sm:$0xff]
        %v4359 = vld [vmem:[#allocation10 + $0xcf0] sm:$0xff]
        %v4360 = vld [vmem:[#allocation10 + $0xcf8] sm:$0xff]
        %v4361 = vld [vmem:[#allocation10 + $0xd00] sm:$0xf]
        %v4362 = vld [vmem:[#allocation10 + $0xd04] sm:$0xff]
        %v4363 = vld [vmem:[#allocation10 + $0xd0c] sm:$0xff]
        %v4364 = vld [vmem:[#allocation10 + $0xd14] sm:$0xff]
        %v4365 = vld [vmem:[#allocation10 + $0xd1c] sm:$0xf]
        %v4366 = vld [vmem:[#allocation10 + $0xd20] sm:$0xff]
        %v4367 = vld [vmem:[#allocation10 + $0xd28] sm:$0xff]
        %v4368 = vld [vmem:[#allocation10 + $0xd30] sm:$0xff]
        %v4369 = vld [vmem:[#allocation10 + $0xd38] sm:$0xf]
        %v4370 = vld [vmem:[#allocation10 + $0xd3c] sm:$0xff]
        %v4371 = vld [vmem:[#allocation10 + $0xd44] sm:$0xff]
        %v4372 = vld [vmem:[#allocation10 + $0xd4c] sm:$0xff]
        %v4373 = vld [vmem:[#allocation10 + $0xd54] sm:$0xf]
        %v4374 = vld [vmem:[#allocation10 + $0xd58] sm:$0xff]
        %v4375 = vld [vmem:[#allocation10 + $0xd60] sm:$0xff]
        %v4376 = vld [vmem:[#allocation10 + $0xd68] sm:$0xff]
        %v4377 = vld [vmem:[#allocation10 + $0xd70] sm:$0xf]
        %v4378 = vld [vmem:[#allocation10 + $0xd74] sm:$0xff]
        %v4379 = vld [vmem:[#allocation10 + $0xd7c] sm:$0xff]
        %v4380 = vld [vmem:[#allocation10 + $0xd84] sm:$0xff]
        %v4381 = vld [vmem:[#allocation10 + $0xd8c] sm:$0xf]
        %v4382 = vld [vmem:[#allocation10 + $0xd90] sm:$0xff]
        %v4383 = vld [vmem:[#allocation10 + $0xd98] sm:$0xff]
        %v4384 = vld [vmem:[#allocation10 + $0xda0] sm:$0xff]
        %v4385 = vld [vmem:[#allocation10 + $0xda8] sm:$0xf]
        %v4386 = vld [vmem:[#allocation10 + $0xdac] sm:$0xff]
        %v4387 = vld [vmem:[#allocation10 + $0xdb4] sm:$0xff]
        %v4388 = vld [vmem:[#allocation10 + $0xdbc] sm:$0xff]
        %v4389 = vld [vmem:[#allocation10 + $0xdc4] sm:$0xf]
        %v4390 = vld [vmem:[#allocation10 + $0xdc8] sm:$0xff]
        %v4391 = vld [vmem:[#allocation10 + $0xdd0] sm:$0xff]
        %v4392 = vld [vmem:[#allocation10 + $0xdd8] sm:$0xff]
        %v4393 = vld [vmem:[#allocation10 + $0xde0] sm:$0xf]
        %v4394 = vld [vmem:[#allocation10 + $0xde4] sm:$0xff]
        %v4395 = vld [vmem:[#allocation10 + $0xdec] sm:$0xff]
        %v4396 = vld [vmem:[#allocation10 + $0xdf4] sm:$0xff]
        %v4397 = vld [vmem:[#allocation10 + $0xdfc] sm:$0xf]
        %v4399 = vlaneseq
        %v4400 = vshrl.u32 %v4399, 7
        %v4401 = vsub.s32 0, %v4400
        %v4402 = vrot.slane %v352, %v4401
        %v4403 = vlaneseq
        %v4404 = vshrl.u32 %v4403, 7
        %v4405 = vsub.s32 1, %v4404
        %v4406 = vrot.slane %v352, %v4405
        %v4407 = vlaneseq
        %v4408 = vshrl.u32 %v4407, 7
        %v4409 = vsub.s32 2, %v4408
        %v4410 = vrot.slane %v352, %v4409
        %v4411 = vlaneseq
        %v4412 = vshrl.u32 %v4411, 7
        %v4413 = vsub.s32 3, %v4412
        %v4414 = vrot.slane %v352, %v4413
        %v4415 = vlaneseq
        %v4416 = vshrl.u32 %v4415, 7
        %v4417 = vsub.s32 4, %v4416
        %v4418 = vrot.slane %v352, %v4417
        %v4419 = vlaneseq
        %v4420 = vshrl.u32 %v4419, 7
        %v4421 = vsub.s32 5, %v4420
        %v4422 = vrot.slane %v352, %v4421
        %v4423 = vlaneseq
        %v4424 = vshrl.u32 %v4423, 7
        %v4425 = vsub.s32 6, %v4424
        %v4426 = vrot.slane %v352, %v4425
        %v4946 = vunpack.c.l.b16 %v3886
        %v4947 = vunpack.c.h.b16 %v3886
        %v4948 = vunpack.c.l.b16 %v3887
        %v4949 = vunpack.c.h.b16 %v3887
        %v4950 = vunpack.c.l.b16 %v3888
        %v4951 = vunpack.c.h.b16 %v3888
        %v4952 = vunpack.c.l.b16 %v3889
        %v4953 = vunpack.c.l.b16 %v3890
        %v4954 = vunpack.c.h.b16 %v3890
        %v4955 = vunpack.c.l.b16 %v3891
        %v4956 = vunpack.c.h.b16 %v3891
        %v4957 = vunpack.c.l.b16 %v3892
        %v4958 = vunpack.c.h.b16 %v3892
        %v4959 = vunpack.c.l.b16 %v3893
        %v4960 = vunpack.c.l.b16 %v3894
        %v4961 = vunpack.c.h.b16 %v3894
        %v4962 = vunpack.c.l.b16 %v3895
        %v4963 = vunpack.c.h.b16 %v3895
        %v4964 = vunpack.c.l.b16 %v3896
        %v4965 = vunpack.c.h.b16 %v3896
        %v4966 = vunpack.c.l.b16 %v3897
        %v4967 = vunpack.c.l.b16 %v3898
        %v4968 = vunpack.c.h.b16 %v3898
        %v4969 = vunpack.c.l.b16 %v3899
        %v4970 = vunpack.c.h.b16 %v3899
        %v4971 = vunpack.c.l.b16 %v3900
        %v4972 = vunpack.c.h.b16 %v3900
        %v4973 = vunpack.c.l.b16 %v3901
        %v4974 = vunpack.c.l.b16 %v3902
        %v4975 = vunpack.c.h.b16 %v3902
        %v4976 = vunpack.c.l.b16 %v3903
        %v4977 = vunpack.c.h.b16 %v3903
        %v4978 = vunpack.c.l.b16 %v3904
        %v4979 = vunpack.c.h.b16 %v3904
        %v4980 = vunpack.c.l.b16 %v3905
        %v4981 = vunpack.c.l.b16 %v3906
        %v4982 = vunpack.c.h.b16 %v3906
        %v4983 = vunpack.c.l.b16 %v3907
        %v4984 = vunpack.c.h.b16 %v3907
        %v4985 = vunpack.c.l.b16 %v3908
        %v4986 = vunpack.c.h.b16 %v3908
        %v4987 = vunpack.c.l.b16 %v3909
        %v4988 = vunpack.c.l.b16 %v3910
        %v4989 = vunpack.c.h.b16 %v3910
        %v4990 = vunpack.c.l.b16 %v3911
        %v4991 = vunpack.c.h.b16 %v3911
        %v4992 = vunpack.c.l.b16 %v3912
        %v4993 = vunpack.c.h.b16 %v3912
        %v4994 = vunpack.c.l.b16 %v3913
        %v4995 = vunpack.c.l.b16 %v3914
        %v4996 = vunpack.c.h.b16 %v3914
        %v4997 = vunpack.c.l.b16 %v3915
        %v4998 = vunpack.c.h.b16 %v3915
        %v4999 = vunpack.c.l.b16 %v3916
        %v5000 = vunpack.c.h.b16 %v3916
        %v5001 = vunpack.c.l.b16 %v3917
        %v5002 = vunpack.c.l.b16 %v3918
        %v5003 = vunpack.c.h.b16 %v3918
        %v5004 = vunpack.c.l.b16 %v3919
        %v5005 = vunpack.c.h.b16 %v3919
        %v5006 = vunpack.c.l.b16 %v3920
        %v5007 = vunpack.c.h.b16 %v3920
        %v5008 = vunpack.c.l.b16 %v3921
        %v5009 = vunpack.c.l.b16 %v3922
        %v5010 = vunpack.c.h.b16 %v3922
        %v5011 = vunpack.c.l.b16 %v3923
        %v5012 = vunpack.c.h.b16 %v3923
        %v5013 = vunpack.c.l.b16 %v3924
        %v5014 = vunpack.c.h.b16 %v3924
        %v5015 = vunpack.c.l.b16 %v3925
        %v5016 = vunpack.c.l.b16 %v3926
        %v5017 = vunpack.c.h.b16 %v3926
        %v5018 = vunpack.c.l.b16 %v3927
        %v5019 = vunpack.c.h.b16 %v3927
        %v5020 = vunpack.c.l.b16 %v3928
        %v5021 = vunpack.c.h.b16 %v3928
        %v5022 = vunpack.c.l.b16 %v3929
        %v5023 = vunpack.c.l.b16 %v3930
        %v5024 = vunpack.c.h.b16 %v3930
        %v5025 = vunpack.c.l.b16 %v3931
        %v5026 = vunpack.c.h.b16 %v3931
        %v5027 = vunpack.c.l.b16 %v3932
        %v5028 = vunpack.c.h.b16 %v3932
        %v5029 = vunpack.c.l.b16 %v3933
        %v5030 = vunpack.c.l.b16 %v3934
        %v5031 = vunpack.c.h.b16 %v3934
        %v5032 = vunpack.c.l.b16 %v3935
        %v5033 = vunpack.c.h.b16 %v3935
        %v5034 = vunpack.c.l.b16 %v3936
        %v5035 = vunpack.c.h.b16 %v3936
        %v5036 = vunpack.c.l.b16 %v3937
        %v5037 = vunpack.c.l.b16 %v3938
        %v5038 = vunpack.c.h.b16 %v3938
        %v5039 = vunpack.c.l.b16 %v3939
        %v5040 = vunpack.c.h.b16 %v3939
        %v5041 = vunpack.c.l.b16 %v3940
        %v5042 = vunpack.c.h.b16 %v3940
        %v5043 = vunpack.c.l.b16 %v3941
        %v5044 = vunpack.c.l.b16 %v3942
        %v5045 = vunpack.c.h.b16 %v3942
        %v5046 = vunpack.c.l.b16 %v3943
        %v5047 = vunpack.c.h.b16 %v3943
        %v5048 = vunpack.c.l.b16 %v3944
        %v5049 = vunpack.c.h.b16 %v3944
        %v5050 = vunpack.c.l.b16 %v3945
        %v5051 = vunpack.c.l.b16 %v3946
        %v5052 = vunpack.c.h.b16 %v3946
        %v5053 = vunpack.c.l.b16 %v3947
        %v5054 = vunpack.c.h.b16 %v3947
        %v5055 = vunpack.c.l.b16 %v3948
        %v5056 = vunpack.c.h.b16 %v3948
        %v5057 = vunpack.c.l.b16 %v3949
        %v5058 = vunpack.c.l.b16 %v3950
        %v5059 = vunpack.c.h.b16 %v3950
        %v5060 = vunpack.c.l.b16 %v3951
        %v5061 = vunpack.c.h.b16 %v3951
        %v5062 = vunpack.c.l.b16 %v3952
        %v5063 = vunpack.c.h.b16 %v3952
        %v5064 = vunpack.c.l.b16 %v3953
        %v5065 = vunpack.c.l.b16 %v3954
        %v5066 = vunpack.c.h.b16 %v3954
        %v5067 = vunpack.c.l.b16 %v3955
        %v5068 = vunpack.c.h.b16 %v3955
        %v5069 = vunpack.c.l.b16 %v3956
        %v5070 = vunpack.c.h.b16 %v3956
        %v5071 = vunpack.c.l.b16 %v3957
        %v5072 = vunpack.c.l.b16 %v3958
        %v5073 = vunpack.c.h.b16 %v3958
        %v5074 = vunpack.c.l.b16 %v3959
        %v5075 = vunpack.c.h.b16 %v3959
        %v5076 = vunpack.c.l.b16 %v3960
        %v5077 = vunpack.c.h.b16 %v3960
        %v5078 = vunpack.c.l.b16 %v3961
        %v5079 = vunpack.c.l.b16 %v3962
        %v5080 = vunpack.c.h.b16 %v3962
        %v5081 = vunpack.c.l.b16 %v3963
        %v5082 = vunpack.c.h.b16 %v3963
        %v5083 = vunpack.c.l.b16 %v3964
        %v5084 = vunpack.c.h.b16 %v3964
        %v5085 = vunpack.c.l.b16 %v3965
        %v5086 = vunpack.c.l.b16 %v3966
        %v5087 = vunpack.c.h.b16 %v3966
        %v5088 = vunpack.c.l.b16 %v3967
        %v5089 = vunpack.c.h.b16 %v3967
        %v5090 = vunpack.c.l.b16 %v3968
        %v5091 = vunpack.c.h.b16 %v3968
        %v5092 = vunpack.c.l.b16 %v3969
        %v5093 = vunpack.c.l.b16 %v3970
        %v5094 = vunpack.c.h.b16 %v3970
        %v5095 = vunpack.c.l.b16 %v3971
        %v5096 = vunpack.c.h.b16 %v3971
        %v5097 = vunpack.c.l.b16 %v3972
        %v5098 = vunpack.c.h.b16 %v3972
        %v5099 = vunpack.c.l.b16 %v3973
        %v5100 = vunpack.c.l.b16 %v3974
        %v5101 = vunpack.c.h.b16 %v3974
        %v5102 = vunpack.c.l.b16 %v3975
        %v5103 = vunpack.c.h.b16 %v3975
        %v5104 = vunpack.c.l.b16 %v3976
        %v5105 = vunpack.c.h.b16 %v3976
        %v5106 = vunpack.c.l.b16 %v3977
        %v5107 = vunpack.c.l.b16 %v3978
        %v5108 = vunpack.c.h.b16 %v3978
        %v5109 = vunpack.c.l.b16 %v3979
        %v5110 = vunpack.c.h.b16 %v3979
        %v5111 = vunpack.c.l.b16 %v3980
        %v5112 = vunpack.c.h.b16 %v3980
        %v5113 = vunpack.c.l.b16 %v3981
        %v5114 = vunpack.c.l.b16 %v3982
        %v5115 = vunpack.c.h.b16 %v3982
        %v5116 = vunpack.c.l.b16 %v3983
        %v5117 = vunpack.c.h.b16 %v3983
        %v5118 = vunpack.c.l.b16 %v3984
        %v5119 = vunpack.c.h.b16 %v3984
        %v5120 = vunpack.c.l.b16 %v3985
        %v5121 = vunpack.c.l.b16 %v3986
        %v5122 = vunpack.c.h.b16 %v3986
        %v5123 = vunpack.c.l.b16 %v3987
        %v5124 = vunpack.c.h.b16 %v3987
        %v5125 = vunpack.c.l.b16 %v3988
        %v5126 = vunpack.c.h.b16 %v3988
        %v5127 = vunpack.c.l.b16 %v3989
        %v5128 = vunpack.c.l.b16 %v3990
        %v5129 = vunpack.c.h.b16 %v3990
        %v5130 = vunpack.c.l.b16 %v3991
        %v5131 = vunpack.c.h.b16 %v3991
        %v5132 = vunpack.c.l.b16 %v3992
        %v5133 = vunpack.c.h.b16 %v3992
        %v5134 = vunpack.c.l.b16 %v3993
        %v5135 = vunpack.c.l.b16 %v3994
        %v5136 = vunpack.c.h.b16 %v3994
        %v5137 = vunpack.c.l.b16 %v3995
        %v5138 = vunpack.c.h.b16 %v3995
        %v5139 = vunpack.c.l.b16 %v3996
        %v5140 = vunpack.c.h.b16 %v3996
        %v5141 = vunpack.c.l.b16 %v3997
        %v5142 = vunpack.c.l.b16 %v3998
        %v5143 = vunpack.c.h.b16 %v3998
        %v5144 = vunpack.c.l.b16 %v3999
        %v5145 = vunpack.c.h.b16 %v3999
        %v5146 = vunpack.c.l.b16 %v4000
        %v5147 = vunpack.c.h.b16 %v4000
        %v5148 = vunpack.c.l.b16 %v4001
        %v5149 = vunpack.c.l.b16 %v4002
        %v5150 = vunpack.c.h.b16 %v4002
        %v5151 = vunpack.c.l.b16 %v4003
        %v5152 = vunpack.c.h.b16 %v4003
        %v5153 = vunpack.c.l.b16 %v4004
        %v5154 = vunpack.c.h.b16 %v4004
        %v5155 = vunpack.c.l.b16 %v4005
        %v5156 = vunpack.c.l.b16 %v4006
        %v5157 = vunpack.c.h.b16 %v4006
        %v5158 = vunpack.c.l.b16 %v4007
        %v5159 = vunpack.c.h.b16 %v4007
        %v5160 = vunpack.c.l.b16 %v4008
        %v5161 = vunpack.c.h.b16 %v4008
        %v5162 = vunpack.c.l.b16 %v4009
        %v5163 = vunpack.c.l.b16 %v4010
        %v5164 = vunpack.c.h.b16 %v4010
        %v5165 = vunpack.c.l.b16 %v4011
        %v5166 = vunpack.c.h.b16 %v4011
        %v5167 = vunpack.c.l.b16 %v4012
        %v5168 = vunpack.c.h.b16 %v4012
        %v5169 = vunpack.c.l.b16 %v4013
        %v5170 = vunpack.c.l.b16 %v4014
        %v5171 = vunpack.c.h.b16 %v4014
        %v5172 = vunpack.c.l.b16 %v4015
        %v5173 = vunpack.c.h.b16 %v4015
        %v5174 = vunpack.c.l.b16 %v4016
        %v5175 = vunpack.c.h.b16 %v4016
        %v5176 = vunpack.c.l.b16 %v4017
        %v5177 = vunpack.c.l.b16 %v4018
        %v5178 = vunpack.c.h.b16 %v4018
        %v5179 = vunpack.c.l.b16 %v4019
        %v5180 = vunpack.c.h.b16 %v4019
        %v5181 = vunpack.c.l.b16 %v4020
        %v5182 = vunpack.c.h.b16 %v4020
        %v5183 = vunpack.c.l.b16 %v4021
        %v5184 = vunpack.c.l.b16 %v4022
        %v5185 = vunpack.c.h.b16 %v4022
        %v5186 = vunpack.c.l.b16 %v4023
        %v5187 = vunpack.c.h.b16 %v4023
        %v5188 = vunpack.c.l.b16 %v4024
        %v5189 = vunpack.c.h.b16 %v4024
        %v5190 = vunpack.c.l.b16 %v4025
        %v5191 = vunpack.c.l.b16 %v4026
        %v5192 = vunpack.c.h.b16 %v4026
        %v5193 = vunpack.c.l.b16 %v4027
        %v5194 = vunpack.c.h.b16 %v4027
        %v5195 = vunpack.c.l.b16 %v4028
        %v5196 = vunpack.c.h.b16 %v4028
        %v5197 = vunpack.c.l.b16 %v4029
        %v5198 = vunpack.c.l.b16 %v4030
        %v5199 = vunpack.c.h.b16 %v4030
        %v5200 = vunpack.c.l.b16 %v4031
        %v5201 = vunpack.c.h.b16 %v4031
        %v5202 = vunpack.c.l.b16 %v4032
        %v5203 = vunpack.c.h.b16 %v4032
        %v5204 = vunpack.c.l.b16 %v4033
        %v5205 = vunpack.c.l.b16 %v4034
        %v5206 = vunpack.c.h.b16 %v4034
        %v5207 = vunpack.c.l.b16 %v4035
        %v5208 = vunpack.c.h.b16 %v4035
        %v5209 = vunpack.c.l.b16 %v4036
        %v5210 = vunpack.c.h.b16 %v4036
        %v5211 = vunpack.c.l.b16 %v4037
        %v5212 = vunpack.c.l.b16 %v4038
        %v5213 = vunpack.c.h.b16 %v4038
        %v5214 = vunpack.c.l.b16 %v4039
        %v5215 = vunpack.c.h.b16 %v4039
        %v5216 = vunpack.c.l.b16 %v4040
        %v5217 = vunpack.c.h.b16 %v4040
        %v5218 = vunpack.c.l.b16 %v4041
        %v5219 = vunpack.c.l.b16 %v4042
        %v5220 = vunpack.c.h.b16 %v4042
        %v5221 = vunpack.c.l.b16 %v4043
        %v5222 = vunpack.c.h.b16 %v4043
        %v5223 = vunpack.c.l.b16 %v4044
        %v5224 = vunpack.c.h.b16 %v4044
        %v5225 = vunpack.c.l.b16 %v4045
        %v5226 = vunpack.c.l.b16 %v4046
        %v5227 = vunpack.c.h.b16 %v4046
        %v5228 = vunpack.c.l.b16 %v4047
        %v5229 = vunpack.c.h.b16 %v4047
        %v5230 = vunpack.c.l.b16 %v4048
        %v5231 = vunpack.c.h.b16 %v4048
        %v5232 = vunpack.c.l.b16 %v4049
        %v5233 = vunpack.c.l.b16 %v4050
        %v5234 = vunpack.c.h.b16 %v4050
        %v5235 = vunpack.c.l.b16 %v4051
        %v5236 = vunpack.c.h.b16 %v4051
        %v5237 = vunpack.c.l.b16 %v4052
        %v5238 = vunpack.c.h.b16 %v4052
        %v5239 = vunpack.c.l.b16 %v4053
        %v5240 = vunpack.c.l.b16 %v4054
        %v5241 = vunpack.c.h.b16 %v4054
        %v5242 = vunpack.c.l.b16 %v4055
        %v5243 = vunpack.c.h.b16 %v4055
        %v5244 = vunpack.c.l.b16 %v4056
        %v5245 = vunpack.c.h.b16 %v4056
        %v5246 = vunpack.c.l.b16 %v4057
        %v5247 = vunpack.c.l.b16 %v4058
        %v5248 = vunpack.c.h.b16 %v4058
        %v5249 = vunpack.c.l.b16 %v4059
        %v5250 = vunpack.c.h.b16 %v4059
        %v5251 = vunpack.c.l.b16 %v4060
        %v5252 = vunpack.c.h.b16 %v4060
        %v5253 = vunpack.c.l.b16 %v4061
        %v5254 = vunpack.c.l.b16 %v4062
        %v5255 = vunpack.c.h.b16 %v4062
        %v5256 = vunpack.c.l.b16 %v4063
        %v5257 = vunpack.c.h.b16 %v4063
        %v5258 = vunpack.c.l.b16 %v4064
        %v5259 = vunpack.c.h.b16 %v4064
        %v5260 = vunpack.c.l.b16 %v4065
        %v5261 = vunpack.c.l.b16 %v4066
        %v5262 = vunpack.c.h.b16 %v4066
        %v5263 = vunpack.c.l.b16 %v4067
        %v5264 = vunpack.c.h.b16 %v4067
        %v5265 = vunpack.c.l.b16 %v4068
        %v5266 = vunpack.c.h.b16 %v4068
        %v5267 = vunpack.c.l.b16 %v4069
        %v5268 = vunpack.c.l.b16 %v4070
        %v5269 = vunpack.c.h.b16 %v4070
        %v5270 = vunpack.c.l.b16 %v4071
        %v5271 = vunpack.c.h.b16 %v4071
        %v5272 = vunpack.c.l.b16 %v4072
        %v5273 = vunpack.c.h.b16 %v4072
        %v5274 = vunpack.c.l.b16 %v4073
        %v5275 = vunpack.c.l.b16 %v4074
        %v5276 = vunpack.c.h.b16 %v4074
        %v5277 = vunpack.c.l.b16 %v4075
        %v5278 = vunpack.c.h.b16 %v4075
        %v5279 = vunpack.c.l.b16 %v4076
        %v5280 = vunpack.c.h.b16 %v4076
        %v5281 = vunpack.c.l.b16 %v4077
        %v5282 = vunpack.c.l.b16 %v4078
        %v5283 = vunpack.c.h.b16 %v4078
        %v5284 = vunpack.c.l.b16 %v4079
        %v5285 = vunpack.c.h.b16 %v4079
        %v5286 = vunpack.c.l.b16 %v4080
        %v5287 = vunpack.c.h.b16 %v4080
        %v5288 = vunpack.c.l.b16 %v4081
        %v5289 = vunpack.c.l.b16 %v4082
        %v5290 = vunpack.c.h.b16 %v4082
        %v5291 = vunpack.c.l.b16 %v4083
        %v5292 = vunpack.c.h.b16 %v4083
        %v5293 = vunpack.c.l.b16 %v4084
        %v5294 = vunpack.c.h.b16 %v4084
        %v5295 = vunpack.c.l.b16 %v4085
        %v5296 = vunpack.c.l.b16 %v4086
        %v5297 = vunpack.c.h.b16 %v4086
        %v5298 = vunpack.c.l.b16 %v4087
        %v5299 = vunpack.c.h.b16 %v4087
        %v5300 = vunpack.c.l.b16 %v4088
        %v5301 = vunpack.c.h.b16 %v4088
        %v5302 = vunpack.c.l.b16 %v4089
        %v5303 = vunpack.c.l.b16 %v4090
        %v5304 = vunpack.c.h.b16 %v4090
        %v5305 = vunpack.c.l.b16 %v4091
        %v5306 = vunpack.c.h.b16 %v4091
        %v5307 = vunpack.c.l.b16 %v4092
        %v5308 = vunpack.c.h.b16 %v4092
        %v5309 = vunpack.c.l.b16 %v4093
        %v5310 = vunpack.c.l.b16 %v4094
        %v5311 = vunpack.c.h.b16 %v4094
        %v5312 = vunpack.c.l.b16 %v4095
        %v5313 = vunpack.c.h.b16 %v4095
        %v5314 = vunpack.c.l.b16 %v4096
        %v5315 = vunpack.c.h.b16 %v4096
        %v5316 = vunpack.c.l.b16 %v4097
        %v5317 = vunpack.c.l.b16 %v4098
        %v5318 = vunpack.c.h.b16 %v4098
        %v5319 = vunpack.c.l.b16 %v4099
        %v5320 = vunpack.c.h.b16 %v4099
        %v5321 = vunpack.c.l.b16 %v4100
        %v5322 = vunpack.c.h.b16 %v4100
        %v5323 = vunpack.c.l.b16 %v4101
        %v5324 = vunpack.c.l.b16 %v4102
        %v5325 = vunpack.c.h.b16 %v4102
        %v5326 = vunpack.c.l.b16 %v4103
        %v5327 = vunpack.c.h.b16 %v4103
        %v5328 = vunpack.c.l.b16 %v4104
        %v5329 = vunpack.c.h.b16 %v4104
        %v5330 = vunpack.c.l.b16 %v4105
        %v5331 = vunpack.c.l.b16 %v4106
        %v5332 = vunpack.c.h.b16 %v4106
        %v5333 = vunpack.c.l.b16 %v4107
        %v5334 = vunpack.c.h.b16 %v4107
        %v5335 = vunpack.c.l.b16 %v4108
        %v5336 = vunpack.c.h.b16 %v4108
        %v5337 = vunpack.c.l.b16 %v4109
        %v5338 = vunpack.c.l.b16 %v4110
        %v5339 = vunpack.c.h.b16 %v4110
        %v5340 = vunpack.c.l.b16 %v4111
        %v5341 = vunpack.c.h.b16 %v4111
        %v5342 = vunpack.c.l.b16 %v4112
        %v5343 = vunpack.c.h.b16 %v4112
        %v5344 = vunpack.c.l.b16 %v4113
        %v5345 = vunpack.c.l.b16 %v4114
        %v5346 = vunpack.c.h.b16 %v4114
        %v5347 = vunpack.c.l.b16 %v4115
        %v5348 = vunpack.c.h.b16 %v4115
        %v5349 = vunpack.c.l.b16 %v4116
        %v5350 = vunpack.c.h.b16 %v4116
        %v5351 = vunpack.c.l.b16 %v4117
        %v5352 = vunpack.c.l.b16 %v4118
        %v5353 = vunpack.c.h.b16 %v4118
        %v5354 = vunpack.c.l.b16 %v4119
        %v5355 = vunpack.c.h.b16 %v4119
        %v5356 = vunpack.c.l.b16 %v4120
        %v5357 = vunpack.c.h.b16 %v4120
        %v5358 = vunpack.c.l.b16 %v4121
        %v5359 = vunpack.c.l.b16 %v4122
        %v5360 = vunpack.c.h.b16 %v4122
        %v5361 = vunpack.c.l.b16 %v4123
        %v5362 = vunpack.c.h.b16 %v4123
        %v5363 = vunpack.c.l.b16 %v4124
        %v5364 = vunpack.c.h.b16 %v4124
        %v5365 = vunpack.c.l.b16 %v4125
        %v5366 = vunpack.c.l.b16 %v4126
        %v5367 = vunpack.c.h.b16 %v4126
        %v5368 = vunpack.c.l.b16 %v4127
        %v5369 = vunpack.c.h.b16 %v4127
        %v5370 = vunpack.c.l.b16 %v4128
        %v5371 = vunpack.c.h.b16 %v4128
        %v5372 = vunpack.c.l.b16 %v4129
        %v5373 = vunpack.c.l.b16 %v4130
        %v5374 = vunpack.c.h.b16 %v4130
        %v5375 = vunpack.c.l.b16 %v4131
        %v5376 = vunpack.c.h.b16 %v4131
        %v5377 = vunpack.c.l.b16 %v4132
        %v5378 = vunpack.c.h.b16 %v4132
        %v5379 = vunpack.c.l.b16 %v4133
        %v5380 = vunpack.c.l.b16 %v4134
        %v5381 = vunpack.c.h.b16 %v4134
        %v5382 = vunpack.c.l.b16 %v4135
        %v5383 = vunpack.c.h.b16 %v4135
        %v5384 = vunpack.c.l.b16 %v4136
        %v5385 = vunpack.c.h.b16 %v4136
        %v5386 = vunpack.c.l.b16 %v4137
        %v5387 = vunpack.c.l.b16 %v4138
        %v5388 = vunpack.c.h.b16 %v4138
        %v5389 = vunpack.c.l.b16 %v4139
        %v5390 = vunpack.c.h.b16 %v4139
        %v5391 = vunpack.c.l.b16 %v4140
        %v5392 = vunpack.c.h.b16 %v4140
        %v5393 = vunpack.c.l.b16 %v4141
        %v5394 = vunpack.c.l.b16 %v4142
        %v5395 = vunpack.c.h.b16 %v4142
        %v5396 = vunpack.c.l.b16 %v4143
        %v5397 = vunpack.c.h.b16 %v4143
        %v5398 = vunpack.c.l.b16 %v4144
        %v5399 = vunpack.c.h.b16 %v4144
        %v5400 = vunpack.c.l.b16 %v4145
        %v5401 = vunpack.c.l.b16 %v4146
        %v5402 = vunpack.c.h.b16 %v4146
        %v5403 = vunpack.c.l.b16 %v4147
        %v5404 = vunpack.c.h.b16 %v4147
        %v5405 = vunpack.c.l.b16 %v4148
        %v5406 = vunpack.c.h.b16 %v4148
        %v5407 = vunpack.c.l.b16 %v4149
        %v5408 = vunpack.c.l.b16 %v4150
        %v5409 = vunpack.c.h.b16 %v4150
        %v5410 = vunpack.c.l.b16 %v4151
        %v5411 = vunpack.c.h.b16 %v4151
        %v5412 = vunpack.c.l.b16 %v4152
        %v5413 = vunpack.c.h.b16 %v4152
        %v5414 = vunpack.c.l.b16 %v4153
        %v5415 = vunpack.c.l.b16 %v4154
        %v5416 = vunpack.c.h.b16 %v4154
        %v5417 = vunpack.c.l.b16 %v4155
        %v5418 = vunpack.c.h.b16 %v4155
        %v5419 = vunpack.c.l.b16 %v4156
        %v5420 = vunpack.c.h.b16 %v4156
        %v5421 = vunpack.c.l.b16 %v4157
        %v5422 = vunpack.c.l.b16 %v4158
        %v5423 = vunpack.c.h.b16 %v4158
        %v5424 = vunpack.c.l.b16 %v4159
        %v5425 = vunpack.c.h.b16 %v4159
        %v5426 = vunpack.c.l.b16 %v4160
        %v5427 = vunpack.c.h.b16 %v4160
        %v5428 = vunpack.c.l.b16 %v4161
        %v5429 = vunpack.c.l.b16 %v4162
        %v5430 = vunpack.c.h.b16 %v4162
        %v5431 = vunpack.c.l.b16 %v4163
        %v5432 = vunpack.c.h.b16 %v4163
        %v5433 = vunpack.c.l.b16 %v4164
        %v5434 = vunpack.c.h.b16 %v4164
        %v5435 = vunpack.c.l.b16 %v4165
        %v5436 = vunpack.c.l.b16 %v4166
        %v5437 = vunpack.c.h.b16 %v4166
        %v5438 = vunpack.c.l.b16 %v4167
        %v5439 = vunpack.c.h.b16 %v4167
        %v5440 = vunpack.c.l.b16 %v4168
        %v5441 = vunpack.c.h.b16 %v4168
        %v5442 = vunpack.c.l.b16 %v4169
        %v5443 = vunpack.c.l.b16 %v4170
        %v5444 = vunpack.c.h.b16 %v4170
        %v5445 = vunpack.c.l.b16 %v4171
        %v5446 = vunpack.c.h.b16 %v4171
        %v5447 = vunpack.c.l.b16 %v4172
        %v5448 = vunpack.c.h.b16 %v4172
        %v5449 = vunpack.c.l.b16 %v4173
        %v5450 = vunpack.c.l.b16 %v4174
        %v5451 = vunpack.c.h.b16 %v4174
        %v5452 = vunpack.c.l.b16 %v4175
        %v5453 = vunpack.c.h.b16 %v4175
        %v5454 = vunpack.c.l.b16 %v4176
        %v5455 = vunpack.c.h.b16 %v4176
        %v5456 = vunpack.c.l.b16 %v4177
        %v5457 = vunpack.c.l.b16 %v4178
        %v5458 = vunpack.c.h.b16 %v4178
        %v5459 = vunpack.c.l.b16 %v4179
        %v5460 = vunpack.c.h.b16 %v4179
        %v5461 = vunpack.c.l.b16 %v4180
        %v5462 = vunpack.c.h.b16 %v4180
        %v5463 = vunpack.c.l.b16 %v4181
        %v5464 = vunpack.c.l.b16 %v4182
        %v5465 = vunpack.c.h.b16 %v4182
        %v5466 = vunpack.c.l.b16 %v4183
        %v5467 = vunpack.c.h.b16 %v4183
        %v5468 = vunpack.c.l.b16 %v4184
        %v5469 = vunpack.c.h.b16 %v4184
        %v5470 = vunpack.c.l.b16 %v4185
        %v5471 = vunpack.c.l.b16 %v4186
        %v5472 = vunpack.c.h.b16 %v4186
        %v5473 = vunpack.c.l.b16 %v4187
        %v5474 = vunpack.c.h.b16 %v4187
        %v5475 = vunpack.c.l.b16 %v4188
        %v5476 = vunpack.c.h.b16 %v4188
        %v5477 = vunpack.c.l.b16 %v4189
        %v5478 = vunpack.c.l.b16 %v4190
        %v5479 = vunpack.c.h.b16 %v4190
        %v5480 = vunpack.c.l.b16 %v4191
        %v5481 = vunpack.c.h.b16 %v4191
        %v5482 = vunpack.c.l.b16 %v4192
        %v5483 = vunpack.c.h.b16 %v4192
        %v5484 = vunpack.c.l.b16 %v4193
        %v5485 = vunpack.c.l.b16 %v4194
        %v5486 = vunpack.c.h.b16 %v4194
        %v5487 = vunpack.c.l.b16 %v4195
        %v5488 = vunpack.c.h.b16 %v4195
        %v5489 = vunpack.c.l.b16 %v4196
        %v5490 = vunpack.c.h.b16 %v4196
        %v5491 = vunpack.c.l.b16 %v4197
        %v5492 = vunpack.c.l.b16 %v4198
        %v5493 = vunpack.c.h.b16 %v4198
        %v5494 = vunpack.c.l.b16 %v4199
        %v5495 = vunpack.c.h.b16 %v4199
        %v5496 = vunpack.c.l.b16 %v4200
        %v5497 = vunpack.c.h.b16 %v4200
        %v5498 = vunpack.c.l.b16 %v4201
        %v5499 = vunpack.c.l.b16 %v4202
        %v5500 = vunpack.c.h.b16 %v4202
        %v5501 = vunpack.c.l.b16 %v4203
        %v5502 = vunpack.c.h.b16 %v4203
        %v5503 = vunpack.c.l.b16 %v4204
        %v5504 = vunpack.c.h.b16 %v4204
        %v5505 = vunpack.c.l.b16 %v4205
        %v5506 = vunpack.c.l.b16 %v4206
        %v5507 = vunpack.c.h.b16 %v4206
        %v5508 = vunpack.c.l.b16 %v4207
        %v5509 = vunpack.c.h.b16 %v4207
        %v5510 = vunpack.c.l.b16 %v4208
        %v5511 = vunpack.c.h.b16 %v4208
        %v5512 = vunpack.c.l.b16 %v4209
        %v5513 = vunpack.c.l.b16 %v4210
        %v5514 = vunpack.c.h.b16 %v4210
        %v5515 = vunpack.c.l.b16 %v4211
        %v5516 = vunpack.c.h.b16 %v4211
        %v5517 = vunpack.c.l.b16 %v4212
        %v5518 = vunpack.c.h.b16 %v4212
        %v5519 = vunpack.c.l.b16 %v4213
        %v5520 = vunpack.c.l.b16 %v4214
        %v5521 = vunpack.c.h.b16 %v4214
        %v5522 = vunpack.c.l.b16 %v4215
        %v5523 = vunpack.c.h.b16 %v4215
        %v5524 = vunpack.c.l.b16 %v4216
        %v5525 = vunpack.c.h.b16 %v4216
        %v5526 = vunpack.c.l.b16 %v4217
        %v5527 = vunpack.c.l.b16 %v4218
        %v5528 = vunpack.c.h.b16 %v4218
        %v5529 = vunpack.c.l.b16 %v4219
        %v5530 = vunpack.c.h.b16 %v4219
        %v5531 = vunpack.c.l.b16 %v4220
        %v5532 = vunpack.c.h.b16 %v4220
        %v5533 = vunpack.c.l.b16 %v4221
        %v5534 = vunpack.c.l.b16 %v4222
        %v5535 = vunpack.c.h.b16 %v4222
        %v5536 = vunpack.c.l.b16 %v4223
        %v5537 = vunpack.c.h.b16 %v4223
        %v5538 = vunpack.c.l.b16 %v4224
        %v5539 = vunpack.c.h.b16 %v4224
        %v5540 = vunpack.c.l.b16 %v4225
        %v5541 = vunpack.c.l.b16 %v4226
        %v5542 = vunpack.c.h.b16 %v4226
        %v5543 = vunpack.c.l.b16 %v4227
        %v5544 = vunpack.c.h.b16 %v4227
        %v5545 = vunpack.c.l.b16 %v4228
        %v5546 = vunpack.c.h.b16 %v4228
        %v5547 = vunpack.c.l.b16 %v4229
        %v5548 = vunpack.c.l.b16 %v4230
        %v5549 = vunpack.c.h.b16 %v4230
        %v5550 = vunpack.c.l.b16 %v4231
        %v5551 = vunpack.c.h.b16 %v4231
        %v5552 = vunpack.c.l.b16 %v4232
        %v5553 = vunpack.c.h.b16 %v4232
        %v5554 = vunpack.c.l.b16 %v4233
        %v5555 = vunpack.c.l.b16 %v4234
        %v5556 = vunpack.c.h.b16 %v4234
        %v5557 = vunpack.c.l.b16 %v4235
        %v5558 = vunpack.c.h.b16 %v4235
        %v5559 = vunpack.c.l.b16 %v4236
        %v5560 = vunpack.c.h.b16 %v4236
        %v5561 = vunpack.c.l.b16 %v4237
        %v5562 = vunpack.c.l.b16 %v4238
        %v5563 = vunpack.c.h.b16 %v4238
        %v5564 = vunpack.c.l.b16 %v4239
        %v5565 = vunpack.c.h.b16 %v4239
        %v5566 = vunpack.c.l.b16 %v4240
        %v5567 = vunpack.c.h.b16 %v4240
        %v5568 = vunpack.c.l.b16 %v4241
        %v5569 = vunpack.c.l.b16 %v4242
        %v5570 = vunpack.c.h.b16 %v4242
        %v5571 = vunpack.c.l.b16 %v4243
        %v5572 = vunpack.c.h.b16 %v4243
        %v5573 = vunpack.c.l.b16 %v4244
        %v5574 = vunpack.c.h.b16 %v4244
        %v5575 = vunpack.c.l.b16 %v4245
        %v5576 = vunpack.c.l.b16 %v4246
        %v5577 = vunpack.c.h.b16 %v4246
        %v5578 = vunpack.c.l.b16 %v4247
        %v5579 = vunpack.c.h.b16 %v4247
        %v5580 = vunpack.c.l.b16 %v4248
        %v5581 = vunpack.c.h.b16 %v4248
        %v5582 = vunpack.c.l.b16 %v4249
        %v5583 = vunpack.c.l.b16 %v4250
        %v5584 = vunpack.c.h.b16 %v4250
        %v5585 = vunpack.c.l.b16 %v4251
        %v5586 = vunpack.c.h.b16 %v4251
        %v5587 = vunpack.c.l.b16 %v4252
        %v5588 = vunpack.c.h.b16 %v4252
        %v5589 = vunpack.c.l.b16 %v4253
        %v5590 = vunpack.c.l.b16 %v4254
        %v5591 = vunpack.c.h.b16 %v4254
        %v5592 = vunpack.c.l.b16 %v4255
        %v5593 = vunpack.c.h.b16 %v4255
        %v5594 = vunpack.c.l.b16 %v4256
        %v5595 = vunpack.c.h.b16 %v4256
        %v5596 = vunpack.c.l.b16 %v4257
        %v5597 = vunpack.c.l.b16 %v4258
        %v5598 = vunpack.c.h.b16 %v4258
        %v5599 = vunpack.c.l.b16 %v4259
        %v5600 = vunpack.c.h.b16 %v4259
        %v5601 = vunpack.c.l.b16 %v4260
        %v5602 = vunpack.c.h.b16 %v4260
        %v5603 = vunpack.c.l.b16 %v4261
        %v5604 = vunpack.c.l.b16 %v4262
        %v5605 = vunpack.c.h.b16 %v4262
        %v5606 = vunpack.c.l.b16 %v4263
        %v5607 = vunpack.c.h.b16 %v4263
        %v5608 = vunpack.c.l.b16 %v4264
        %v5609 = vunpack.c.h.b16 %v4264
        %v5610 = vunpack.c.l.b16 %v4265
        %v5611 = vunpack.c.l.b16 %v4266
        %v5612 = vunpack.c.h.b16 %v4266
        %v5613 = vunpack.c.l.b16 %v4267
        %v5614 = vunpack.c.h.b16 %v4267
        %v5615 = vunpack.c.l.b16 %v4268
        %v5616 = vunpack.c.h.b16 %v4268
        %v5617 = vunpack.c.l.b16 %v4269
        %v5618 = vunpack.c.l.b16 %v4270
        %v5619 = vunpack.c.h.b16 %v4270
        %v5620 = vunpack.c.l.b16 %v4271
        %v5621 = vunpack.c.h.b16 %v4271
        %v5622 = vunpack.c.l.b16 %v4272
        %v5623 = vunpack.c.h.b16 %v4272
        %v5624 = vunpack.c.l.b16 %v4273
        %v5625 = vunpack.c.l.b16 %v4274
        %v5626 = vunpack.c.h.b16 %v4274
        %v5627 = vunpack.c.l.b16 %v4275
        %v5628 = vunpack.c.h.b16 %v4275
        %v5629 = vunpack.c.l.b16 %v4276
        %v5630 = vunpack.c.h.b16 %v4276
        %v5631 = vunpack.c.l.b16 %v4277
        %v5632 = vunpack.c.l.b16 %v4278
        %v5633 = vunpack.c.h.b16 %v4278
        %v5634 = vunpack.c.l.b16 %v4279
        %v5635 = vunpack.c.h.b16 %v4279
        %v5636 = vunpack.c.l.b16 %v4280
        %v5637 = vunpack.c.h.b16 %v4280
        %v5638 = vunpack.c.l.b16 %v4281
        %v5639 = vunpack.c.l.b16 %v4282
        %v5640 = vunpack.c.h.b16 %v4282
        %v5641 = vunpack.c.l.b16 %v4283
        %v5642 = vunpack.c.h.b16 %v4283
        %v5643 = vunpack.c.l.b16 %v4284
        %v5644 = vunpack.c.h.b16 %v4284
        %v5645 = vunpack.c.l.b16 %v4285
        %v5646 = vunpack.c.l.b16 %v4286
        %v5647 = vunpack.c.h.b16 %v4286
        %v5648 = vunpack.c.l.b16 %v4287
        %v5649 = vunpack.c.h.b16 %v4287
        %v5650 = vunpack.c.l.b16 %v4288
        %v5651 = vunpack.c.h.b16 %v4288
        %v5652 = vunpack.c.l.b16 %v4289
        %v5653 = vunpack.c.l.b16 %v4290
        %v5654 = vunpack.c.h.b16 %v4290
        %v5655 = vunpack.c.l.b16 %v4291
        %v5656 = vunpack.c.h.b16 %v4291
        %v5657 = vunpack.c.l.b16 %v4292
        %v5658 = vunpack.c.h.b16 %v4292
        %v5659 = vunpack.c.l.b16 %v4293
        %v5660 = vunpack.c.l.b16 %v4294
        %v5661 = vunpack.c.h.b16 %v4294
        %v5662 = vunpack.c.l.b16 %v4295
        %v5663 = vunpack.c.h.b16 %v4295
        %v5664 = vunpack.c.l.b16 %v4296
        %v5665 = vunpack.c.h.b16 %v4296
        %v5666 = vunpack.c.l.b16 %v4297
        %v5667 = vunpack.c.l.b16 %v4298
        %v5668 = vunpack.c.h.b16 %v4298
        %v5669 = vunpack.c.l.b16 %v4299
        %v5670 = vunpack.c.h.b16 %v4299
        %v5671 = vunpack.c.l.b16 %v4300
        %v5672 = vunpack.c.h.b16 %v4300
        %v5673 = vunpack.c.l.b16 %v4301
        %v5674 = vunpack.c.l.b16 %v4302
        %v5675 = vunpack.c.h.b16 %v4302
        %v5676 = vunpack.c.l.b16 %v4303
        %v5677 = vunpack.c.h.b16 %v4303
        %v5678 = vunpack.c.l.b16 %v4304
        %v5679 = vunpack.c.h.b16 %v4304
        %v5680 = vunpack.c.l.b16 %v4305
        %v5681 = vunpack.c.l.b16 %v4306
        %v5682 = vunpack.c.h.b16 %v4306
        %v5683 = vunpack.c.l.b16 %v4307
        %v5684 = vunpack.c.h.b16 %v4307
        %v5685 = vunpack.c.l.b16 %v4308
        %v5686 = vunpack.c.h.b16 %v4308
        %v5687 = vunpack.c.l.b16 %v4309
        %v5688 = vunpack.c.l.b16 %v4310
        %v5689 = vunpack.c.h.b16 %v4310
        %v5690 = vunpack.c.l.b16 %v4311
        %v5691 = vunpack.c.h.b16 %v4311
        %v5692 = vunpack.c.l.b16 %v4312
        %v5693 = vunpack.c.h.b16 %v4312
        %v5694 = vunpack.c.l.b16 %v4313
        %v5695 = vunpack.c.l.b16 %v4314
        %v5696 = vunpack.c.h.b16 %v4314
        %v5697 = vunpack.c.l.b16 %v4315
        %v5698 = vunpack.c.h.b16 %v4315
        %v5699 = vunpack.c.l.b16 %v4316
        %v5700 = vunpack.c.h.b16 %v4316
        %v5701 = vunpack.c.l.b16 %v4317
        %v5702 = vunpack.c.l.b16 %v4318
        %v5703 = vunpack.c.h.b16 %v4318
        %v5704 = vunpack.c.l.b16 %v4319
        %v5705 = vunpack.c.h.b16 %v4319
        %v5706 = vunpack.c.l.b16 %v4320
        %v5707 = vunpack.c.h.b16 %v4320
        %v5708 = vunpack.c.l.b16 %v4321
        %v5709 = vunpack.c.l.b16 %v4322
        %v5710 = vunpack.c.h.b16 %v4322
        %v5711 = vunpack.c.l.b16 %v4323
        %v5712 = vunpack.c.h.b16 %v4323
        %v5713 = vunpack.c.l.b16 %v4324
        %v5714 = vunpack.c.h.b16 %v4324
        %v5715 = vunpack.c.l.b16 %v4325
        %v5716 = vunpack.c.l.b16 %v4326
        %v5717 = vunpack.c.h.b16 %v4326
        %v5718 = vunpack.c.l.b16 %v4327
        %v5719 = vunpack.c.h.b16 %v4327
        %v5720 = vunpack.c.l.b16 %v4328
        %v5721 = vunpack.c.h.b16 %v4328
        %v5722 = vunpack.c.l.b16 %v4329
        %v5723 = vunpack.c.l.b16 %v4330
        %v5724 = vunpack.c.h.b16 %v4330
        %v5725 = vunpack.c.l.b16 %v4331
        %v5726 = vunpack.c.h.b16 %v4331
        %v5727 = vunpack.c.l.b16 %v4332
        %v5728 = vunpack.c.h.b16 %v4332
        %v5729 = vunpack.c.l.b16 %v4333
        %v5730 = vunpack.c.l.b16 %v4334
        %v5731 = vunpack.c.h.b16 %v4334
        %v5732 = vunpack.c.l.b16 %v4335
        %v5733 = vunpack.c.h.b16 %v4335
        %v5734 = vunpack.c.l.b16 %v4336
        %v5735 = vunpack.c.h.b16 %v4336
        %v5736 = vunpack.c.l.b16 %v4337
        %v5737 = vunpack.c.l.b16 %v4338
        %v5738 = vunpack.c.h.b16 %v4338
        %v5739 = vunpack.c.l.b16 %v4339
        %v5740 = vunpack.c.h.b16 %v4339
        %v5741 = vunpack.c.l.b16 %v4340
        %v5742 = vunpack.c.h.b16 %v4340
        %v5743 = vunpack.c.l.b16 %v4341
        %v5744 = vunpack.c.l.b16 %v4342
        %v5745 = vunpack.c.h.b16 %v4342
        %v5746 = vunpack.c.l.b16 %v4343
        %v5747 = vunpack.c.h.b16 %v4343
        %v5748 = vunpack.c.l.b16 %v4344
        %v5749 = vunpack.c.h.b16 %v4344
        %v5750 = vunpack.c.l.b16 %v4345
        %v5751 = vunpack.c.l.b16 %v4346
        %v5752 = vunpack.c.h.b16 %v4346
        %v5753 = vunpack.c.l.b16 %v4347
        %v5754 = vunpack.c.h.b16 %v4347
        %v5755 = vunpack.c.l.b16 %v4348
        %v5756 = vunpack.c.h.b16 %v4348
        %v5757 = vunpack.c.l.b16 %v4349
        %v5758 = vunpack.c.l.b16 %v4350
        %v5759 = vunpack.c.h.b16 %v4350
        %v5760 = vunpack.c.l.b16 %v4351
        %v5761 = vunpack.c.h.b16 %v4351
        %v5762 = vunpack.c.l.b16 %v4352
        %v5763 = vunpack.c.h.b16 %v4352
        %v5764 = vunpack.c.l.b16 %v4353
        %v5765 = vunpack.c.l.b16 %v4354
        %v5766 = vunpack.c.h.b16 %v4354
        %v5767 = vunpack.c.l.b16 %v4355
        %v5768 = vunpack.c.h.b16 %v4355
        %v5769 = vunpack.c.l.b16 %v4356
        %v5770 = vunpack.c.h.b16 %v4356
        %v5771 = vunpack.c.l.b16 %v4357
        %v5772 = vunpack.c.l.b16 %v4358
        %v5773 = vunpack.c.h.b16 %v4358
        %v5774 = vunpack.c.l.b16 %v4359
        %v5775 = vunpack.c.h.b16 %v4359
        %v5776 = vunpack.c.l.b16 %v4360
        %v5777 = vunpack.c.h.b16 %v4360
        %v5778 = vunpack.c.l.b16 %v4361
        %v5779 = vunpack.c.l.b16 %v4362
        %v5780 = vunpack.c.h.b16 %v4362
        %v5781 = vunpack.c.l.b16 %v4363
        %v5782 = vunpack.c.h.b16 %v4363
        %v5783 = vunpack.c.l.b16 %v4364
        %v5784 = vunpack.c.h.b16 %v4364
        %v5785 = vunpack.c.l.b16 %v4365
        %v5786 = vunpack.c.l.b16 %v4366
        %v5787 = vunpack.c.h.b16 %v4366
        %v5788 = vunpack.c.l.b16 %v4367
        %v5789 = vunpack.c.h.b16 %v4367
        %v5790 = vunpack.c.l.b16 %v4368
        %v5791 = vunpack.c.h.b16 %v4368
        %v5792 = vunpack.c.l.b16 %v4369
        %v5793 = vunpack.c.l.b16 %v4370
        %v5794 = vunpack.c.h.b16 %v4370
        %v5795 = vunpack.c.l.b16 %v4371
        %v5796 = vunpack.c.h.b16 %v4371
        %v5797 = vunpack.c.l.b16 %v4372
        %v5798 = vunpack.c.h.b16 %v4372
        %v5799 = vunpack.c.l.b16 %v4373
        %v5800 = vunpack.c.l.b16 %v4374
        %v5801 = vunpack.c.h.b16 %v4374
        %v5802 = vunpack.c.l.b16 %v4375
        %v5803 = vunpack.c.h.b16 %v4375
        %v5804 = vunpack.c.l.b16 %v4376
        %v5805 = vunpack.c.h.b16 %v4376
        %v5806 = vunpack.c.l.b16 %v4377
        %v5807 = vunpack.c.l.b16 %v4378
        %v5808 = vunpack.c.h.b16 %v4378
        %v5809 = vunpack.c.l.b16 %v4379
        %v5810 = vunpack.c.h.b16 %v4379
        %v5811 = vunpack.c.l.b16 %v4380
        %v5812 = vunpack.c.h.b16 %v4380
        %v5813 = vunpack.c.l.b16 %v4381
        %v5814 = vunpack.c.l.b16 %v4382
        %v5815 = vunpack.c.h.b16 %v4382
        %v5816 = vunpack.c.l.b16 %v4383
        %v5817 = vunpack.c.h.b16 %v4383
        %v5818 = vunpack.c.l.b16 %v4384
        %v5819 = vunpack.c.h.b16 %v4384
        %v5820 = vunpack.c.l.b16 %v4385
        %v5821 = vunpack.c.l.b16 %v4386
        %v5822 = vunpack.c.h.b16 %v4386
        %v5823 = vunpack.c.l.b16 %v4387
        %v5824 = vunpack.c.h.b16 %v4387
        %v5825 = vunpack.c.l.b16 %v4388
        %v5826 = vunpack.c.h.b16 %v4388
        %v5827 = vunpack.c.l.b16 %v4389
        %v5828 = vunpack.c.l.b16 %v4390
        %v5829 = vunpack.c.h.b16 %v4390
        %v5830 = vunpack.c.l.b16 %v4391
        %v5831 = vunpack.c.h.b16 %v4391
        %v5832 = vunpack.c.l.b16 %v4392
        %v5833 = vunpack.c.h.b16 %v4392
        %v5834 = vunpack.c.l.b16 %v4393
        %v5835 = vunpack.c.l.b16 %v4394
        %v5836 = vunpack.c.h.b16 %v4394
        %v5837 = vunpack.c.l.b16 %v4395
        %v5838 = vunpack.c.h.b16 %v4395
        %v5839 = vunpack.c.l.b16 %v4396
        %v5840 = vunpack.c.h.b16 %v4396
        %v5841 = vunpack.c.l.b16 %v4397
        %v5842 = vpack.c.b16 %v4953, %v4946
        %v5843 = vpack.c.b16 %v4954, %v4947
        %v5844 = vpack.c.b16 %v4955, %v4948
        %v5845 = vpack.c.b16 %v4956, %v4949
        %v5846 = vpack.c.b16 %v4957, %v4950
        %v5847 = vpack.c.b16 %v4958, %v4951
        %v5848 = vpack.c.b16 %v4959, %v4952
        %v5849 = vpack.c.b16 %v4967, %v4960
        %v5850 = vpack.c.b16 %v4968, %v4961
        %v5851 = vpack.c.b16 %v4969, %v4962
        %v5852 = vpack.c.b16 %v4970, %v4963
        %v5853 = vpack.c.b16 %v4971, %v4964
        %v5854 = vpack.c.b16 %v4972, %v4965
        %v5855 = vpack.c.b16 %v4973, %v4966
        %v5856 = vpack.c.b16 %v4981, %v4974
        %v5857 = vpack.c.b16 %v4982, %v4975
        %v5858 = vpack.c.b16 %v4983, %v4976
        %v5859 = vpack.c.b16 %v4984, %v4977
        %v5860 = vpack.c.b16 %v4985, %v4978
        %v5861 = vpack.c.b16 %v4986, %v4979
        %v5862 = vpack.c.b16 %v4987, %v4980
        %v5863 = vpack.c.b16 %v4995, %v4988
        %v5864 = vpack.c.b16 %v4996, %v4989
        %v5865 = vpack.c.b16 %v4997, %v4990
        %v5866 = vpack.c.b16 %v4998, %v4991
        %v5867 = vpack.c.b16 %v4999, %v4992
        %v5868 = vpack.c.b16 %v5000, %v4993
        %v5869 = vpack.c.b16 %v5001, %v4994
        %v5870 = vpack.c.b16 %v5009, %v5002
        %v5871 = vpack.c.b16 %v5010, %v5003
        %v5872 = vpack.c.b16 %v5011, %v5004
        %v5873 = vpack.c.b16 %v5012, %v5005
        %v5874 = vpack.c.b16 %v5013, %v5006
        %v5875 = vpack.c.b16 %v5014, %v5007
        %v5876 = vpack.c.b16 %v5015, %v5008
        %v5877 = vpack.c.b16 %v5023, %v5016
        %v5878 = vpack.c.b16 %v5024, %v5017
        %v5879 = vpack.c.b16 %v5025, %v5018
        %v5880 = vpack.c.b16 %v5026, %v5019
        %v5881 = vpack.c.b16 %v5027, %v5020
        %v5882 = vpack.c.b16 %v5028, %v5021
        %v5883 = vpack.c.b16 %v5029, %v5022
        %v5884 = vpack.c.b16 %v5037, %v5030
        %v5885 = vpack.c.b16 %v5038, %v5031
        %v5886 = vpack.c.b16 %v5039, %v5032
        %v5887 = vpack.c.b16 %v5040, %v5033
        %v5888 = vpack.c.b16 %v5041, %v5034
        %v5889 = vpack.c.b16 %v5042, %v5035
        %v5890 = vpack.c.b16 %v5043, %v5036
        %v5891 = vpack.c.b16 %v5051, %v5044
        %v5892 = vpack.c.b16 %v5052, %v5045
        %v5893 = vpack.c.b16 %v5053, %v5046
        %v5894 = vpack.c.b16 %v5054, %v5047
        %v5895 = vpack.c.b16 %v5055, %v5048
        %v5896 = vpack.c.b16 %v5056, %v5049
        %v5897 = vpack.c.b16 %v5057, %v5050
        %v5898 = vpack.c.b16 %v5065, %v5058
        %v5899 = vpack.c.b16 %v5066, %v5059
        %v5900 = vpack.c.b16 %v5067, %v5060
        %v5901 = vpack.c.b16 %v5068, %v5061
        %v5902 = vpack.c.b16 %v5069, %v5062
        %v5903 = vpack.c.b16 %v5070, %v5063
        %v5904 = vpack.c.b16 %v5071, %v5064
        %v5905 = vpack.c.b16 %v5079, %v5072
        %v5906 = vpack.c.b16 %v5080, %v5073
        %v5907 = vpack.c.b16 %v5081, %v5074
        %v5908 = vpack.c.b16 %v5082, %v5075
        %v5909 = vpack.c.b16 %v5083, %v5076
        %v5910 = vpack.c.b16 %v5084, %v5077
        %v5911 = vpack.c.b16 %v5085, %v5078
        %v5912 = vpack.c.b16 %v5093, %v5086
        %v5913 = vpack.c.b16 %v5094, %v5087
        %v5914 = vpack.c.b16 %v5095, %v5088
        %v5915 = vpack.c.b16 %v5096, %v5089
        %v5916 = vpack.c.b16 %v5097, %v5090
        %v5917 = vpack.c.b16 %v5098, %v5091
        %v5918 = vpack.c.b16 %v5099, %v5092
        %v5919 = vpack.c.b16 %v5107, %v5100
        %v5920 = vpack.c.b16 %v5108, %v5101
        %v5921 = vpack.c.b16 %v5109, %v5102
        %v5922 = vpack.c.b16 %v5110, %v5103
        %v5923 = vpack.c.b16 %v5111, %v5104
        %v5924 = vpack.c.b16 %v5112, %v5105
        %v5925 = vpack.c.b16 %v5113, %v5106
        %v5926 = vpack.c.b16 %v5121, %v5114
        %v5927 = vpack.c.b16 %v5122, %v5115
        %v5928 = vpack.c.b16 %v5123, %v5116
        %v5929 = vpack.c.b16 %v5124, %v5117
        %v5930 = vpack.c.b16 %v5125, %v5118
        %v5931 = vpack.c.b16 %v5126, %v5119
        %v5932 = vpack.c.b16 %v5127, %v5120
        %v5933 = vpack.c.b16 %v5135, %v5128
        %v5934 = vpack.c.b16 %v5136, %v5129
        %v5935 = vpack.c.b16 %v5137, %v5130
        %v5936 = vpack.c.b16 %v5138, %v5131
        %v5937 = vpack.c.b16 %v5139, %v5132
        %v5938 = vpack.c.b16 %v5140, %v5133
        %v5939 = vpack.c.b16 %v5141, %v5134
        %v5940 = vpack.c.b16 %v5149, %v5142
        %v5941 = vpack.c.b16 %v5150, %v5143
        %v5942 = vpack.c.b16 %v5151, %v5144
        %v5943 = vpack.c.b16 %v5152, %v5145
        %v5944 = vpack.c.b16 %v5153, %v5146
        %v5945 = vpack.c.b16 %v5154, %v5147
        %v5946 = vpack.c.b16 %v5155, %v5148
        %v5947 = vpack.c.b16 %v5163, %v5156
        %v5948 = vpack.c.b16 %v5164, %v5157
        %v5949 = vpack.c.b16 %v5165, %v5158
        %v5950 = vpack.c.b16 %v5166, %v5159
        %v5951 = vpack.c.b16 %v5167, %v5160
        %v5952 = vpack.c.b16 %v5168, %v5161
        %v5953 = vpack.c.b16 %v5169, %v5162
        %v5954 = vpack.c.b16 %v5177, %v5170
        %v5955 = vpack.c.b16 %v5178, %v5171
        %v5956 = vpack.c.b16 %v5179, %v5172
        %v5957 = vpack.c.b16 %v5180, %v5173
        %v5958 = vpack.c.b16 %v5181, %v5174
        %v5959 = vpack.c.b16 %v5182, %v5175
        %v5960 = vpack.c.b16 %v5183, %v5176
        %v5961 = vpack.c.b16 %v5191, %v5184
        %v5962 = vpack.c.b16 %v5192, %v5185
        %v5963 = vpack.c.b16 %v5193, %v5186
        %v5964 = vpack.c.b16 %v5194, %v5187
        %v5965 = vpack.c.b16 %v5195, %v5188
        %v5966 = vpack.c.b16 %v5196, %v5189
        %v5967 = vpack.c.b16 %v5197, %v5190
        %v5968 = vpack.c.b16 %v5205, %v5198
        %v5969 = vpack.c.b16 %v5206, %v5199
        %v5970 = vpack.c.b16 %v5207, %v5200
        %v5971 = vpack.c.b16 %v5208, %v5201
        %v5972 = vpack.c.b16 %v5209, %v5202
        %v5973 = vpack.c.b16 %v5210, %v5203
        %v5974 = vpack.c.b16 %v5211, %v5204
        %v5975 = vpack.c.b16 %v5219, %v5212
        %v5976 = vpack.c.b16 %v5220, %v5213
        %v5977 = vpack.c.b16 %v5221, %v5214
        %v5978 = vpack.c.b16 %v5222, %v5215
        %v5979 = vpack.c.b16 %v5223, %v5216
        %v5980 = vpack.c.b16 %v5224, %v5217
        %v5981 = vpack.c.b16 %v5225, %v5218
        %v5982 = vpack.c.b16 %v5233, %v5226
        %v5983 = vpack.c.b16 %v5234, %v5227
        %v5984 = vpack.c.b16 %v5235, %v5228
        %v5985 = vpack.c.b16 %v5236, %v5229
        %v5986 = vpack.c.b16 %v5237, %v5230
        %v5987 = vpack.c.b16 %v5238, %v5231
        %v5988 = vpack.c.b16 %v5239, %v5232
        %v5989 = vpack.c.b16 %v5247, %v5240
        %v5990 = vpack.c.b16 %v5248, %v5241
        %v5991 = vpack.c.b16 %v5249, %v5242
        %v5992 = vpack.c.b16 %v5250, %v5243
        %v5993 = vpack.c.b16 %v5251, %v5244
        %v5994 = vpack.c.b16 %v5252, %v5245
        %v5995 = vpack.c.b16 %v5253, %v5246
        %v5996 = vpack.c.b16 %v5261, %v5254
        %v5997 = vpack.c.b16 %v5262, %v5255
        %v5998 = vpack.c.b16 %v5263, %v5256
        %v5999 = vpack.c.b16 %v5264, %v5257
        %v6000 = vpack.c.b16 %v5265, %v5258
        %v6001 = vpack.c.b16 %v5266, %v5259
        %v6002 = vpack.c.b16 %v5267, %v5260
        %v6003 = vpack.c.b16 %v5275, %v5268
        %v6004 = vpack.c.b16 %v5276, %v5269
        %v6005 = vpack.c.b16 %v5277, %v5270
        %v6006 = vpack.c.b16 %v5278, %v5271
        %v6007 = vpack.c.b16 %v5279, %v5272
        %v6008 = vpack.c.b16 %v5280, %v5273
        %v6009 = vpack.c.b16 %v5281, %v5274
        %v6010 = vpack.c.b16 %v5289, %v5282
        %v6011 = vpack.c.b16 %v5290, %v5283
        %v6012 = vpack.c.b16 %v5291, %v5284
        %v6013 = vpack.c.b16 %v5292, %v5285
        %v6014 = vpack.c.b16 %v5293, %v5286
        %v6015 = vpack.c.b16 %v5294, %v5287
        %v6016 = vpack.c.b16 %v5295, %v5288
        %v6017 = vpack.c.b16 %v5303, %v5296
        %v6018 = vpack.c.b16 %v5304, %v5297
        %v6019 = vpack.c.b16 %v5305, %v5298
        %v6020 = vpack.c.b16 %v5306, %v5299
        %v6021 = vpack.c.b16 %v5307, %v5300
        %v6022 = vpack.c.b16 %v5308, %v5301
        %v6023 = vpack.c.b16 %v5309, %v5302
        %v6024 = vpack.c.b16 %v5317, %v5310
        %v6025 = vpack.c.b16 %v5318, %v5311
        %v6026 = vpack.c.b16 %v5319, %v5312
        %v6027 = vpack.c.b16 %v5320, %v5313
        %v6028 = vpack.c.b16 %v5321, %v5314
        %v6029 = vpack.c.b16 %v5322, %v5315
        %v6030 = vpack.c.b16 %v5323, %v5316
        %v6031 = vpack.c.b16 %v5331, %v5324
        %v6032 = vpack.c.b16 %v5332, %v5325
        %v6033 = vpack.c.b16 %v5333, %v5326
        %v6034 = vpack.c.b16 %v5334, %v5327
        %v6035 = vpack.c.b16 %v5335, %v5328
        %v6036 = vpack.c.b16 %v5336, %v5329
        %v6037 = vpack.c.b16 %v5337, %v5330
        %v6038 = vpack.c.b16 %v5345, %v5338
        %v6039 = vpack.c.b16 %v5346, %v5339
        %v6040 = vpack.c.b16 %v5347, %v5340
        %v6041 = vpack.c.b16 %v5348, %v5341
        %v6042 = vpack.c.b16 %v5349, %v5342
        %v6043 = vpack.c.b16 %v5350, %v5343
        %v6044 = vpack.c.b16 %v5351, %v5344
        %v6045 = vpack.c.b16 %v5359, %v5352
        %v6046 = vpack.c.b16 %v5360, %v5353
        %v6047 = vpack.c.b16 %v5361, %v5354
        %v6048 = vpack.c.b16 %v5362, %v5355
        %v6049 = vpack.c.b16 %v5363, %v5356
        %v6050 = vpack.c.b16 %v5364, %v5357
        %v6051 = vpack.c.b16 %v5365, %v5358
        %v6052 = vpack.c.b16 %v5373, %v5366
        %v6053 = vpack.c.b16 %v5374, %v5367
        %v6054 = vpack.c.b16 %v5375, %v5368
        %v6055 = vpack.c.b16 %v5376, %v5369
        %v6056 = vpack.c.b16 %v5377, %v5370
        %v6057 = vpack.c.b16 %v5378, %v5371
        %v6058 = vpack.c.b16 %v5379, %v5372
        %v6059 = vpack.c.b16 %v5387, %v5380
        %v6060 = vpack.c.b16 %v5388, %v5381
        %v6061 = vpack.c.b16 %v5389, %v5382
        %v6062 = vpack.c.b16 %v5390, %v5383
        %v6063 = vpack.c.b16 %v5391, %v5384
        %v6064 = vpack.c.b16 %v5392, %v5385
        %v6065 = vpack.c.b16 %v5393, %v5386
        %v6066 = vpack.c.b16 %v5401, %v5394
        %v6067 = vpack.c.b16 %v5402, %v5395
        %v6068 = vpack.c.b16 %v5403, %v5396
        %v6069 = vpack.c.b16 %v5404, %v5397
        %v6070 = vpack.c.b16 %v5405, %v5398
        %v6071 = vpack.c.b16 %v5406, %v5399
        %v6072 = vpack.c.b16 %v5407, %v5400
        %v6073 = vpack.c.b16 %v5415, %v5408
        %v6074 = vpack.c.b16 %v5416, %v5409
        %v6075 = vpack.c.b16 %v5417, %v5410
        %v6076 = vpack.c.b16 %v5418, %v5411
        %v6077 = vpack.c.b16 %v5419, %v5412
        %v6078 = vpack.c.b16 %v5420, %v5413
        %v6079 = vpack.c.b16 %v5421, %v5414
        %v6080 = vpack.c.b16 %v5429, %v5422
        %v6081 = vpack.c.b16 %v5430, %v5423
        %v6082 = vpack.c.b16 %v5431, %v5424
        %v6083 = vpack.c.b16 %v5432, %v5425
        %v6084 = vpack.c.b16 %v5433, %v5426
        %v6085 = vpack.c.b16 %v5434, %v5427
        %v6086 = vpack.c.b16 %v5435, %v5428
        %v6087 = vpack.c.b16 %v5443, %v5436
        %v6088 = vpack.c.b16 %v5444, %v5437
        %v6089 = vpack.c.b16 %v5445, %v5438
        %v6090 = vpack.c.b16 %v5446, %v5439
        %v6091 = vpack.c.b16 %v5447, %v5440
        %v6092 = vpack.c.b16 %v5448, %v5441
        %v6093 = vpack.c.b16 %v5449, %v5442
        %v6094 = vpack.c.b16 %v5457, %v5450
        %v6095 = vpack.c.b16 %v5458, %v5451
        %v6096 = vpack.c.b16 %v5459, %v5452
        %v6097 = vpack.c.b16 %v5460, %v5453
        %v6098 = vpack.c.b16 %v5461, %v5454
        %v6099 = vpack.c.b16 %v5462, %v5455
        %v6100 = vpack.c.b16 %v5463, %v5456
        %v6101 = vpack.c.b16 %v5471, %v5464
        %v6102 = vpack.c.b16 %v5472, %v5465
        %v6103 = vpack.c.b16 %v5473, %v5466
        %v6104 = vpack.c.b16 %v5474, %v5467
        %v6105 = vpack.c.b16 %v5475, %v5468
        %v6106 = vpack.c.b16 %v5476, %v5469
        %v6107 = vpack.c.b16 %v5477, %v5470
        %v6108 = vpack.c.b16 %v5485, %v5478
        %v6109 = vpack.c.b16 %v5486, %v5479
        %v6110 = vpack.c.b16 %v5487, %v5480
        %v6111 = vpack.c.b16 %v5488, %v5481
        %v6112 = vpack.c.b16 %v5489, %v5482
        %v6113 = vpack.c.b16 %v5490, %v5483
        %v6114 = vpack.c.b16 %v5491, %v5484
        %v6115 = vpack.c.b16 %v5499, %v5492
        %v6116 = vpack.c.b16 %v5500, %v5493
        %v6117 = vpack.c.b16 %v5501, %v5494
        %v6118 = vpack.c.b16 %v5502, %v5495
        %v6119 = vpack.c.b16 %v5503, %v5496
        %v6120 = vpack.c.b16 %v5504, %v5497
        %v6121 = vpack.c.b16 %v5505, %v5498
        %v6122 = vpack.c.b16 %v5513, %v5506
        %v6123 = vpack.c.b16 %v5514, %v5507
        %v6124 = vpack.c.b16 %v5515, %v5508
        %v6125 = vpack.c.b16 %v5516, %v5509
        %v6126 = vpack.c.b16 %v5517, %v5510
        %v6127 = vpack.c.b16 %v5518, %v5511
        %v6128 = vpack.c.b16 %v5519, %v5512
        %v6129 = vpack.c.b16 %v5527, %v5520
        %v6130 = vpack.c.b16 %v5528, %v5521
        %v6131 = vpack.c.b16 %v5529, %v5522
        %v6132 = vpack.c.b16 %v5530, %v5523
        %v6133 = vpack.c.b16 %v5531, %v5524
        %v6134 = vpack.c.b16 %v5532, %v5525
        %v6135 = vpack.c.b16 %v5533, %v5526
        %v6136 = vpack.c.b16 %v5541, %v5534
        %v6137 = vpack.c.b16 %v5542, %v5535
        %v6138 = vpack.c.b16 %v5543, %v5536
        %v6139 = vpack.c.b16 %v5544, %v5537
        %v6140 = vpack.c.b16 %v5545, %v5538
        %v6141 = vpack.c.b16 %v5546, %v5539
        %v6142 = vpack.c.b16 %v5547, %v5540
        %v6143 = vpack.c.b16 %v5555, %v5548
        %v6144 = vpack.c.b16 %v5556, %v5549
        %v6145 = vpack.c.b16 %v5557, %v5550
        %v6146 = vpack.c.b16 %v5558, %v5551
        %v6147 = vpack.c.b16 %v5559, %v5552
        %v6148 = vpack.c.b16 %v5560, %v5553
        %v6149 = vpack.c.b16 %v5561, %v5554
        %v6150 = vpack.c.b16 %v5569, %v5562
        %v6151 = vpack.c.b16 %v5570, %v5563
        %v6152 = vpack.c.b16 %v5571, %v5564
        %v6153 = vpack.c.b16 %v5572, %v5565
        %v6154 = vpack.c.b16 %v5573, %v5566
        %v6155 = vpack.c.b16 %v5574, %v5567
        %v6156 = vpack.c.b16 %v5575, %v5568
        %v6157 = vpack.c.b16 %v5583, %v5576
        %v6158 = vpack.c.b16 %v5584, %v5577
        %v6159 = vpack.c.b16 %v5585, %v5578
        %v6160 = vpack.c.b16 %v5586, %v5579
        %v6161 = vpack.c.b16 %v5587, %v5580
        %v6162 = vpack.c.b16 %v5588, %v5581
        %v6163 = vpack.c.b16 %v5589, %v5582
        %v6164 = vpack.c.b16 %v5597, %v5590
        %v6165 = vpack.c.b16 %v5598, %v5591
        %v6166 = vpack.c.b16 %v5599, %v5592
        %v6167 = vpack.c.b16 %v5600, %v5593
        %v6168 = vpack.c.b16 %v5601, %v5594
        %v6169 = vpack.c.b16 %v5602, %v5595
        %v6170 = vpack.c.b16 %v5603, %v5596
        %v6171 = vpack.c.b16 %v5611, %v5604
        %v6172 = vpack.c.b16 %v5612, %v5605
        %v6173 = vpack.c.b16 %v5613, %v5606
        %v6174 = vpack.c.b16 %v5614, %v5607
        %v6175 = vpack.c.b16 %v5615, %v5608
        %v6176 = vpack.c.b16 %v5616, %v5609
        %v6177 = vpack.c.b16 %v5617, %v5610
        %v6178 = vpack.c.b16 %v5625, %v5618
        %v6179 = vpack.c.b16 %v5626, %v5619
        %v6180 = vpack.c.b16 %v5627, %v5620
        %v6181 = vpack.c.b16 %v5628, %v5621
        %v6182 = vpack.c.b16 %v5629, %v5622
        %v6183 = vpack.c.b16 %v5630, %v5623
        %v6184 = vpack.c.b16 %v5631, %v5624
        %v6185 = vpack.c.b16 %v5639, %v5632
        %v6186 = vpack.c.b16 %v5640, %v5633
        %v6187 = vpack.c.b16 %v5641, %v5634
        %v6188 = vpack.c.b16 %v5642, %v5635
        %v6189 = vpack.c.b16 %v5643, %v5636
        %v6190 = vpack.c.b16 %v5644, %v5637
        %v6191 = vpack.c.b16 %v5645, %v5638
        %v6192 = vpack.c.b16 %v5653, %v5646
        %v6193 = vpack.c.b16 %v5654, %v5647
        %v6194 = vpack.c.b16 %v5655, %v5648
        %v6195 = vpack.c.b16 %v5656, %v5649
        %v6196 = vpack.c.b16 %v5657, %v5650
        %v6197 = vpack.c.b16 %v5658, %v5651
        %v6198 = vpack.c.b16 %v5659, %v5652
        %v6199 = vpack.c.b16 %v5667, %v5660
        %v6200 = vpack.c.b16 %v5668, %v5661
        %v6201 = vpack.c.b16 %v5669, %v5662
        %v6202 = vpack.c.b16 %v5670, %v5663
        %v6203 = vpack.c.b16 %v5671, %v5664
        %v6204 = vpack.c.b16 %v5672, %v5665
        %v6205 = vpack.c.b16 %v5673, %v5666
        %v6206 = vpack.c.b16 %v5681, %v5674
        %v6207 = vpack.c.b16 %v5682, %v5675
        %v6208 = vpack.c.b16 %v5683, %v5676
        %v6209 = vpack.c.b16 %v5684, %v5677
        %v6210 = vpack.c.b16 %v5685, %v5678
        %v6211 = vpack.c.b16 %v5686, %v5679
        %v6212 = vpack.c.b16 %v5687, %v5680
        %v6213 = vpack.c.b16 %v5695, %v5688
        %v6214 = vpack.c.b16 %v5696, %v5689
        %v6215 = vpack.c.b16 %v5697, %v5690
        %v6216 = vpack.c.b16 %v5698, %v5691
        %v6217 = vpack.c.b16 %v5699, %v5692
        %v6218 = vpack.c.b16 %v5700, %v5693
        %v6219 = vpack.c.b16 %v5701, %v5694
        %v6220 = vpack.c.b16 %v5709, %v5702
        %v6221 = vpack.c.b16 %v5710, %v5703
        %v6222 = vpack.c.b16 %v5711, %v5704
        %v6223 = vpack.c.b16 %v5712, %v5705
        %v6224 = vpack.c.b16 %v5713, %v5706
        %v6225 = vpack.c.b16 %v5714, %v5707
        %v6226 = vpack.c.b16 %v5715, %v5708
        %v6227 = vpack.c.b16 %v5723, %v5716
        %v6228 = vpack.c.b16 %v5724, %v5717
        %v6229 = vpack.c.b16 %v5725, %v5718
        %v6230 = vpack.c.b16 %v5726, %v5719
        %v6231 = vpack.c.b16 %v5727, %v5720
        %v6232 = vpack.c.b16 %v5728, %v5721
        %v6233 = vpack.c.b16 %v5729, %v5722
        %v6234 = vpack.c.b16 %v5737, %v5730
        %v6235 = vpack.c.b16 %v5738, %v5731
        %v6236 = vpack.c.b16 %v5739, %v5732
        %v6237 = vpack.c.b16 %v5740, %v5733
        %v6238 = vpack.c.b16 %v5741, %v5734
        %v6239 = vpack.c.b16 %v5742, %v5735
        %v6240 = vpack.c.b16 %v5743, %v5736
        %v6241 = vpack.c.b16 %v5751, %v5744
        %v6242 = vpack.c.b16 %v5752, %v5745
        %v6243 = vpack.c.b16 %v5753, %v5746
        %v6244 = vpack.c.b16 %v5754, %v5747
        %v6245 = vpack.c.b16 %v5755, %v5748
        %v6246 = vpack.c.b16 %v5756, %v5749
        %v6247 = vpack.c.b16 %v5757, %v5750
        %v6248 = vpack.c.b16 %v5765, %v5758
        %v6249 = vpack.c.b16 %v5766, %v5759
        %v6250 = vpack.c.b16 %v5767, %v5760
        %v6251 = vpack.c.b16 %v5768, %v5761
        %v6252 = vpack.c.b16 %v5769, %v5762
        %v6253 = vpack.c.b16 %v5770, %v5763
        %v6254 = vpack.c.b16 %v5771, %v5764
        %v6255 = vpack.c.b16 %v5779, %v5772
        %v6256 = vpack.c.b16 %v5780, %v5773
        %v6257 = vpack.c.b16 %v5781, %v5774
        %v6258 = vpack.c.b16 %v5782, %v5775
        %v6259 = vpack.c.b16 %v5783, %v5776
        %v6260 = vpack.c.b16 %v5784, %v5777
        %v6261 = vpack.c.b16 %v5785, %v5778
        %v6262 = vpack.c.b16 %v5793, %v5786
        %v6263 = vpack.c.b16 %v5794, %v5787
        %v6264 = vpack.c.b16 %v5795, %v5788
        %v6265 = vpack.c.b16 %v5796, %v5789
        %v6266 = vpack.c.b16 %v5797, %v5790
        %v6267 = vpack.c.b16 %v5798, %v5791
        %v6268 = vpack.c.b16 %v5799, %v5792
        %v6269 = vpack.c.b16 %v5807, %v5800
        %v6270 = vpack.c.b16 %v5808, %v5801
        %v6271 = vpack.c.b16 %v5809, %v5802
        %v6272 = vpack.c.b16 %v5810, %v5803
        %v6273 = vpack.c.b16 %v5811, %v5804
        %v6274 = vpack.c.b16 %v5812, %v5805
        %v6275 = vpack.c.b16 %v5813, %v5806
        %v6276 = vpack.c.b16 %v5821, %v5814
        %v6277 = vpack.c.b16 %v5822, %v5815
        %v6278 = vpack.c.b16 %v5823, %v5816
        %v6279 = vpack.c.b16 %v5824, %v5817
        %v6280 = vpack.c.b16 %v5825, %v5818
        %v6281 = vpack.c.b16 %v5826, %v5819
        %v6282 = vpack.c.b16 %v5827, %v5820
        %v6283 = vpack.c.b16 %v5835, %v5828
        %v6284 = vpack.c.b16 %v5836, %v5829
        %v6285 = vpack.c.b16 %v5837, %v5830
        %v6286 = vpack.c.b16 %v5838, %v5831
        %v6287 = vpack.c.b16 %v5839, %v5832
        %v6288 = vpack.c.b16 %v5840, %v5833
        %v6289 = vpack.c.b16 %v5841, %v5834
        %6738 = vmatprep.subr.bf16.mxu0 %v5843
        %6739 = vmatpush1.bf16.msra.mxu0 %v5842
        %6740 = vmatprep.subr.bf16.mxu0 %v5850
        %6741 = vmatpush1.bf16.msra.mxu0 %v5849
        %6742 = vmatprep.subr.bf16.mxu0 %v5857
        %6743 = vmatpush1.bf16.msra.mxu0 %v5856
        %6744 = vmatprep.subr.bf16.mxu0 %v5864
        %6745 = vmatpush1.bf16.msra.mxu0 %v5863
        %6746 = vmatprep.subr.bf16.mxu0 %v5871
        %6747 = vmatpush1.bf16.msra.mxu0 %v5870
        %6748 = vmatprep.subr.bf16.mxu0 %v5878
        %6749 = vmatpush1.bf16.msra.mxu0 %v5877
        %6750 = vmatprep.subr.bf16.mxu0 %v5885
        %6751 = vmatpush1.bf16.msra.mxu0 %v5884
        %6752 = vmatprep.subr.bf16.mxu0 %v5892
        %6753 = vmatpush1.bf16.msra.mxu0 %v5891
        %6754 = vmatprep.subr.bf16.mxu0 %v5899
        %6755 = vmatpush1.bf16.msra.mxu0 %v5898
        %6756 = vmatprep.subr.bf16.mxu0 %v5906
        %6757 = vmatpush1.bf16.msra.mxu0 %v5905
        %6758 = vmatprep.subr.bf16.mxu0 %v5913
        %6759 = vmatpush1.bf16.msra.mxu0 %v5912
        %6760 = vmatprep.subr.bf16.mxu0 %v5920
        %6761 = vmatpush1.bf16.msra.mxu0 %v5919
        %6762 = vmatprep.subr.bf16.mxu0 %v5927
        %6763 = vmatpush1.bf16.msra.mxu0 %v5926
        %6764 = vmatprep.subr.bf16.mxu0 %v5934
        %6765 = vmatpush1.bf16.msra.mxu0 %v5933
        %6766 = vmatprep.subr.bf16.mxu0 %v5941
        %6767 = vmatpush1.bf16.msra.mxu0 %v5940
        %6768 = vmatprep.subr.bf16.mxu0 %v5948
        %6769 = vmatpush1.bf16.msra.mxu0 %v5947
        %6770 = vmatprep.mubr.bf16.mxu0 %v3871
        %6771 = vmatmul.mubr.bf16.gmra.mrb[0].mxu0 %v3870
        %v6772 = vpop.f32.mrb[0].mxu0
        %v6773 = vadd.f32 %v4402, %v6772
        %v6774 = vpop.f32.mrb[0].mxu0
        %v6775 = vadd.f32 %v4406, %v6774
        %v6776 = vpop.f32.mrb[0].mxu0
        %v6777 = vadd.f32 %v4402, %v6776
        %v6778 = vpop.f32.mrb[0].mxu0
        %v6779 = vadd.f32 %v4406, %v6778
        %6780 = vmatprep.mubr.bf16.mxu0 %v3879
        %6781 = vmatmul.mubr.bf16.gmra.mrb[0].mxu0 %v3878
        %v6782 = vpop.f32.mrb[0].mxu0
        %v6783 = vadd.f32 %v4402, %v6782
        %v6784 = vpop.f32.mrb[0].mxu0
        %v6785 = vadd.f32 %v4406, %v6784
        %v6786 = vpop.f32.mrb[0].mxu0
        %v6787 = vadd.f32 %v4402, %v6786
        %v6788 = vpop.f32.mrb[0].mxu0
        %v6789 = vadd.f32 %v4406, %v6788
        %6790 = vdwg.mxu0
        %6791 = vmatprep.subr.bf16.mxu0 %v5955
        %6792 = vmatpush1.bf16.msra.mxu0 %v5954
        %6793 = vmatprep.subr.bf16.mxu0 %v5962
        %6794 = vmatpush1.bf16.msra.mxu0 %v5961
        %6795 = vmatprep.subr.bf16.mxu0 %v5969
        %6796 = vmatpush1.bf16.msra.mxu0 %v5968
        %6797 = vmatprep.subr.bf16.mxu0 %v5976
        %6798 = vmatpush1.bf16.msra.mxu0 %v5975
        %6799 = vmatprep.subr.bf16.mxu0 %v5983
        %6800 = vmatpush1.bf16.msra.mxu0 %v5982
        %6801 = vmatprep.subr.bf16.mxu0 %v5990
        %6802 = vmatpush1.bf16.msra.mxu0 %v5989
        %6803 = vmatprep.subr.bf16.mxu0 %v5997
        %6804 = vmatpush1.bf16.msra.mxu0 %v5996
        %6805 = vmatprep.subr.bf16.mxu0 %v6004
        %6806 = vmatpush1.bf16.msra.mxu0 %v6003
        %6807 = vmatprep.subr.bf16.mxu0 %v6011
        %6808 = vmatpush1.bf16.msra.mxu0 %v6010
        %6809 = vmatprep.subr.bf16.mxu0 %v6018
        %6810 = vmatpush1.bf16.msra.mxu0 %v6017
        %6811 = vmatprep.subr.bf16.mxu0 %v6025
        %6812 = vmatpush1.bf16.msra.mxu0 %v6024
        %6813 = vmatprep.subr.bf16.mxu0 %v6032
        %6814 = vmatpush1.bf16.msra.mxu0 %v6031
        %6815 = vmatprep.subr.bf16.mxu0 %v6039
        %6816 = vmatpush1.bf16.msra.mxu0 %v6038
        %6817 = vmatprep.subr.bf16.mxu0 %v6046
        %6818 = vmatpush1.bf16.msra.mxu0 %v6045
        %6819 = vmatprep.subr.bf16.mxu0 %v6053
        %6820 = vmatpush1.bf16.msra.mxu0 %v6052
        %6821 = vmatprep.subr.bf16.mxu0 %v6060
        %6822 = vmatpush1.bf16.msra.mxu0 %v6059
        %6823 = vmatprep.mubr.bf16.mxu0 %v3873
        %6824 = vmatmul.mubr.bf16.gmra.mrb[0].mxu0 %v3872
        %v6825 = vpop.f32.mrb[0].mxu0
        %v6826 = vadd.f32 %v6773, %v6825
        %v6827 = vpop.f32.mrb[0].mxu0
        %v6828 = vadd.f32 %v6775, %v6827
        %v6829 = vpop.f32.mrb[0].mxu0
        %v6830 = vadd.f32 %v6777, %v6829
        %v6831 = vpop.f32.mrb[0].mxu0
        %v6832 = vadd.f32 %v6779, %v6831
        %6833 = vmatprep.mubr.bf16.mxu0 %v3881
        %6834 = vmatmul.mubr.bf16.gmra.mrb[0].mxu0 %v3880
        %v6835 = vpop.f32.mrb[0].mxu0
        %v6836 = vadd.f32 %v6783, %v6835
        %v6837 = vpop.f32.mrb[0].mxu0
        %v6838 = vadd.f32 %v6785, %v6837
        %v6839 = vpop.f32.mrb[0].mxu0
        %v6840 = vadd.f32 %v6787, %v6839
        %v6841 = vpop.f32.mrb[0].mxu0
        %v6842 = vadd.f32 %v6789, %v6841
        %6843 = vdwg.mxu0
        %6844 = vmatprep.subr.bf16.mxu0 %v6067
        %6845 = vmatpush1.bf16.msra.mxu0 %v6066
        %6846 = vmatprep.subr.bf16.mxu0 %v6074
        %6847 = vmatpush1.bf16.msra.mxu0 %v6073
        %6848 = vmatprep.subr.bf16.mxu0 %v6081
        %6849 = vmatpush1.bf16.msra.mxu0 %v6080
        %6850 = vmatprep.subr.bf16.mxu0 %v6088
        %6851 = vmatpush1.bf16.msra.mxu0 %v6087
        %6852 = vmatprep.subr.bf16.mxu0 %v6095
        %6853 = vmatpush1.bf16.msra.mxu0 %v6094
        %6854 = vmatprep.subr.bf16.mxu0 %v6102
        %6855 = vmatpush1.bf16.msra.mxu0 %v6101
        %6856 = vmatprep.subr.bf16.mxu0 %v6109
        %6857 = vmatpush1.bf16.msra.mxu0 %v6108
        %6858 = vmatprep.subr.bf16.mxu0 %v6116
        %6859 = vmatpush1.bf16.msra.mxu0 %v6115
        %6860 = vmatprep.subr.bf16.mxu0 %v6123
        %6861 = vmatpush1.bf16.msra.mxu0 %v6122
        %6862 = vmatprep.subr.bf16.mxu0 %v6130
        %6863 = vmatpush1.bf16.msra.mxu0 %v6129
        %6864 = vmatprep.subr.bf16.mxu0 %v6137
        %6865 = vmatpush1.bf16.msra.mxu0 %v6136
        %6866 = vmatprep.subr.bf16.mxu0 %v6144
        %6867 = vmatpush1.bf16.msra.mxu0 %v6143
        %6868 = vmatprep.subr.bf16.mxu0 %v6151
        %6869 = vmatpush1.bf16.msra.mxu0 %v6150
        %6870 = vmatprep.subr.bf16.mxu0 %v6158
        %6871 = vmatpush1.bf16.msra.mxu0 %v6157
        %6872 = vmatprep.subr.bf16.mxu0 %v6165
        %6873 = vmatpush1.bf16.msra.mxu0 %v6164
        %6874 = vmatprep.subr.bf16.mxu0 %v6172
        %6875 = vmatpush1.bf16.msra.mxu0 %v6171
        %6876 = vmatprep.mubr.bf16.mxu0 %v3875
        %6877 = vmatmul.mubr.bf16.gmra.mrb[0].mxu0 %v3874
        %v6878 = vpop.f32.mrb[0].mxu0
        %v6879 = vadd.f32 %v6826, %v6878
        %v6880 = vpop.f32.mrb[0].mxu0
        %v6881 = vadd.f32 %v6828, %v6880
        %v6882 = vpop.f32.mrb[0].mxu0
        %v6883 = vadd.f32 %v6830, %v6882
        %v6884 = vpop.f32.mrb[0].mxu0
        %v6885 = vadd.f32 %v6832, %v6884
        %6886 = vmatprep.mubr.bf16.mxu0 %v3883
        %6887 = vmatmul.mubr.bf16.gmra.mrb[0].mxu0 %v3882
        %v6888 = vpop.f32.mrb[0].mxu0
        %v6889 = vadd.f32 %v6836, %v6888
        %v6890 = vpop.f32.mrb[0].mxu0
        %v6891 = vadd.f32 %v6838, %v6890
        %v6892 = vpop.f32.mrb[0].mxu0
        %v6893 = vadd.f32 %v6840, %v6892
        %v6894 = vpop.f32.mrb[0].mxu0
        %v6895 = vadd.f32 %v6842, %v6894
        %6896 = vdwg.mxu0
        %6897 = vmatprep.subr.bf16.mxu0 %v6179
        %6898 = vmatpush1.bf16.msra.mxu0 %v6178
        %6899 = vmatprep.subr.bf16.mxu0 %v6186
        %6900 = vmatpush1.bf16.msra.mxu0 %v6185
        %6901 = vmatprep.subr.bf16.mxu0 %v6193
        %6902 = vmatpush1.bf16.msra.mxu0 %v6192
        %6903 = vmatprep.subr.bf16.mxu0 %v6200
        %6904 = vmatpush1.bf16.msra.mxu0 %v6199
        %6905 = vmatprep.subr.bf16.mxu0 %v6207
        %6906 = vmatpush1.bf16.msra.mxu0 %v6206
        %6907 = vmatprep.subr.bf16.mxu0 %v6214
        %6908 = vmatpush1.bf16.msra.mxu0 %v6213
        %6909 = vmatprep.subr.bf16.mxu0 %v6221
        %6910 = vmatpush1.bf16.msra.mxu0 %v6220
        %6911 = vmatprep.subr.bf16.mxu0 %v6228
        %6912 = vmatpush1.bf16.msra.mxu0 %v6227
        %6913 = vmatprep.subr.bf16.mxu0 %v6235
        %6914 = vmatpush1.bf16.msra.mxu0 %v6234
        %6915 = vmatprep.subr.bf16.mxu0 %v6242
        %6916 = vmatpush1.bf16.msra.mxu0 %v6241
        %6917 = vmatprep.subr.bf16.mxu0 %v6249
        %6918 = vmatpush1.bf16.msra.mxu0 %v6248
        %6919 = vmatprep.subr.bf16.mxu0 %v6256
        %6920 = vmatpush1.bf16.msra.mxu0 %v6255
        %6921 = vmatprep.subr.bf16.mxu0 %v6263
        %6922 = vmatpush1.bf16.msra.mxu0 %v6262
        %6923 = vmatprep.subr.bf16.mxu0 %v6270
        %6924 = vmatpush1.bf16.msra.mxu0 %v6269
        %6925 = vmatprep.subr.bf16.mxu0 %v6277
        %6926 = vmatpush1.bf16.msra.mxu0 %v6276
        %6927 = vmatprep.subr.bf16.mxu0 %v6284
        %6928 = vmatpush1.bf16.msra.mxu0 %v6283
        %6929 = vmatprep.mubr.bf16.mxu0 %v3877
        %6930 = vmatmul.mubr.bf16.gmra.mrb[0].mxu0 %v3876
        %v6931 = vpop.f32.mrb[0].mxu0
        %v6932 = vadd.f32 %v6879, %v6931
        %v6933 = vpop.f32.mrb[0].mxu0
        %v6934 = vadd.f32 %v6881, %v6933
        %v6935 = vpop.f32.mrb[0].mxu0
        %v6936 = vadd.f32 %v6883, %v6935
        %v6937 = vpop.f32.mrb[0].mxu0
        %v6938 = vadd.f32 %v6885, %v6937
        %6939 = vmatprep.mubr.bf16.mxu0 %v3885
        %6940 = vmatmul.mubr.bf16.gmra.mrb[0].mxu0 %v3884
        %v6941 = vpop.f32.mrb[0].mxu0
        %v6942 = vadd.f32 %v6889, %v6941
        %v6943 = vpop.f32.mrb[0].mxu0
        %v6944 = vadd.f32 %v6891, %v6943
        %v6945 = vpop.f32.mrb[0].mxu0
        %v6946 = vadd.f32 %v6893, %v6945
        %v6947 = vpop.f32.mrb[0].mxu0
        %v6948 = vadd.f32 %v6895, %v6947
        %6949 = vdwg.mxu0
        %6950 = vmatprep.subr.bf16.mxu0 %v5845
        %6951 = vmatpush1.bf16.msra.mxu0 %v5844
        %6952 = vmatprep.subr.bf16.mxu0 %v5852
        %6953 = vmatpush1.bf16.msra.mxu0 %v5851
        %6954 = vmatprep.subr.bf16.mxu0 %v5859
        %6955 = vmatpush1.bf16.msra.mxu0 %v5858
        %6956 = vmatprep.subr.bf16.mxu0 %v5866
        %6957 = vmatpush1.bf16.msra.mxu0 %v5865
        %6958 = vmatprep.subr.bf16.mxu0 %v5873
        %6959 = vmatpush1.bf16.msra.mxu0 %v5872
        %6960 = vmatprep.subr.bf16.mxu0 %v5880
        %6961 = vmatpush1.bf16.msra.mxu0 %v5879
        %6962 = vmatprep.subr.bf16.mxu0 %v5887
        %6963 = vmatpush1.bf16.msra.mxu0 %v5886
        %6964 = vmatprep.subr.bf16.mxu0 %v5894
        %6965 = vmatpush1.bf16.msra.mxu0 %v5893
        %6966 = vmatprep.subr.bf16.mxu0 %v5901
        %6967 = vmatpush1.bf16.msra.mxu0 %v5900
        %6968 = vmatprep.subr.bf16.mxu0 %v5908
        %6969 = vmatpush1.bf16.msra.mxu0 %v5907
        %6970 = vmatprep.subr.bf16.mxu0 %v5915
        %6971 = vmatpush1.bf16.msra.mxu0 %v5914
        %6972 = vmatprep.subr.bf16.mxu0 %v5922
        %6973 = vmatpush1.bf16.msra.mxu0 %v5921
        %6974 = vmatprep.subr.bf16.mxu0 %v5929
        %6975 = vmatpush1.bf16.msra.mxu0 %v5928
        %6976 = vmatprep.subr.bf16.mxu0 %v5936
        %6977 = vmatpush1.bf16.msra.mxu0 %v5935
        %6978 = vmatprep.subr.bf16.mxu0 %v5943
        %6979 = vmatpush1.bf16.msra.mxu0 %v5942
        %6980 = vmatprep.subr.bf16.mxu0 %v5950
        %6981 = vmatpush1.bf16.msra.mxu0 %v5949
        %6982 = vmatprep.mubr.bf16.mxu0 %v3871
        %6983 = vmatmul.mubr.bf16.gmra.mrb[0].mxu0 %v3870
        %v6984 = vpop.f32.mrb[0].mxu0
        %v6985 = vadd.f32 %v4410, %v6984
        %v6986 = vpop.f32.mrb[0].mxu0
        %v6987 = vadd.f32 %v4414, %v6986
        %v6988 = vpop.f32.mrb[0].mxu0
        %v6989 = vadd.f32 %v4410, %v6988
        %v6990 = vpop.f32.mrb[0].mxu0
        %v6991 = vadd.f32 %v4414, %v6990
        %6992 = vmatprep.mubr.bf16.mxu0 %v3879
        %6993 = vmatmul.mubr.bf16.gmra.mrb[0].mxu0 %v3878
        %v6994 = vpop.f32.mrb[0].mxu0
        %v6995 = vadd.f32 %v4410, %v6994
        %v6996 = vpop.f32.mrb[0].mxu0
        %v6997 = vadd.f32 %v4414, %v6996
        %v6998 = vpop.f32.mrb[0].mxu0
        %v6999 = vadd.f32 %v4410, %v6998
        %v7000 = vpop.f32.mrb[0].mxu0
        %v7001 = vadd.f32 %v4414, %v7000
        %7002 = vdwg.mxu0
        %7003 = vmatprep.subr.bf16.mxu0 %v5957
        %7004 = vmatpush1.bf16.msra.mxu0 %v5956
        %7005 = vmatprep.subr.bf16.mxu0 %v5964
        %7006 = vmatpush1.bf16.msra.mxu0 %v5963
        %7007 = vmatprep.subr.bf16.mxu0 %v5971
        %7008 = vmatpush1.bf16.msra.mxu0 %v5970
        %7009 = vmatprep.subr.bf16.mxu0 %v5978
        %7010 = vmatpush1.bf16.msra.mxu0 %v5977
        %7011 = vmatprep.subr.bf16.mxu0 %v5985
        %7012 = vmatpush1.bf16.msra.mxu0 %v5984
        %7013 = vmatprep.subr.bf16.mxu0 %v5992
        %7014 = vmatpush1.bf16.msra.mxu0 %v5991
        %7015 = vmatprep.subr.bf16.mxu0 %v5999
        %7016 = vmatpush1.bf16.msra.mxu0 %v5998
        %7017 = vmatprep.subr.bf16.mxu0 %v6006
        %7018 = vmatpush1.bf16.msra.mxu0 %v6005
        %7019 = vmatprep.subr.bf16.mxu0 %v6013
        %7020 = vmatpush1.bf16.msra.mxu0 %v6012
        %7021 = vmatprep.subr.bf16.mxu0 %v6020
        %7022 = vmatpush1.bf16.msra.mxu0 %v6019
        %7023 = vmatprep.subr.bf16.mxu0 %v6027
        %7024 = vmatpush1.bf16.msra.mxu0 %v6026
        %7025 = vmatprep.subr.bf16.mxu0 %v6034
        %7026 = vmatpush1.bf16.msra.mxu0 %v6033
        %7027 = vmatprep.subr.bf16.mxu0 %v6041
        %7028 = vmatpush1.bf16.msra.mxu0 %v6040
        %7029 = vmatprep.subr.bf16.mxu0 %v6048
        %7030 = vmatpush1.bf16.msra.mxu0 %v6047
        %7031 = vmatprep.subr.bf16.mxu0 %v6055
        %7032 = vmatpush1.bf16.msra.mxu0 %v6054
        %7033 = vmatprep.subr.bf16.mxu0 %v6062
        %7034 = vmatpush1.bf16.msra.mxu0 %v6061
        %7035 = vmatprep.mubr.bf16.mxu0 %v3873
        %7036 = vmatmul.mubr.bf16.gmra.mrb[0].mxu0 %v3872
        %v7037 = vpop.f32.mrb[0].mxu0
        %v7038 = vadd.f32 %v6985, %v7037
        %v7039 = vpop.f32.mrb[0].mxu0
        %v7040 = vadd.f32 %v6987, %v7039
        %v7041 = vpop.f32.mrb[0].mxu0
        %v7042 = vadd.f32 %v6989, %v7041
        %v7043 = vpop.f32.mrb[0].mxu0
        %v7044 = vadd.f32 %v6991, %v7043
        %7045 = vmatprep.mubr.bf16.mxu0 %v3881
        %7046 = vmatmul.mubr.bf16.gmra.mrb[0].mxu0 %v3880
        %v7047 = vpop.f32.mrb[0].mxu0
        %v7048 = vadd.f32 %v6995, %v7047
        %v7049 = vpop.f32.mrb[0].mxu0
        %v7050 = vadd.f32 %v6997, %v7049
        %v7051 = vpop.f32.mrb[0].mxu0
        %v7052 = vadd.f32 %v6999, %v7051
        %v7053 = vpop.f32.mrb[0].mxu0
        %v7054 = vadd.f32 %v7001, %v7053
        %7055 = vdwg.mxu0
        %7056 = vmatprep.subr.bf16.mxu0 %v6069
        %7057 = vmatpush1.bf16.msra.mxu0 %v6068
        %7058 = vmatprep.subr.bf16.mxu0 %v6076
        %7059 = vmatpush1.bf16.msra.mxu0 %v6075
        %7060 = vmatprep.subr.bf16.mxu0 %v6083
        %7061 = vmatpush1.bf16.msra.mxu0 %v6082
        %7062 = vmatprep.subr.bf16.mxu0 %v6090
        %7063 = vmatpush1.bf16.msra.mxu0 %v6089
        %7064 = vmatprep.subr.bf16.mxu0 %v6097
        %7065 = vmatpush1.bf16.msra.mxu0 %v6096
        %7066 = vmatprep.subr.bf16.mxu0 %v6104
        %7067 = vmatpush1.bf16.msra.mxu0 %v6103
        %7068 = vmatprep.subr.bf16.mxu0 %v6111
        %7069 = vmatpush1.bf16.msra.mxu0 %v6110
        %7070 = vmatprep.subr.bf16.mxu0 %v6118
        %7071 = vmatpush1.bf16.msra.mxu0 %v6117
        %7072 = vmatprep.subr.bf16.mxu0 %v6125
        %7073 = vmatpush1.bf16.msra.mxu0 %v6124
        %7074 = vmatprep.subr.bf16.mxu0 %v6132
        %7075 = vmatpush1.bf16.msra.mxu0 %v6131
        %7076 = vmatprep.subr.bf16.mxu0 %v6139
        %7077 = vmatpush1.bf16.msra.mxu0 %v6138
        %7078 = vmatprep.subr.bf16.mxu0 %v6146
        %7079 = vmatpush1.bf16.msra.mxu0 %v6145
        %7080 = vmatprep.subr.bf16.mxu0 %v6153
        %7081 = vmatpush1.bf16.msra.mxu0 %v6152
        %7082 = vmatprep.subr.bf16.mxu0 %v6160
        %7083 = vmatpush1.bf16.msra.mxu0 %v6159
        %7084 = vmatprep.subr.bf16.mxu0 %v6167
        %7085 = vmatpush1.bf16.msra.mxu0 %v6166
        %7086 = vmatprep.subr.bf16.mxu0 %v6174
        %7087 = vmatpush1.bf16.msra.mxu0 %v6173
        %7088 = vmatprep.mubr.bf16.mxu0 %v3875
        %7089 = vmatmul.mubr.bf16.gmra.mrb[0].mxu0 %v3874
        %v7090 = vpop.f32.mrb[0].mxu0
        %v7091 = vadd.f32 %v7038, %v7090
        %v7092 = vpop.f32.mrb[0].mxu0
        %v7093 = vadd.f32 %v7040, %v7092
        %v7094 = vpop.f32.mrb[0].mxu0
        %v7095 = vadd.f32 %v7042, %v7094
        %v7096 = vpop.f32.mrb[0].mxu0
        %v7097 = vadd.f32 %v7044, %v7096
        %7098 = vmatprep.mubr.bf16.mxu0 %v3883
        %7099 = vmatmul.mubr.bf16.gmra.mrb[0].mxu0 %v3882
        %v7100 = vpop.f32.mrb[0].mxu0
        %v7101 = vadd.f32 %v7048, %v7100
        %v7102 = vpop.f32.mrb[0].mxu0
        %v7103 = vadd.f32 %v7050, %v7102
        %v7104 = vpop.f32.mrb[0].mxu0
        %v7105 = vadd.f32 %v7052, %v7104
        %v7106 = vpop.f32.mrb[0].mxu0
        %v7107 = vadd.f32 %v7054, %v7106
        %7108 = vdwg.mxu0
        %7109 = vmatprep.subr.bf16.mxu0 %v6181
        %7110 = vmatpush1.bf16.msra.mxu0 %v6180
        %7111 = vmatprep.subr.bf16.mxu0 %v6188
        %7112 = vmatpush1.bf16.msra.mxu0 %v6187
        %7113 = vmatprep.subr.bf16.mxu0 %v6195
        %7114 = vmatpush1.bf16.msra.mxu0 %v6194
        %7115 = vmatprep.subr.bf16.mxu0 %v6202
        %7116 = vmatpush1.bf16.msra.mxu0 %v6201
        %7117 = vmatprep.subr.bf16.mxu0 %v6209
        %7118 = vmatpush1.bf16.msra.mxu0 %v6208
        %7119 = vmatprep.subr.bf16.mxu0 %v6216
        %7120 = vmatpush1.bf16.msra.mxu0 %v6215
        %7121 = vmatprep.subr.bf16.mxu0 %v6223
        %7122 = vmatpush1.bf16.msra.mxu0 %v6222
        %7123 = vmatprep.subr.bf16.mxu0 %v6230
        %7124 = vmatpush1.bf16.msra.mxu0 %v6229
        %7125 = vmatprep.subr.bf16.mxu0 %v6237
        %7126 = vmatpush1.bf16.msra.mxu0 %v6236
        %7127 = vmatprep.subr.bf16.mxu0 %v6244
        %7128 = vmatpush1.bf16.msra.mxu0 %v6243
        %7129 = vmatprep.subr.bf16.mxu0 %v6251
        %7130 = vmatpush1.bf16.msra.mxu0 %v6250
        %7131 = vmatprep.subr.bf16.mxu0 %v6258
        %7132 = vmatpush1.bf16.msra.mxu0 %v6257
        %7133 = vmatprep.subr.bf16.mxu0 %v6265
        %7134 = vmatpush1.bf16.msra.mxu0 %v6264
        %7135 = vmatprep.subr.bf16.mxu0 %v6272
        %7136 = vmatpush1.bf16.msra.mxu0 %v6271
        %7137 = vmatprep.subr.bf16.mxu0 %v6279
        %7138 = vmatpush1.bf16.msra.mxu0 %v6278
        %7139 = vmatprep.subr.bf16.mxu0 %v6286
        %7140 = vmatpush1.bf16.msra.mxu0 %v6285
        %7141 = vmatprep.mubr.bf16.mxu0 %v3877
        %7142 = vmatmul.mubr.bf16.gmra.mrb[0].mxu0 %v3876
        %v7143 = vpop.f32.mrb[0].mxu0
        %v7144 = vadd.f32 %v7091, %v7143
        %v7145 = vpop.f32.mrb[0].mxu0
        %v7146 = vadd.f32 %v7093, %v7145
        %v7147 = vpop.f32.mrb[0].mxu0
        %v7148 = vadd.f32 %v7095, %v7147
        %v7149 = vpop.f32.mrb[0].mxu0
        %v7150 = vadd.f32 %v7097, %v7149
        %7151 = vmatprep.mubr.bf16.mxu0 %v3885
        %7152 = vmatmul.mubr.bf16.gmra.mrb[0].mxu0 %v3884
        %v7153 = vpop.f32.mrb[0].mxu0
        %v7154 = vadd.f32 %v7101, %v7153
        %v7155 = vpop.f32.mrb[0].mxu0
        %v7156 = vadd.f32 %v7103, %v7155
        %v7157 = vpop.f32.mrb[0].mxu0
        %v7158 = vadd.f32 %v7105, %v7157
        %v7159 = vpop.f32.mrb[0].mxu0
        %v7160 = vadd.f32 %v7107, %v7159
        %7161 = vdwg.mxu0
        %7162 = vmatprep.subr.bf16.mxu0 %v5847
        %7163 = vmatpush1.bf16.msra.mxu0 %v5846
        %7164 = vmatprep.subr.bf16.mxu0 %v5854
        %7165 = vmatpush1.bf16.msra.mxu0 %v5853
        %7166 = vmatprep.subr.bf16.mxu0 %v5861
        %7167 = vmatpush1.bf16.msra.mxu0 %v5860
        %7168 = vmatprep.subr.bf16.mxu0 %v5868
        %7169 = vmatpush1.bf16.msra.mxu0 %v5867
        %7170 = vmatprep.subr.bf16.mxu0 %v5875
        %7171 = vmatpush1.bf16.msra.mxu0 %v5874
        %7172 = vmatprep.subr.bf16.mxu0 %v5882
        %7173 = vmatpush1.bf16.msra.mxu0 %v5881
        %7174 = vmatprep.subr.bf16.mxu0 %v5889
        %7175 = vmatpush1.bf16.msra.mxu0 %v5888
        %7176 = vmatprep.subr.bf16.mxu0 %v5896
        %7177 = vmatpush1.bf16.msra.mxu0 %v5895
        %7178 = vmatprep.subr.bf16.mxu0 %v5903
        %7179 = vmatpush1.bf16.msra.mxu0 %v5902
        %7180 = vmatprep.subr.bf16.mxu0 %v5910
        %7181 = vmatpush1.bf16.msra.mxu0 %v5909
        %7182 = vmatprep.subr.bf16.mxu0 %v5917
        %7183 = vmatpush1.bf16.msra.mxu0 %v5916
        %7184 = vmatprep.subr.bf16.mxu0 %v5924
        %7185 = vmatpush1.bf16.msra.mxu0 %v5923
        %7186 = vmatprep.subr.bf16.mxu0 %v5931
        %7187 = vmatpush1.bf16.msra.mxu0 %v5930
        %7188 = vmatprep.subr.bf16.mxu0 %v5938
        %7189 = vmatpush1.bf16.msra.mxu0 %v5937
        %7190 = vmatprep.subr.bf16.mxu0 %v5945
        %7191 = vmatpush1.bf16.msra.mxu0 %v5944
        %7192 = vmatprep.subr.bf16.mxu0 %v5952
        %7193 = vmatpush1.bf16.msra.mxu0 %v5951
        %7194 = vmatprep.mubr.bf16.mxu0 %v3871
        %7195 = vmatmul.mubr.bf16.gmra.mrb[0].mxu0 %v3870
        %v7196 = vpop.f32.mrb[0].mxu0
        %v7197 = vadd.f32 %v4418, %v7196
        %v7198 = vpop.f32.mrb[0].mxu0
        %v7199 = vadd.f32 %v4422, %v7198
        %v7200 = vpop.f32.mrb[0].mxu0
        %v7201 = vadd.f32 %v4418, %v7200
        %v7202 = vpop.f32.mrb[0].mxu0
        %v7203 = vadd.f32 %v4422, %v7202
        %7204 = vmatprep.mubr.bf16.mxu0 %v3879
        %7205 = vmatmul.mubr.bf16.gmra.mrb[0].mxu0 %v3878
        %v7206 = vpop.f32.mrb[0].mxu0
        %v7207 = vadd.f32 %v4418, %v7206
        %v7208 = vpop.f32.mrb[0].mxu0
        %v7209 = vadd.f32 %v4422, %v7208
        %v7210 = vpop.f32.mrb[0].mxu0
        %v7211 = vadd.f32 %v4418, %v7210
        %v7212 = vpop.f32.mrb[0].mxu0
        %v7213 = vadd.f32 %v4422, %v7212
        %7214 = vdwg.mxu0
        %7215 = vmatprep.subr.bf16.mxu0 %v5959
        %7216 = vmatpush1.bf16.msra.mxu0 %v5958
        %7217 = vmatprep.subr.bf16.mxu0 %v5966
        %7218 = vmatpush1.bf16.msra.mxu0 %v5965
        %7219 = vmatprep.subr.bf16.mxu0 %v5973
        %7220 = vmatpush1.bf16.msra.mxu0 %v5972
        %7221 = vmatprep.subr.bf16.mxu0 %v5980
        %7222 = vmatpush1.bf16.msra.mxu0 %v5979
        %7223 = vmatprep.subr.bf16.mxu0 %v5987
        %7224 = vmatpush1.bf16.msra.mxu0 %v5986
        %7225 = vmatprep.subr.bf16.mxu0 %v5994
        %7226 = vmatpush1.bf16.msra.mxu0 %v5993
        %7227 = vmatprep.subr.bf16.mxu0 %v6001
        %7228 = vmatpush1.bf16.msra.mxu0 %v6000
        %7229 = vmatprep.subr.bf16.mxu0 %v6008
        %7230 = vmatpush1.bf16.msra.mxu0 %v6007
        %7231 = vmatprep.subr.bf16.mxu0 %v6015
        %7232 = vmatpush1.bf16.msra.mxu0 %v6014
        %7233 = vmatprep.subr.bf16.mxu0 %v6022
        %7234 = vmatpush1.bf16.msra.mxu0 %v6021
        %7235 = vmatprep.subr.bf16.mxu0 %v6029
        %7236 = vmatpush1.bf16.msra.mxu0 %v6028
        %7237 = vmatprep.subr.bf16.mxu0 %v6036
        %7238 = vmatpush1.bf16.msra.mxu0 %v6035
        %7239 = vmatprep.subr.bf16.mxu0 %v6043
        %7240 = vmatpush1.bf16.msra.mxu0 %v6042
        %7241 = vmatprep.subr.bf16.mxu0 %v6050
        %7242 = vmatpush1.bf16.msra.mxu0 %v6049
        %7243 = vmatprep.subr.bf16.mxu0 %v6057
        %7244 = vmatpush1.bf16.msra.mxu0 %v6056
        %7245 = vmatprep.subr.bf16.mxu0 %v6064
        %7246 = vmatpush1.bf16.msra.mxu0 %v6063
        %7247 = vmatprep.mubr.bf16.mxu0 %v3873
        %7248 = vmatmul.mubr.bf16.gmra.mrb[0].mxu0 %v3872
        %v7249 = vpop.f32.mrb[0].mxu0
        %v7250 = vadd.f32 %v7197, %v7249
        %v7251 = vpop.f32.mrb[0].mxu0
        %v7252 = vadd.f32 %v7199, %v7251
        %v7253 = vpop.f32.mrb[0].mxu0
        %v7254 = vadd.f32 %v7201, %v7253
        %v7255 = vpop.f32.mrb[0].mxu0
        %v7256 = vadd.f32 %v7203, %v7255
        %7257 = vmatprep.mubr.bf16.mxu0 %v3881
        %7258 = vmatmul.mubr.bf16.gmra.mrb[0].mxu0 %v3880
        %v7259 = vpop.f32.mrb[0].mxu0
        %v7260 = vadd.f32 %v7207, %v7259
        %v7261 = vpop.f32.mrb[0].mxu0
        %v7262 = vadd.f32 %v7209, %v7261
        %v7263 = vpop.f32.mrb[0].mxu0
        %v7264 = vadd.f32 %v7211, %v7263
        %v7265 = vpop.f32.mrb[0].mxu0
        %v7266 = vadd.f32 %v7213, %v7265
        %7267 = vdwg.mxu0
        %7268 = vmatprep.subr.bf16.mxu0 %v6071
        %7269 = vmatpush1.bf16.msra.mxu0 %v6070
        %7270 = vmatprep.subr.bf16.mxu0 %v6078
        %7271 = vmatpush1.bf16.msra.mxu0 %v6077
        %7272 = vmatprep.subr.bf16.mxu0 %v6085
        %7273 = vmatpush1.bf16.msra.mxu0 %v6084
        %7274 = vmatprep.subr.bf16.mxu0 %v6092
        %7275 = vmatpush1.bf16.msra.mxu0 %v6091
        %7276 = vmatprep.subr.bf16.mxu0 %v6099
        %7277 = vmatpush1.bf16.msra.mxu0 %v6098
        %7278 = vmatprep.subr.bf16.mxu0 %v6106
        %7279 = vmatpush1.bf16.msra.mxu0 %v6105
        %7280 = vmatprep.subr.bf16.mxu0 %v6113
        %7281 = vmatpush1.bf16.msra.mxu0 %v6112
        %7282 = vmatprep.subr.bf16.mxu0 %v6120
        %7283 = vmatpush1.bf16.msra.mxu0 %v6119
        %7284 = vmatprep.subr.bf16.mxu0 %v6127
        %7285 = vmatpush1.bf16.msra.mxu0 %v6126
        %7286 = vmatprep.subr.bf16.mxu0 %v6134
        %7287 = vmatpush1.bf16.msra.mxu0 %v6133
        %7288 = vmatprep.subr.bf16.mxu0 %v6141
        %7289 = vmatpush1.bf16.msra.mxu0 %v6140
        %7290 = vmatprep.subr.bf16.mxu0 %v6148
        %7291 = vmatpush1.bf16.msra.mxu0 %v6147
        %7292 = vmatprep.subr.bf16.mxu0 %v6155
        %7293 = vmatpush1.bf16.msra.mxu0 %v6154
        %7294 = vmatprep.subr.bf16.mxu0 %v6162
        %7295 = vmatpush1.bf16.msra.mxu0 %v6161
        %7296 = vmatprep.subr.bf16.mxu0 %v6169
        %7297 = vmatpush1.bf16.msra.mxu0 %v6168
        %7298 = vmatprep.subr.bf16.mxu0 %v6176
        %7299 = vmatpush1.bf16.msra.mxu0 %v6175
        %7300 = vmatprep.mubr.bf16.mxu0 %v3875
        %7301 = vmatmul.mubr.bf16.gmra.mrb[0].mxu0 %v3874
        %v7302 = vpop.f32.mrb[0].mxu0
        %v7303 = vadd.f32 %v7250, %v7302
        %v7304 = vpop.f32.mrb[0].mxu0
        %v7305 = vadd.f32 %v7252, %v7304
        %v7306 = vpop.f32.mrb[0].mxu0
        %v7307 = vadd.f32 %v7254, %v7306
        %v7308 = vpop.f32.mrb[0].mxu0
        %v7309 = vadd.f32 %v7256, %v7308
        %7310 = vmatprep.mubr.bf16.mxu0 %v3883
        %7311 = vmatmul.mubr.bf16.gmra.mrb[0].mxu0 %v3882
        %v7312 = vpop.f32.mrb[0].mxu0
        %v7313 = vadd.f32 %v7260, %v7312
        %v7314 = vpop.f32.mrb[0].mxu0
        %v7315 = vadd.f32 %v7262, %v7314
        %v7316 = vpop.f32.mrb[0].mxu0
        %v7317 = vadd.f32 %v7264, %v7316
        %v7318 = vpop.f32.mrb[0].mxu0
        %v7319 = vadd.f32 %v7266, %v7318
        %7320 = vdwg.mxu0
        %7321 = vmatprep.subr.bf16.mxu0 %v6183
        %7322 = vmatpush1.bf16.msra.mxu0 %v6182
        %7323 = vmatprep.subr.bf16.mxu0 %v6190
        %7324 = vmatpush1.bf16.msra.mxu0 %v6189
        %7325 = vmatprep.subr.bf16.mxu0 %v6197
        %7326 = vmatpush1.bf16.msra.mxu0 %v6196
        %7327 = vmatprep.subr.bf16.mxu0 %v6204
        %7328 = vmatpush1.bf16.msra.mxu0 %v6203
        %7329 = vmatprep.subr.bf16.mxu0 %v6211
        %7330 = vmatpush1.bf16.msra.mxu0 %v6210
        %7331 = vmatprep.subr.bf16.mxu0 %v6218
        %7332 = vmatpush1.bf16.msra.mxu0 %v6217
        %7333 = vmatprep.subr.bf16.mxu0 %v6225
        %7334 = vmatpush1.bf16.msra.mxu0 %v6224
        %7335 = vmatprep.subr.bf16.mxu0 %v6232
        %7336 = vmatpush1.bf16.msra.mxu0 %v6231
        %7337 = vmatprep.subr.bf16.mxu0 %v6239
        %7338 = vmatpush1.bf16.msra.mxu0 %v6238
        %7339 = vmatprep.subr.bf16.mxu0 %v6246
        %7340 = vmatpush1.bf16.msra.mxu0 %v6245
        %7341 = vmatprep.subr.bf16.mxu0 %v6253
        %7342 = vmatpush1.bf16.msra.mxu0 %v6252
        %7343 = vmatprep.subr.bf16.mxu0 %v6260
        %7344 = vmatpush1.bf16.msra.mxu0 %v6259
        %7345 = vmatprep.subr.bf16.mxu0 %v6267
        %7346 = vmatpush1.bf16.msra.mxu0 %v6266
        %7347 = vmatprep.subr.bf16.mxu0 %v6274
        %7348 = vmatpush1.bf16.msra.mxu0 %v6273
        %7349 = vmatprep.subr.bf16.mxu0 %v6281
        %7350 = vmatpush1.bf16.msra.mxu0 %v6280
        %7351 = vmatprep.subr.bf16.mxu0 %v6288
        %7352 = vmatpush1.bf16.msra.mxu0 %v6287
        %7353 = vmatprep.mubr.bf16.mxu0 %v3877
        %7354 = vmatmul.mubr.bf16.gmra.mrb[0].mxu0 %v3876
        %v7355 = vpop.f32.mrb[0].mxu0
        %v7356 = vadd.f32 %v7303, %v7355
        %v7357 = vpop.f32.mrb[0].mxu0
        %v7358 = vadd.f32 %v7305, %v7357
        %v7359 = vpop.f32.mrb[0].mxu0
        %v7360 = vadd.f32 %v7307, %v7359
        %v7361 = vpop.f32.mrb[0].mxu0
        %v7362 = vadd.f32 %v7309, %v7361
        %7363 = vmatprep.mubr.bf16.mxu0 %v3885
        %7364 = vmatmul.mubr.bf16.gmra.mrb[0].mxu0 %v3884
        %v7365 = vpop.f32.mrb[0].mxu0
        %v7366 = vadd.f32 %v7313, %v7365
        %v7367 = vpop.f32.mrb[0].mxu0
        %v7368 = vadd.f32 %v7315, %v7367
        %v7369 = vpop.f32.mrb[0].mxu0
        %v7370 = vadd.f32 %v7317, %v7369
        %v7371 = vpop.f32.mrb[0].mxu0
        %v7372 = vadd.f32 %v7319, %v7371
        %7373 = vdwg.mxu0
        %7374 = vmatprep.subr.bf16.mxu0 0
        %7375 = vmatpush1.bf16.msra.mxu0 %v5848
        %7376 = vmatprep.subr.bf16.mxu0 0
        %7377 = vmatpush1.bf16.msra.mxu0 %v5855
        %7378 = vmatprep.subr.bf16.mxu0 0
        %7379 = vmatpush1.bf16.msra.mxu0 %v5862
        %7380 = vmatprep.subr.bf16.mxu0 0
        %7381 = vmatpush1.bf16.msra.mxu0 %v5869
        %7382 = vmatprep.subr.bf16.mxu0 0
        %7383 = vmatpush1.bf16.msra.mxu0 %v5876
        %7384 = vmatprep.subr.bf16.mxu0 0
        %7385 = vmatpush1.bf16.msra.mxu0 %v5883
        %7386 = vmatprep.subr.bf16.mxu0 0
        %7387 = vmatpush1.bf16.msra.mxu0 %v5890
        %7388 = vmatprep.subr.bf16.mxu0 0
        %7389 = vmatpush1.bf16.msra.mxu0 %v5897
        %7390 = vmatprep.subr.bf16.mxu0 0
        %7391 = vmatpush1.bf16.msra.mxu0 %v5904
        %7392 = vmatprep.subr.bf16.mxu0 0
        %7393 = vmatpush1.bf16.msra.mxu0 %v5911
        %7394 = vmatprep.subr.bf16.mxu0 0
        %7395 = vmatpush1.bf16.msra.mxu0 %v5918
        %7396 = vmatprep.subr.bf16.mxu0 0
        %7397 = vmatpush1.bf16.msra.mxu0 %v5925
        %7398 = vmatprep.subr.bf16.mxu0 0
        %7399 = vmatpush1.bf16.msra.mxu0 %v5932
        %7400 = vmatprep.subr.bf16.mxu0 0
        %7401 = vmatpush1.bf16.msra.mxu0 %v5939
        %7402 = vmatprep.subr.bf16.mxu0 0
        %7403 = vmatpush1.bf16.msra.mxu0 %v5946
        %7404 = vmatprep.subr.bf16.mxu0 0
        %7405 = vmatpush1.bf16.msra.mxu0 %v5953
        %7406 = vmatprep.mubr.bf16.mxu0 %v3871
        %7407 = vmatmul.mubr.bf16.gmra.mrb[0].mxu0 %v3870
        %v7408 = vpop.f32.mrb[0].mxu0
        %v7409 = vadd.f32 %v4426, %v7408
        %v7410 = vpop.f32.mrb[0].mxu0
        %v7411 = vpop.f32.mrb[0].mxu0
        %v7412 = vadd.f32 %v4426, %v7411
        %v7413 = vpop.f32.mrb[0].mxu0
        %7414 = vmatprep.mubr.bf16.mxu0 %v3879
        %7415 = vmatmul.mubr.bf16.gmra.mrb[0].mxu0 %v3878
        %v7416 = vpop.f32.mrb[0].mxu0
        %v7417 = vadd.f32 %v4426, %v7416
        %v7418 = vpop.f32.mrb[0].mxu0
        %v7419 = vpop.f32.mrb[0].mxu0
        %v7420 = vadd.f32 %v4426, %v7419
        %v7421 = vpop.f32.mrb[0].mxu0
        %7422 = vdwg.mxu0
        %7423 = vmatprep.subr.bf16.mxu0 0
        %7424 = vmatpush1.bf16.msra.mxu0 %v5960
        %7425 = vmatprep.subr.bf16.mxu0 0
        %7426 = vmatpush1.bf16.msra.mxu0 %v5967
        %7427 = vmatprep.subr.bf16.mxu0 0
        %7428 = vmatpush1.bf16.msra.mxu0 %v5974
        %7429 = vmatprep.subr.bf16.mxu0 0
        %7430 = vmatpush1.bf16.msra.mxu0 %v5981
        %7431 = vmatprep.subr.bf16.mxu0 0
        %7432 = vmatpush1.bf16.msra.mxu0 %v5988
        %7433 = vmatprep.subr.bf16.mxu0 0
        %7434 = vmatpush1.bf16.msra.mxu0 %v5995
        %7435 = vmatprep.subr.bf16.mxu0 0
        %7436 = vmatpush1.bf16.msra.mxu0 %v6002
        %7437 = vmatprep.subr.bf16.mxu0 0
        %7438 = vmatpush1.bf16.msra.mxu0 %v6009
        %7439 = vmatprep.subr.bf16.mxu0 0
        %7440 = vmatpush1.bf16.msra.mxu0 %v6016
        %7441 = vmatprep.subr.bf16.mxu0 0
        %7442 = vmatpush1.bf16.msra.mxu0 %v6023
        %7443 = vmatprep.subr.bf16.mxu0 0
        %7444 = vmatpush1.bf16.msra.mxu0 %v6030
        %7445 = vmatprep.subr.bf16.mxu0 0
        %7446 = vmatpush1.bf16.msra.mxu0 %v6037
        %7447 = vmatprep.subr.bf16.mxu0 0
        %7448 = vmatpush1.bf16.msra.mxu0 %v6044
        %7449 = vmatprep.subr.bf16.mxu0 0
        %7450 = vmatpush1.bf16.msra.mxu0 %v6051
        %7451 = vmatprep.subr.bf16.mxu0 0
        %7452 = vmatpush1.bf16.msra.mxu0 %v6058
        %7453 = vmatprep.subr.bf16.mxu0 0
        %7454 = vmatpush1.bf16.msra.mxu0 %v6065
        %7455 = vmatprep.mubr.bf16.mxu0 %v3873
        %7456 = vmatmul.mubr.bf16.gmra.mrb[0].mxu0 %v3872
        %v7457 = vpop.f32.mrb[0].mxu0
        %v7458 = vadd.f32 %v7409, %v7457
        %v7459 = vpop.f32.mrb[0].mxu0
        %v7460 = vpop.f32.mrb[0].mxu0
        %v7461 = vadd.f32 %v7412, %v7460
        %v7462 = vpop.f32.mrb[0].mxu0
        %7463 = vmatprep.mubr.bf16.mxu0 %v3881
        %7464 = vmatmul.mubr.bf16.gmra.mrb[0].mxu0 %v3880
        %v7465 = vpop.f32.mrb[0].mxu0
        %v7466 = vadd.f32 %v7417, %v7465
        %v7467 = vpop.f32.mrb[0].mxu0
        %v7468 = vpop.f32.mrb[0].mxu0
        %v7469 = vadd.f32 %v7420, %v7468
        %v7470 = vpop.f32.mrb[0].mxu0
        %7471 = vdwg.mxu0
        %7472 = vmatprep.subr.bf16.mxu0 0
        %7473 = vmatpush1.bf16.msra.mxu0 %v6072
        %7474 = vmatprep.subr.bf16.mxu0 0
        %7475 = vmatpush1.bf16.msra.mxu0 %v6079
        %7476 = vmatprep.subr.bf16.mxu0 0
        %7477 = vmatpush1.bf16.msra.mxu0 %v6086
        %7478 = vmatprep.subr.bf16.mxu0 0
        %7479 = vmatpush1.bf16.msra.mxu0 %v6093
        %7480 = vmatprep.subr.bf16.mxu0 0
        %7481 = vmatpush1.bf16.msra.mxu0 %v6100
        %7482 = vmatprep.subr.bf16.mxu0 0
        %7483 = vmatpush1.bf16.msra.mxu0 %v6107
        %7484 = vmatprep.subr.bf16.mxu0 0
        %7485 = vmatpush1.bf16.msra.mxu0 %v6114
        %7486 = vmatprep.subr.bf16.mxu0 0
        %7487 = vmatpush1.bf16.msra.mxu0 %v6121
        %7488 = vmatprep.subr.bf16.mxu0 0
        %7489 = vmatpush1.bf16.msra.mxu0 %v6128
        %7490 = vmatprep.subr.bf16.mxu0 0
        %7491 = vmatpush1.bf16.msra.mxu0 %v6135
        %7492 = vmatprep.subr.bf16.mxu0 0
        %7493 = vmatpush1.bf16.msra.mxu0 %v6142
        %7494 = vmatprep.subr.bf16.mxu0 0
        %7495 = vmatpush1.bf16.msra.mxu0 %v6149
        %7496 = vmatprep.subr.bf16.mxu0 0
        %7497 = vmatpush1.bf16.msra.mxu0 %v6156
        %7498 = vmatprep.subr.bf16.mxu0 0
        %7499 = vmatpush1.bf16.msra.mxu0 %v6163
        %7500 = vmatprep.subr.bf16.mxu0 0
        %7501 = vmatpush1.bf16.msra.mxu0 %v6170
        %7502 = vmatprep.subr.bf16.mxu0 0
        %7503 = vmatpush1.bf16.msra.mxu0 %v6177
        %7504 = vmatprep.mubr.bf16.mxu0 %v3875
        %7505 = vmatmul.mubr.bf16.gmra.mrb[0].mxu0 %v3874
        %v7506 = vpop.f32.mrb[0].mxu0
        %v7507 = vadd.f32 %v7458, %v7506
        %v7508 = vpop.f32.mrb[0].mxu0
        %v7509 = vpop.f32.mrb[0].mxu0
        %v7510 = vadd.f32 %v7461, %v7509
        %v7511 = vpop.f32.mrb[0].mxu0
        %7512 = vmatprep.mubr.bf16.mxu0 %v3883
        %7513 = vmatmul.mubr.bf16.gmra.mrb[0].mxu0 %v3882
        %v7514 = vpop.f32.mrb[0].mxu0
        %v7515 = vadd.f32 %v7466, %v7514
        %v7516 = vpop.f32.mrb[0].mxu0
        %v7517 = vpop.f32.mrb[0].mxu0
        %v7518 = vadd.f32 %v7469, %v7517
        %v7519 = vpop.f32.mrb[0].mxu0
        %7520 = vdwg.mxu0
        %7521 = vmatprep.subr.bf16.mxu0 0
        %7522 = vmatpush1.bf16.msra.mxu0 %v6184
        %7523 = vmatprep.subr.bf16.mxu0 0
        %7524 = vmatpush1.bf16.msra.mxu0 %v6191
        %7525 = vmatprep.subr.bf16.mxu0 0
        %7526 = vmatpush1.bf16.msra.mxu0 %v6198
        %7527 = vmatprep.subr.bf16.mxu0 0
        %7528 = vmatpush1.bf16.msra.mxu0 %v6205
        %7529 = vmatprep.subr.bf16.mxu0 0
        %7530 = vmatpush1.bf16.msra.mxu0 %v6212
        %7531 = vmatprep.subr.bf16.mxu0 0
        %7532 = vmatpush1.bf16.msra.mxu0 %v6219
        %7533 = vmatprep.subr.bf16.mxu0 0
        %7534 = vmatpush1.bf16.msra.mxu0 %v6226
        %7535 = vmatprep.subr.bf16.mxu0 0
        %7536 = vmatpush1.bf16.msra.mxu0 %v6233
        %7537 = vmatprep.subr.bf16.mxu0 0
        %7538 = vmatpush1.bf16.msra.mxu0 %v6240
        %7539 = vmatprep.subr.bf16.mxu0 0
        %7540 = vmatpush1.bf16.msra.mxu0 %v6247
        %7541 = vmatprep.subr.bf16.mxu0 0
        %7542 = vmatpush1.bf16.msra.mxu0 %v6254
        %7543 = vmatprep.subr.bf16.mxu0 0
        %7544 = vmatpush1.bf16.msra.mxu0 %v6261
        %7545 = vmatprep.subr.bf16.mxu0 0
        %7546 = vmatpush1.bf16.msra.mxu0 %v6268
        %7547 = vmatprep.subr.bf16.mxu0 0
        %7548 = vmatpush1.bf16.msra.mxu0 %v6275
        %7549 = vmatprep.subr.bf16.mxu0 0
        %7550 = vmatpush1.bf16.msra.mxu0 %v6282
        %7551 = vmatprep.subr.bf16.mxu0 0
        %7552 = vmatpush1.bf16.msra.mxu0 %v6289
        %7553 = vmatprep.mubr.bf16.mxu0 %v3877
        %7554 = vmatmul.mubr.bf16.gmra.mrb[0].mxu0 %v3876
        %v7555 = vpop.f32.mrb[0].mxu0
        %v7556 = vadd.f32 %v7507, %v7555
        %v7557 = vpop.f32.mrb[0].mxu0
        %v7558 = vpop.f32.mrb[0].mxu0
        %v7559 = vadd.f32 %v7510, %v7558
        %v7560 = vpop.f32.mrb[0].mxu0
        %7561 = vmatprep.mubr.bf16.mxu0 %v3885
        %7562 = vmatmul.mubr.bf16.gmra.mrb[0].mxu0 %v3884
        %v7563 = vpop.f32.mrb[0].mxu0
        %v7564 = vadd.f32 %v7515, %v7563
        %v7565 = vpop.f32.mrb[0].mxu0
        %v7566 = vpop.f32.mrb[0].mxu0
        %v7567 = vadd.f32 %v7518, %v7566
        %v7568 = vpop.f32.mrb[0].mxu0
        %7569 = vdwg.mxu0
        %v7570 = vtanh.pop %v6932
        %v7571 = vtanh.pop %v6934
        %v7572 = vtanh.pop %v7144
        %v7573 = vtanh.pop %v7146
        %v7574 = vtanh.pop %v7356
        %v7575 = vtanh.pop %v7358
        %v7576 = vtanh.pop %v7556
        %v7577 = vtanh.pop %v6936
        %v7578 = vtanh.pop %v6938
        %v7579 = vtanh.pop %v7148
        %v7580 = vtanh.pop %v7150
        %v7581 = vtanh.pop %v7360
        %v7582 = vtanh.pop %v7362
        %v7583 = vtanh.pop %v7559
        %v7584 = vtanh.pop %v6942
        %v7585 = vtanh.pop %v6944
        %v7586 = vtanh.pop %v7154
        %v7587 = vtanh.pop %v7156
        %v7588 = vtanh.pop %v7366
        %v7589 = vtanh.pop %v7368
        %v7590 = vtanh.pop %v7564
        %v7591 = vtanh.pop %v6946
        %v7592 = vtanh.pop %v6948
        %v7593 = vtanh.pop %v7158
        %v7594 = vtanh.pop %v7160
        %v7595 = vtanh.pop %v7370
        %v7596 = vtanh.pop %v7372
        %v7597 = vtanh.pop %v7567
        %7598 = vst [vmem:[%s341] sm:$0xff] %v7570
        %7599 = vst [vmem:[%s341 + $0x8] sm:$0xff] %v7571
        %7600 = vst [vmem:[%s341 + $0x10] sm:$0xff] %v7572
        %7601 = vst [vmem:[%s341 + $0x18] sm:$0xff] %v7573
        %7602 = vst [vmem:[%s341 + $0x20] sm:$0xff] %v7574
        %7603 = vst [vmem:[%s341 + $0x28] sm:$0xff] %v7575
        %7604 = vst [vmem:[%s341 + $0x30] sm:$0xff] %v7576
        %7605 = vst [vmem:[%s341 + $0x38] sm:$0xff] %v7577
        %7606 = vst [vmem:[%s341 + $0x40] sm:$0xff] %v7578
        %7607 = vst [vmem:[%s341 + $0x48] sm:$0xff] %v7579
        %7608 = vst [vmem:[%s341 + $0x50] sm:$0xff] %v7580
        %7609 = vst [vmem:[%s341 + $0x58] sm:$0xff] %v7581
        %7610 = vst [vmem:[%s341 + $0x60] sm:$0xff] %v7582
        %7611 = vst [vmem:[%s341 + $0x68] sm:$0xff] %v7583
        %7612 = vst [vmem:[%s341 + $0x70] sm:$0xff] %v7584
        %7613 = vst [vmem:[%s341 + $0x78] sm:$0xff] %v7585
        %7614 = vst [vmem:[%s341 + $0x80] sm:$0xff] %v7586
        %7615 = vst [vmem:[%s341 + $0x88] sm:$0xff] %v7587
        %7616 = vst [vmem:[%s341 + $0x90] sm:$0xff] %v7588
        %7617 = vst [vmem:[%s341 + $0x98] sm:$0xff] %v7589
        %7618 = vst [vmem:[%s341 + $0xa0] sm:$0xff] %v7590
        %7619 = vst [vmem:[%s341 + $0xa8] sm:$0xff] %v7591
        %7620 = vst [vmem:[%s341 + $0xb0] sm:$0xff] %v7592
        %7621 = vst [vmem:[%s341 + $0xb8] sm:$0xff] %v7593
        %7622 = vst [vmem:[%s341 + $0xc0] sm:$0xff] %v7594
        %7623 = vst [vmem:[%s341 + $0xc8] sm:$0xff] %v7595
        %7624 = vst [vmem:[%s341 + $0xd0] sm:$0xff] %v7596
        %7625 = vst [vmem:[%s341 + $0xd8] sm:$0xff] %v7597
        %s7626 = sand.u32 %s165, 1
        %s7627 = scalar_lea.sflag [#allocation4], %s7626
        %s7628 = sand.u32 %s165, 1
        %s7629 = smul.addr %s7628, 224
        %s7630 = scalar_lea.vmem [#allocation13], %s7629
        // Predicated region
        $region69: #{_generator_forward_padded.1} parent=43 // pred_check
          %p7631 = pneg %p175
        $region70: #{_generator_forward_padded.1} parent=43 // pred_check_branch
          %7633 = sbr.rel (%p7631) target = $region72
        $region71: #{_generator_forward_padded.1} parent=43 // pred_region
          %s7634 = smul.u32 4, %s26
          %s7636 = ssub.s32 3584, 3584
          %7637 = vsyncadd %s7627, %s7636
          %s7638 = smul.addr %s7634, 7
          %s7639 = smul.addr %s7638, 128
          %s7640 = scalar_lea.hbm %s6, %s7639
          %s7641 = sshll.u32 %s7630, 4
          %s7642 = int_to_ptr.vmem [resolvable:$true] %s7641
          %7647 = dma.vmem_to_hbm [thread:$0]  %s7642, 3584, %s7640, %s7627, 896, 896, 56
        $region72: #{_generator_forward_padded.1} parent=43 // pred_fallthru
          _
      $region44: #{_generator_forward_padded.1} parent=5 // pred_fallthru
        _
      %p7648 = scmp.le.s32.totalorder 2, %s21
      // Predicated region
      $region73: #{_generator_forward_padded.1} parent=5 // pred_check
        %p7649 = pneg %p7648
      $region74: #{_generator_forward_padded.1} parent=5 // pred_check_branch
        %7651 = sbr.rel (%p7649) target = $region76
      $region75: #{_generator_forward_padded.1} parent=5 // pred_region
        %s7652 = ssub.s32 %s21, 2
        // Predicated region
        $region77: #{_generator_forward_padded.1} parent=75 // pred_check
          %p7653 = pneg %p181
        $region78: #{_generator_forward_padded.1} parent=75 // pred_check_branch
          %7655 = sbr.rel (%p7653) target = $region80
        $region79: #{_generator_forward_padded.1} parent=75 // pred_region
          %s7656 = sand.u32 %s166, 1
          %s7657 = scalar_lea.sflag [#allocation4], %s7656
          %s7658 = sand.u32 %s166, 1
          %s7659 = smul.addr %s7658, 224
          %s7660 = scalar_lea.vmem [#allocation13], %s7659
          %7661 = dma.done %s7657, 3584
        $region80: #{_generator_forward_padded.1} parent=75 // pred_fallthru
          _
      $region76: #{_generator_forward_padded.1} parent=5 // pred_fallthru
        _
    $region6: #{_generator_forward_padded.1} parent=1 // loop_footer
      %s25 = sadd.s32 1, %s21
    $region7: #{_generator_forward_padded.1} parent=1 // loop_footer_branch
      %20 = sbr.rel target = $region3
    $region8: #{_generator_forward_padded.1} parent=1 // loop_exit
      _
    %7662 = vsyncpa [#allocation3], 1
    %s7663 = scalar_lea.sflag [#allocation3], 1
    %7664 = vsyncpa %s7663, 1
    %7665 = vsyncpa [#allocation6], 1
    %7666 = vsyncpa [#allocation9], 1
    %7667 = vsyncpa [#allocation12], 1
    %7668 = vsyncpa [#allocation4], 1
    %s7669 = scalar_lea.sflag [#allocation4], 1
    %7670 = vsyncpa %s7669, 1

</llo_original>
